<compile_context>
chip_gen: v7x
topology: tpu7x:2x2x1
jax: 0.10.0
libtpu: 0.0.40
codegen_flags: <defaults>
</compile_context>

<pallas_src>
import math

import jax
import jax.numpy as jnp
from jax import lax
from jax.experimental import pallas as pl
from jax.experimental.pallas import tpu as pltpu

IN_CH = 4
OUT_CH = 64
HIDDEN = 128
NUM_HEADS = 8
HEAD_DIM = HIDDEN // NUM_HEADS
KSIZE = 3
OUT_SIZE = 1
BLOCK_B = 64  # max batch rows per grid step (multiple of 8)


def _model_kernel(x_ref, conv_w_ref, conv_b_ref,
                  w_ih_ref, w_hh_ref, b_lstm_ref,
                  wq_ref, bq_ref, wk_ref, bk_ref, wv_ref, bv_ref,
                  wo_ref, bo_ref,
                  w_out_q_ref, w_out_a_ref, b_out_ref,
                  seg_ref, seg_t_ref,
                  out_ref,
                  gx_ref, seq_ref):
    f32 = jnp.float32
    bf16 = jnp.bfloat16
    Bt = out_ref.shape[0]              # batch rows handled by this grid step
    TB, H = seq_ref.shape              # TB = T * Bt
    T = TB // Bt
    nheads = seg_ref.shape[1]
    scale = 1.0 / math.sqrt(H // nheads)

    # ---- Conv1d(k=3, stride=1, pad=1) + ReLU, as one im2col matmul ----------
    # x rows are (time, local-batch)-flattened; columns are the K*Cin im2col
    # taps (built once in the wrapper).  Conv is tiny (K=12), kept in f32.
    xcol = x_ref[0]                                            # (L*Bt, K*Cin)
    conv = jnp.maximum(
        jnp.dot(xcol, conv_w_ref[...], preferred_element_type=f32)
        + conv_b_ref[...], 0.0)                                # (L*Bt, Cout)

    # ---- MaxPool1d(k=2, stride=1): T = L - 1 --------------------------------
    pooled = jnp.maximum(conv[0:TB, :], conv[Bt:Bt + TB, :])   # (T*Bt, Cout)

    # ---- LSTM: input projection hoisted out of the recurrence (bf16 MXU) ----
    gx_ref[...] = (jnp.dot(pooled.astype(bf16), w_ih_ref[...],
                           preferred_element_type=f32)
                   + b_lstm_ref[...])                          # (T*Bt, 4H) f32

    H3 = 3 * H

    def lstm_step(t, hc):
        h, c = hc
        row = pl.multiple_of(t * Bt, Bt)
        gates = gx_ref[pl.ds(row, Bt), :] + jnp.dot(
            h.astype(bf16), w_hh_ref[...], preferred_element_type=f32)
        # gate columns are pre-ordered [i, f, o, g] -> one fused sigmoid block
        ifo = jax.nn.sigmoid(gates[:, :H3])
        g_g = jnp.tanh(gates[:, H3:])
        c_new = ifo[:, H:2 * H] * c + ifo[:, :H] * g_g
        h_new = ifo[:, 2 * H:] * jnp.tanh(c_new)
        seq_ref[pl.ds(row, Bt), :] = h_new.astype(bf16)
        return (h_new, c_new)

    zeros_bh = jnp.zeros((Bt, H), f32)
    # T is static; full unroll gives the LLO scheduler visibility across steps.
    h_last, _ = lax.fori_loop(0, T, lstm_step, (zeros_bh, zeros_bh),
                              unroll=True)

    query = h_last                                             # (Bt, H) == out[:, -1, :]

    # ---- MultiheadAttention (lstm_fc already folded into k / v weights) -----
    q = (jnp.dot(query.astype(bf16), wq_ref[...], preferred_element_type=f32)
         + bq_ref[...]) * scale                                # (Bt, H)

    seq_bf = seq_ref[...]                                      # (T*Bt, H) bf16
    k_mat = jnp.dot(seq_bf, wk_ref[...], preferred_element_type=f32) + bk_ref[...]

    # per-head score reduction via one matmul with the 0/1 head-segment matrix
    prod = (k_mat.reshape(T, Bt, H) * q).reshape(TB, H)        # q broadcast over time
    scores = jnp.dot(prod, seg_ref[...], preferred_element_type=f32)  # (T*Bt, heads)

    scores3 = scores.reshape(T, Bt, nheads)
    m = jnp.max(scores3, axis=0)                               # (Bt, heads)
    p3 = jnp.exp(scores3 - m)
    denom = jnp.sum(p3, axis=0)                                # (Bt, heads)
    inv = pl.reciprocal(denom, approx=True)

    # head -> lane expansion via one matmul; weighted sum over time on the VPU
    v_mat = jnp.dot(seq_bf, wv_ref[...], preferred_element_type=f32) + bv_ref[...]
    p_full = jnp.dot(p3.reshape(TB, nheads), seg_t_ref[...],
                     preferred_element_type=f32)               # (T*Bt, H)
    attn_un = jnp.sum((p_full * v_mat).reshape(T, Bt, H), axis=0)     # (Bt, H)
    inv_full = jnp.dot(inv, seg_t_ref[...], preferred_element_type=f32)
    attn_heads = attn_un * inv_full                            # (Bt, H)

    attn_out = (jnp.dot(attn_heads.astype(bf16), wo_ref[...],
                        preferred_element_type=f32) + bo_ref[...])

    # ---- fc_out on concat(query, attn_out): VPU mul + lane reduction --------
    # (an N=1 matmul would burn a full MXU pass for a single output column)
    out_ref[...] = (jnp.sum(query * w_out_q_ref[...], axis=-1, keepdims=True)
                    + jnp.sum(attn_out * w_out_a_ref[...], axis=-1, keepdims=True)
                    + b_out_ref[...])                          # (Bt, 1)


def _pick_block_b(batch, max_block=BLOCK_B):
    """Batch rows per grid step: multiple of 8, <= max_block, and (when the
    batch allows it) small enough that the grid keeps >= 2 steps so both v7x
    TensorCores get work under dimension_semantics=("parallel",)."""
    bt = min(max_block, max(8, -(-batch // 2)))
    return -(-bt // 8) * 8


def cnn_lstm_attention_forward(x, params, block_b=None):
    B, L, Cin = x.shape
    T = L - 1
    Bt = _pick_block_b(B) if block_b is None else block_b
    nb = -(-B // Bt)                 # ceil(B / Bt)
    B_pad = nb * Bt

    f32 = jnp.float32
    bf16 = jnp.bfloat16

    # Time-major, conv-zero-padded in time, batch padded to a block multiple,
    # and im2col'd over the 3 conv taps so the conv is one matmul per step.
    x_tm = jnp.transpose(x, (1, 0, 2)).astype(f32)             # (L, B, Cin)
    x_tm = jnp.pad(x_tm, ((1, 1), (0, B_pad - B), (0, 0)))     # (L+2, B_pad, Cin)
    xcol = jnp.concatenate([x_tm[0:L], x_tm[1:L + 1], x_tm[2:L + 2]], axis=-1)
    x_blk = (xcol.reshape(L, nb, Bt, KSIZE * Cin)
                 .transpose(1, 0, 2, 3)
                 .reshape(nb, L * Bt, KSIZE * Cin))

    # 0/1 head-segment matrix: seg[l, h] = 1 iff lane l belongs to head h.
    seg = (jnp.arange(HIDDEN)[:, None] // HEAD_DIM
           == jnp.arange(NUM_HEADS)[None, :]).astype(f32)

    # MXU operands cast to bf16 once here (halves weight DMA / VMEM); biases
    # and all accumulation stay f32.  lstm_fc (linear, feeds only k/v) is
    # folded into the attention k / v projections:
    #   (x W_fc + b_fc) W_k + b_k = x (W_fc W_k) + (b_fc W_k + b_k).
    wk_f = (params['w_fc'] @ params['wk']).astype(bf16)
    wv_f = (params['w_fc'] @ params['wv']).astype(bf16)
    bk_f = params['b_fc'] @ params['wk'] + params['bk']
    bv_f = params['b_fc'] @ params['wv'] + params['bv']

    param_arrays = [
        params['conv_w'].reshape(KSIZE * IN_CH, OUT_CH),       # im2col weight, f32
        params['conv_b'],
        params['w_ih'].astype(bf16), params['w_hh'].astype(bf16),
        params['b_lstm'],
        params['wq'].astype(bf16), params['bq'],
        wk_f, bk_f, wv_f, bv_f,
        params['wo'].astype(bf16), params['bo'],
        params['w_out'][:HIDDEN].reshape(1, HIDDEN),            # fc_out, query half
        params['w_out'][HIDDEN:].reshape(1, HIDDEN),            # fc_out, attn half
        params['b_out'], seg, seg.T,
    ]

    def full_spec(arr):
        nd = arr.ndim
        return pl.BlockSpec(arr.shape, lambda b, _nd=nd: (0,) * _nd)

    in_specs = [pl.BlockSpec((1, L * Bt, KSIZE * Cin), lambda b: (b, 0, 0))]
    in_specs += [full_spec(a) for a in param_arrays]

    out = pl.pallas_call(
        _model_kernel,
        out_shape=jax.ShapeDtypeStruct((B_pad, OUT_SIZE), f32),
        grid_spec=pltpu.PrefetchScalarGridSpec(
            num_scalar_prefetch=0,
            grid=(nb,),
            in_specs=in_specs,
            out_specs=pl.BlockSpec((Bt, OUT_SIZE), lambda b: (b, 0)),
            scratch_shapes=[
                pltpu.VMEM((T * Bt, 4 * HIDDEN), jnp.float32),  # hoisted x-gates
                pltpu.VMEM((T * Bt, HIDDEN), jnp.bfloat16),     # LSTM hidden sequence
            ],
        ),
        compiler_params=pltpu.CompilerParams(
            dimension_semantics=("parallel",),
            vmem_limit_bytes=32 * 1024 * 1024),
    )(x_blk, *param_arrays)
    return out[:B]


def init_params(key):
    """Deterministic synthetic parameters with PyTorch-shaped tensors, then
    rearranged into kernel-friendly (pre-transposed) layouts.  The LSTM gate
    columns are re-ordered from PyTorch's [i, f, g, o] to [i, f, o, g] so the
    kernel can fuse the three sigmoids; the reference below uses the same
    ordering, so semantics are unchanged."""
    ks = jax.random.split(key, 14)
    s = 0.1
    conv_w_pt = jax.random.normal(ks[0], (OUT_CH, IN_CH, KSIZE), jnp.float32) * s
    conv_b = jax.random.normal(ks[1], (OUT_CH,), jnp.float32) * s
    w_ih_pt = jax.random.normal(ks[2], (4 * HIDDEN, OUT_CH), jnp.float32) * s
    w_hh_pt = jax.random.normal(ks[3], (4 * HIDDEN, HIDDEN), jnp.float32) * s
    b_ih = jax.random.normal(ks[4], (4 * HIDDEN,), jnp.float32) * s
    b_hh = jax.random.normal(ks[5], (4 * HIDDEN,), jnp.float32) * s
    w_fc = jax.random.normal(ks[6], (HIDDEN, HIDDEN), jnp.float32) * s
    b_fc = jax.random.normal(ks[7], (HIDDEN,), jnp.float32) * s
    in_proj_w = jax.random.normal(ks[8], (3 * HIDDEN, HIDDEN), jnp.float32) * s
    in_proj_b = jax.random.normal(ks[9], (3 * HIDDEN,), jnp.float32) * s
    out_proj_w = jax.random.normal(ks[10], (HIDDEN, HIDDEN), jnp.float32) * s
    out_proj_b = jax.random.normal(ks[11], (HIDDEN,), jnp.float32) * s
    fc_out_w = jax.random.normal(ks[12], (OUT_SIZE, 2 * HIDDEN), jnp.float32) * s
    fc_out_b = jax.random.normal(ks[13], (OUT_SIZE,), jnp.float32) * s

    # gate permutation: PyTorch [i, f, g, o] -> kernel [i, f, o, g]
    perm = jnp.concatenate([jnp.arange(0, 2 * HIDDEN),            # i, f
                            jnp.arange(3 * HIDDEN, 4 * HIDDEN),   # o
                            jnp.arange(2 * HIDDEN, 3 * HIDDEN)])  # g

    return dict(
        conv_w=jnp.transpose(conv_w_pt, (2, 1, 0)),     # (K, Cin, Cout)
        conv_b=conv_b.reshape(1, OUT_CH),
        w_ih=w_ih_pt[perm].T,                           # (Cout, 4H), gates [i,f,o,g]
        w_hh=w_hh_pt[perm].T,                           # (H, 4H)
        b_lstm=(b_ih + b_hh)[perm].reshape(1, 4 * HIDDEN),
        w_fc=w_fc.T,
        b_fc=b_fc.reshape(1, HIDDEN),
        wq=in_proj_w[:HIDDEN].T,
        wk=in_proj_w[HIDDEN:2 * HIDDEN].T,
        wv=in_proj_w[2 * HIDDEN:].T,
        bq=in_proj_b[:HIDDEN].reshape(1, HIDDEN),
        bk=in_proj_b[HIDDEN:2 * HIDDEN].reshape(1, HIDDEN),
        bv=in_proj_b[2 * HIDDEN:].reshape(1, HIDDEN),
        wo=out_proj_w.T,
        bo=out_proj_b.reshape(1, HIDDEN),
        w_out=fc_out_w.T,                               # (2H, 1)
        b_out=fc_out_b.reshape(1, OUT_SIZE),
    )


def reference_forward(x, params):
    """Pure-JAX f32 replica of the PyTorch forward, used to validate the kernel
    (including its bf16 MXU operands and the lstm_fc/k-v weight fusion)."""
    _, L, Cin = x.shape
    T = L - 1

    def single(xb):
        zrow = jnp.zeros((1, Cin), jnp.float32)
        xp = jnp.concatenate([zrow, xb, zrow], axis=0)
        conv = sum(xp[k:k + L] @ params['conv_w'][k] for k in range(KSIZE)) + params['conv_b']
        conv = jnp.maximum(conv, 0.0)
        pooled = jnp.maximum(conv[:-1], conv[1:])
        h = jnp.zeros((1, HIDDEN), jnp.float32)
        c = jnp.zeros((1, HIDDEN), jnp.float32)
        outs = []
        for t in range(T):
            gates = pooled[t:t + 1] @ params['w_ih'] + h @ params['w_hh'] + params['b_lstm']
            i_g = jax.nn.sigmoid(gates[:, :HIDDEN])
            f_g = jax.nn.sigmoid(gates[:, HIDDEN:2 * HIDDEN])
            o_g = jax.nn.sigmoid(gates[:, 2 * HIDDEN:3 * HIDDEN])
            g_g = jnp.tanh(gates[:, 3 * HIDDEN:])
            c = f_g * c + i_g * g_g
            h = o_g * jnp.tanh(c)
            outs.append(h)
        out_seq = jnp.concatenate(outs, axis=0)
        kv = out_seq @ params['w_fc'] + params['b_fc']
        query = h
        q = query @ params['wq'] + params['bq']
        km = kv @ params['wk'] + params['bk']
        vm = kv @ params['wv'] + params['bv']
        scale = 1.0 / math.sqrt(HEAD_DIM)
        houts = []
        for hh in range(NUM_HEADS):
            lo, hi = hh * HEAD_DIM, (hh + 1) * HEAD_DIM
            sc = (q[:, lo:hi] * scale) @ km[:, lo:hi].T
            p = jax.nn.softmax(sc, axis=-1)
            houts.append(p @ vm[:, lo:hi])
        attn = jnp.concatenate(houts, axis=1) @ params['wo'] + params['bo']
        comb = jnp.concatenate([query, attn], axis=1)
        return (comb @ params['w_out'] + params['b_out'])[0]

    return jax.vmap(single)(x)


if __name__ == "__main__":
    key = jax.random.PRNGKey(0)
    kx, kp = jax.random.split(key)
    B, L = 16, 16
    x = jax.random.normal(kx, (B, L, IN_CH), jnp.float32)
    params = init_params(kp)

    out = cnn_lstm_attention_forward(x, params)
    out = jax.block_until_ready(out)

    ref = reference_forward(x, params)
    assert out.shape == (B, OUT_SIZE)
    assert jnp.allclose(out, ref, atol=2e-2, rtol=2e-2), (out, ref)
    print("KERNEL_OK")
</pallas_src>

<mosaic_0001>
module attributes {stable_mosaic.version = 11 : i64} {
  func.func @_model_kernel(%arg0: i32, %arg1: memref<1x128x12xf32, #tpu.memory_space<vmem>>, %arg2: memref<12x64xf32, #tpu.memory_space<vmem>>, %arg3: memref<1x64xf32, #tpu.memory_space<vmem>>, %arg4: memref<64x512xbf16, #tpu.memory_space<vmem>>, %arg5: memref<128x512xbf16, #tpu.memory_space<vmem>>, %arg6: memref<1x512xf32, #tpu.memory_space<vmem>>, %arg7: memref<128x128xbf16, #tpu.memory_space<vmem>>, %arg8: memref<1x128xf32, #tpu.memory_space<vmem>>, %arg9: memref<128x128xbf16, #tpu.memory_space<vmem>>, %arg10: memref<1x128xf32, #tpu.memory_space<vmem>>, %arg11: memref<128x128xbf16, #tpu.memory_space<vmem>>, %arg12: memref<1x128xf32, #tpu.memory_space<vmem>>, %arg13: memref<128x128xbf16, #tpu.memory_space<vmem>>, %arg14: memref<1x128xf32, #tpu.memory_space<vmem>>, %arg15: memref<1x128xf32, #tpu.memory_space<vmem>>, %arg16: memref<1x128xf32, #tpu.memory_space<vmem>>, %arg17: memref<1x1xf32, #tpu.memory_space<vmem>>, %arg18: memref<128x8xf32, #tpu.memory_space<vmem>>, %arg19: memref<8x128xf32, #tpu.memory_space<vmem>>, %arg20: memref<8x1xf32, #tpu.memory_space<vmem>>, %arg21: memref<120x512xf32, #tpu.memory_space<vmem>>, %arg22: memref<120x128xbf16, #tpu.memory_space<vmem>>) attributes {dimension_semantics = [#tpu.dimension_semantics<parallel>], iteration_bounds = array<i64: 2>, scalar_prefetch = 0 : i64, scratch_operands = 2 : i64, tpu.core_type = #tpu.core_type<tc>, window_params = [{transform_indices = @transform_0, window_bounds = array<i64: 1, 128, 12>}, {pipeline_mode = #tpu.pipeline_mode<synchronous>, transform_indices = @transform_1, window_bounds = array<i64: 12, 64>}, {pipeline_mode = #tpu.pipeline_mode<synchronous>, transform_indices = @transform_2, window_bounds = array<i64: 1, 64>}, {pipeline_mode = #tpu.pipeline_mode<synchronous>, transform_indices = @transform_3, window_bounds = array<i64: 64, 512>}, {pipeline_mode = #tpu.pipeline_mode<synchronous>, transform_indices = @transform_4, window_bounds = array<i64: 128, 512>}, {pipeline_mode = #tpu.pipeline_mode<synchronous>, transform_indices = @transform_5, window_bounds = array<i64: 1, 512>}, {pipeline_mode = #tpu.pipeline_mode<synchronous>, transform_indices = @transform_6, window_bounds = array<i64: 128, 128>}, {pipeline_mode = #tpu.pipeline_mode<synchronous>, transform_indices = @transform_7, window_bounds = array<i64: 1, 128>}, {pipeline_mode = #tpu.pipeline_mode<synchronous>, transform_indices = @transform_8, window_bounds = array<i64: 128, 128>}, {pipeline_mode = #tpu.pipeline_mode<synchronous>, transform_indices = @transform_9, window_bounds = array<i64: 1, 128>}, {pipeline_mode = #tpu.pipeline_mode<synchronous>, transform_indices = @transform_10, window_bounds = array<i64: 128, 128>}, {pipeline_mode = #tpu.pipeline_mode<synchronous>, transform_indices = @transform_11, window_bounds = array<i64: 1, 128>}, {pipeline_mode = #tpu.pipeline_mode<synchronous>, transform_indices = @transform_12, window_bounds = array<i64: 128, 128>}, {pipeline_mode = #tpu.pipeline_mode<synchronous>, transform_indices = @transform_13, window_bounds = array<i64: 1, 128>}, {pipeline_mode = #tpu.pipeline_mode<synchronous>, transform_indices = @transform_14, window_bounds = array<i64: 1, 128>}, {pipeline_mode = #tpu.pipeline_mode<synchronous>, transform_indices = @transform_15, window_bounds = array<i64: 1, 128>}, {pipeline_mode = #tpu.pipeline_mode<synchronous>, transform_indices = @transform_16, window_bounds = array<i64: 1, 1>}, {pipeline_mode = #tpu.pipeline_mode<synchronous>, transform_indices = @transform_17, window_bounds = array<i64: 128, 8>}, {pipeline_mode = #tpu.pipeline_mode<synchronous>, transform_indices = @transform_18, window_bounds = array<i64: 8, 128>}, {transform_indices = @transform_19, window_bounds = array<i64: 8, 1>}]} {
    %c0 = arith.constant 0 : index
    %c0_0 = arith.constant 0 : index
    %c0_1 = arith.constant 0 : index
    %0 = vector.load %arg1[%c0, %c0_0, %c0_1] : memref<1x128x12xf32, #tpu.memory_space<vmem>>, vector<1x128x12xf32>
    %1 = vector.shape_cast %0 : vector<1x128x12xf32> to vector<128x12xf32>
    %c0_2 = arith.constant 0 : index
    %c0_3 = arith.constant 0 : index
    %2 = vector.load %arg2[%c0_2, %c0_3] : memref<12x64xf32, #tpu.memory_space<vmem>>, vector<12x64xf32>
    %cst = arith.constant dense<0.000000e+00> : vector<128x64xf32>
    %3 = tpu.matmul %1, %2, %cst {dimension_numbers = #tpu.dot_dimension_numbers<[1], [0], [0], [1], [0, 0, 1, 1], [], []>} : vector<128x12xf32>, vector<12x64xf32>, vector<128x64xf32> -> vector<128x64xf32>
    %c0_4 = arith.constant 0 : index
    %c0_5 = arith.constant 0 : index
    %4 = vector.load %arg3[%c0_4, %c0_5] : memref<1x64xf32, #tpu.memory_space<vmem>>, vector<1x64xf32>
    %5 = vector.broadcast %4 : vector<1x64xf32> to vector<128x64xf32>
    %6 = arith.addf %3, %5 : vector<128x64xf32>
    %cst_6 = arith.constant 0.000000e+00 : f32
    %7 = vector.broadcast %cst_6 : f32 to vector<128x64xf32>
    %8 = arith.maximumf %6, %7 : vector<128x64xf32>
    %9 = vector.extract_strided_slice %8 {offsets = [0, 0], sizes = [120, 64], strides = [1, 1]} : vector<128x64xf32> to vector<120x64xf32>
    %10 = vector.extract_strided_slice %8 {offsets = [8, 0], sizes = [120, 64], strides = [1, 1]} : vector<128x64xf32> to vector<120x64xf32>
    %11 = arith.maximumf %9, %10 : vector<120x64xf32>
    %12 = arith.truncf %11 : vector<120x64xf32> to vector<120x64xbf16>
    %c0_7 = arith.constant 0 : index
    %c0_8 = arith.constant 0 : index
    %13 = vector.load %arg4[%c0_7, %c0_8] : memref<64x512xbf16, #tpu.memory_space<vmem>>, vector<64x512xbf16>
    %cst_9 = arith.constant dense<0.000000e+00> : vector<120x512xf32>
    %14 = tpu.matmul %12, %13, %cst_9 {dimension_numbers = #tpu.dot_dimension_numbers<[1], [0], [0], [1], [0, 0, 1, 1], [], []>} : vector<120x64xbf16>, vector<64x512xbf16>, vector<120x512xf32> -> vector<120x512xf32>
    %c0_10 = arith.constant 0 : index
    %c0_11 = arith.constant 0 : index
    %15 = vector.load %arg6[%c0_10, %c0_11] : memref<1x512xf32, #tpu.memory_space<vmem>>, vector<1x512xf32>
    %16 = vector.broadcast %15 : vector<1x512xf32> to vector<120x512xf32>
    %17 = arith.addf %14, %16 : vector<120x512xf32>
    %c0_12 = arith.constant 0 : index
    %c0_13 = arith.constant 0 : index
    %18 = vector.load %arg21[%c0_12, %c0_13] : memref<120x512xf32, #tpu.memory_space<vmem>>, vector<120x512xf32>
    tpu.vector_store %arg21[%c0_12, %c0_13], %17 {strides = array<i32>} : memref<120x512xf32, #tpu.memory_space<vmem>>, vector<120x512xf32>,
    %cst_14 = arith.constant 0.000000e+00 : f32
    %19 = vector.broadcast %cst_14 : f32 to vector<8x128xf32>
    %c0_i32 = arith.constant 0 : i32
    %c8_i32 = arith.constant 8 : i32
    %20 = arith.muli %c0_i32, %c8_i32 : i32
    %21 = tpu.assume_multiple %20, 8 : i32
    %22 = arith.index_cast %21 : i32 to index
    %c0_15 = arith.constant 0 : index
    %23 = vector.load %arg21[%22, %c0_15] : memref<120x512xf32, #tpu.memory_space<vmem>>, vector<8x512xf32>
    %24 = arith.truncf %19 : vector<8x128xf32> to vector<8x128xbf16>
    %c0_16 = arith.constant 0 : index
    %c0_17 = arith.constant 0 : index
    %25 = vector.load %arg5[%c0_16, %c0_17] : memref<128x512xbf16, #tpu.memory_space<vmem>>, vector<128x512xbf16>
    %cst_18 = arith.constant dense<0.000000e+00> : vector<8x512xf32>
    %26 = tpu.matmul %24, %25, %cst_18 {dimension_numbers = #tpu.dot_dimension_numbers<[1], [0], [0], [1], [0, 0, 1, 1], [], []>} : vector<8x128xbf16>, vector<128x512xbf16>, vector<8x512xf32> -> vector<8x512xf32>
    %27 = arith.addf %23, %26 : vector<8x512xf32>
    %28 = vector.extract_strided_slice %27 {offsets = [0, 0], sizes = [8, 384], strides = [1, 1]} : vector<8x512xf32> to vector<8x384xf32>
    %29 = arith.negf %28 : vector<8x384xf32>
    %30 = math.exp %29 : vector<8x384xf32>
    %cst_19 = arith.constant 1.000000e+00 : f32
    %31 = vector.broadcast %cst_19 : f32 to vector<8x384xf32>
    %32 = arith.addf %31, %30 : vector<8x384xf32>
    %33 = arith.divf %31, %32 : vector<8x384xf32>
    %34 = vector.extract_strided_slice %27 {offsets = [0, 384], sizes = [8, 128], strides = [1, 1]} : vector<8x512xf32> to vector<8x128xf32>
    %35 = math.tanh %34 : vector<8x128xf32>
    %36 = vector.extract_strided_slice %33 {offsets = [0, 128], sizes = [8, 128], strides = [1, 1]} : vector<8x384xf32> to vector<8x128xf32>
    %37 = arith.mulf %36, %19 : vector<8x128xf32>
    %38 = vector.extract_strided_slice %33 {offsets = [0, 0], sizes = [8, 128], strides = [1, 1]} : vector<8x384xf32> to vector<8x128xf32>
    %39 = arith.mulf %38, %35 : vector<8x128xf32>
    %40 = arith.addf %37, %39 : vector<8x128xf32>
    %41 = vector.extract_strided_slice %33 {offsets = [0, 256], sizes = [8, 128], strides = [1, 1]} : vector<8x384xf32> to vector<8x128xf32>
    %42 = math.tanh %40 : vector<8x128xf32>
    %43 = arith.mulf %41, %42 : vector<8x128xf32>
    %44 = arith.truncf %43 : vector<8x128xf32> to vector<8x128xbf16>
    %45 = arith.index_cast %21 : i32 to index
    %c0_20 = arith.constant 0 : index
    %46 = vector.load %arg22[%45, %c0_20] : memref<120x128xbf16, #tpu.memory_space<vmem>>, vector<8x128xbf16>
    tpu.vector_store %arg22[%45, %c0_20], %44 {strides = array<i32>} : memref<120x128xbf16, #tpu.memory_space<vmem>>, vector<8x128xbf16>,
    %c1_i32 = arith.constant 1 : i32
    %c8_i32_21 = arith.constant 8 : i32
    %47 = arith.muli %c1_i32, %c8_i32_21 : i32
    %48 = tpu.assume_multiple %47, 8 : i32
    %49 = arith.index_cast %48 : i32 to index
    %c0_22 = arith.constant 0 : index
    %50 = vector.load %arg21[%49, %c0_22] : memref<120x512xf32, #tpu.memory_space<vmem>>, vector<8x512xf32>
    %51 = arith.truncf %43 : vector<8x128xf32> to vector<8x128xbf16>
    %c0_23 = arith.constant 0 : index
    %c0_24 = arith.constant 0 : index
    %52 = vector.load %arg5[%c0_23, %c0_24] : memref<128x512xbf16, #tpu.memory_space<vmem>>, vector<128x512xbf16>
    %cst_25 = arith.constant dense<0.000000e+00> : vector<8x512xf32>
    %53 = tpu.matmul %51, %52, %cst_25 {dimension_numbers = #tpu.dot_dimension_numbers<[1], [0], [0], [1], [0, 0, 1, 1], [], []>} : vector<8x128xbf16>, vector<128x512xbf16>, vector<8x512xf32> -> vector<8x512xf32>
    %54 = arith.addf %50, %53 : vector<8x512xf32>
    %55 = vector.extract_strided_slice %54 {offsets = [0, 0], sizes = [8, 384], strides = [1, 1]} : vector<8x512xf32> to vector<8x384xf32>
    %56 = arith.negf %55 : vector<8x384xf32>
    %57 = math.exp %56 : vector<8x384xf32>
    %cst_26 = arith.constant 1.000000e+00 : f32
    %58 = vector.broadcast %cst_26 : f32 to vector<8x384xf32>
    %59 = arith.addf %58, %57 : vector<8x384xf32>
    %60 = arith.divf %58, %59 : vector<8x384xf32>
    %61 = vector.extract_strided_slice %54 {offsets = [0, 384], sizes = [8, 128], strides = [1, 1]} : vector<8x512xf32> to vector<8x128xf32>
    %62 = math.tanh %61 : vector<8x128xf32>
    %63 = vector.extract_strided_slice %60 {offsets = [0, 128], sizes = [8, 128], strides = [1, 1]} : vector<8x384xf32> to vector<8x128xf32>
    %64 = arith.mulf %63, %40 : vector<8x128xf32>
    %65 = vector.extract_strided_slice %60 {offsets = [0, 0], sizes = [8, 128], strides = [1, 1]} : vector<8x384xf32> to vector<8x128xf32>
    %66 = arith.mulf %65, %62 : vector<8x128xf32>
    %67 = arith.addf %64, %66 : vector<8x128xf32>
    %68 = vector.extract_strided_slice %60 {offsets = [0, 256], sizes = [8, 128], strides = [1, 1]} : vector<8x384xf32> to vector<8x128xf32>
    %69 = math.tanh %67 : vector<8x128xf32>
    %70 = arith.mulf %68, %69 : vector<8x128xf32>
    %71 = arith.truncf %70 : vector<8x128xf32> to vector<8x128xbf16>
    %72 = arith.index_cast %48 : i32 to index
    %c0_27 = arith.constant 0 : index
    %73 = vector.load %arg22[%72, %c0_27] : memref<120x128xbf16, #tpu.memory_space<vmem>>, vector<8x128xbf16>
    tpu.vector_store %arg22[%72, %c0_27], %71 {strides = array<i32>} : memref<120x128xbf16, #tpu.memory_space<vmem>>, vector<8x128xbf16>,
    %c2_i32 = arith.constant 2 : i32
    %c8_i32_28 = arith.constant 8 : i32
    %74 = arith.muli %c2_i32, %c8_i32_28 : i32
    %75 = tpu.assume_multiple %74, 8 : i32
    %76 = arith.index_cast %75 : i32 to index
    %c0_29 = arith.constant 0 : index
    %77 = vector.load %arg21[%76, %c0_29] : memref<120x512xf32, #tpu.memory_space<vmem>>, vector<8x512xf32>
    %78 = arith.truncf %70 : vector<8x128xf32> to vector<8x128xbf16>
    %c0_30 = arith.constant 0 : index
    %c0_31 = arith.constant 0 : index
    %79 = vector.load %arg5[%c0_30, %c0_31] : memref<128x512xbf16, #tpu.memory_space<vmem>>, vector<128x512xbf16>
    %cst_32 = arith.constant dense<0.000000e+00> : vector<8x512xf32>
    %80 = tpu.matmul %78, %79, %cst_32 {dimension_numbers = #tpu.dot_dimension_numbers<[1], [0], [0], [1], [0, 0, 1, 1], [], []>} : vector<8x128xbf16>, vector<128x512xbf16>, vector<8x512xf32> -> vector<8x512xf32>
    %81 = arith.addf %77, %80 : vector<8x512xf32>
    %82 = vector.extract_strided_slice %81 {offsets = [0, 0], sizes = [8, 384], strides = [1, 1]} : vector<8x512xf32> to vector<8x384xf32>
    %83 = arith.negf %82 : vector<8x384xf32>
    %84 = math.exp %83 : vector<8x384xf32>
    %cst_33 = arith.constant 1.000000e+00 : f32
    %85 = vector.broadcast %cst_33 : f32 to vector<8x384xf32>
    %86 = arith.addf %85, %84 : vector<8x384xf32>
    %87 = arith.divf %85, %86 : vector<8x384xf32>
    %88 = vector.extract_strided_slice %81 {offsets = [0, 384], sizes = [8, 128], strides = [1, 1]} : vector<8x512xf32> to vector<8x128xf32>
    %89 = math.tanh %88 : vector<8x128xf32>
    %90 = vector.extract_strided_slice %87 {offsets = [0, 128], sizes = [8, 128], strides = [1, 1]} : vector<8x384xf32> to vector<8x128xf32>
    %91 = arith.mulf %90, %67 : vector<8x128xf32>
    %92 = vector.extract_strided_slice %87 {offsets = [0, 0], sizes = [8, 128], strides = [1, 1]} : vector<8x384xf32> to vector<8x128xf32>
    %93 = arith.mulf %92, %89 : vector<8x128xf32>
    %94 = arith.addf %91, %93 : vector<8x128xf32>
    %95 = vector.extract_strided_slice %87 {offsets = [0, 256], sizes = [8, 128], strides = [1, 1]} : vector<8x384xf32> to vector<8x128xf32>
    %96 = math.tanh %94 : vector<8x128xf32>
    %97 = arith.mulf %95, %96 : vector<8x128xf32>
    %98 = arith.truncf %97 : vector<8x128xf32> to vector<8x128xbf16>
    %99 = arith.index_cast %75 : i32 to index
    %c0_34 = arith.constant 0 : index
    %100 = vector.load %arg22[%99, %c0_34] : memref<120x128xbf16, #tpu.memory_space<vmem>>, vector<8x128xbf16>
    tpu.vector_store %arg22[%99, %c0_34], %98 {strides = array<i32>} : memref<120x128xbf16, #tpu.memory_space<vmem>>, vector<8x128xbf16>,
    %c3_i32 = arith.constant 3 : i32
    %c8_i32_35 = arith.constant 8 : i32
    %101 = arith.muli %c3_i32, %c8_i32_35 : i32
    %102 = tpu.assume_multiple %101, 8 : i32
    %103 = arith.index_cast %102 : i32 to index
    %c0_36 = arith.constant 0 : index
    %104 = vector.load %arg21[%103, %c0_36] : memref<120x512xf32, #tpu.memory_space<vmem>>, vector<8x512xf32>
    %105 = arith.truncf %97 : vector<8x128xf32> to vector<8x128xbf16>
    %c0_37 = arith.constant 0 : index
    %c0_38 = arith.constant 0 : index
    %106 = vector.load %arg5[%c0_37, %c0_38] : memref<128x512xbf16, #tpu.memory_space<vmem>>, vector<128x512xbf16>
    %cst_39 = arith.constant dense<0.000000e+00> : vector<8x512xf32>
    %107 = tpu.matmul %105, %106, %cst_39 {dimension_numbers = #tpu.dot_dimension_numbers<[1], [0], [0], [1], [0, 0, 1, 1], [], []>} : vector<8x128xbf16>, vector<128x512xbf16>, vector<8x512xf32> -> vector<8x512xf32>
    %108 = arith.addf %104, %107 : vector<8x512xf32>
    %109 = vector.extract_strided_slice %108 {offsets = [0, 0], sizes = [8, 384], strides = [1, 1]} : vector<8x512xf32> to vector<8x384xf32>
    %110 = arith.negf %109 : vector<8x384xf32>
    %111 = math.exp %110 : vector<8x384xf32>
    %cst_40 = arith.constant 1.000000e+00 : f32
    %112 = vector.broadcast %cst_40 : f32 to vector<8x384xf32>
    %113 = arith.addf %112, %111 : vector<8x384xf32>
    %114 = arith.divf %112, %113 : vector<8x384xf32>
    %115 = vector.extract_strided_slice %108 {offsets = [0, 384], sizes = [8, 128], strides = [1, 1]} : vector<8x512xf32> to vector<8x128xf32>
    %116 = math.tanh %115 : vector<8x128xf32>
    %117 = vector.extract_strided_slice %114 {offsets = [0, 128], sizes = [8, 128], strides = [1, 1]} : vector<8x384xf32> to vector<8x128xf32>
    %118 = arith.mulf %117, %94 : vector<8x128xf32>
    %119 = vector.extract_strided_slice %114 {offsets = [0, 0], sizes = [8, 128], strides = [1, 1]} : vector<8x384xf32> to vector<8x128xf32>
    %120 = arith.mulf %119, %116 : vector<8x128xf32>
    %121 = arith.addf %118, %120 : vector<8x128xf32>
    %122 = vector.extract_strided_slice %114 {offsets = [0, 256], sizes = [8, 128], strides = [1, 1]} : vector<8x384xf32> to vector<8x128xf32>
    %123 = math.tanh %121 : vector<8x128xf32>
    %124 = arith.mulf %122, %123 : vector<8x128xf32>
    %125 = arith.truncf %124 : vector<8x128xf32> to vector<8x128xbf16>
    %126 = arith.index_cast %102 : i32 to index
    %c0_41 = arith.constant 0 : index
    %127 = vector.load %arg22[%126, %c0_41] : memref<120x128xbf16, #tpu.memory_space<vmem>>, vector<8x128xbf16>
    tpu.vector_store %arg22[%126, %c0_41], %125 {strides = array<i32>} : memref<120x128xbf16, #tpu.memory_space<vmem>>, vector<8x128xbf16>,
    %c4_i32 = arith.constant 4 : i32
    %c8_i32_42 = arith.constant 8 : i32
    %128 = arith.muli %c4_i32, %c8_i32_42 : i32
    %129 = tpu.assume_multiple %128, 8 : i32
    %130 = arith.index_cast %129 : i32 to index
    %c0_43 = arith.constant 0 : index
    %131 = vector.load %arg21[%130, %c0_43] : memref<120x512xf32, #tpu.memory_space<vmem>>, vector<8x512xf32>
    %132 = arith.truncf %124 : vector<8x128xf32> to vector<8x128xbf16>
    %c0_44 = arith.constant 0 : index
    %c0_45 = arith.constant 0 : index
    %133 = vector.load %arg5[%c0_44, %c0_45] : memref<128x512xbf16, #tpu.memory_space<vmem>>, vector<128x512xbf16>
    %cst_46 = arith.constant dense<0.000000e+00> : vector<8x512xf32>
    %134 = tpu.matmul %132, %133, %cst_46 {dimension_numbers = #tpu.dot_dimension_numbers<[1], [0], [0], [1], [0, 0, 1, 1], [], []>} : vector<8x128xbf16>, vector<128x512xbf16>, vector<8x512xf32> -> vector<8x512xf32>
    %135 = arith.addf %131, %134 : vector<8x512xf32>
    %136 = vector.extract_strided_slice %135 {offsets = [0, 0], sizes = [8, 384], strides = [1, 1]} : vector<8x512xf32> to vector<8x384xf32>
    %137 = arith.negf %136 : vector<8x384xf32>
    %138 = math.exp %137 : vector<8x384xf32>
    %cst_47 = arith.constant 1.000000e+00 : f32
    %139 = vector.broadcast %cst_47 : f32 to vector<8x384xf32>
    %140 = arith.addf %139, %138 : vector<8x384xf32>
    %141 = arith.divf %139, %140 : vector<8x384xf32>
    %142 = vector.extract_strided_slice %135 {offsets = [0, 384], sizes = [8, 128], strides = [1, 1]} : vector<8x512xf32> to vector<8x128xf32>
    %143 = math.tanh %142 : vector<8x128xf32>
    %144 = vector.extract_strided_slice %141 {offsets = [0, 128], sizes = [8, 128], strides = [1, 1]} : vector<8x384xf32> to vector<8x128xf32>
    %145 = arith.mulf %144, %121 : vector<8x128xf32>
    %146 = vector.extract_strided_slice %141 {offsets = [0, 0], sizes = [8, 128], strides = [1, 1]} : vector<8x384xf32> to vector<8x128xf32>
    %147 = arith.mulf %146, %143 : vector<8x128xf32>
    %148 = arith.addf %145, %147 : vector<8x128xf32>
    %149 = vector.extract_strided_slice %141 {offsets = [0, 256], sizes = [8, 128], strides = [1, 1]} : vector<8x384xf32> to vector<8x128xf32>
    %150 = math.tanh %148 : vector<8x128xf32>
    %151 = arith.mulf %149, %150 : vector<8x128xf32>
    %152 = arith.truncf %151 : vector<8x128xf32> to vector<8x128xbf16>
    %153 = arith.index_cast %129 : i32 to index
    %c0_48 = arith.constant 0 : index
    %154 = vector.load %arg22[%153, %c0_48] : memref<120x128xbf16, #tpu.memory_space<vmem>>, vector<8x128xbf16>
    tpu.vector_store %arg22[%153, %c0_48], %152 {strides = array<i32>} : memref<120x128xbf16, #tpu.memory_space<vmem>>, vector<8x128xbf16>,
    %c5_i32 = arith.constant 5 : i32
    %c8_i32_49 = arith.constant 8 : i32
    %155 = arith.muli %c5_i32, %c8_i32_49 : i32
    %156 = tpu.assume_multiple %155, 8 : i32
    %157 = arith.index_cast %156 : i32 to index
    %c0_50 = arith.constant 0 : index
    %158 = vector.load %arg21[%157, %c0_50] : memref<120x512xf32, #tpu.memory_space<vmem>>, vector<8x512xf32>
    %159 = arith.truncf %151 : vector<8x128xf32> to vector<8x128xbf16>
    %c0_51 = arith.constant 0 : index
    %c0_52 = arith.constant 0 : index
    %160 = vector.load %arg5[%c0_51, %c0_52] : memref<128x512xbf16, #tpu.memory_space<vmem>>, vector<128x512xbf16>
    %cst_53 = arith.constant dense<0.000000e+00> : vector<8x512xf32>
    %161 = tpu.matmul %159, %160, %cst_53 {dimension_numbers = #tpu.dot_dimension_numbers<[1], [0], [0], [1], [0, 0, 1, 1], [], []>} : vector<8x128xbf16>, vector<128x512xbf16>, vector<8x512xf32> -> vector<8x512xf32>
    %162 = arith.addf %158, %161 : vector<8x512xf32>
    %163 = vector.extract_strided_slice %162 {offsets = [0, 0], sizes = [8, 384], strides = [1, 1]} : vector<8x512xf32> to vector<8x384xf32>
    %164 = arith.negf %163 : vector<8x384xf32>
    %165 = math.exp %164 : vector<8x384xf32>
    %cst_54 = arith.constant 1.000000e+00 : f32
    %166 = vector.broadcast %cst_54 : f32 to vector<8x384xf32>
    %167 = arith.addf %166, %165 : vector<8x384xf32>
    %168 = arith.divf %166, %167 : vector<8x384xf32>
    %169 = vector.extract_strided_slice %162 {offsets = [0, 384], sizes = [8, 128], strides = [1, 1]} : vector<8x512xf32> to vector<8x128xf32>
    %170 = math.tanh %169 : vector<8x128xf32>
    %171 = vector.extract_strided_slice %168 {offsets = [0, 128], sizes = [8, 128], strides = [1, 1]} : vector<8x384xf32> to vector<8x128xf32>
    %172 = arith.mulf %171, %148 : vector<8x128xf32>
    %173 = vector.extract_strided_slice %168 {offsets = [0, 0], sizes = [8, 128], strides = [1, 1]} : vector<8x384xf32> to vector<8x128xf32>
    %174 = arith.mulf %173, %170 : vector<8x128xf32>
    %175 = arith.addf %172, %174 : vector<8x128xf32>
    %176 = vector.extract_strided_slice %168 {offsets = [0, 256], sizes = [8, 128], strides = [1, 1]} : vector<8x384xf32> to vector<8x128xf32>
    %177 = math.tanh %175 : vector<8x128xf32>
    %178 = arith.mulf %176, %177 : vector<8x128xf32>
    %179 = arith.truncf %178 : vector<8x128xf32> to vector<8x128xbf16>
    %180 = arith.index_cast %156 : i32 to index
    %c0_55 = arith.constant 0 : index
    %181 = vector.load %arg22[%180, %c0_55] : memref<120x128xbf16, #tpu.memory_space<vmem>>, vector<8x128xbf16>
    tpu.vector_store %arg22[%180, %c0_55], %179 {strides = array<i32>} : memref<120x128xbf16, #tpu.memory_space<vmem>>, vector<8x128xbf16>,
    %c6_i32 = arith.constant 6 : i32
    %c8_i32_56 = arith.constant 8 : i32
    %182 = arith.muli %c6_i32, %c8_i32_56 : i32
    %183 = tpu.assume_multiple %182, 8 : i32
    %184 = arith.index_cast %183 : i32 to index
    %c0_57 = arith.constant 0 : index
    %185 = vector.load %arg21[%184, %c0_57] : memref<120x512xf32, #tpu.memory_space<vmem>>, vector<8x512xf32>
    %186 = arith.truncf %178 : vector<8x128xf32> to vector<8x128xbf16>
    %c0_58 = arith.constant 0 : index
    %c0_59 = arith.constant 0 : index
    %187 = vector.load %arg5[%c0_58, %c0_59] : memref<128x512xbf16, #tpu.memory_space<vmem>>, vector<128x512xbf16>
    %cst_60 = arith.constant dense<0.000000e+00> : vector<8x512xf32>
    %188 = tpu.matmul %186, %187, %cst_60 {dimension_numbers = #tpu.dot_dimension_numbers<[1], [0], [0], [1], [0, 0, 1, 1], [], []>} : vector<8x128xbf16>, vector<128x512xbf16>, vector<8x512xf32> -> vector<8x512xf32>
    %189 = arith.addf %185, %188 : vector<8x512xf32>
    %190 = vector.extract_strided_slice %189 {offsets = [0, 0], sizes = [8, 384], strides = [1, 1]} : vector<8x512xf32> to vector<8x384xf32>
    %191 = arith.negf %190 : vector<8x384xf32>
    %192 = math.exp %191 : vector<8x384xf32>
    %cst_61 = arith.constant 1.000000e+00 : f32
    %193 = vector.broadcast %cst_61 : f32 to vector<8x384xf32>
    %194 = arith.addf %193, %192 : vector<8x384xf32>
    %195 = arith.divf %193, %194 : vector<8x384xf32>
    %196 = vector.extract_strided_slice %189 {offsets = [0, 384], sizes = [8, 128], strides = [1, 1]} : vector<8x512xf32> to vector<8x128xf32>
    %197 = math.tanh %196 : vector<8x128xf32>
    %198 = vector.extract_strided_slice %195 {offsets = [0, 128], sizes = [8, 128], strides = [1, 1]} : vector<8x384xf32> to vector<8x128xf32>
    %199 = arith.mulf %198, %175 : vector<8x128xf32>
    %200 = vector.extract_strided_slice %195 {offsets = [0, 0], sizes = [8, 128], strides = [1, 1]} : vector<8x384xf32> to vector<8x128xf32>
    %201 = arith.mulf %200, %197 : vector<8x128xf32>
    %202 = arith.addf %199, %201 : vector<8x128xf32>
    %203 = vector.extract_strided_slice %195 {offsets = [0, 256], sizes = [8, 128], strides = [1, 1]} : vector<8x384xf32> to vector<8x128xf32>
    %204 = math.tanh %202 : vector<8x128xf32>
    %205 = arith.mulf %203, %204 : vector<8x128xf32>
    %206 = arith.truncf %205 : vector<8x128xf32> to vector<8x128xbf16>
    %207 = arith.index_cast %183 : i32 to index
    %c0_62 = arith.constant 0 : index
    %208 = vector.load %arg22[%207, %c0_62] : memref<120x128xbf16, #tpu.memory_space<vmem>>, vector<8x128xbf16>
    tpu.vector_store %arg22[%207, %c0_62], %206 {strides = array<i32>} : memref<120x128xbf16, #tpu.memory_space<vmem>>, vector<8x128xbf16>,
    %c7_i32 = arith.constant 7 : i32
    %c8_i32_63 = arith.constant 8 : i32
    %209 = arith.muli %c7_i32, %c8_i32_63 : i32
    %210 = tpu.assume_multiple %209, 8 : i32
    %211 = arith.index_cast %210 : i32 to index
    %c0_64 = arith.constant 0 : index
    %212 = vector.load %arg21[%211, %c0_64] : memref<120x512xf32, #tpu.memory_space<vmem>>, vector<8x512xf32>
    %213 = arith.truncf %205 : vector<8x128xf32> to vector<8x128xbf16>
    %c0_65 = arith.constant 0 : index
    %c0_66 = arith.constant 0 : index
    %214 = vector.load %arg5[%c0_65, %c0_66] : memref<128x512xbf16, #tpu.memory_space<vmem>>, vector<128x512xbf16>
    %cst_67 = arith.constant dense<0.000000e+00> : vector<8x512xf32>
    %215 = tpu.matmul %213, %214, %cst_67 {dimension_numbers = #tpu.dot_dimension_numbers<[1], [0], [0], [1], [0, 0, 1, 1], [], []>} : vector<8x128xbf16>, vector<128x512xbf16>, vector<8x512xf32> -> vector<8x512xf32>
    %216 = arith.addf %212, %215 : vector<8x512xf32>
    %217 = vector.extract_strided_slice %216 {offsets = [0, 0], sizes = [8, 384], strides = [1, 1]} : vector<8x512xf32> to vector<8x384xf32>
    %218 = arith.negf %217 : vector<8x384xf32>
    %219 = math.exp %218 : vector<8x384xf32>
    %cst_68 = arith.constant 1.000000e+00 : f32
    %220 = vector.broadcast %cst_68 : f32 to vector<8x384xf32>
    %221 = arith.addf %220, %219 : vector<8x384xf32>
    %222 = arith.divf %220, %221 : vector<8x384xf32>
    %223 = vector.extract_strided_slice %216 {offsets = [0, 384], sizes = [8, 128], strides = [1, 1]} : vector<8x512xf32> to vector<8x128xf32>
    %224 = math.tanh %223 : vector<8x128xf32>
    %225 = vector.extract_strided_slice %222 {offsets = [0, 128], sizes = [8, 128], strides = [1, 1]} : vector<8x384xf32> to vector<8x128xf32>
    %226 = arith.mulf %225, %202 : vector<8x128xf32>
    %227 = vector.extract_strided_slice %222 {offsets = [0, 0], sizes = [8, 128], strides = [1, 1]} : vector<8x384xf32> to vector<8x128xf32>
    %228 = arith.mulf %227, %224 : vector<8x128xf32>
    %229 = arith.addf %226, %228 : vector<8x128xf32>
    %230 = vector.extract_strided_slice %222 {offsets = [0, 256], sizes = [8, 128], strides = [1, 1]} : vector<8x384xf32> to vector<8x128xf32>
    %231 = math.tanh %229 : vector<8x128xf32>
    %232 = arith.mulf %230, %231 : vector<8x128xf32>
    %233 = arith.truncf %232 : vector<8x128xf32> to vector<8x128xbf16>
    %234 = arith.index_cast %210 : i32 to index
    %c0_69 = arith.constant 0 : index
    %235 = vector.load %arg22[%234, %c0_69] : memref<120x128xbf16, #tpu.memory_space<vmem>>, vector<8x128xbf16>
    tpu.vector_store %arg22[%234, %c0_69], %233 {strides = array<i32>} : memref<120x128xbf16, #tpu.memory_space<vmem>>, vector<8x128xbf16>,
    %c8_i32_70 = arith.constant 8 : i32
    %c8_i32_71 = arith.constant 8 : i32
    %236 = arith.muli %c8_i32_70, %c8_i32_71 : i32
    %237 = tpu.assume_multiple %236, 8 : i32
    %238 = arith.index_cast %237 : i32 to index
    %c0_72 = arith.constant 0 : index
    %239 = vector.load %arg21[%238, %c0_72] : memref<120x512xf32, #tpu.memory_space<vmem>>, vector<8x512xf32>
    %240 = arith.truncf %232 : vector<8x128xf32> to vector<8x128xbf16>
    %c0_73 = arith.constant 0 : index
    %c0_74 = arith.constant 0 : index
    %241 = vector.load %arg5[%c0_73, %c0_74] : memref<128x512xbf16, #tpu.memory_space<vmem>>, vector<128x512xbf16>
    %cst_75 = arith.constant dense<0.000000e+00> : vector<8x512xf32>
    %242 = tpu.matmul %240, %241, %cst_75 {dimension_numbers = #tpu.dot_dimension_numbers<[1], [0], [0], [1], [0, 0, 1, 1], [], []>} : vector<8x128xbf16>, vector<128x512xbf16>, vector<8x512xf32> -> vector<8x512xf32>
    %243 = arith.addf %239, %242 : vector<8x512xf32>
    %244 = vector.extract_strided_slice %243 {offsets = [0, 0], sizes = [8, 384], strides = [1, 1]} : vector<8x512xf32> to vector<8x384xf32>
    %245 = arith.negf %244 : vector<8x384xf32>
    %246 = math.exp %245 : vector<8x384xf32>
    %cst_76 = arith.constant 1.000000e+00 : f32
    %247 = vector.broadcast %cst_76 : f32 to vector<8x384xf32>
    %248 = arith.addf %247, %246 : vector<8x384xf32>
    %249 = arith.divf %247, %248 : vector<8x384xf32>
    %250 = vector.extract_strided_slice %243 {offsets = [0, 384], sizes = [8, 128], strides = [1, 1]} : vector<8x512xf32> to vector<8x128xf32>
    %251 = math.tanh %250 : vector<8x128xf32>
    %252 = vector.extract_strided_slice %249 {offsets = [0, 128], sizes = [8, 128], strides = [1, 1]} : vector<8x384xf32> to vector<8x128xf32>
    %253 = arith.mulf %252, %229 : vector<8x128xf32>
    %254 = vector.extract_strided_slice %249 {offsets = [0, 0], sizes = [8, 128], strides = [1, 1]} : vector<8x384xf32> to vector<8x128xf32>
    %255 = arith.mulf %254, %251 : vector<8x128xf32>
    %256 = arith.addf %253, %255 : vector<8x128xf32>
    %257 = vector.extract_strided_slice %249 {offsets = [0, 256], sizes = [8, 128], strides = [1, 1]} : vector<8x384xf32> to vector<8x128xf32>
    %258 = math.tanh %256 : vector<8x128xf32>
    %259 = arith.mulf %257, %258 : vector<8x128xf32>
    %260 = arith.truncf %259 : vector<8x128xf32> to vector<8x128xbf16>
    %261 = arith.index_cast %237 : i32 to index
    %c0_77 = arith.constant 0 : index
    %262 = vector.load %arg22[%261, %c0_77] : memref<120x128xbf16, #tpu.memory_space<vmem>>, vector<8x128xbf16>
    tpu.vector_store %arg22[%261, %c0_77], %260 {strides = array<i32>} : memref<120x128xbf16, #tpu.memory_space<vmem>>, vector<8x128xbf16>,
    %c9_i32 = arith.constant 9 : i32
    %c8_i32_78 = arith.constant 8 : i32
    %263 = arith.muli %c9_i32, %c8_i32_78 : i32
    %264 = tpu.assume_multiple %263, 8 : i32
    %265 = arith.index_cast %264 : i32 to index
    %c0_79 = arith.constant 0 : index
    %266 = vector.load %arg21[%265, %c0_79] : memref<120x512xf32, #tpu.memory_space<vmem>>, vector<8x512xf32>
    %267 = arith.truncf %259 : vector<8x128xf32> to vector<8x128xbf16>
    %c0_80 = arith.constant 0 : index
    %c0_81 = arith.constant 0 : index
    %268 = vector.load %arg5[%c0_80, %c0_81] : memref<128x512xbf16, #tpu.memory_space<vmem>>, vector<128x512xbf16>
    %cst_82 = arith.constant dense<0.000000e+00> : vector<8x512xf32>
    %269 = tpu.matmul %267, %268, %cst_82 {dimension_numbers = #tpu.dot_dimension_numbers<[1], [0], [0], [1], [0, 0, 1, 1], [], []>} : vector<8x128xbf16>, vector<128x512xbf16>, vector<8x512xf32> -> vector<8x512xf32>
    %270 = arith.addf %266, %269 : vector<8x512xf32>
    %271 = vector.extract_strided_slice %270 {offsets = [0, 0], sizes = [8, 384], strides = [1, 1]} : vector<8x512xf32> to vector<8x384xf32>
    %272 = arith.negf %271 : vector<8x384xf32>
    %273 = math.exp %272 : vector<8x384xf32>
    %cst_83 = arith.constant 1.000000e+00 : f32
    %274 = vector.broadcast %cst_83 : f32 to vector<8x384xf32>
    %275 = arith.addf %274, %273 : vector<8x384xf32>
    %276 = arith.divf %274, %275 : vector<8x384xf32>
    %277 = vector.extract_strided_slice %270 {offsets = [0, 384], sizes = [8, 128], strides = [1, 1]} : vector<8x512xf32> to vector<8x128xf32>
    %278 = math.tanh %277 : vector<8x128xf32>
    %279 = vector.extract_strided_slice %276 {offsets = [0, 128], sizes = [8, 128], strides = [1, 1]} : vector<8x384xf32> to vector<8x128xf32>
    %280 = arith.mulf %279, %256 : vector<8x128xf32>
    %281 = vector.extract_strided_slice %276 {offsets = [0, 0], sizes = [8, 128], strides = [1, 1]} : vector<8x384xf32> to vector<8x128xf32>
    %282 = arith.mulf %281, %278 : vector<8x128xf32>
    %283 = arith.addf %280, %282 : vector<8x128xf32>
    %284 = vector.extract_strided_slice %276 {offsets = [0, 256], sizes = [8, 128], strides = [1, 1]} : vector<8x384xf32> to vector<8x128xf32>
    %285 = math.tanh %283 : vector<8x128xf32>
    %286 = arith.mulf %284, %285 : vector<8x128xf32>
    %287 = arith.truncf %286 : vector<8x128xf32> to vector<8x128xbf16>
    %288 = arith.index_cast %264 : i32 to index
    %c0_84 = arith.constant 0 : index
    %289 = vector.load %arg22[%288, %c0_84] : memref<120x128xbf16, #tpu.memory_space<vmem>>, vector<8x128xbf16>
    tpu.vector_store %arg22[%288, %c0_84], %287 {strides = array<i32>} : memref<120x128xbf16, #tpu.memory_space<vmem>>, vector<8x128xbf16>,
    %c10_i32 = arith.constant 10 : i32
    %c8_i32_85 = arith.constant 8 : i32
    %290 = arith.muli %c10_i32, %c8_i32_85 : i32
    %291 = tpu.assume_multiple %290, 8 : i32
    %292 = arith.index_cast %291 : i32 to index
    %c0_86 = arith.constant 0 : index
    %293 = vector.load %arg21[%292, %c0_86] : memref<120x512xf32, #tpu.memory_space<vmem>>, vector<8x512xf32>
    %294 = arith.truncf %286 : vector<8x128xf32> to vector<8x128xbf16>
    %c0_87 = arith.constant 0 : index
    %c0_88 = arith.constant 0 : index
    %295 = vector.load %arg5[%c0_87, %c0_88] : memref<128x512xbf16, #tpu.memory_space<vmem>>, vector<128x512xbf16>
    %cst_89 = arith.constant dense<0.000000e+00> : vector<8x512xf32>
    %296 = tpu.matmul %294, %295, %cst_89 {dimension_numbers = #tpu.dot_dimension_numbers<[1], [0], [0], [1], [0, 0, 1, 1], [], []>} : vector<8x128xbf16>, vector<128x512xbf16>, vector<8x512xf32> -> vector<8x512xf32>
    %297 = arith.addf %293, %296 : vector<8x512xf32>
    %298 = vector.extract_strided_slice %297 {offsets = [0, 0], sizes = [8, 384], strides = [1, 1]} : vector<8x512xf32> to vector<8x384xf32>
    %299 = arith.negf %298 : vector<8x384xf32>
    %300 = math.exp %299 : vector<8x384xf32>
    %cst_90 = arith.constant 1.000000e+00 : f32
    %301 = vector.broadcast %cst_90 : f32 to vector<8x384xf32>
    %302 = arith.addf %301, %300 : vector<8x384xf32>
    %303 = arith.divf %301, %302 : vector<8x384xf32>
    %304 = vector.extract_strided_slice %297 {offsets = [0, 384], sizes = [8, 128], strides = [1, 1]} : vector<8x512xf32> to vector<8x128xf32>
    %305 = math.tanh %304 : vector<8x128xf32>
    %306 = vector.extract_strided_slice %303 {offsets = [0, 128], sizes = [8, 128], strides = [1, 1]} : vector<8x384xf32> to vector<8x128xf32>
    %307 = arith.mulf %306, %283 : vector<8x128xf32>
    %308 = vector.extract_strided_slice %303 {offsets = [0, 0], sizes = [8, 128], strides = [1, 1]} : vector<8x384xf32> to vector<8x128xf32>
    %309 = arith.mulf %308, %305 : vector<8x128xf32>
    %310 = arith.addf %307, %309 : vector<8x128xf32>
    %311 = vector.extract_strided_slice %303 {offsets = [0, 256], sizes = [8, 128], strides = [1, 1]} : vector<8x384xf32> to vector<8x128xf32>
    %312 = math.tanh %310 : vector<8x128xf32>
    %313 = arith.mulf %311, %312 : vector<8x128xf32>
    %314 = arith.truncf %313 : vector<8x128xf32> to vector<8x128xbf16>
    %315 = arith.index_cast %291 : i32 to index
    %c0_91 = arith.constant 0 : index
    %316 = vector.load %arg22[%315, %c0_91] : memref<120x128xbf16, #tpu.memory_space<vmem>>, vector<8x128xbf16>
    tpu.vector_store %arg22[%315, %c0_91], %314 {strides = array<i32>} : memref<120x128xbf16, #tpu.memory_space<vmem>>, vector<8x128xbf16>,
    %c11_i32 = arith.constant 11 : i32
    %c8_i32_92 = arith.constant 8 : i32
    %317 = arith.muli %c11_i32, %c8_i32_92 : i32
    %318 = tpu.assume_multiple %317, 8 : i32
    %319 = arith.index_cast %318 : i32 to index
    %c0_93 = arith.constant 0 : index
    %320 = vector.load %arg21[%319, %c0_93] : memref<120x512xf32, #tpu.memory_space<vmem>>, vector<8x512xf32>
    %321 = arith.truncf %313 : vector<8x128xf32> to vector<8x128xbf16>
    %c0_94 = arith.constant 0 : index
    %c0_95 = arith.constant 0 : index
    %322 = vector.load %arg5[%c0_94, %c0_95] : memref<128x512xbf16, #tpu.memory_space<vmem>>, vector<128x512xbf16>
    %cst_96 = arith.constant dense<0.000000e+00> : vector<8x512xf32>
    %323 = tpu.matmul %321, %322, %cst_96 {dimension_numbers = #tpu.dot_dimension_numbers<[1], [0], [0], [1], [0, 0, 1, 1], [], []>} : vector<8x128xbf16>, vector<128x512xbf16>, vector<8x512xf32> -> vector<8x512xf32>
    %324 = arith.addf %320, %323 : vector<8x512xf32>
    %325 = vector.extract_strided_slice %324 {offsets = [0, 0], sizes = [8, 384], strides = [1, 1]} : vector<8x512xf32> to vector<8x384xf32>
    %326 = arith.negf %325 : vector<8x384xf32>
    %327 = math.exp %326 : vector<8x384xf32>
    %cst_97 = arith.constant 1.000000e+00 : f32
    %328 = vector.broadcast %cst_97 : f32 to vector<8x384xf32>
    %329 = arith.addf %328, %327 : vector<8x384xf32>
    %330 = arith.divf %328, %329 : vector<8x384xf32>
    %331 = vector.extract_strided_slice %324 {offsets = [0, 384], sizes = [8, 128], strides = [1, 1]} : vector<8x512xf32> to vector<8x128xf32>
    %332 = math.tanh %331 : vector<8x128xf32>
    %333 = vector.extract_strided_slice %330 {offsets = [0, 128], sizes = [8, 128], strides = [1, 1]} : vector<8x384xf32> to vector<8x128xf32>
    %334 = arith.mulf %333, %310 : vector<8x128xf32>
    %335 = vector.extract_strided_slice %330 {offsets = [0, 0], sizes = [8, 128], strides = [1, 1]} : vector<8x384xf32> to vector<8x128xf32>
    %336 = arith.mulf %335, %332 : vector<8x128xf32>
    %337 = arith.addf %334, %336 : vector<8x128xf32>
    %338 = vector.extract_strided_slice %330 {offsets = [0, 256], sizes = [8, 128], strides = [1, 1]} : vector<8x384xf32> to vector<8x128xf32>
    %339 = math.tanh %337 : vector<8x128xf32>
    %340 = arith.mulf %338, %339 : vector<8x128xf32>
    %341 = arith.truncf %340 : vector<8x128xf32> to vector<8x128xbf16>
    %342 = arith.index_cast %318 : i32 to index
    %c0_98 = arith.constant 0 : index
    %343 = vector.load %arg22[%342, %c0_98] : memref<120x128xbf16, #tpu.memory_space<vmem>>, vector<8x128xbf16>
    tpu.vector_store %arg22[%342, %c0_98], %341 {strides = array<i32>} : memref<120x128xbf16, #tpu.memory_space<vmem>>, vector<8x128xbf16>,
    %c12_i32 = arith.constant 12 : i32
    %c8_i32_99 = arith.constant 8 : i32
    %344 = arith.muli %c12_i32, %c8_i32_99 : i32
    %345 = tpu.assume_multiple %344, 8 : i32
    %346 = arith.index_cast %345 : i32 to index
    %c0_100 = arith.constant 0 : index
    %347 = vector.load %arg21[%346, %c0_100] : memref<120x512xf32, #tpu.memory_space<vmem>>, vector<8x512xf32>
    %348 = arith.truncf %340 : vector<8x128xf32> to vector<8x128xbf16>
    %c0_101 = arith.constant 0 : index
    %c0_102 = arith.constant 0 : index
    %349 = vector.load %arg5[%c0_101, %c0_102] : memref<128x512xbf16, #tpu.memory_space<vmem>>, vector<128x512xbf16>
    %cst_103 = arith.constant dense<0.000000e+00> : vector<8x512xf32>
    %350 = tpu.matmul %348, %349, %cst_103 {dimension_numbers = #tpu.dot_dimension_numbers<[1], [0], [0], [1], [0, 0, 1, 1], [], []>} : vector<8x128xbf16>, vector<128x512xbf16>, vector<8x512xf32> -> vector<8x512xf32>
    %351 = arith.addf %347, %350 : vector<8x512xf32>
    %352 = vector.extract_strided_slice %351 {offsets = [0, 0], sizes = [8, 384], strides = [1, 1]} : vector<8x512xf32> to vector<8x384xf32>
    %353 = arith.negf %352 : vector<8x384xf32>
    %354 = math.exp %353 : vector<8x384xf32>
    %cst_104 = arith.constant 1.000000e+00 : f32
    %355 = vector.broadcast %cst_104 : f32 to vector<8x384xf32>
    %356 = arith.addf %355, %354 : vector<8x384xf32>
    %357 = arith.divf %355, %356 : vector<8x384xf32>
    %358 = vector.extract_strided_slice %351 {offsets = [0, 384], sizes = [8, 128], strides = [1, 1]} : vector<8x512xf32> to vector<8x128xf32>
    %359 = math.tanh %358 : vector<8x128xf32>
    %360 = vector.extract_strided_slice %357 {offsets = [0, 128], sizes = [8, 128], strides = [1, 1]} : vector<8x384xf32> to vector<8x128xf32>
    %361 = arith.mulf %360, %337 : vector<8x128xf32>
    %362 = vector.extract_strided_slice %357 {offsets = [0, 0], sizes = [8, 128], strides = [1, 1]} : vector<8x384xf32> to vector<8x128xf32>
    %363 = arith.mulf %362, %359 : vector<8x128xf32>
    %364 = arith.addf %361, %363 : vector<8x128xf32>
    %365 = vector.extract_strided_slice %357 {offsets = [0, 256], sizes = [8, 128], strides = [1, 1]} : vector<8x384xf32> to vector<8x128xf32>
    %366 = math.tanh %364 : vector<8x128xf32>
    %367 = arith.mulf %365, %366 : vector<8x128xf32>
    %368 = arith.truncf %367 : vector<8x128xf32> to vector<8x128xbf16>
    %369 = arith.index_cast %345 : i32 to index
    %c0_105 = arith.constant 0 : index
    %370 = vector.load %arg22[%369, %c0_105] : memref<120x128xbf16, #tpu.memory_space<vmem>>, vector<8x128xbf16>
    tpu.vector_store %arg22[%369, %c0_105], %368 {strides = array<i32>} : memref<120x128xbf16, #tpu.memory_space<vmem>>, vector<8x128xbf16>,
    %c13_i32 = arith.constant 13 : i32
    %c8_i32_106 = arith.constant 8 : i32
    %371 = arith.muli %c13_i32, %c8_i32_106 : i32
    %372 = tpu.assume_multiple %371, 8 : i32
    %373 = arith.index_cast %372 : i32 to index
    %c0_107 = arith.constant 0 : index
    %374 = vector.load %arg21[%373, %c0_107] : memref<120x512xf32, #tpu.memory_space<vmem>>, vector<8x512xf32>
    %375 = arith.truncf %367 : vector<8x128xf32> to vector<8x128xbf16>
    %c0_108 = arith.constant 0 : index
    %c0_109 = arith.constant 0 : index
    %376 = vector.load %arg5[%c0_108, %c0_109] : memref<128x512xbf16, #tpu.memory_space<vmem>>, vector<128x512xbf16>
    %cst_110 = arith.constant dense<0.000000e+00> : vector<8x512xf32>
    %377 = tpu.matmul %375, %376, %cst_110 {dimension_numbers = #tpu.dot_dimension_numbers<[1], [0], [0], [1], [0, 0, 1, 1], [], []>} : vector<8x128xbf16>, vector<128x512xbf16>, vector<8x512xf32> -> vector<8x512xf32>
    %378 = arith.addf %374, %377 : vector<8x512xf32>
    %379 = vector.extract_strided_slice %378 {offsets = [0, 0], sizes = [8, 384], strides = [1, 1]} : vector<8x512xf32> to vector<8x384xf32>
    %380 = arith.negf %379 : vector<8x384xf32>
    %381 = math.exp %380 : vector<8x384xf32>
    %cst_111 = arith.constant 1.000000e+00 : f32
    %382 = vector.broadcast %cst_111 : f32 to vector<8x384xf32>
    %383 = arith.addf %382, %381 : vector<8x384xf32>
    %384 = arith.divf %382, %383 : vector<8x384xf32>
    %385 = vector.extract_strided_slice %378 {offsets = [0, 384], sizes = [8, 128], strides = [1, 1]} : vector<8x512xf32> to vector<8x128xf32>
    %386 = math.tanh %385 : vector<8x128xf32>
    %387 = vector.extract_strided_slice %384 {offsets = [0, 128], sizes = [8, 128], strides = [1, 1]} : vector<8x384xf32> to vector<8x128xf32>
    %388 = arith.mulf %387, %364 : vector<8x128xf32>
    %389 = vector.extract_strided_slice %384 {offsets = [0, 0], sizes = [8, 128], strides = [1, 1]} : vector<8x384xf32> to vector<8x128xf32>
    %390 = arith.mulf %389, %386 : vector<8x128xf32>
    %391 = arith.addf %388, %390 : vector<8x128xf32>
    %392 = vector.extract_strided_slice %384 {offsets = [0, 256], sizes = [8, 128], strides = [1, 1]} : vector<8x384xf32> to vector<8x128xf32>
    %393 = math.tanh %391 : vector<8x128xf32>
    %394 = arith.mulf %392, %393 : vector<8x128xf32>
    %395 = arith.truncf %394 : vector<8x128xf32> to vector<8x128xbf16>
    %396 = arith.index_cast %372 : i32 to index
    %c0_112 = arith.constant 0 : index
    %397 = vector.load %arg22[%396, %c0_112] : memref<120x128xbf16, #tpu.memory_space<vmem>>, vector<8x128xbf16>
    tpu.vector_store %arg22[%396, %c0_112], %395 {strides = array<i32>} : memref<120x128xbf16, #tpu.memory_space<vmem>>, vector<8x128xbf16>,
    %c14_i32 = arith.constant 14 : i32
    %c8_i32_113 = arith.constant 8 : i32
    %398 = arith.muli %c14_i32, %c8_i32_113 : i32
    %399 = tpu.assume_multiple %398, 8 : i32
    %400 = arith.index_cast %399 : i32 to index
    %c0_114 = arith.constant 0 : index
    %401 = vector.load %arg21[%400, %c0_114] : memref<120x512xf32, #tpu.memory_space<vmem>>, vector<8x512xf32>
    %402 = arith.truncf %394 : vector<8x128xf32> to vector<8x128xbf16>
    %c0_115 = arith.constant 0 : index
    %c0_116 = arith.constant 0 : index
    %403 = vector.load %arg5[%c0_115, %c0_116] : memref<128x512xbf16, #tpu.memory_space<vmem>>, vector<128x512xbf16>
    %cst_117 = arith.constant dense<0.000000e+00> : vector<8x512xf32>
    %404 = tpu.matmul %402, %403, %cst_117 {dimension_numbers = #tpu.dot_dimension_numbers<[1], [0], [0], [1], [0, 0, 1, 1], [], []>} : vector<8x128xbf16>, vector<128x512xbf16>, vector<8x512xf32> -> vector<8x512xf32>
    %405 = arith.addf %401, %404 : vector<8x512xf32>
    %406 = vector.extract_strided_slice %405 {offsets = [0, 0], sizes = [8, 384], strides = [1, 1]} : vector<8x512xf32> to vector<8x384xf32>
    %407 = arith.negf %406 : vector<8x384xf32>
    %408 = math.exp %407 : vector<8x384xf32>
    %cst_118 = arith.constant 1.000000e+00 : f32
    %409 = vector.broadcast %cst_118 : f32 to vector<8x384xf32>
    %410 = arith.addf %409, %408 : vector<8x384xf32>
    %411 = arith.divf %409, %410 : vector<8x384xf32>
    %412 = vector.extract_strided_slice %405 {offsets = [0, 384], sizes = [8, 128], strides = [1, 1]} : vector<8x512xf32> to vector<8x128xf32>
    %413 = math.tanh %412 : vector<8x128xf32>
    %414 = vector.extract_strided_slice %411 {offsets = [0, 128], sizes = [8, 128], strides = [1, 1]} : vector<8x384xf32> to vector<8x128xf32>
    %415 = arith.mulf %414, %391 : vector<8x128xf32>
    %416 = vector.extract_strided_slice %411 {offsets = [0, 0], sizes = [8, 128], strides = [1, 1]} : vector<8x384xf32> to vector<8x128xf32>
    %417 = arith.mulf %416, %413 : vector<8x128xf32>
    %418 = arith.addf %415, %417 : vector<8x128xf32>
    %419 = vector.extract_strided_slice %411 {offsets = [0, 256], sizes = [8, 128], strides = [1, 1]} : vector<8x384xf32> to vector<8x128xf32>
    %420 = math.tanh %418 : vector<8x128xf32>
    %421 = arith.mulf %419, %420 : vector<8x128xf32>
    %422 = arith.truncf %421 : vector<8x128xf32> to vector<8x128xbf16>
    %423 = arith.index_cast %399 : i32 to index
    %c0_119 = arith.constant 0 : index
    %424 = vector.load %arg22[%423, %c0_119] : memref<120x128xbf16, #tpu.memory_space<vmem>>, vector<8x128xbf16>
    tpu.vector_store %arg22[%423, %c0_119], %422 {strides = array<i32>} : memref<120x128xbf16, #tpu.memory_space<vmem>>, vector<8x128xbf16>,
    %c15_i32 = arith.constant 15 : i32
    %425 = arith.truncf %421 : vector<8x128xf32> to vector<8x128xbf16>
    %c0_120 = arith.constant 0 : index
    %c0_121 = arith.constant 0 : index
    %426 = vector.load %arg7[%c0_120, %c0_121] : memref<128x128xbf16, #tpu.memory_space<vmem>>, vector<128x128xbf16>
    %cst_122 = arith.constant dense<0.000000e+00> : vector<8x128xf32>
    %427 = tpu.matmul %425, %426, %cst_122 {dimension_numbers = #tpu.dot_dimension_numbers<[1], [0], [0], [1], [0, 0, 1, 1], [], []>} : vector<8x128xbf16>, vector<128x128xbf16>, vector<8x128xf32> -> vector<8x128xf32>
    %c0_123 = arith.constant 0 : index
    %c0_124 = arith.constant 0 : index
    %428 = vector.load %arg8[%c0_123, %c0_124] : memref<1x128xf32, #tpu.memory_space<vmem>>, vector<1x128xf32>
    %429 = vector.broadcast %428 : vector<1x128xf32> to vector<8x128xf32>
    %430 = arith.addf %427, %429 : vector<8x128xf32>
    %cst_125 = arith.constant 2.500000e-01 : f32
    %431 = vector.broadcast %cst_125 : f32 to vector<8x128xf32>
    %432 = arith.mulf %430, %431 : vector<8x128xf32>
    %c0_126 = arith.constant 0 : index
    %c0_127 = arith.constant 0 : index
    %433 = vector.load %arg22[%c0_126, %c0_127] : memref<120x128xbf16, #tpu.memory_space<vmem>>, vector<120x128xbf16>
    %c0_128 = arith.constant 0 : index
    %c0_129 = arith.constant 0 : index
    %434 = vector.load %arg9[%c0_128, %c0_129] : memref<128x128xbf16, #tpu.memory_space<vmem>>, vector<128x128xbf16>
    %cst_130 = arith.constant dense<0.000000e+00> : vector<120x128xf32>
    %435 = tpu.matmul %433, %434, %cst_130 {dimension_numbers = #tpu.dot_dimension_numbers<[1], [0], [0], [1], [0, 0, 1, 1], [], []>} : vector<120x128xbf16>, vector<128x128xbf16>, vector<120x128xf32> -> vector<120x128xf32>
    %c0_131 = arith.constant 0 : index
    %c0_132 = arith.constant 0 : index
    %436 = vector.load %arg10[%c0_131, %c0_132] : memref<1x128xf32, #tpu.memory_space<vmem>>, vector<1x128xf32>
    %437 = vector.broadcast %436 : vector<1x128xf32> to vector<120x128xf32>
    %438 = arith.addf %435, %437 : vector<120x128xf32>
    %439 = vector.shape_cast %438 : vector<120x128xf32> to vector<15x8x128xf32>
    %440 = vector.shape_cast %432 : vector<8x128xf32> to vector<1x8x128xf32>
    %441 = vector.broadcast %440 : vector<1x8x128xf32> to vector<15x8x128xf32>
    %442 = arith.mulf %439, %441 : vector<15x8x128xf32>
    %443 = vector.shape_cast %442 : vector<15x8x128xf32> to vector<120x128xf32>
    %c0_133 = arith.constant 0 : index
    %c0_134 = arith.constant 0 : index
    %444 = vector.load %arg18[%c0_133, %c0_134] : memref<128x8xf32, #tpu.memory_space<vmem>>, vector<128x8xf32>
    %cst_135 = arith.constant dense<0.000000e+00> : vector<120x8xf32>
    %445 = tpu.matmul %443, %444, %cst_135 {dimension_numbers = #tpu.dot_dimension_numbers<[1], [0], [0], [1], [0, 0, 1, 1], [], []>} : vector<120x128xf32>, vector<128x8xf32>, vector<120x8xf32> -> vector<120x8xf32>
    %446 = vector.shape_cast %445 : vector<120x8xf32> to vector<15x8x8xf32>
    %cst_136 = arith.constant dense<0xFF800000> : vector<8x8xf32>
    %447 = vector.multi_reduction <maximumf>, %446, %cst_136 [0] : vector<15x8x8xf32> to vector<8x8xf32>
    %448 = vector.shape_cast %447 : vector<8x8xf32> to vector<1x8x8xf32>
    %449 = vector.broadcast %448 : vector<1x8x8xf32> to vector<15x8x8xf32>
    %450 = arith.subf %446, %449 : vector<15x8x8xf32>
    %451 = math.exp %450 : vector<15x8x8xf32>
    %cst_137 = arith.constant dense<0.000000e+00> : vector<8x8xf32>
    %452 = vector.multi_reduction <add>, %451, %cst_137 [0] : vector<15x8x8xf32> to vector<8x8xf32>
    %453 = tpu.reciprocal %452 {approx = true} : vector<8x8xf32> -> vector<8x8xf32>
    %c0_138 = arith.constant 0 : index
    %c0_139 = arith.constant 0 : index
    %454 = vector.load %arg11[%c0_138, %c0_139] : memref<128x128xbf16, #tpu.memory_space<vmem>>, vector<128x128xbf16>
    %cst_140 = arith.constant dense<0.000000e+00> : vector<120x128xf32>
    %455 = tpu.matmul %433, %454, %cst_140 {dimension_numbers = #tpu.dot_dimension_numbers<[1], [0], [0], [1], [0, 0, 1, 1], [], []>} : vector<120x128xbf16>, vector<128x128xbf16>, vector<120x128xf32> -> vector<120x128xf32>
    %c0_141 = arith.constant 0 : index
    %c0_142 = arith.constant 0 : index
    %456 = vector.load %arg12[%c0_141, %c0_142] : memref<1x128xf32, #tpu.memory_space<vmem>>, vector<1x128xf32>
    %457 = vector.broadcast %456 : vector<1x128xf32> to vector<120x128xf32>
    %458 = arith.addf %455, %457 : vector<120x128xf32>
    %459 = vector.shape_cast %451 : vector<15x8x8xf32> to vector<120x8xf32>
    %c0_143 = arith.constant 0 : index
    %c0_144 = arith.constant 0 : index
    %460 = vector.load %arg19[%c0_143, %c0_144] : memref<8x128xf32, #tpu.memory_space<vmem>>, vector<8x128xf32>
    %cst_145 = arith.constant dense<0.000000e+00> : vector<120x128xf32>
    %461 = tpu.matmul %459, %460, %cst_145 {dimension_numbers = #tpu.dot_dimension_numbers<[1], [0], [0], [1], [0, 0, 1, 1], [], []>} : vector<120x8xf32>, vector<8x128xf32>, vector<120x128xf32> -> vector<120x128xf32>
    %462 = arith.mulf %461, %458 : vector<120x128xf32>
    %463 = vector.shape_cast %462 : vector<120x128xf32> to vector<15x8x128xf32>
    %cst_146 = arith.constant dense<0.000000e+00> : vector<8x128xf32>
    %464 = vector.multi_reduction <add>, %463, %cst_146 [0] : vector<15x8x128xf32> to vector<8x128xf32>
    %c0_147 = arith.constant 0 : index
    %c0_148 = arith.constant 0 : index
    %465 = vector.load %arg19[%c0_147, %c0_148] : memref<8x128xf32, #tpu.memory_space<vmem>>, vector<8x128xf32>
    %cst_149 = arith.constant dense<0.000000e+00> : vector<8x128xf32>
    %466 = tpu.matmul %453, %465, %cst_149 {dimension_numbers = #tpu.dot_dimension_numbers<[1], [0], [0], [1], [0, 0, 1, 1], [], []>} : vector<8x8xf32>, vector<8x128xf32>, vector<8x128xf32> -> vector<8x128xf32>
    %467 = arith.mulf %464, %466 : vector<8x128xf32>
    %468 = arith.truncf %467 : vector<8x128xf32> to vector<8x128xbf16>
    %c0_150 = arith.constant 0 : index
    %c0_151 = arith.constant 0 : index
    %469 = vector.load %arg13[%c0_150, %c0_151] : memref<128x128xbf16, #tpu.memory_space<vmem>>, vector<128x128xbf16>
    %cst_152 = arith.constant dense<0.000000e+00> : vector<8x128xf32>
    %470 = tpu.matmul %468, %469, %cst_152 {dimension_numbers = #tpu.dot_dimension_numbers<[1], [0], [0], [1], [0, 0, 1, 1], [], []>} : vector<8x128xbf16>, vector<128x128xbf16>, vector<8x128xf32> -> vector<8x128xf32>
    %c0_153 = arith.constant 0 : index
    %c0_154 = arith.constant 0 : index
    %471 = vector.load %arg14[%c0_153, %c0_154] : memref<1x128xf32, #tpu.memory_space<vmem>>, vector<1x128xf32>
    %472 = vector.broadcast %471 : vector<1x128xf32> to vector<8x128xf32>
    %473 = arith.addf %470, %472 : vector<8x128xf32>
    %c0_155 = arith.constant 0 : index
    %c0_156 = arith.constant 0 : index
    %474 = vector.load %arg15[%c0_155, %c0_156] : memref<1x128xf32, #tpu.memory_space<vmem>>, vector<1x128xf32>
    %475 = vector.broadcast %474 : vector<1x128xf32> to vector<8x128xf32>
    %476 = arith.mulf %421, %475 : vector<8x128xf32>
    %cst_157 = arith.constant dense<0.000000e+00> : vector<8xf32>
    %477 = vector.multi_reduction <add>, %476, %cst_157 [1] : vector<8x128xf32> to vector<8xf32>
    %478 = vector.shape_cast %477 : vector<8xf32> to vector<8x1xf32>
    %c0_158 = arith.constant 0 : index
    %c0_159 = arith.constant 0 : index
    %479 = vector.load %arg16[%c0_158, %c0_159] : memref<1x128xf32, #tpu.memory_space<vmem>>, vector<1x128xf32>
    %480 = vector.broadcast %479 : vector<1x128xf32> to vector<8x128xf32>
    %481 = arith.mulf %473, %480 : vector<8x128xf32>
    %cst_160 = arith.constant dense<0.000000e+00> : vector<8xf32>
    %482 = vector.multi_reduction <add>, %481, %cst_160 [1] : vector<8x128xf32> to vector<8xf32>
    %483 = vector.shape_cast %482 : vector<8xf32> to vector<8x1xf32>
    %484 = arith.addf %478, %483 : vector<8x1xf32>
    %c0_161 = arith.constant 0 : index
    %c0_162 = arith.constant 0 : index
    %485 = vector.load %arg17[%c0_161, %c0_162] : memref<1x1xf32, #tpu.memory_space<vmem>>, vector<1x1xf32>
    %486 = vector.broadcast %485 : vector<1x1xf32> to vector<8x1xf32>
    %487 = arith.addf %484, %486 : vector<8x1xf32>
    %c0_163 = arith.constant 0 : index
    %c0_164 = arith.constant 0 : index
    %488 = vector.load %arg20[%c0_163, %c0_164] : memref<8x1xf32, #tpu.memory_space<vmem>>, vector<8x1xf32>
    tpu.vector_store %arg20[%c0_163, %c0_164], %487 {strides = array<i32>} : memref<8x1xf32, #tpu.memory_space<vmem>>, vector<8x1xf32>,
    return
  }
  func.func @transform_0(%arg0: i32) -> (i32, i32, i32) {
    %c0_i32 = arith.constant 0 : i32
    %c0_i32_0 = arith.constant 0 : i32
    %c0_i32_1 = arith.constant 0 : i32
    return %arg0, %c0_i32, %c0_i32_0 : i32, i32, i32
  }
  func.func @transform_1(%arg0: i32) -> (i32, i32) {
    %c0_i32 = arith.constant 0 : i32
    %c0_i32_0 = arith.constant 0 : i32
    %c0_i32_1 = arith.constant 0 : i32
    return %c0_i32, %c0_i32_0 : i32, i32
  }
  func.func @transform_2(%arg0: i32) -> (i32, i32) {
    %c0_i32 = arith.constant 0 : i32
    %c0_i32_0 = arith.constant 0 : i32
    %c0_i32_1 = arith.constant 0 : i32
    return %c0_i32, %c0_i32_0 : i32, i32
  }
  func.func @transform_3(%arg0: i32) -> (i32, i32) {
    %c0_i32 = arith.constant 0 : i32
    %c0_i32_0 = arith.constant 0 : i32
    %c0_i32_1 = arith.constant 0 : i32
    return %c0_i32, %c0_i32_0 : i32, i32
  }
  func.func @transform_4(%arg0: i32) -> (i32, i32) {
    %c0_i32 = arith.constant 0 : i32
    %c0_i32_0 = arith.constant 0 : i32
    %c0_i32_1 = arith.constant 0 : i32
    return %c0_i32, %c0_i32_0 : i32, i32
  }
  func.func @transform_5(%arg0: i32) -> (i32, i32) {
    %c0_i32 = arith.constant 0 : i32
    %c0_i32_0 = arith.constant 0 : i32
    %c0_i32_1 = arith.constant 0 : i32
    return %c0_i32, %c0_i32_0 : i32, i32
  }
  func.func @transform_6(%arg0: i32) -> (i32, i32) {
    %c0_i32 = arith.constant 0 : i32
    %c0_i32_0 = arith.constant 0 : i32
    %c0_i32_1 = arith.constant 0 : i32
    return %c0_i32, %c0_i32_0 : i32, i32
  }
  func.func @transform_7(%arg0: i32) -> (i32, i32) {
    %c0_i32 = arith.constant 0 : i32
    %c0_i32_0 = arith.constant 0 : i32
    %c0_i32_1 = arith.constant 0 : i32
    return %c0_i32, %c0_i32_0 : i32, i32
  }
  func.func @transform_8(%arg0: i32) -> (i32, i32) {
    %c0_i32 = arith.constant 0 : i32
    %c0_i32_0 = arith.constant 0 : i32
    %c0_i32_1 = arith.constant 0 : i32
    return %c0_i32, %c0_i32_0 : i32, i32
  }
  func.func @transform_9(%arg0: i32) -> (i32, i32) {
    %c0_i32 = arith.constant 0 : i32
    %c0_i32_0 = arith.constant 0 : i32
    %c0_i32_1 = arith.constant 0 : i32
    return %c0_i32, %c0_i32_0 : i32, i32
  }
  func.func @transform_10(%arg0: i32) -> (i32, i32) {
    %c0_i32 = arith.constant 0 : i32
    %c0_i32_0 = arith.constant 0 : i32
    %c0_i32_1 = arith.constant 0 : i32
    return %c0_i32, %c0_i32_0 : i32, i32
  }
  func.func @transform_11(%arg0: i32) -> (i32, i32) {
    %c0_i32 = arith.constant 0 : i32
    %c0_i32_0 = arith.constant 0 : i32
    %c0_i32_1 = arith.constant 0 : i32
    return %c0_i32, %c0_i32_0 : i32, i32
  }
  func.func @transform_12(%arg0: i32) -> (i32, i32) {
    %c0_i32 = arith.constant 0 : i32
    %c0_i32_0 = arith.constant 0 : i32
    %c0_i32_1 = arith.constant 0 : i32
    return %c0_i32, %c0_i32_0 : i32, i32
  }
  func.func @transform_13(%arg0: i32) -> (i32, i32) {
    %c0_i32 = arith.constant 0 : i32
    %c0_i32_0 = arith.constant 0 : i32
    %c0_i32_1 = arith.constant 0 : i32
    return %c0_i32, %c0_i32_0 : i32, i32
  }
  func.func @transform_14(%arg0: i32) -> (i32, i32) {
    %c0_i32 = arith.constant 0 : i32
    %c0_i32_0 = arith.constant 0 : i32
    %c0_i32_1 = arith.constant 0 : i32
    return %c0_i32, %c0_i32_0 : i32, i32
  }
  func.func @transform_15(%arg0: i32) -> (i32, i32) {
    %c0_i32 = arith.constant 0 : i32
    %c0_i32_0 = arith.constant 0 : i32
    %c0_i32_1 = arith.constant 0 : i32
    return %c0_i32, %c0_i32_0 : i32, i32
  }
  func.func @transform_16(%arg0: i32) -> (i32, i32) {
    %c0_i32 = arith.constant 0 : i32
    %c0_i32_0 = arith.constant 0 : i32
    %c0_i32_1 = arith.constant 0 : i32
    return %c0_i32, %c0_i32_0 : i32, i32
  }
  func.func @transform_17(%arg0: i32) -> (i32, i32) {
    %c0_i32 = arith.constant 0 : i32
    %c0_i32_0 = arith.constant 0 : i32
    %c0_i32_1 = arith.constant 0 : i32
    return %c0_i32, %c0_i32_0 : i32, i32
  }
  func.func @transform_18(%arg0: i32) -> (i32, i32) {
    %c0_i32 = arith.constant 0 : i32
    %c0_i32_0 = arith.constant 0 : i32
    %c0_i32_1 = arith.constant 0 : i32
    return %c0_i32, %c0_i32_0 : i32, i32
  }
  func.func @transform_19(%arg0: i32) -> (i32, i32) {
    %c0_i32 = arith.constant 0 : i32
    %c0_i32_0 = arith.constant 0 : i32
    return %arg0, %c0_i32 : i32, i32
  }
}

</mosaic_0001>

<llo_original>
// kernel: tpu_custom_call.1
$region0: #{tpu_custom_call.1}
  #allocation0 [shape = 'u32[]', space=smem, size = 0x4, offset = 0x4, fixed_abs, tag = 'smem constant byte address 0x4 - core index']
  #allocation1 [shape = 'u32[144,128]{1,0:T(1,128)}', space=vmem, size = 0x12000, scoped, tag = 'internal scratch']
  #allocation2 [shape = 'f32[120,512]{1,0:T(8,128)}', space=vmem, size = 0x3c000, scoped, tag = 'scratch operand']
  #allocation3 [shape = 'bf16[120,128]{1,0:T(8,128)(2,1)}', space=vmem, size = 0x7800, scoped, tag = 'scratch operand']
  #allocation4 [shape = 'f32[1,1]{1,0:T(1,128)S(1)}', space=vmem, size = 0x200, scoped, tag = 'scoped memory for tpu_custom_call.1']
  %s0 = inlined_call_operand.vmem [shape: f32[2,128,12], index: 0, kind: input, shape index: {}]
  %s1 = inlined_call_operand.hbm [shape: f32[12,64], index: 1, kind: input, shape index: {}]
  %s2 = inlined_call_operand.vmem [shape: f32[1,64], index: 2, kind: input, shape index: {}]
  %s3 = inlined_call_operand.vmem [shape: bf16[64,512], index: 3, kind: input, shape index: {}]
  %s4 = inlined_call_operand.vmem [shape: bf16[128,512], index: 4, kind: input, shape index: {}]
  %s5 = inlined_call_operand.hbm [shape: f32[1,512], index: 5, kind: input, shape index: {}]
  %s6 = inlined_call_operand.hbm [shape: bf16[128,128], index: 6, kind: input, shape index: {}]
  %s7 = inlined_call_operand.hbm [shape: f32[1,128], index: 7, kind: input, shape index: {}]
  %s8 = inlined_call_operand.hbm [shape: bf16[128,128], index: 8, kind: input, shape index: {}]
  %s9 = inlined_call_operand.hbm [shape: f32[1,128], index: 9, kind: input, shape index: {}]
  %s10 = inlined_call_operand.vmem [shape: bf16[128,128], index: 10, kind: input, shape index: {}]
  %s11 = inlined_call_operand.hbm [shape: f32[1,128], index: 11, kind: input, shape index: {}]
  %s12 = inlined_call_operand.hbm [shape: bf16[128,128], index: 12, kind: input, shape index: {}]
  %s13 = inlined_call_operand.vmem [shape: f32[1,128], index: 13, kind: input, shape index: {}]
  %s14 = inlined_call_operand.vmem [shape: f32[1,128], index: 14, kind: input, shape index: {}]
  %s15 = inlined_call_operand.vmem [shape: f32[1,128], index: 15, kind: input, shape index: {}]
  %s16 = inlined_call_operand.<no memory space> [shape: f32[1,1], index: 16, kind: input, shape index: {}]
  %s17 = inlined_call_operand.vmem [shape: f32[128,8], index: 17, kind: input, shape index: {}]
  %s18 = inlined_call_operand.vmem [shape: f32[8,128], index: 18, kind: input, shape index: {}]
  %s19 = inlined_call_operand.vmem [shape: f32[16,1], index: 19, kind: output, shape index: {}]
  %s20 = sld [smem:[#allocation0]]
  $region141: #{tpu_custom_call.1} parent=0
    _
  %s22 = ssub.s32 1, %s20
  %s23 = scalar_select 0, %s22, %s20
  %v24 = vstv %s16
  %25 = vst [vmem:[#allocation4] sm:$0x1] %v24
  $region1: #{tpu_custom_call.1} parent=0
    #allocation5 [shape = 'u8[8192]{0}', space=vmem, size = 0x2000, scoped, tag = 'input window, operand 1, single buffered']
    #allocation6 [shape = 's32[2]{0}', space=sflag, size = 0x8, scoped, tag = 'scoped memory for tpu_custom_call.1']
    #allocation7 [shape = 'u8[2048]{0}', space=vmem, size = 0x800, scoped, tag = 'input window, operand 5, single buffered']
    #allocation8 [shape = 's32[1]{0}', space=sflag, size = 0x4, scoped, tag = 'scoped memory for tpu_custom_call.1']
    #allocation9 [shape = 'u8[32768]{0}', space=vmem, size = 0x8000, scoped, tag = 'input window, operand 6, single buffered']
    #allocation10 [shape = 'u8[512]{0}', space=vmem, size = 0x400, scoped, tag = 'input window, operand 7, single buffered']
    #allocation11 [shape = 's32[1]{0}', space=sflag, size = 0x4, scoped, tag = 'scoped memory for tpu_custom_call.1']
    #allocation12 [shape = 'u8[32768]{0}', space=vmem, size = 0x8000, scoped, tag = 'input window, operand 8, single buffered']
    #allocation13 [shape = 'u8[512]{0}', space=vmem, size = 0x400, scoped, tag = 'input window, operand 9, single buffered']
    #allocation14 [shape = 's32[1]{0}', space=sflag, size = 0x4, scoped, tag = 'scoped memory for tpu_custom_call.1']
    #allocation15 [shape = 'u8[512]{0}', space=vmem, size = 0x400, scoped, tag = 'input window, operand 11, single buffered']
    #allocation16 [shape = 'u8[32768]{0}', space=vmem, size = 0x8000, scoped, tag = 'input window, operand 12, single buffered']
    #allocation17 [shape = 's32[1]{0}', space=sflag, size = 0x4, scoped, tag = 'scoped memory for tpu_custom_call.1']
    %26 = vsyncpa [#allocation6], 0
    %27 = vsyncpa [#allocation8], 0
    %28 = vsyncpa [#allocation11], 0
    %29 = vsyncpa [#allocation14], 0
    %30 = vsyncpa [#allocation17], 0
    loop: start=0, step=1, limit=4
    $region2: #{tpu_custom_call.1} parent=1 // loop_pre_header
      _
    $region3: #{tpu_custom_call.1} parent=1 // loop_header
      %s32 = sphi 0, %s36
      %p33 = scmp.ge.s32.totalorder %s32, 4
      %s42 = sphi 0, %s44
      %s45 = sphi 0, %s42
      %s46 = sphi 0, %s45
      %s62 = sphi 0, %s46
      %s66 = sphi 0, %s66
      %s68 = sphi 0, %s66
      %s69 = sphi 0, %s68
      %s83 = sphi 0, %s69
      %s87 = sphi 0, %s87
      %s89 = sphi 0, %s87
      %s90 = sphi 0, %s89
      %s104 = sphi 0, %s90
      %s108 = sphi 0, %s108
      %s110 = sphi 0, %s108
      %s111 = sphi 0, %s110
      %s125 = sphi 0, %s111
      %s129 = sphi 0, %s129
      %s131 = sphi 0, %s129
      %s132 = sphi 0, %s131
      %s146 = sphi 0, %s132
      %s150 = sphi 0, %s150
      %s152 = sphi 0, %s150
      %s153 = sphi 0, %s152
      %s167 = sphi 0, %s153
      %s171 = sphi 0, %s171
      %s173 = sphi 0, %s171
      %s174 = sphi 0, %s173
      %s188 = sphi 0, %s174
      %s192 = sphi 0, %s192
      %s194 = sphi 0, %s192
      %s195 = sphi 0, %s194
      %s209 = sphi 0, %s195
      %s213 = sphi 0, %s213
      %s215 = sphi 0, %s213
      %s216 = sphi 0, %s215
      %s230 = sphi 0, %s216
      %s234 = sphi 0, %s234
      %s236 = sphi 0, %s234
      %s237 = sphi 0, %s236
      %s251 = sphi 0, %s237
      %s255 = sphi 0, %s255
      %s257 = sphi 0, %s255
      %s258 = sphi 0, %s257
      %s272 = sphi 0, %s258
      %s276 = sphi 0, %s276
      %s278 = sphi 0, %s276
      %s279 = sphi 0, %s278
      %s293 = sphi 0, %s279
      %s297 = sphi 0, %s297
      %s299 = sphi 0, %s297
      %s300 = sphi 0, %s299
      %s314 = sphi 0, %s300
      %s318 = sphi 0, %s318
      %s320 = sphi 0, %s318
      %s321 = sphi 0, %s320
      %s335 = sphi 0, %s321
      %s339 = sphi 0, %s339
      %s341 = sphi 0, %s339
      %s342 = sphi 0, %s341
      %s356 = sphi 0, %s342
      %s360 = sphi 0, %s360
      %s362 = sphi 0, %s360
      %s363 = sphi 0, %s362
      %s377 = sphi 0, %s363
      %s381 = sphi 0, %s381
      %s383 = sphi 0, %s381
      %s384 = sphi 0, %s383
      %s398 = sphi 0, %s384
      %s402 = sphi 0, %s402
      %s404 = sphi 0, %s402
      %s405 = sphi 0, %s404
      %s419 = sphi 0, %s405
      %s423 = sphi 0, %s423
      %s425 = sphi 0, %s423
      %s426 = sphi 0, %s425
      %s440 = sphi 0, %s426
      %s446 = sphi 0, %s448
      %s449 = sphi 0, %s446
      %s450 = sphi 0, %s449
      %s466 = sphi 0, %s450
    $region4: #{tpu_custom_call.1} parent=1 // loop_header_branch
      %35 = sbr.rel (%p33) target = $region8
    $region5: #{tpu_custom_call.1} parent=1 // loop_body
      %s37 = ssub.s32 %s32, 1
      %s38 = ssub.s32 %s32, 2
      %s39 = sadd.s32 %s32, 1
      %s40 = ssub.s32 %s32, %s39
      %p41 = scmp.eq.s32.totalorder %s40, 0
      %s43 = sadd.s32 %s42, 1
      %s44 = scalar_select %p41, %s42, %s43
      %p47 = pneg %p41
      %p48 = scmp.eq.s32.totalorder %s32, 1
      %p49 = por %p47, %p48
      %p50 = scmp.ne.s32.totalorder %s42, %s45
      %p51 = scmp.eq.s32.totalorder %s32, 0
      %p52 = por %p50, %p51
      %p53 = scmp.ne.s32.totalorder %s42, %s45
      %p54 = scmp.eq.s32.totalorder %s37, 1
      %p55 = por %p53, %p54
      %p56 = scmp.ne.s32.totalorder %s45, %s46
      %p57 = scmp.eq.s32.totalorder %s37, 0
      %p58 = por %p56, %p57
      %p59 = scmp.ne.s32.totalorder %s45, %s46
      %p60 = scmp.eq.s32.totalorder %s38, 1
      %p61 = por %p59, %p60
      %p63 = scmp.ne.s32.totalorder %s46, %s62
      %p64 = scmp.eq.s32.totalorder %s38, 0
      %p65 = por %p63, %p64
      %s67 = sadd.s32 %s66, 1
      %p70 = scmp.eq.s32.totalorder %s32, 1
      %p71 = scmp.ne.s32.totalorder %s66, %s68
      %p72 = scmp.eq.s32.totalorder %s32, 0
      %p73 = por %p71, %p72
      %p74 = scmp.ne.s32.totalorder %s66, %s68
      %p75 = scmp.eq.s32.totalorder %s37, 1
      %p76 = por %p74, %p75
      %p77 = scmp.ne.s32.totalorder %s68, %s69
      %p78 = scmp.eq.s32.totalorder %s37, 0
      %p79 = por %p77, %p78
      %p80 = scmp.ne.s32.totalorder %s68, %s69
      %p81 = scmp.eq.s32.totalorder %s38, 1
      %p82 = por %p80, %p81
      %p84 = scmp.ne.s32.totalorder %s69, %s83
      %p85 = scmp.eq.s32.totalorder %s38, 0
      %p86 = por %p84, %p85
      %s88 = sadd.s32 %s87, 1
      %p91 = scmp.eq.s32.totalorder %s32, 1
      %p92 = scmp.ne.s32.totalorder %s87, %s89
      %p93 = scmp.eq.s32.totalorder %s32, 0
      %p94 = por %p92, %p93
      %p95 = scmp.ne.s32.totalorder %s87, %s89
      %p96 = scmp.eq.s32.totalorder %s37, 1
      %p97 = por %p95, %p96
      %p98 = scmp.ne.s32.totalorder %s89, %s90
      %p99 = scmp.eq.s32.totalorder %s37, 0
      %p100 = por %p98, %p99
      %p101 = scmp.ne.s32.totalorder %s89, %s90
      %p102 = scmp.eq.s32.totalorder %s38, 1
      %p103 = por %p101, %p102
      %p105 = scmp.ne.s32.totalorder %s90, %s104
      %p106 = scmp.eq.s32.totalorder %s38, 0
      %p107 = por %p105, %p106
      %s109 = sadd.s32 %s108, 1
      %p112 = scmp.eq.s32.totalorder %s32, 1
      %p113 = scmp.ne.s32.totalorder %s108, %s110
      %p114 = scmp.eq.s32.totalorder %s32, 0
      %p115 = por %p113, %p114
      %p116 = scmp.ne.s32.totalorder %s108, %s110
      %p117 = scmp.eq.s32.totalorder %s37, 1
      %p118 = por %p116, %p117
      %p119 = scmp.ne.s32.totalorder %s110, %s111
      %p120 = scmp.eq.s32.totalorder %s37, 0
      %p121 = por %p119, %p120
      %p122 = scmp.ne.s32.totalorder %s110, %s111
      %p123 = scmp.eq.s32.totalorder %s38, 1
      %p124 = por %p122, %p123
      %p126 = scmp.ne.s32.totalorder %s111, %s125
      %p127 = scmp.eq.s32.totalorder %s38, 0
      %p128 = por %p126, %p127
      %s130 = sadd.s32 %s129, 1
      %p133 = scmp.eq.s32.totalorder %s32, 1
      %p134 = scmp.ne.s32.totalorder %s129, %s131
      %p135 = scmp.eq.s32.totalorder %s32, 0
      %p136 = por %p134, %p135
      %p137 = scmp.ne.s32.totalorder %s129, %s131
      %p138 = scmp.eq.s32.totalorder %s37, 1
      %p139 = por %p137, %p138
      %p140 = scmp.ne.s32.totalorder %s131, %s132
      %p141 = scmp.eq.s32.totalorder %s37, 0
      %p142 = por %p140, %p141
      %p143 = scmp.ne.s32.totalorder %s131, %s132
      %p144 = scmp.eq.s32.totalorder %s38, 1
      %p145 = por %p143, %p144
      %p147 = scmp.ne.s32.totalorder %s132, %s146
      %p148 = scmp.eq.s32.totalorder %s38, 0
      %p149 = por %p147, %p148
      %s151 = sadd.s32 %s150, 1
      %p154 = scmp.eq.s32.totalorder %s32, 1
      %p155 = scmp.ne.s32.totalorder %s150, %s152
      %p156 = scmp.eq.s32.totalorder %s32, 0
      %p157 = por %p155, %p156
      %p158 = scmp.ne.s32.totalorder %s150, %s152
      %p159 = scmp.eq.s32.totalorder %s37, 1
      %p160 = por %p158, %p159
      %p161 = scmp.ne.s32.totalorder %s152, %s153
      %p162 = scmp.eq.s32.totalorder %s37, 0
      %p163 = por %p161, %p162
      %p164 = scmp.ne.s32.totalorder %s152, %s153
      %p165 = scmp.eq.s32.totalorder %s38, 1
      %p166 = por %p164, %p165
      %p168 = scmp.ne.s32.totalorder %s153, %s167
      %p169 = scmp.eq.s32.totalorder %s38, 0
      %p170 = por %p168, %p169
      %s172 = sadd.s32 %s171, 1
      %p175 = scmp.eq.s32.totalorder %s32, 1
      %p176 = scmp.ne.s32.totalorder %s171, %s173
      %p177 = scmp.eq.s32.totalorder %s32, 0
      %p178 = por %p176, %p177
      %p179 = scmp.ne.s32.totalorder %s171, %s173
      %p180 = scmp.eq.s32.totalorder %s37, 1
      %p181 = por %p179, %p180
      %p182 = scmp.ne.s32.totalorder %s173, %s174
      %p183 = scmp.eq.s32.totalorder %s37, 0
      %p184 = por %p182, %p183
      %p185 = scmp.ne.s32.totalorder %s173, %s174
      %p186 = scmp.eq.s32.totalorder %s38, 1
      %p187 = por %p185, %p186
      %p189 = scmp.ne.s32.totalorder %s174, %s188
      %p190 = scmp.eq.s32.totalorder %s38, 0
      %p191 = por %p189, %p190
      %s193 = sadd.s32 %s192, 1
      %p196 = scmp.eq.s32.totalorder %s32, 1
      %p197 = scmp.ne.s32.totalorder %s192, %s194
      %p198 = scmp.eq.s32.totalorder %s32, 0
      %p199 = por %p197, %p198
      %p200 = scmp.ne.s32.totalorder %s192, %s194
      %p201 = scmp.eq.s32.totalorder %s37, 1
      %p202 = por %p200, %p201
      %p203 = scmp.ne.s32.totalorder %s194, %s195
      %p204 = scmp.eq.s32.totalorder %s37, 0
      %p205 = por %p203, %p204
      %p206 = scmp.ne.s32.totalorder %s194, %s195
      %p207 = scmp.eq.s32.totalorder %s38, 1
      %p208 = por %p206, %p207
      %p210 = scmp.ne.s32.totalorder %s195, %s209
      %p211 = scmp.eq.s32.totalorder %s38, 0
      %p212 = por %p210, %p211
      %s214 = sadd.s32 %s213, 1
      %p217 = scmp.eq.s32.totalorder %s32, 1
      %p218 = scmp.ne.s32.totalorder %s213, %s215
      %p219 = scmp.eq.s32.totalorder %s32, 0
      %p220 = por %p218, %p219
      %p221 = scmp.ne.s32.totalorder %s213, %s215
      %p222 = scmp.eq.s32.totalorder %s37, 1
      %p223 = por %p221, %p222
      %p224 = scmp.ne.s32.totalorder %s215, %s216
      %p225 = scmp.eq.s32.totalorder %s37, 0
      %p226 = por %p224, %p225
      %p227 = scmp.ne.s32.totalorder %s215, %s216
      %p228 = scmp.eq.s32.totalorder %s38, 1
      %p229 = por %p227, %p228
      %p231 = scmp.ne.s32.totalorder %s216, %s230
      %p232 = scmp.eq.s32.totalorder %s38, 0
      %p233 = por %p231, %p232
      %s235 = sadd.s32 %s234, 1
      %p238 = scmp.eq.s32.totalorder %s32, 1
      %p239 = scmp.ne.s32.totalorder %s234, %s236
      %p240 = scmp.eq.s32.totalorder %s32, 0
      %p241 = por %p239, %p240
      %p242 = scmp.ne.s32.totalorder %s234, %s236
      %p243 = scmp.eq.s32.totalorder %s37, 1
      %p244 = por %p242, %p243
      %p245 = scmp.ne.s32.totalorder %s236, %s237
      %p246 = scmp.eq.s32.totalorder %s37, 0
      %p247 = por %p245, %p246
      %p248 = scmp.ne.s32.totalorder %s236, %s237
      %p249 = scmp.eq.s32.totalorder %s38, 1
      %p250 = por %p248, %p249
      %p252 = scmp.ne.s32.totalorder %s237, %s251
      %p253 = scmp.eq.s32.totalorder %s38, 0
      %p254 = por %p252, %p253
      %s256 = sadd.s32 %s255, 1
      %p259 = scmp.eq.s32.totalorder %s32, 1
      %p260 = scmp.ne.s32.totalorder %s255, %s257
      %p261 = scmp.eq.s32.totalorder %s32, 0
      %p262 = por %p260, %p261
      %p263 = scmp.ne.s32.totalorder %s255, %s257
      %p264 = scmp.eq.s32.totalorder %s37, 1
      %p265 = por %p263, %p264
      %p266 = scmp.ne.s32.totalorder %s257, %s258
      %p267 = scmp.eq.s32.totalorder %s37, 0
      %p268 = por %p266, %p267
      %p269 = scmp.ne.s32.totalorder %s257, %s258
      %p270 = scmp.eq.s32.totalorder %s38, 1
      %p271 = por %p269, %p270
      %p273 = scmp.ne.s32.totalorder %s258, %s272
      %p274 = scmp.eq.s32.totalorder %s38, 0
      %p275 = por %p273, %p274
      %s277 = sadd.s32 %s276, 1
      %p280 = scmp.eq.s32.totalorder %s32, 1
      %p281 = scmp.ne.s32.totalorder %s276, %s278
      %p282 = scmp.eq.s32.totalorder %s32, 0
      %p283 = por %p281, %p282
      %p284 = scmp.ne.s32.totalorder %s276, %s278
      %p285 = scmp.eq.s32.totalorder %s37, 1
      %p286 = por %p284, %p285
      %p287 = scmp.ne.s32.totalorder %s278, %s279
      %p288 = scmp.eq.s32.totalorder %s37, 0
      %p289 = por %p287, %p288
      %p290 = scmp.ne.s32.totalorder %s278, %s279
      %p291 = scmp.eq.s32.totalorder %s38, 1
      %p292 = por %p290, %p291
      %p294 = scmp.ne.s32.totalorder %s279, %s293
      %p295 = scmp.eq.s32.totalorder %s38, 0
      %p296 = por %p294, %p295
      %s298 = sadd.s32 %s297, 1
      %p301 = scmp.eq.s32.totalorder %s32, 1
      %p302 = scmp.ne.s32.totalorder %s297, %s299
      %p303 = scmp.eq.s32.totalorder %s32, 0
      %p304 = por %p302, %p303
      %p305 = scmp.ne.s32.totalorder %s297, %s299
      %p306 = scmp.eq.s32.totalorder %s37, 1
      %p307 = por %p305, %p306
      %p308 = scmp.ne.s32.totalorder %s299, %s300
      %p309 = scmp.eq.s32.totalorder %s37, 0
      %p310 = por %p308, %p309
      %p311 = scmp.ne.s32.totalorder %s299, %s300
      %p312 = scmp.eq.s32.totalorder %s38, 1
      %p313 = por %p311, %p312
      %p315 = scmp.ne.s32.totalorder %s300, %s314
      %p316 = scmp.eq.s32.totalorder %s38, 0
      %p317 = por %p315, %p316
      %s319 = sadd.s32 %s318, 1
      %p322 = scmp.eq.s32.totalorder %s32, 1
      %p323 = scmp.ne.s32.totalorder %s318, %s320
      %p324 = scmp.eq.s32.totalorder %s32, 0
      %p325 = por %p323, %p324
      %p326 = scmp.ne.s32.totalorder %s318, %s320
      %p327 = scmp.eq.s32.totalorder %s37, 1
      %p328 = por %p326, %p327
      %p329 = scmp.ne.s32.totalorder %s320, %s321
      %p330 = scmp.eq.s32.totalorder %s37, 0
      %p331 = por %p329, %p330
      %p332 = scmp.ne.s32.totalorder %s320, %s321
      %p333 = scmp.eq.s32.totalorder %s38, 1
      %p334 = por %p332, %p333
      %p336 = scmp.ne.s32.totalorder %s321, %s335
      %p337 = scmp.eq.s32.totalorder %s38, 0
      %p338 = por %p336, %p337
      %s340 = sadd.s32 %s339, 1
      %p343 = scmp.eq.s32.totalorder %s32, 1
      %p344 = scmp.ne.s32.totalorder %s339, %s341
      %p345 = scmp.eq.s32.totalorder %s32, 0
      %p346 = por %p344, %p345
      %p347 = scmp.ne.s32.totalorder %s339, %s341
      %p348 = scmp.eq.s32.totalorder %s37, 1
      %p349 = por %p347, %p348
      %p350 = scmp.ne.s32.totalorder %s341, %s342
      %p351 = scmp.eq.s32.totalorder %s37, 0
      %p352 = por %p350, %p351
      %p353 = scmp.ne.s32.totalorder %s341, %s342
      %p354 = scmp.eq.s32.totalorder %s38, 1
      %p355 = por %p353, %p354
      %p357 = scmp.ne.s32.totalorder %s342, %s356
      %p358 = scmp.eq.s32.totalorder %s38, 0
      %p359 = por %p357, %p358
      %s361 = sadd.s32 %s360, 1
      %p364 = scmp.eq.s32.totalorder %s32, 1
      %p365 = scmp.ne.s32.totalorder %s360, %s362
      %p366 = scmp.eq.s32.totalorder %s32, 0
      %p367 = por %p365, %p366
      %p368 = scmp.ne.s32.totalorder %s360, %s362
      %p369 = scmp.eq.s32.totalorder %s37, 1
      %p370 = por %p368, %p369
      %p371 = scmp.ne.s32.totalorder %s362, %s363
      %p372 = scmp.eq.s32.totalorder %s37, 0
      %p373 = por %p371, %p372
      %p374 = scmp.ne.s32.totalorder %s362, %s363
      %p375 = scmp.eq.s32.totalorder %s38, 1
      %p376 = por %p374, %p375
      %p378 = scmp.ne.s32.totalorder %s363, %s377
      %p379 = scmp.eq.s32.totalorder %s38, 0
      %p380 = por %p378, %p379
      %s382 = sadd.s32 %s381, 1
      %p385 = scmp.eq.s32.totalorder %s32, 1
      %p386 = scmp.ne.s32.totalorder %s381, %s383
      %p387 = scmp.eq.s32.totalorder %s32, 0
      %p388 = por %p386, %p387
      %p389 = scmp.ne.s32.totalorder %s381, %s383
      %p390 = scmp.eq.s32.totalorder %s37, 1
      %p391 = por %p389, %p390
      %p392 = scmp.ne.s32.totalorder %s383, %s384
      %p393 = scmp.eq.s32.totalorder %s37, 0
      %p394 = por %p392, %p393
      %p395 = scmp.ne.s32.totalorder %s383, %s384
      %p396 = scmp.eq.s32.totalorder %s38, 1
      %p397 = por %p395, %p396
      %p399 = scmp.ne.s32.totalorder %s384, %s398
      %p400 = scmp.eq.s32.totalorder %s38, 0
      %p401 = por %p399, %p400
      %s403 = sadd.s32 %s402, 1
      %p406 = scmp.eq.s32.totalorder %s32, 1
      %p407 = scmp.ne.s32.totalorder %s402, %s404
      %p408 = scmp.eq.s32.totalorder %s32, 0
      %p409 = por %p407, %p408
      %p410 = scmp.ne.s32.totalorder %s402, %s404
      %p411 = scmp.eq.s32.totalorder %s37, 1
      %p412 = por %p410, %p411
      %p413 = scmp.ne.s32.totalorder %s404, %s405
      %p414 = scmp.eq.s32.totalorder %s37, 0
      %p415 = por %p413, %p414
      %p416 = scmp.ne.s32.totalorder %s404, %s405
      %p417 = scmp.eq.s32.totalorder %s38, 1
      %p418 = por %p416, %p417
      %p420 = scmp.ne.s32.totalorder %s405, %s419
      %p421 = scmp.eq.s32.totalorder %s38, 0
      %p422 = por %p420, %p421
      %s424 = sadd.s32 %s423, 1
      %p427 = scmp.eq.s32.totalorder %s32, 1
      %p428 = scmp.ne.s32.totalorder %s423, %s425
      %p429 = scmp.eq.s32.totalorder %s32, 0
      %p430 = por %p428, %p429
      %p431 = scmp.ne.s32.totalorder %s423, %s425
      %p432 = scmp.eq.s32.totalorder %s37, 1
      %p433 = por %p431, %p432
      %p434 = scmp.ne.s32.totalorder %s425, %s426
      %p435 = scmp.eq.s32.totalorder %s37, 0
      %p436 = por %p434, %p435
      %p437 = scmp.ne.s32.totalorder %s425, %s426
      %p438 = scmp.eq.s32.totalorder %s38, 1
      %p439 = por %p437, %p438
      %p441 = scmp.ne.s32.totalorder %s426, %s440
      %p442 = scmp.eq.s32.totalorder %s38, 0
      %p443 = por %p441, %p442
      %s444 = ssub.s32 %s32, %s39
      %p445 = scmp.eq.s32.totalorder %s444, 0
      %s447 = sadd.s32 %s446, 1
      %s448 = scalar_select %p445, %s446, %s447
      %p451 = pneg %p445
      %p452 = scmp.eq.s32.totalorder %s32, 1
      %p453 = por %p451, %p452
      %p454 = scmp.ne.s32.totalorder %s446, %s449
      %p455 = scmp.eq.s32.totalorder %s32, 0
      %p456 = por %p454, %p455
      %p457 = scmp.ne.s32.totalorder %s446, %s449
      %p458 = scmp.eq.s32.totalorder %s37, 1
      %p459 = por %p457, %p458
      %p460 = scmp.ne.s32.totalorder %s449, %s450
      %p461 = scmp.eq.s32.totalorder %s37, 0
      %p462 = por %p460, %p461
      %p463 = scmp.ne.s32.totalorder %s449, %s450
      %p464 = scmp.eq.s32.totalorder %s38, 1
      %p465 = por %p463, %p464
      %p467 = scmp.ne.s32.totalorder %s450, %s466
      %p468 = scmp.eq.s32.totalorder %s38, 0
      %p469 = por %p467, %p468
      %p470 = scmp.le.s32.totalorder 1, %s32
      %p471 = scmp.lt.s32.totalorder %s32, 3
      %p472 = pnand %p470, %p471
      %p473 = pneg %p472
      // Predicated region
      $region9: #{tpu_custom_call.1} parent=5 // pred_check
        _
      $region10: #{tpu_custom_call.1} parent=5 // pred_check_branch
        %475 = sbr.rel (%p472) target = $region12
      $region11: #{tpu_custom_call.1} parent=5 // pred_region
        %s476 = ssub.s32 %s32, 1
        // Predicated region
        $region13: #{tpu_custom_call.1} parent=11 // pred_check
          %p477 = pneg %p79
        $region14: #{tpu_custom_call.1} parent=11 // pred_check_branch
          %479 = sbr.rel (%p477) target = $region16
        $region15: #{tpu_custom_call.1} parent=11 // pred_region
          %s481 = ssub.s32 256, 256
          %482 = vsyncadd [#allocation6], %s481
          %s483 = sshll.u32 [#allocation5], 4
          %s484 = int_to_ptr.vmem [resolvable:$true] %s483
          %489 = dma.hbm_to_vmem [thread:$0]  %s1, 256, %s484, [#allocation6], 128, 128, 8
        $region16: #{tpu_custom_call.1} parent=11 // pred_fallthru
          _
        // Predicated region
        $region17: #{tpu_custom_call.1} parent=11 // pred_check
          %p490 = pneg %p100
        $region18: #{tpu_custom_call.1} parent=11 // pred_check_branch
          %492 = sbr.rel (%p490) target = $region20
        $region19: #{tpu_custom_call.1} parent=11 // pred_region
          _
        $region20: #{tpu_custom_call.1} parent=11 // pred_fallthru
          _
        // Predicated region
        $region21: #{tpu_custom_call.1} parent=11 // pred_check
          %p493 = pneg %p121
        $region22: #{tpu_custom_call.1} parent=11 // pred_check_branch
          %495 = sbr.rel (%p493) target = $region24
        $region23: #{tpu_custom_call.1} parent=11 // pred_region
          _
        $region24: #{tpu_custom_call.1} parent=11 // pred_fallthru
          _
        // Predicated region
        $region25: #{tpu_custom_call.1} parent=11 // pred_check
          %p496 = pneg %p142
        $region26: #{tpu_custom_call.1} parent=11 // pred_check_branch
          %498 = sbr.rel (%p496) target = $region28
        $region27: #{tpu_custom_call.1} parent=11 // pred_region
          _
        $region28: #{tpu_custom_call.1} parent=11 // pred_fallthru
          _
        // Predicated region
        $region29: #{tpu_custom_call.1} parent=11 // pred_check
          %p499 = pneg %p163
        $region30: #{tpu_custom_call.1} parent=11 // pred_check_branch
          %501 = sbr.rel (%p499) target = $region32
        $region31: #{tpu_custom_call.1} parent=11 // pred_region
          %s503 = ssub.s32 64, 64
          %504 = vsyncadd [#allocation8], %s503
          %s506 = sshll.u32 [#allocation7], 4
          %s507 = int_to_ptr.vmem [resolvable:$true] %s506
          %509 = dma.hbm_to_vmem [thread:$0]  %s5, 64, %s507, [#allocation8]
        $region32: #{tpu_custom_call.1} parent=11 // pred_fallthru
          _
        // Predicated region
        $region33: #{tpu_custom_call.1} parent=11 // pred_check
          %p510 = pneg %p184
        $region34: #{tpu_custom_call.1} parent=11 // pred_check_branch
          %512 = sbr.rel (%p510) target = $region36
        $region35: #{tpu_custom_call.1} parent=11 // pred_region
          %s514 = ssub.s32 1024, 1024
          %515 = vsyncadd [#allocation8], %s514
          %s516 = sshll.u32 [#allocation9], 4
          %s517 = int_to_ptr.vmem [resolvable:$true] %s516
          %522 = dma.hbm_to_vmem [thread:$0]  %s6, 1024, %s517, [#allocation8], 64, 64, 4
        $region36: #{tpu_custom_call.1} parent=11 // pred_fallthru
          _
        // Predicated region
        $region37: #{tpu_custom_call.1} parent=11 // pred_check
          %p523 = pneg %p205
        $region38: #{tpu_custom_call.1} parent=11 // pred_check_branch
          %525 = sbr.rel (%p523) target = $region40
        $region39: #{tpu_custom_call.1} parent=11 // pred_region
          %s527 = ssub.s32 16, 16
          %528 = vsyncadd [#allocation11], %s527
          %s530 = sshll.u32 [#allocation10], 4
          %s531 = int_to_ptr.vmem [resolvable:$true] %s530
          %533 = dma.hbm_to_vmem [thread:$0]  %s7, 16, %s531, [#allocation11]
        $region40: #{tpu_custom_call.1} parent=11 // pred_fallthru
          _
        // Predicated region
        $region41: #{tpu_custom_call.1} parent=11 // pred_check
          %p534 = pneg %p226
        $region42: #{tpu_custom_call.1} parent=11 // pred_check_branch
          %536 = sbr.rel (%p534) target = $region44
        $region43: #{tpu_custom_call.1} parent=11 // pred_region
          %s538 = ssub.s32 1024, 1024
          %539 = vsyncadd [#allocation11], %s538
          %s540 = sshll.u32 [#allocation12], 4
          %s541 = int_to_ptr.vmem [resolvable:$true] %s540
          %546 = dma.hbm_to_vmem [thread:$0]  %s8, 1024, %s541, [#allocation11], 64, 64, 4
        $region44: #{tpu_custom_call.1} parent=11 // pred_fallthru
          _
        // Predicated region
        $region45: #{tpu_custom_call.1} parent=11 // pred_check
          %p547 = pneg %p247
        $region46: #{tpu_custom_call.1} parent=11 // pred_check_branch
          %549 = sbr.rel (%p547) target = $region48
        $region47: #{tpu_custom_call.1} parent=11 // pred_region
          %s551 = ssub.s32 16, 16
          %552 = vsyncadd [#allocation14], %s551
          %s554 = sshll.u32 [#allocation13], 4
          %s555 = int_to_ptr.vmem [resolvable:$true] %s554
          %557 = dma.hbm_to_vmem [thread:$0]  %s9, 16, %s555, [#allocation14]
        $region48: #{tpu_custom_call.1} parent=11 // pred_fallthru
          _
        // Predicated region
        $region49: #{tpu_custom_call.1} parent=11 // pred_check
          %p558 = pneg %p268
        $region50: #{tpu_custom_call.1} parent=11 // pred_check_branch
          %560 = sbr.rel (%p558) target = $region52
        $region51: #{tpu_custom_call.1} parent=11 // pred_region
          _
        $region52: #{tpu_custom_call.1} parent=11 // pred_fallthru
          _
        // Predicated region
        $region53: #{tpu_custom_call.1} parent=11 // pred_check
          %p561 = pneg %p289
        $region54: #{tpu_custom_call.1} parent=11 // pred_check_branch
          %563 = sbr.rel (%p561) target = $region56
        $region55: #{tpu_custom_call.1} parent=11 // pred_region
          %s565 = ssub.s32 16, 16
          %566 = vsyncadd [#allocation14], %s565
          %s568 = sshll.u32 [#allocation15], 4
          %s569 = int_to_ptr.vmem [resolvable:$true] %s568
          %571 = dma.hbm_to_vmem [thread:$0]  %s11, 16, %s569, [#allocation14]
        $region56: #{tpu_custom_call.1} parent=11 // pred_fallthru
          _
        // Predicated region
        $region57: #{tpu_custom_call.1} parent=11 // pred_check
          %p572 = pneg %p310
        $region58: #{tpu_custom_call.1} parent=11 // pred_check_branch
          %574 = sbr.rel (%p572) target = $region60
        $region59: #{tpu_custom_call.1} parent=11 // pred_region
          %s576 = ssub.s32 1024, 1024
          %577 = vsyncadd [#allocation17], %s576
          %s578 = sshll.u32 [#allocation16], 4
          %s579 = int_to_ptr.vmem [resolvable:$true] %s578
          %584 = dma.hbm_to_vmem [thread:$0]  %s12, 1024, %s579, [#allocation17], 64, 64, 4
        $region60: #{tpu_custom_call.1} parent=11 // pred_fallthru
          _
        // Predicated region
        $region61: #{tpu_custom_call.1} parent=11 // pred_check
          %p585 = pneg %p331
        $region62: #{tpu_custom_call.1} parent=11 // pred_check_branch
          %587 = sbr.rel (%p585) target = $region64
        $region63: #{tpu_custom_call.1} parent=11 // pred_region
          _
        $region64: #{tpu_custom_call.1} parent=11 // pred_fallthru
          _
        // Predicated region
        $region65: #{tpu_custom_call.1} parent=11 // pred_check
          %p588 = pneg %p352
        $region66: #{tpu_custom_call.1} parent=11 // pred_check_branch
          %590 = sbr.rel (%p588) target = $region68
        $region67: #{tpu_custom_call.1} parent=11 // pred_region
          _
        $region68: #{tpu_custom_call.1} parent=11 // pred_fallthru
          _
        // Predicated region
        $region69: #{tpu_custom_call.1} parent=11 // pred_check
          %p591 = pneg %p373
        $region70: #{tpu_custom_call.1} parent=11 // pred_check_branch
          %593 = sbr.rel (%p591) target = $region72
        $region71: #{tpu_custom_call.1} parent=11 // pred_region
          _
        $region72: #{tpu_custom_call.1} parent=11 // pred_fallthru
          _
        // Predicated region
        $region73: #{tpu_custom_call.1} parent=11 // pred_check
          %p594 = pneg %p394
        $region74: #{tpu_custom_call.1} parent=11 // pred_check_branch
          %596 = sbr.rel (%p594) target = $region76
        $region75: #{tpu_custom_call.1} parent=11 // pred_region
          _
        $region76: #{tpu_custom_call.1} parent=11 // pred_fallthru
          _
        // Predicated region
        $region77: #{tpu_custom_call.1} parent=11 // pred_check
          %p597 = pneg %p415
        $region78: #{tpu_custom_call.1} parent=11 // pred_check_branch
          %599 = sbr.rel (%p597) target = $region80
        $region79: #{tpu_custom_call.1} parent=11 // pred_region
          _
        $region80: #{tpu_custom_call.1} parent=11 // pred_fallthru
          _
        // Predicated region
        $region81: #{tpu_custom_call.1} parent=11 // pred_check
          %p600 = pneg %p436
        $region82: #{tpu_custom_call.1} parent=11 // pred_check_branch
          %602 = sbr.rel (%p600) target = $region84
        $region83: #{tpu_custom_call.1} parent=11 // pred_region
          _
        $region84: #{tpu_custom_call.1} parent=11 // pred_fallthru
          _
      $region12: #{tpu_custom_call.1} parent=5 // pred_fallthru
        _
      %p603 = scmp.lt.s32.totalorder %s32, 2
      // Predicated region
      $region85: #{tpu_custom_call.1} parent=5 // pred_check
        %p604 = pneg %p603
      $region86: #{tpu_custom_call.1} parent=5 // pred_check_branch
        %606 = sbr.rel (%p604) target = $region88
      $region87: #{tpu_custom_call.1} parent=5 // pred_region
        // Predicated region
        $region89: #{tpu_custom_call.1} parent=87 // pred_check
          %p607 = pneg %p52
        $region90: #{tpu_custom_call.1} parent=87 // pred_check_branch
          %609 = sbr.rel (%p607) target = $region92
        $region91: #{tpu_custom_call.1} parent=87 // pred_region
          %p610 = scmp.lt.s32.totalorder %s32, 1
          %s611 = scalar_select %p610, %s32, 1
          %s612 = smul.addr %s611, 16
          %s613 = smul.addr %s612, 8
          %s614 = scalar_lea.vmem %s0, %s613
        $region92: #{tpu_custom_call.1} parent=87 // pred_fallthru
          _
      $region88: #{tpu_custom_call.1} parent=5 // pred_fallthru
        _
      %p615 = scmp.le.s32.totalorder 1, %s32
      %p616 = scmp.lt.s32.totalorder %s32, 3
      %p617 = pnand %p615, %p616
      %p618 = pneg %p617
      // Predicated region
      $region93: #{tpu_custom_call.1} parent=5 // pred_check
        _
      $region94: #{tpu_custom_call.1} parent=5 // pred_check_branch
        %620 = sbr.rel (%p617) target = $region96
      $region95: #{tpu_custom_call.1} parent=5 // pred_region
        %s621 = ssub.s32 %s32, 1
        // Predicated region
        $region97: #{tpu_custom_call.1} parent=95 // pred_check
          %p622 = pneg %p79
        $region98: #{tpu_custom_call.1} parent=95 // pred_check_branch
          %624 = sbr.rel (%p622) target = $region100
        $region99: #{tpu_custom_call.1} parent=95 // pred_region
          %625 = dma.done [#allocation6], 256
        $region100: #{tpu_custom_call.1} parent=95 // pred_fallthru
          _
        // Predicated region
        $region101: #{tpu_custom_call.1} parent=95 // pred_check
          %p626 = pneg %p163
        $region102: #{tpu_custom_call.1} parent=95 // pred_check_branch
          %628 = sbr.rel (%p626) target = $region104
        $region103: #{tpu_custom_call.1} parent=95 // pred_region
          %629 = dma.done [#allocation8], 64
        $region104: #{tpu_custom_call.1} parent=95 // pred_fallthru
          _
        // Predicated region
        $region105: #{tpu_custom_call.1} parent=95 // pred_check
          %p630 = pneg %p184
        $region106: #{tpu_custom_call.1} parent=95 // pred_check_branch
          %632 = sbr.rel (%p630) target = $region108
        $region107: #{tpu_custom_call.1} parent=95 // pred_region
          %633 = dma.done [#allocation8], 1024
        $region108: #{tpu_custom_call.1} parent=95 // pred_fallthru
          _
        // Predicated region
        $region109: #{tpu_custom_call.1} parent=95 // pred_check
          %p634 = pneg %p205
        $region110: #{tpu_custom_call.1} parent=95 // pred_check_branch
          %636 = sbr.rel (%p634) target = $region112
        $region111: #{tpu_custom_call.1} parent=95 // pred_region
          %637 = dma.done [#allocation11], 16
        $region112: #{tpu_custom_call.1} parent=95 // pred_fallthru
          _
        // Predicated region
        $region113: #{tpu_custom_call.1} parent=95 // pred_check
          %p638 = pneg %p226
        $region114: #{tpu_custom_call.1} parent=95 // pred_check_branch
          %640 = sbr.rel (%p638) target = $region116
        $region115: #{tpu_custom_call.1} parent=95 // pred_region
          %641 = dma.done [#allocation11], 1024
        $region116: #{tpu_custom_call.1} parent=95 // pred_fallthru
          _
        // Predicated region
        $region117: #{tpu_custom_call.1} parent=95 // pred_check
          %p642 = pneg %p247
        $region118: #{tpu_custom_call.1} parent=95 // pred_check_branch
          %644 = sbr.rel (%p642) target = $region120
        $region119: #{tpu_custom_call.1} parent=95 // pred_region
          %645 = dma.done [#allocation14], 16
        $region120: #{tpu_custom_call.1} parent=95 // pred_fallthru
          _
        // Predicated region
        $region121: #{tpu_custom_call.1} parent=95 // pred_check
          %p646 = pneg %p289
        $region122: #{tpu_custom_call.1} parent=95 // pred_check_branch
          %648 = sbr.rel (%p646) target = $region124
        $region123: #{tpu_custom_call.1} parent=95 // pred_region
          %649 = dma.done [#allocation14], 16
        $region124: #{tpu_custom_call.1} parent=95 // pred_fallthru
          _
        // Predicated region
        $region125: #{tpu_custom_call.1} parent=95 // pred_check
          %p650 = pneg %p310
        $region126: #{tpu_custom_call.1} parent=95 // pred_check_branch
          %652 = sbr.rel (%p650) target = $region128
        $region127: #{tpu_custom_call.1} parent=95 // pred_region
          %653 = dma.done [#allocation17], 1024
        $region128: #{tpu_custom_call.1} parent=95 // pred_fallthru
          _
        %p654 = scmp.lt.s32.totalorder %s37, 1
        %s655 = scalar_select %p654, %s37, 1
        %s656 = smul.addr %s655, 16
        %s657 = smul.addr %s656, 8
        %s658 = scalar_lea.vmem %s0, %s657
        %p659 = pneg %p58
        %p660 = pneg %p55
        %p661 = pneg %p79
        %p662 = pneg %p76
        %p663 = pneg %p100
        %p664 = pneg %p97
        %p665 = pneg %p121
        %p666 = pneg %p118
        %p667 = pneg %p142
        %p668 = pneg %p139
        %p669 = pneg %p163
        %p670 = pneg %p160
        %p671 = pneg %p184
        %p672 = pneg %p181
        %p673 = pneg %p205
        %p674 = pneg %p202
        %p675 = pneg %p226
        %p676 = pneg %p223
        %p677 = pneg %p247
        %p678 = pneg %p244
        %p679 = pneg %p268
        %p680 = pneg %p265
        %p681 = pneg %p289
        %p682 = pneg %p286
        %p683 = pneg %p310
        %p684 = pneg %p307
        %p685 = pneg %p331
        %p686 = pneg %p328
        %p687 = pneg %p352
        %p688 = pneg %p349
        %p689 = pneg %p373
        %p690 = pneg %p370
        %p691 = pneg %p394
        %p692 = pneg %p391
        %p693 = pneg %p415
        %p694 = pneg %p412
        %p695 = pneg %p436
        %p696 = pneg %p433
        %p697 = pneg %p462
        %p698 = pneg %p459
        %p699 = scmp.lt.s32.totalorder %s37, 1
        %s700 = scalar_select %p699, %s37, 1
        %s701 = smul.addr %s700, 8
        %s702 = scalar_lea.vmem %s19, %s701
        %p703 = scmp.lt.s32.totalorder %s37, 1
        %s704 = scalar_select %p703, %s37, 1
        %s705 = smul.addr %s704, 16
        %s706 = smul.addr %s705, 8
        %s707 = scalar_lea.vmem %s0, %s706
        %p708 = scmp.lt.s32.totalorder %s37, 1
        %s709 = scalar_select %p708, %s37, 1
        %s710 = smul.addr %s709, 8
        %s711 = scalar_lea.vmem %s19, %s710
        %v713 = vld [vmem:[%s707] sm:$0xff]
        %v714 = vld [vmem:[%s707 + $0x8] sm:$0xff]
        %v715 = vld [vmem:[%s707 + $0x10] sm:$0xff]
        %v716 = vld [vmem:[%s707 + $0x18] sm:$0xff]
        %v717 = vld [vmem:[%s707 + $0x20] sm:$0xff]
        %v718 = vld [vmem:[%s707 + $0x28] sm:$0xff]
        %v719 = vld [vmem:[%s707 + $0x30] sm:$0xff]
        %v720 = vld [vmem:[%s707 + $0x38] sm:$0xff]
        %v721 = vld [vmem:[%s707 + $0x40] sm:$0xff]
        %v722 = vld [vmem:[%s707 + $0x48] sm:$0xff]
        %v723 = vld [vmem:[%s707 + $0x50] sm:$0xff]
        %v724 = vld [vmem:[%s707 + $0x58] sm:$0xff]
        %v725 = vld [vmem:[%s707 + $0x60] sm:$0xff]
        %v726 = vld [vmem:[%s707 + $0x68] sm:$0xff]
        %v727 = vld [vmem:[%s707 + $0x70] sm:$0xff]
        %v728 = vld [vmem:[%s707 + $0x78] sm:$0xff]
        %v729 = vld [vmem:[#allocation5] sm:$0xff]
        %v730 = vld [vmem:[#allocation5 + $0x8] sm:$0xf]
        %v731 = vld [vmem:[%s2] sm:$0x1]
        %v733 = vlaneseq
        %v734 = vshrl.u32 %v733, 7
        %v735 = vsub.s32 0, %v734
        %v736 = vrot.slane %v731, %v735
        %vm738 = vcmask 97280
        %v740 = vsel %vm738, %v713, 0
        %v743 = vsel %vm738, %v714, 0
        %v746 = vsel %vm738, %v715, 0
        %v749 = vsel %vm738, %v716, 0
        %v752 = vsel %vm738, %v717, 0
        %v755 = vsel %vm738, %v718, 0
        %v758 = vsel %vm738, %v719, 0
        %v761 = vsel %vm738, %v720, 0
        %v764 = vsel %vm738, %v721, 0
        %v767 = vsel %vm738, %v722, 0
        %v770 = vsel %vm738, %v723, 0
        %v773 = vsel %vm738, %v724, 0
        %v776 = vsel %vm738, %v725, 0
        %v779 = vsel %vm738, %v726, 0
        %v782 = vsel %vm738, %v727, 0
        %v785 = vsel %vm738, %v728, 0
        %vm787 = vcmask 1043456
        %v789 = vsel %vm787, %v730, 0
        %791 = vmatprep.subr.mxu0 0.0
        %792 = vmatpush1.msra.mxu0 %v729
        %793 = vmatprep.subr.mxu0 0.0
        %794 = vmatpush1.msra.mxu0 %v789
        %795 = vmatprep.subr.mxu0 0.0
        %796 = vmatpush1.msra.mxu0 0.0
        %797 = vmatprep.subr.mxu0 0.0
        %798 = vmatpush1.msra.mxu0 0.0
        %799 = vmatprep.subr.mxu0 0.0
        %800 = vmatpush1.msra.mxu0 0.0
        %801 = vmatprep.subr.mxu0 0.0
        %802 = vmatpush1.msra.mxu0 0.0
        %803 = vmatprep.subr.mxu0 0.0
        %804 = vmatpush1.msra.mxu0 0.0
        %805 = vmatprep.subr.mxu0 0.0
        %806 = vmatpush1.msra.mxu0 0.0
        %807 = vmatprep.subr.mxu0 0.0
        %808 = vmatpush1.msra.mxu0 0.0
        %809 = vmatprep.subr.mxu0 0.0
        %810 = vmatpush1.msra.mxu0 0.0
        %811 = vmatprep.subr.mxu0 0.0
        %812 = vmatpush1.msra.mxu0 0.0
        %813 = vmatprep.subr.mxu0 0.0
        %814 = vmatpush1.msra.mxu0 0.0
        %815 = vmatprep.subr.mxu0 0.0
        %816 = vmatpush1.msra.mxu0 0.0
        %817 = vmatprep.subr.mxu0 0.0
        %818 = vmatpush1.msra.mxu0 0.0
        %819 = vmatprep.subr.mxu0 0.0
        %820 = vmatpush1.msra.mxu0 0.0
        %821 = vmatprep.subr.mxu0 0.0
        %822 = vmatpush1.msra.mxu0 0.0
        %823 = vmatprep.subr.mxu0 0.0
        %824 = vmatpush1.msra.mxu0 0.0
        %825 = vmatprep.subr.mxu0 0.0
        %826 = vmatpush1.msra.mxu0 0.0
        %827 = vmatprep.subr.mxu0 0.0
        %828 = vmatpush1.msra.mxu0 0.0
        %829 = vmatprep.subr.mxu0 0.0
        %830 = vmatpush1.msra.mxu0 0.0
        %831 = vmatprep.subr.mxu0 0.0
        %832 = vmatpush1.msra.mxu0 0.0
        %833 = vmatprep.subr.mxu0 0.0
        %834 = vmatpush1.msra.mxu0 0.0
        %835 = vmatprep.subr.mxu0 0.0
        %836 = vmatpush1.msra.mxu0 0.0
        %837 = vmatprep.subr.mxu0 0.0
        %838 = vmatpush1.msra.mxu0 0.0
        %839 = vmatprep.subr.mxu0 0.0
        %840 = vmatpush1.msra.mxu0 0.0
        %841 = vmatprep.subr.mxu0 0.0
        %842 = vmatpush1.msra.mxu0 0.0
        %843 = vmatprep.subr.mxu0 0.0
        %844 = vmatpush1.msra.mxu0 0.0
        %845 = vmatprep.subr.mxu0 0.0
        %846 = vmatpush1.msra.mxu0 0.0
        %847 = vmatprep.subr.mxu0 0.0
        %848 = vmatpush1.msra.mxu0 0.0
        %849 = vmatprep.subr.mxu0 0.0
        %850 = vmatpush1.msra.mxu0 0.0
        %851 = vmatprep.subr.mxu0 0.0
        %852 = vmatpush1.msra.mxu0 0.0
        %853 = vmatprep.subr.mxu0 0.0
        %854 = vmatpush1.msra.mxu0 0.0
        %855 = vmatprep.mubr.f32.mxu0 0.0
        %856 = vmatmul.mubr.f32.gmra.mrb[0].mxu0 %v740
        %v857 = vpop.f32.mrb[0].mxu0
        %v858 = vadd.f32 %v736, %v857
        %v859 = vpop.f32.mrb[0].mxu0
        %860 = vmatprep.mubr.f32.mxu0 0.0
        %861 = vmatmul.mubr.f32.gmra.mrb[0].mxu0 %v743
        %v862 = vpop.f32.mrb[0].mxu0
        %v863 = vadd.f32 %v736, %v862
        %v864 = vpop.f32.mrb[0].mxu0
        %865 = vmatprep.mubr.f32.mxu0 0.0
        %866 = vmatmul.mubr.f32.gmra.mrb[0].mxu0 %v746
        %v867 = vpop.f32.mrb[0].mxu0
        %v868 = vadd.f32 %v736, %v867
        %v869 = vpop.f32.mrb[0].mxu0
        %870 = vmatprep.mubr.f32.mxu0 0.0
        %871 = vmatmul.mubr.f32.gmra.mrb[0].mxu0 %v749
        %v872 = vpop.f32.mrb[0].mxu0
        %v873 = vadd.f32 %v736, %v872
        %v874 = vpop.f32.mrb[0].mxu0
        %875 = vmatprep.mubr.f32.mxu0 0.0
        %876 = vmatmul.mubr.f32.gmra.mrb[0].mxu0 %v752
        %v877 = vpop.f32.mrb[0].mxu0
        %v878 = vadd.f32 %v736, %v877
        %v879 = vpop.f32.mrb[0].mxu0
        %880 = vmatprep.mubr.f32.mxu0 0.0
        %881 = vmatmul.mubr.f32.gmra.mrb[0].mxu0 %v755
        %v882 = vpop.f32.mrb[0].mxu0
        %v883 = vadd.f32 %v736, %v882
        %v884 = vpop.f32.mrb[0].mxu0
        %885 = vmatprep.mubr.f32.mxu0 0.0
        %886 = vmatmul.mubr.f32.gmra.mrb[0].mxu0 %v758
        %v887 = vpop.f32.mrb[0].mxu0
        %v888 = vadd.f32 %v736, %v887
        %v889 = vpop.f32.mrb[0].mxu0
        %890 = vmatprep.mubr.f32.mxu0 0.0
        %891 = vmatmul.mubr.f32.gmra.mrb[0].mxu0 %v761
        %v892 = vpop.f32.mrb[0].mxu0
        %v893 = vadd.f32 %v736, %v892
        %v894 = vpop.f32.mrb[0].mxu0
        %895 = vmatprep.mubr.f32.mxu0 0.0
        %896 = vmatmul.mubr.f32.gmra.mrb[0].mxu0 %v764
        %v897 = vpop.f32.mrb[0].mxu0
        %v898 = vadd.f32 %v736, %v897
        %v899 = vpop.f32.mrb[0].mxu0
        %900 = vmatprep.mubr.f32.mxu0 0.0
        %901 = vmatmul.mubr.f32.gmra.mrb[0].mxu0 %v767
        %v902 = vpop.f32.mrb[0].mxu0
        %v903 = vadd.f32 %v736, %v902
        %v904 = vpop.f32.mrb[0].mxu0
        %905 = vmatprep.mubr.f32.mxu0 0.0
        %906 = vmatmul.mubr.f32.gmra.mrb[0].mxu0 %v770
        %v907 = vpop.f32.mrb[0].mxu0
        %v908 = vadd.f32 %v736, %v907
        %v909 = vpop.f32.mrb[0].mxu0
        %910 = vmatprep.mubr.f32.mxu0 0.0
        %911 = vmatmul.mubr.f32.gmra.mrb[0].mxu0 %v773
        %v912 = vpop.f32.mrb[0].mxu0
        %v913 = vadd.f32 %v736, %v912
        %v914 = vpop.f32.mrb[0].mxu0
        %915 = vmatprep.mubr.f32.mxu0 0.0
        %916 = vmatmul.mubr.f32.gmra.mrb[0].mxu0 %v776
        %v917 = vpop.f32.mrb[0].mxu0
        %v918 = vadd.f32 %v736, %v917
        %v919 = vpop.f32.mrb[0].mxu0
        %920 = vmatprep.mubr.f32.mxu0 0.0
        %921 = vmatmul.mubr.f32.gmra.mrb[0].mxu0 %v779
        %v922 = vpop.f32.mrb[0].mxu0
        %v923 = vadd.f32 %v736, %v922
        %v924 = vpop.f32.mrb[0].mxu0
        %925 = vmatprep.mubr.f32.mxu0 0.0
        %926 = vmatmul.mubr.f32.gmra.mrb[0].mxu0 %v782
        %v927 = vpop.f32.mrb[0].mxu0
        %v928 = vadd.f32 %v736, %v927
        %v929 = vpop.f32.mrb[0].mxu0
        %930 = vmatprep.mubr.f32.mxu0 0.0
        %931 = vmatmul.mubr.f32.gmra.mrb[0].mxu0 %v785
        %v932 = vpop.f32.mrb[0].mxu0
        %v933 = vadd.f32 %v736, %v932
        %v934 = vpop.f32.mrb[0].mxu0
        %935 = vdwg.mxu0
        %v936 = vmax.f32 %v858, 0.0
        %v937 = vmax.f32 %v863, 0.0
        %v938 = vmax.f32 %v868, 0.0
        %v939 = vmax.f32 %v873, 0.0
        %v940 = vmax.f32 %v878, 0.0
        %v941 = vmax.f32 %v883, 0.0
        %v942 = vmax.f32 %v888, 0.0
        %v943 = vmax.f32 %v893, 0.0
        %v944 = vmax.f32 %v898, 0.0
        %v945 = vmax.f32 %v903, 0.0
        %v946 = vmax.f32 %v908, 0.0
        %v947 = vmax.f32 %v913, 0.0
        %v948 = vmax.f32 %v918, 0.0
        %v949 = vmax.f32 %v923, 0.0
        %v950 = vmax.f32 %v928, 0.0
        %v951 = vmax.f32 %v933, 0.0
        %v952 = vmax.f32 %v936, %v937
        %v953 = vmax.f32 %v937, %v938
        %v954 = vmax.f32 %v938, %v939
        %v955 = vmax.f32 %v939, %v940
        %v956 = vmax.f32 %v940, %v941
        %v957 = vmax.f32 %v941, %v942
        %v958 = vmax.f32 %v942, %v943
        %v959 = vmax.f32 %v943, %v944
        %v960 = vmax.f32 %v944, %v945
        %v961 = vmax.f32 %v945, %v946
        %v962 = vmax.f32 %v946, %v947
        %v963 = vmax.f32 %v947, %v948
        %v964 = vmax.f32 %v948, %v949
        %v965 = vmax.f32 %v949, %v950
        %v966 = vmax.f32 %v950, %v951
        %v967 = vpack.c.bf16 %v953, %v952
        %v968 = vpack.c.bf16 %v955, %v954
        %v969 = vpack.c.bf16 %v957, %v956
        %v970 = vpack.c.bf16 %v959, %v958
        %v971 = vpack.c.bf16 %v961, %v960
        %v972 = vpack.c.bf16 %v963, %v962
        %v973 = vpack.c.bf16 %v965, %v964
        %v974 = vpack.c.bf16 %v966, %v966
        %v975 = vld [vmem:[%s3] sm:$0xff]
        %v976 = vld [vmem:[%s3 + $0x8] sm:$0xff]
        %v977 = vld [vmem:[%s3 + $0x10] sm:$0xff]
        %v978 = vld [vmem:[%s3 + $0x18] sm:$0xff]
        %v979 = vld [vmem:[%s3 + $0x20] sm:$0xff]
        %v980 = vld [vmem:[%s3 + $0x28] sm:$0xff]
        %v981 = vld [vmem:[%s3 + $0x30] sm:$0xff]
        %v982 = vld [vmem:[%s3 + $0x38] sm:$0xff]
        %v983 = vld [vmem:[%s3 + $0x40] sm:$0xff]
        %v984 = vld [vmem:[%s3 + $0x48] sm:$0xff]
        %v985 = vld [vmem:[%s3 + $0x50] sm:$0xff]
        %v986 = vld [vmem:[%s3 + $0x58] sm:$0xff]
        %v987 = vld [vmem:[%s3 + $0x60] sm:$0xff]
        %v988 = vld [vmem:[%s3 + $0x68] sm:$0xff]
        %v989 = vld [vmem:[%s3 + $0x70] sm:$0xff]
        %v990 = vld [vmem:[%s3 + $0x78] sm:$0xff]
        %v991 = vld [vmem:[#allocation7] sm:$0xf]
        %v993 = vlaneseq
        %v994 = vshrl.u32 %v993, 7
        %v995 = vsub.s32 0, %v994
        %v996 = vrot.slane %v991, %v995
        %v997 = vlaneseq
        %v998 = vshrl.u32 %v997, 7
        %v999 = vsub.s32 1, %v998
        %v1000 = vrot.slane %v991, %v999
        %v1001 = vlaneseq
        %v1002 = vshrl.u32 %v1001, 7
        %v1003 = vsub.s32 2, %v1002
        %v1004 = vrot.slane %v991, %v1003
        %v1005 = vlaneseq
        %v1006 = vshrl.u32 %v1005, 7
        %v1007 = vsub.s32 3, %v1006
        %v1008 = vrot.slane %v991, %v1007
        %v1029 = vunpack.c.l.b16 %v975
        %v1030 = vunpack.c.h.b16 %v975
        %v1031 = vunpack.c.l.b16 %v976
        %v1032 = vunpack.c.h.b16 %v976
        %v1033 = vunpack.c.l.b16 %v977
        %v1034 = vunpack.c.h.b16 %v977
        %v1035 = vunpack.c.l.b16 %v978
        %v1036 = vunpack.c.h.b16 %v978
        %v1037 = vunpack.c.l.b16 %v979
        %v1038 = vunpack.c.h.b16 %v979
        %v1039 = vunpack.c.l.b16 %v980
        %v1040 = vunpack.c.h.b16 %v980
        %v1041 = vunpack.c.l.b16 %v981
        %v1042 = vunpack.c.h.b16 %v981
        %v1043 = vunpack.c.l.b16 %v982
        %v1044 = vunpack.c.h.b16 %v982
        %v1045 = vunpack.c.l.b16 %v983
        %v1046 = vunpack.c.h.b16 %v983
        %v1047 = vunpack.c.l.b16 %v984
        %v1048 = vunpack.c.h.b16 %v984
        %v1049 = vunpack.c.l.b16 %v985
        %v1050 = vunpack.c.h.b16 %v985
        %v1051 = vunpack.c.l.b16 %v986
        %v1052 = vunpack.c.h.b16 %v986
        %v1053 = vunpack.c.l.b16 %v987
        %v1054 = vunpack.c.h.b16 %v987
        %v1055 = vunpack.c.l.b16 %v988
        %v1056 = vunpack.c.h.b16 %v988
        %v1057 = vunpack.c.l.b16 %v989
        %v1058 = vunpack.c.h.b16 %v989
        %v1059 = vunpack.c.l.b16 %v990
        %v1060 = vunpack.c.h.b16 %v990
        %v1061 = vpack.c.b16 %v1033, %v1029
        %v1062 = vpack.c.b16 %v1034, %v1030
        %v1063 = vpack.c.b16 %v1035, %v1031
        %v1064 = vpack.c.b16 %v1036, %v1032
        %v1065 = vpack.c.b16 %v1041, %v1037
        %v1066 = vpack.c.b16 %v1042, %v1038
        %v1067 = vpack.c.b16 %v1043, %v1039
        %v1068 = vpack.c.b16 %v1044, %v1040
        %v1069 = vpack.c.b16 %v1049, %v1045
        %v1070 = vpack.c.b16 %v1050, %v1046
        %v1071 = vpack.c.b16 %v1051, %v1047
        %v1072 = vpack.c.b16 %v1052, %v1048
        %v1073 = vpack.c.b16 %v1057, %v1053
        %v1074 = vpack.c.b16 %v1058, %v1054
        %v1075 = vpack.c.b16 %v1059, %v1055
        %v1076 = vpack.c.b16 %v1060, %v1056
        %vm1093 = vcmask 523264
        %v1095 = vsel %vm1093, %v967, 0
        %v1098 = vsel %vm1093, %v968, 0
        %v1101 = vsel %vm1093, %v969, 0
        %v1104 = vsel %vm1093, %v970, 0
        %v1107 = vsel %vm1093, %v971, 0
        %v1110 = vsel %vm1093, %v972, 0
        %v1113 = vsel %vm1093, %v973, 0
        %v1116 = vsel %vm1093, %v974, 0
        %1118 = vmatprep.subr.bf16.mxu0 %v1062
        %1119 = vmatpush1.bf16.msra.mxu0 %v1061
        %1120 = vmatprep.subr.bf16.mxu0 %v1066
        %1121 = vmatpush1.bf16.msra.mxu0 %v1065
        %1122 = vmatprep.subr.bf16.mxu0 %v1070
        %1123 = vmatpush1.bf16.msra.mxu0 %v1069
        %1124 = vmatprep.subr.bf16.mxu0 %v1074
        %1125 = vmatpush1.bf16.msra.mxu0 %v1073
        %1126 = vmatprep.subr.bf16.mxu0 0
        %1127 = vmatpush1.bf16.msra.mxu0 0
        %1128 = vmatprep.subr.bf16.mxu0 0
        %1129 = vmatpush1.bf16.msra.mxu0 0
        %1130 = vmatprep.subr.bf16.mxu0 0
        %1131 = vmatpush1.bf16.msra.mxu0 0
        %1132 = vmatprep.subr.bf16.mxu0 0
        %1133 = vmatpush1.bf16.msra.mxu0 0
        %1134 = vmatprep.subr.bf16.mxu0 0
        %1135 = vmatpush1.bf16.msra.mxu0 0
        %1136 = vmatprep.subr.bf16.mxu0 0
        %1137 = vmatpush1.bf16.msra.mxu0 0
        %1138 = vmatprep.subr.bf16.mxu0 0
        %1139 = vmatpush1.bf16.msra.mxu0 0
        %1140 = vmatprep.subr.bf16.mxu0 0
        %1141 = vmatpush1.bf16.msra.mxu0 0
        %1142 = vmatprep.subr.bf16.mxu0 0
        %1143 = vmatpush1.bf16.msra.mxu0 0
        %1144 = vmatprep.subr.bf16.mxu0 0
        %1145 = vmatpush1.bf16.msra.mxu0 0
        %1146 = vmatprep.subr.bf16.mxu0 0
        %1147 = vmatpush1.bf16.msra.mxu0 0
        %1148 = vmatprep.subr.bf16.mxu0 0
        %1149 = vmatpush1.bf16.msra.mxu0 0
        %1150 = vmatprep.mubr.bf16.mxu0 0
        %1151 = vmatmul.mubr.bf16.gmra.mrb[0].mxu0 %v1095
        %v1152 = vpop.f32.mrb[0].mxu0
        %v1153 = vadd.f32 %v996, %v1152
        %v1154 = vpop.f32.mrb[0].mxu0
        %v1155 = vadd.f32 %v1000, %v1154
        %v1156 = vpop.f32.mrb[0].mxu0
        %v1157 = vadd.f32 %v996, %v1156
        %v1158 = vpop.f32.mrb[0].mxu0
        %v1159 = vadd.f32 %v1000, %v1158
        %1160 = vmatprep.mubr.bf16.mxu0 0
        %1161 = vmatmul.mubr.bf16.gmra.mrb[0].mxu0 %v1098
        %v1162 = vpop.f32.mrb[0].mxu0
        %v1163 = vadd.f32 %v996, %v1162
        %v1164 = vpop.f32.mrb[0].mxu0
        %v1165 = vadd.f32 %v1000, %v1164
        %v1166 = vpop.f32.mrb[0].mxu0
        %v1167 = vadd.f32 %v996, %v1166
        %v1168 = vpop.f32.mrb[0].mxu0
        %v1169 = vadd.f32 %v1000, %v1168
        %1170 = vmatprep.mubr.bf16.mxu0 0
        %1171 = vmatmul.mubr.bf16.gmra.mrb[0].mxu0 %v1101
        %v1172 = vpop.f32.mrb[0].mxu0
        %v1173 = vadd.f32 %v996, %v1172
        %v1174 = vpop.f32.mrb[0].mxu0
        %v1175 = vadd.f32 %v1000, %v1174
        %v1176 = vpop.f32.mrb[0].mxu0
        %v1177 = vadd.f32 %v996, %v1176
        %v1178 = vpop.f32.mrb[0].mxu0
        %v1179 = vadd.f32 %v1000, %v1178
        %1180 = vmatprep.mubr.bf16.mxu0 0
        %1181 = vmatmul.mubr.bf16.gmra.mrb[0].mxu0 %v1104
        %v1182 = vpop.f32.mrb[0].mxu0
        %v1183 = vadd.f32 %v996, %v1182
        %v1184 = vpop.f32.mrb[0].mxu0
        %v1185 = vadd.f32 %v1000, %v1184
        %v1186 = vpop.f32.mrb[0].mxu0
        %v1187 = vadd.f32 %v996, %v1186
        %v1188 = vpop.f32.mrb[0].mxu0
        %v1189 = vadd.f32 %v1000, %v1188
        %1190 = vmatprep.mubr.bf16.mxu0 0
        %1191 = vmatmul.mubr.bf16.gmra.mrb[0].mxu0 %v1107
        %v1192 = vpop.f32.mrb[0].mxu0
        %v1193 = vadd.f32 %v996, %v1192
        %v1194 = vpop.f32.mrb[0].mxu0
        %v1195 = vadd.f32 %v1000, %v1194
        %v1196 = vpop.f32.mrb[0].mxu0
        %v1197 = vadd.f32 %v996, %v1196
        %v1198 = vpop.f32.mrb[0].mxu0
        %v1199 = vadd.f32 %v1000, %v1198
        %1200 = vmatprep.mubr.bf16.mxu0 0
        %1201 = vmatmul.mubr.bf16.gmra.mrb[0].mxu0 %v1110
        %v1202 = vpop.f32.mrb[0].mxu0
        %v1203 = vadd.f32 %v996, %v1202
        %v1204 = vpop.f32.mrb[0].mxu0
        %v1205 = vadd.f32 %v1000, %v1204
        %v1206 = vpop.f32.mrb[0].mxu0
        %v1207 = vadd.f32 %v996, %v1206
        %v1208 = vpop.f32.mrb[0].mxu0
        %v1209 = vadd.f32 %v1000, %v1208
        %1210 = vmatprep.mubr.bf16.mxu0 0
        %1211 = vmatmul.mubr.bf16.gmra.mrb[0].mxu0 %v1113
        %v1212 = vpop.f32.mrb[0].mxu0
        %v1213 = vadd.f32 %v996, %v1212
        %v1214 = vpop.f32.mrb[0].mxu0
        %v1215 = vadd.f32 %v1000, %v1214
        %v1216 = vpop.f32.mrb[0].mxu0
        %v1217 = vadd.f32 %v996, %v1216
        %v1218 = vpop.f32.mrb[0].mxu0
        %v1219 = vadd.f32 %v1000, %v1218
        %1220 = vmatprep.mubr.bf16.mxu0 0
        %1221 = vmatmul.mubr.bf16.gmra.mrb[0].mxu0 %v1116
        %v1222 = vpop.f32.mrb[0].mxu0
        %v1223 = vadd.f32 %v996, %v1222
        %v1224 = vpop.f32.mrb[0].mxu0
        %v1225 = vadd.f32 %v1000, %v1224
        %v1226 = vpop.f32.mrb[0].mxu0
        %v1227 = vpop.f32.mrb[0].mxu0
        %1228 = vdwg.mxu0
        %1229 = vmatprep.subr.bf16.mxu0 %v1064
        %1230 = vmatpush1.bf16.msra.mxu0 %v1063
        %1231 = vmatprep.subr.bf16.mxu0 %v1068
        %1232 = vmatpush1.bf16.msra.mxu0 %v1067
        %1233 = vmatprep.subr.bf16.mxu0 %v1072
        %1234 = vmatpush1.bf16.msra.mxu0 %v1071
        %1235 = vmatprep.subr.bf16.mxu0 %v1076
        %1236 = vmatpush1.bf16.msra.mxu0 %v1075
        %1237 = vmatprep.subr.bf16.mxu0 0
        %1238 = vmatpush1.bf16.msra.mxu0 0
        %1239 = vmatprep.subr.bf16.mxu0 0
        %1240 = vmatpush1.bf16.msra.mxu0 0
        %1241 = vmatprep.subr.bf16.mxu0 0
        %1242 = vmatpush1.bf16.msra.mxu0 0
        %1243 = vmatprep.subr.bf16.mxu0 0
        %1244 = vmatpush1.bf16.msra.mxu0 0
        %1245 = vmatprep.subr.bf16.mxu0 0
        %1246 = vmatpush1.bf16.msra.mxu0 0
        %1247 = vmatprep.subr.bf16.mxu0 0
        %1248 = vmatpush1.bf16.msra.mxu0 0
        %1249 = vmatprep.subr.bf16.mxu0 0
        %1250 = vmatpush1.bf16.msra.mxu0 0
        %1251 = vmatprep.subr.bf16.mxu0 0
        %1252 = vmatpush1.bf16.msra.mxu0 0
        %1253 = vmatprep.subr.bf16.mxu0 0
        %1254 = vmatpush1.bf16.msra.mxu0 0
        %1255 = vmatprep.subr.bf16.mxu0 0
        %1256 = vmatpush1.bf16.msra.mxu0 0
        %1257 = vmatprep.subr.bf16.mxu0 0
        %1258 = vmatpush1.bf16.msra.mxu0 0
        %1259 = vmatprep.subr.bf16.mxu0 0
        %1260 = vmatpush1.bf16.msra.mxu0 0
        %1261 = vmatprep.mubr.bf16.mxu0 0
        %1262 = vmatmul.mubr.bf16.gmra.mrb[0].mxu0 %v1095
        %v1263 = vpop.f32.mrb[0].mxu0
        %v1264 = vadd.f32 %v1004, %v1263
        %v1265 = vpop.f32.mrb[0].mxu0
        %v1266 = vadd.f32 %v1008, %v1265
        %v1267 = vpop.f32.mrb[0].mxu0
        %v1268 = vadd.f32 %v1004, %v1267
        %v1269 = vpop.f32.mrb[0].mxu0
        %v1270 = vadd.f32 %v1008, %v1269
        %1271 = vmatprep.mubr.bf16.mxu0 0
        %1272 = vmatmul.mubr.bf16.gmra.mrb[0].mxu0 %v1098
        %v1273 = vpop.f32.mrb[0].mxu0
        %v1274 = vadd.f32 %v1004, %v1273
        %v1275 = vpop.f32.mrb[0].mxu0
        %v1276 = vadd.f32 %v1008, %v1275
        %v1277 = vpop.f32.mrb[0].mxu0
        %v1278 = vadd.f32 %v1004, %v1277
        %v1279 = vpop.f32.mrb[0].mxu0
        %v1280 = vadd.f32 %v1008, %v1279
        %1281 = vmatprep.mubr.bf16.mxu0 0
        %1282 = vmatmul.mubr.bf16.gmra.mrb[0].mxu0 %v1101
        %v1283 = vpop.f32.mrb[0].mxu0
        %v1284 = vadd.f32 %v1004, %v1283
        %v1285 = vpop.f32.mrb[0].mxu0
        %v1286 = vadd.f32 %v1008, %v1285
        %v1287 = vpop.f32.mrb[0].mxu0
        %v1288 = vadd.f32 %v1004, %v1287
        %v1289 = vpop.f32.mrb[0].mxu0
        %v1290 = vadd.f32 %v1008, %v1289
        %1291 = vmatprep.mubr.bf16.mxu0 0
        %1292 = vmatmul.mubr.bf16.gmra.mrb[0].mxu0 %v1104
        %v1293 = vpop.f32.mrb[0].mxu0
        %v1294 = vadd.f32 %v1004, %v1293
        %v1295 = vpop.f32.mrb[0].mxu0
        %v1296 = vadd.f32 %v1008, %v1295
        %v1297 = vpop.f32.mrb[0].mxu0
        %v1298 = vadd.f32 %v1004, %v1297
        %v1299 = vpop.f32.mrb[0].mxu0
        %v1300 = vadd.f32 %v1008, %v1299
        %1301 = vmatprep.mubr.bf16.mxu0 0
        %1302 = vmatmul.mubr.bf16.gmra.mrb[0].mxu0 %v1107
        %v1303 = vpop.f32.mrb[0].mxu0
        %v1304 = vadd.f32 %v1004, %v1303
        %v1305 = vpop.f32.mrb[0].mxu0
        %v1306 = vadd.f32 %v1008, %v1305
        %v1307 = vpop.f32.mrb[0].mxu0
        %v1308 = vadd.f32 %v1004, %v1307
        %v1309 = vpop.f32.mrb[0].mxu0
        %v1310 = vadd.f32 %v1008, %v1309
        %1311 = vmatprep.mubr.bf16.mxu0 0
        %1312 = vmatmul.mubr.bf16.gmra.mrb[0].mxu0 %v1110
        %v1313 = vpop.f32.mrb[0].mxu0
        %v1314 = vadd.f32 %v1004, %v1313
        %v1315 = vpop.f32.mrb[0].mxu0
        %v1316 = vadd.f32 %v1008, %v1315
        %v1317 = vpop.f32.mrb[0].mxu0
        %v1318 = vadd.f32 %v1004, %v1317
        %v1319 = vpop.f32.mrb[0].mxu0
        %v1320 = vadd.f32 %v1008, %v1319
        %1321 = vmatprep.mubr.bf16.mxu0 0
        %1322 = vmatmul.mubr.bf16.gmra.mrb[0].mxu0 %v1113
        %v1323 = vpop.f32.mrb[0].mxu0
        %v1324 = vadd.f32 %v1004, %v1323
        %v1325 = vpop.f32.mrb[0].mxu0
        %v1326 = vadd.f32 %v1008, %v1325
        %v1327 = vpop.f32.mrb[0].mxu0
        %v1328 = vadd.f32 %v1004, %v1327
        %v1329 = vpop.f32.mrb[0].mxu0
        %v1330 = vadd.f32 %v1008, %v1329
        %1331 = vmatprep.mubr.bf16.mxu0 0
        %1332 = vmatmul.mubr.bf16.gmra.mrb[0].mxu0 %v1116
        %v1333 = vpop.f32.mrb[0].mxu0
        %v1334 = vadd.f32 %v1004, %v1333
        %v1335 = vpop.f32.mrb[0].mxu0
        %v1336 = vadd.f32 %v1008, %v1335
        %v1337 = vpop.f32.mrb[0].mxu0
        %v1338 = vpop.f32.mrb[0].mxu0
        %1339 = vdwg.mxu0
        %1340 = vst [vmem:[#allocation2] sm:$0xff] %v1153
        %1341 = vst [vmem:[#allocation2 + $0x8] sm:$0xff] %v1155
        %1342 = vst [vmem:[#allocation2 + $0x10] sm:$0xff] %v1264
        %1343 = vst [vmem:[#allocation2 + $0x18] sm:$0xff] %v1266
        %1344 = vst [vmem:[#allocation2 + $0x20] sm:$0xff] %v1157
        %1345 = vst [vmem:[#allocation2 + $0x28] sm:$0xff] %v1159
        %1346 = vst [vmem:[#allocation2 + $0x30] sm:$0xff] %v1268
        %1347 = vst [vmem:[#allocation2 + $0x38] sm:$0xff] %v1270
        %1348 = vst [vmem:[#allocation2 + $0x40] sm:$0xff] %v1163
        %1349 = vst [vmem:[#allocation2 + $0x48] sm:$0xff] %v1165
        %1350 = vst [vmem:[#allocation2 + $0x50] sm:$0xff] %v1274
        %1351 = vst [vmem:[#allocation2 + $0x58] sm:$0xff] %v1276
        %1352 = vst [vmem:[#allocation2 + $0x60] sm:$0xff] %v1167
        %1353 = vst [vmem:[#allocation2 + $0x68] sm:$0xff] %v1169
        %1354 = vst [vmem:[#allocation2 + $0x70] sm:$0xff] %v1278
        %1355 = vst [vmem:[#allocation2 + $0x78] sm:$0xff] %v1280
        %1356 = vst [vmem:[#allocation2 + $0x80] sm:$0xff] %v1173
        %1357 = vst [vmem:[#allocation2 + $0x88] sm:$0xff] %v1175
        %1358 = vst [vmem:[#allocation2 + $0x90] sm:$0xff] %v1284
        %1359 = vst [vmem:[#allocation2 + $0x98] sm:$0xff] %v1286
        %1360 = vst [vmem:[#allocation2 + $0xa0] sm:$0xff] %v1177
        %1361 = vst [vmem:[#allocation2 + $0xa8] sm:$0xff] %v1179
        %1362 = vst [vmem:[#allocation2 + $0xb0] sm:$0xff] %v1288
        %1363 = vst [vmem:[#allocation2 + $0xb8] sm:$0xff] %v1290
        %1364 = vst [vmem:[#allocation2 + $0xc0] sm:$0xff] %v1183
        %1365 = vst [vmem:[#allocation2 + $0xc8] sm:$0xff] %v1185
        %1366 = vst [vmem:[#allocation2 + $0xd0] sm:$0xff] %v1294
        %1367 = vst [vmem:[#allocation2 + $0xd8] sm:$0xff] %v1296
        %1368 = vst [vmem:[#allocation2 + $0xe0] sm:$0xff] %v1187
        %1369 = vst [vmem:[#allocation2 + $0xe8] sm:$0xff] %v1189
        %1370 = vst [vmem:[#allocation2 + $0xf0] sm:$0xff] %v1298
        %1371 = vst [vmem:[#allocation2 + $0xf8] sm:$0xff] %v1300
        %1372 = vst [vmem:[#allocation2 + $0x100] sm:$0xff] %v1193
        %1373 = vst [vmem:[#allocation2 + $0x108] sm:$0xff] %v1195
        %1374 = vst [vmem:[#allocation2 + $0x110] sm:$0xff] %v1304
        %1375 = vst [vmem:[#allocation2 + $0x118] sm:$0xff] %v1306
        %1376 = vst [vmem:[#allocation2 + $0x120] sm:$0xff] %v1197
        %1377 = vst [vmem:[#allocation2 + $0x128] sm:$0xff] %v1199
        %1378 = vst [vmem:[#allocation2 + $0x130] sm:$0xff] %v1308
        %1379 = vst [vmem:[#allocation2 + $0x138] sm:$0xff] %v1310
        %1380 = vst [vmem:[#allocation2 + $0x140] sm:$0xff] %v1203
        %1381 = vst [vmem:[#allocation2 + $0x148] sm:$0xff] %v1205
        %1382 = vst [vmem:[#allocation2 + $0x150] sm:$0xff] %v1314
        %1383 = vst [vmem:[#allocation2 + $0x158] sm:$0xff] %v1316
        %1384 = vst [vmem:[#allocation2 + $0x160] sm:$0xff] %v1207
        %1385 = vst [vmem:[#allocation2 + $0x168] sm:$0xff] %v1209
        %1386 = vst [vmem:[#allocation2 + $0x170] sm:$0xff] %v1318
        %1387 = vst [vmem:[#allocation2 + $0x178] sm:$0xff] %v1320
        %1388 = vst [vmem:[#allocation2 + $0x180] sm:$0xff] %v1213
        %1389 = vst [vmem:[#allocation2 + $0x188] sm:$0xff] %v1215
        %1390 = vst [vmem:[#allocation2 + $0x190] sm:$0xff] %v1324
        %1391 = vst [vmem:[#allocation2 + $0x198] sm:$0xff] %v1326
        %1392 = vst [vmem:[#allocation2 + $0x1a0] sm:$0xff] %v1217
        %1393 = vst [vmem:[#allocation2 + $0x1a8] sm:$0xff] %v1219
        %1394 = vst [vmem:[#allocation2 + $0x1b0] sm:$0xff] %v1328
        %1395 = vst [vmem:[#allocation2 + $0x1b8] sm:$0xff] %v1330
        %1396 = vst [vmem:[#allocation2 + $0x1c0] sm:$0xff] %v1223
        %1397 = vst [vmem:[#allocation2 + $0x1c8] sm:$0xff] %v1225
        %1398 = vst [vmem:[#allocation2 + $0x1d0] sm:$0xff] %v1334
        %1399 = vst [vmem:[#allocation2 + $0x1d8] sm:$0xff] %v1336
        %s1400 = smul.u32 0, 4
        %s1401 = smul.addr %s1400, 8
        %s1402 = scalar_lea.vmem [#allocation2], %s1401
        %v1403 = vld [vmem:[%s1402] sm:$0xff]
        %v1404 = vld [vmem:[%s1402 + $0x8] sm:$0xff]
        %v1405 = vld [vmem:[%s1402 + $0x10] sm:$0xff]
        %v1406 = vld [vmem:[%s1402 + $0x18] sm:$0xff]
        %v1407 = vld [vmem:[%s4] sm:$0xff]
        %v1408 = vld [vmem:[%s4 + $0x8] sm:$0xff]
        %v1409 = vld [vmem:[%s4 + $0x10] sm:$0xff]
        %v1410 = vld [vmem:[%s4 + $0x18] sm:$0xff]
        %v1411 = vld [vmem:[%s4 + $0x20] sm:$0xff]
        %v1412 = vld [vmem:[%s4 + $0x28] sm:$0xff]
        %v1413 = vld [vmem:[%s4 + $0x30] sm:$0xff]
        %v1414 = vld [vmem:[%s4 + $0x38] sm:$0xff]
        %v1415 = vld [vmem:[%s4 + $0x40] sm:$0xff]
        %v1416 = vld [vmem:[%s4 + $0x48] sm:$0xff]
        %v1417 = vld [vmem:[%s4 + $0x50] sm:$0xff]
        %v1418 = vld [vmem:[%s4 + $0x58] sm:$0xff]
        %v1419 = vld [vmem:[%s4 + $0x60] sm:$0xff]
        %v1420 = vld [vmem:[%s4 + $0x68] sm:$0xff]
        %v1421 = vld [vmem:[%s4 + $0x70] sm:$0xff]
        %v1422 = vld [vmem:[%s4 + $0x78] sm:$0xff]
        %v1423 = vld [vmem:[%s4 + $0x80] sm:$0xff]
        %v1424 = vld [vmem:[%s4 + $0x88] sm:$0xff]
        %v1425 = vld [vmem:[%s4 + $0x90] sm:$0xff]
        %v1426 = vld [vmem:[%s4 + $0x98] sm:$0xff]
        %v1427 = vld [vmem:[%s4 + $0xa0] sm:$0xff]
        %v1428 = vld [vmem:[%s4 + $0xa8] sm:$0xff]
        %v1429 = vld [vmem:[%s4 + $0xb0] sm:$0xff]
        %v1430 = vld [vmem:[%s4 + $0xb8] sm:$0xff]
        %v1431 = vld [vmem:[%s4 + $0xc0] sm:$0xff]
        %v1432 = vld [vmem:[%s4 + $0xc8] sm:$0xff]
        %v1433 = vld [vmem:[%s4 + $0xd0] sm:$0xff]
        %v1434 = vld [vmem:[%s4 + $0xd8] sm:$0xff]
        %v1435 = vld [vmem:[%s4 + $0xe0] sm:$0xff]
        %v1436 = vld [vmem:[%s4 + $0xe8] sm:$0xff]
        %v1437 = vld [vmem:[%s4 + $0xf0] sm:$0xff]
        %v1438 = vld [vmem:[%s4 + $0xf8] sm:$0xff]
        %v1471 = vunpack.c.l.b16 %v1407
        %v1472 = vunpack.c.h.b16 %v1407
        %v1473 = vunpack.c.l.b16 %v1408
        %v1474 = vunpack.c.h.b16 %v1408
        %v1475 = vunpack.c.l.b16 %v1409
        %v1476 = vunpack.c.h.b16 %v1409
        %v1477 = vunpack.c.l.b16 %v1410
        %v1478 = vunpack.c.h.b16 %v1410
        %v1479 = vunpack.c.l.b16 %v1411
        %v1480 = vunpack.c.h.b16 %v1411
        %v1481 = vunpack.c.l.b16 %v1412
        %v1482 = vunpack.c.h.b16 %v1412
        %v1483 = vunpack.c.l.b16 %v1413
        %v1484 = vunpack.c.h.b16 %v1413
        %v1485 = vunpack.c.l.b16 %v1414
        %v1486 = vunpack.c.h.b16 %v1414
        %v1487 = vunpack.c.l.b16 %v1415
        %v1488 = vunpack.c.h.b16 %v1415
        %v1489 = vunpack.c.l.b16 %v1416
        %v1490 = vunpack.c.h.b16 %v1416
        %v1491 = vunpack.c.l.b16 %v1417
        %v1492 = vunpack.c.h.b16 %v1417
        %v1493 = vunpack.c.l.b16 %v1418
        %v1494 = vunpack.c.h.b16 %v1418
        %v1495 = vunpack.c.l.b16 %v1419
        %v1496 = vunpack.c.h.b16 %v1419
        %v1497 = vunpack.c.l.b16 %v1420
        %v1498 = vunpack.c.h.b16 %v1420
        %v1499 = vunpack.c.l.b16 %v1421
        %v1500 = vunpack.c.h.b16 %v1421
        %v1501 = vunpack.c.l.b16 %v1422
        %v1502 = vunpack.c.h.b16 %v1422
        %v1503 = vunpack.c.l.b16 %v1423
        %v1504 = vunpack.c.h.b16 %v1423
        %v1505 = vunpack.c.l.b16 %v1424
        %v1506 = vunpack.c.h.b16 %v1424
        %v1507 = vunpack.c.l.b16 %v1425
        %v1508 = vunpack.c.h.b16 %v1425
        %v1509 = vunpack.c.l.b16 %v1426
        %v1510 = vunpack.c.h.b16 %v1426
        %v1511 = vunpack.c.l.b16 %v1427
        %v1512 = vunpack.c.h.b16 %v1427
        %v1513 = vunpack.c.l.b16 %v1428
        %v1514 = vunpack.c.h.b16 %v1428
        %v1515 = vunpack.c.l.b16 %v1429
        %v1516 = vunpack.c.h.b16 %v1429
        %v1517 = vunpack.c.l.b16 %v1430
        %v1518 = vunpack.c.h.b16 %v1430
        %v1519 = vunpack.c.l.b16 %v1431
        %v1520 = vunpack.c.h.b16 %v1431
        %v1521 = vunpack.c.l.b16 %v1432
        %v1522 = vunpack.c.h.b16 %v1432
        %v1523 = vunpack.c.l.b16 %v1433
        %v1524 = vunpack.c.h.b16 %v1433
        %v1525 = vunpack.c.l.b16 %v1434
        %v1526 = vunpack.c.h.b16 %v1434
        %v1527 = vunpack.c.l.b16 %v1435
        %v1528 = vunpack.c.h.b16 %v1435
        %v1529 = vunpack.c.l.b16 %v1436
        %v1530 = vunpack.c.h.b16 %v1436
        %v1531 = vunpack.c.l.b16 %v1437
        %v1532 = vunpack.c.h.b16 %v1437
        %v1533 = vunpack.c.l.b16 %v1438
        %v1534 = vunpack.c.h.b16 %v1438
        %v1535 = vpack.c.b16 %v1475, %v1471
        %v1536 = vpack.c.b16 %v1476, %v1472
        %v1537 = vpack.c.b16 %v1477, %v1473
        %v1538 = vpack.c.b16 %v1478, %v1474
        %v1539 = vpack.c.b16 %v1483, %v1479
        %v1540 = vpack.c.b16 %v1484, %v1480
        %v1541 = vpack.c.b16 %v1485, %v1481
        %v1542 = vpack.c.b16 %v1486, %v1482
        %v1543 = vpack.c.b16 %v1491, %v1487
        %v1544 = vpack.c.b16 %v1492, %v1488
        %v1545 = vpack.c.b16 %v1493, %v1489
        %v1546 = vpack.c.b16 %v1494, %v1490
        %v1547 = vpack.c.b16 %v1499, %v1495
        %v1548 = vpack.c.b16 %v1500, %v1496
        %v1549 = vpack.c.b16 %v1501, %v1497
        %v1550 = vpack.c.b16 %v1502, %v1498
        %v1551 = vpack.c.b16 %v1507, %v1503
        %v1552 = vpack.c.b16 %v1508, %v1504
        %v1553 = vpack.c.b16 %v1509, %v1505
        %v1554 = vpack.c.b16 %v1510, %v1506
        %v1555 = vpack.c.b16 %v1515, %v1511
        %v1556 = vpack.c.b16 %v1516, %v1512
        %v1557 = vpack.c.b16 %v1517, %v1513
        %v1558 = vpack.c.b16 %v1518, %v1514
        %v1559 = vpack.c.b16 %v1523, %v1519
        %v1560 = vpack.c.b16 %v1524, %v1520
        %v1561 = vpack.c.b16 %v1525, %v1521
        %v1562 = vpack.c.b16 %v1526, %v1522
        %v1563 = vpack.c.b16 %v1531, %v1527
        %v1564 = vpack.c.b16 %v1532, %v1528
        %v1565 = vpack.c.b16 %v1533, %v1529
        %v1566 = vpack.c.b16 %v1534, %v1530
        %1599 = vmatprep.subr.bf16.mxu0 %v1536
        %1600 = vmatpush1.bf16.msra.mxu0 %v1535
        %1601 = vmatprep.subr.bf16.mxu0 %v1540
        %1602 = vmatpush1.bf16.msra.mxu0 %v1539
        %1603 = vmatprep.subr.bf16.mxu0 %v1544
        %1604 = vmatpush1.bf16.msra.mxu0 %v1543
        %1605 = vmatprep.subr.bf16.mxu0 %v1548
        %1606 = vmatpush1.bf16.msra.mxu0 %v1547
        %1607 = vmatprep.subr.bf16.mxu0 %v1552
        %1608 = vmatpush1.bf16.msra.mxu0 %v1551
        %1609 = vmatprep.subr.bf16.mxu0 %v1556
        %1610 = vmatpush1.bf16.msra.mxu0 %v1555
        %1611 = vmatprep.subr.bf16.mxu0 %v1560
        %1612 = vmatpush1.bf16.msra.mxu0 %v1559
        %1613 = vmatprep.subr.bf16.mxu0 %v1564
        %1614 = vmatpush1.bf16.msra.mxu0 %v1563
        %1615 = vmatprep.subr.bf16.mxu0 0
        %1616 = vmatpush1.bf16.msra.mxu0 0
        %1617 = vmatprep.subr.bf16.mxu0 0
        %1618 = vmatpush1.bf16.msra.mxu0 0
        %1619 = vmatprep.subr.bf16.mxu0 0
        %1620 = vmatpush1.bf16.msra.mxu0 0
        %1621 = vmatprep.subr.bf16.mxu0 0
        %1622 = vmatpush1.bf16.msra.mxu0 0
        %1623 = vmatprep.subr.bf16.mxu0 0
        %1624 = vmatpush1.bf16.msra.mxu0 0
        %1625 = vmatprep.subr.bf16.mxu0 0
        %1626 = vmatpush1.bf16.msra.mxu0 0
        %1627 = vmatprep.subr.bf16.mxu0 0
        %1628 = vmatpush1.bf16.msra.mxu0 0
        %1629 = vmatprep.subr.bf16.mxu0 0
        %1630 = vmatpush1.bf16.msra.mxu0 0
        %1631 = vmatprep.mubr.bf16.mxu0 0
        %1632 = vmatmul.mubr.bf16.gmra.mrb[0].mxu0 0
        %v1633 = vpop.f32.mrb[0].mxu0
        %v1634 = vadd.f32 0.0, %v1633
        %v1635 = vpop.f32.mrb[0].mxu0
        %v1636 = vadd.f32 0.0, %v1635
        %v1637 = vpop.f32.mrb[0].mxu0
        %v1638 = vpop.f32.mrb[0].mxu0
        %1639 = vdwg.mxu0
        %1640 = vmatprep.subr.bf16.mxu0 %v1538
        %1641 = vmatpush1.bf16.msra.mxu0 %v1537
        %1642 = vmatprep.subr.bf16.mxu0 %v1542
        %1643 = vmatpush1.bf16.msra.mxu0 %v1541
        %1644 = vmatprep.subr.bf16.mxu0 %v1546
        %1645 = vmatpush1.bf16.msra.mxu0 %v1545
        %1646 = vmatprep.subr.bf16.mxu0 %v1550
        %1647 = vmatpush1.bf16.msra.mxu0 %v1549
        %1648 = vmatprep.subr.bf16.mxu0 %v1554
        %1649 = vmatpush1.bf16.msra.mxu0 %v1553
        %1650 = vmatprep.subr.bf16.mxu0 %v1558
        %1651 = vmatpush1.bf16.msra.mxu0 %v1557
        %1652 = vmatprep.subr.bf16.mxu0 %v1562
        %1653 = vmatpush1.bf16.msra.mxu0 %v1561
        %1654 = vmatprep.subr.bf16.mxu0 %v1566
        %1655 = vmatpush1.bf16.msra.mxu0 %v1565
        %1656 = vmatprep.subr.bf16.mxu0 0
        %1657 = vmatpush1.bf16.msra.mxu0 0
        %1658 = vmatprep.subr.bf16.mxu0 0
        %1659 = vmatpush1.bf16.msra.mxu0 0
        %1660 = vmatprep.subr.bf16.mxu0 0
        %1661 = vmatpush1.bf16.msra.mxu0 0
        %1662 = vmatprep.subr.bf16.mxu0 0
        %1663 = vmatpush1.bf16.msra.mxu0 0
        %1664 = vmatprep.subr.bf16.mxu0 0
        %1665 = vmatpush1.bf16.msra.mxu0 0
        %1666 = vmatprep.subr.bf16.mxu0 0
        %1667 = vmatpush1.bf16.msra.mxu0 0
        %1668 = vmatprep.subr.bf16.mxu0 0
        %1669 = vmatpush1.bf16.msra.mxu0 0
        %1670 = vmatprep.subr.bf16.mxu0 0
        %1671 = vmatpush1.bf16.msra.mxu0 0
        %1672 = vmatprep.mubr.bf16.mxu0 0
        %1673 = vmatmul.mubr.bf16.gmra.mrb[0].mxu0 0
        %v1674 = vpop.f32.mrb[0].mxu0
        %v1675 = vadd.f32 0.0, %v1674
        %v1676 = vpop.f32.mrb[0].mxu0
        %v1677 = vadd.f32 0.0, %v1676
        %v1678 = vpop.f32.mrb[0].mxu0
        %v1679 = vpop.f32.mrb[0].mxu0
        %1680 = vdwg.mxu0
        %v1681 = vadd.f32 %v1403, %v1634
        %v1682 = vadd.f32 %v1404, %v1636
        %v1683 = vadd.f32 %v1405, %v1675
        %v1684 = vadd.f32 %v1406, %v1677
        %v1685 = vxor.u32 %v1681, 2147483648
        %v1686 = vxor.u32 %v1682, 2147483648
        %v1687 = vxor.u32 %v1683, 2147483648
        %v1688 = vmul.f32 %v1685, 1.442695
        %v1689 = vpow.pop %v1688
        %v1690 = vmul.f32 %v1686, 1.442695
        %v1691 = vpow.pop %v1690
        %v1692 = vmul.f32 %v1687, 1.442695
        %v1693 = vpow.pop %v1692
        %v1694 = vadd.f32 %v1689, 1.0
        %v1695 = vadd.f32 %v1691, 1.0
        %v1696 = vadd.f32 %v1693, 1.0
        %v1697 = vrcp.pop %v1694
        %v1698 = vmul.f32 1.0, %v1697
        %v1699 = vrcp.pop %v1695
        %v1700 = vmul.f32 1.0, %v1699
        %v1701 = vrcp.pop %v1696
        %v1702 = vmul.f32 1.0, %v1701
        %v1703 = vtanh.pop %v1684
        %v1704 = vmul.f32 %v1700, 0.0
        %v1705 = vmul.f32 %v1698, %v1703
        %v1706 = vadd.f32 %v1704, %v1705
        %v1707 = vtanh.pop %v1706
        %v1708 = vmul.f32 %v1702, %v1707
        %v1709 = vpack.c.bf16 %v1708, %v1708
        %1710 = vst [vmem:[#allocation3] sm:$0xf] %v1709
        %s1711 = smul.u32 1, 4
        %s1712 = smul.addr %s1711, 8
        %s1713 = scalar_lea.vmem [#allocation2], %s1712
        %v1714 = vld [vmem:[%s1713] sm:$0xff]
        %v1715 = vld [vmem:[%s1713 + $0x8] sm:$0xff]
        %v1716 = vld [vmem:[%s1713 + $0x10] sm:$0xff]
        %v1717 = vld [vmem:[%s1713 + $0x18] sm:$0xff]
        %v1718 = vld [vmem:[%s4] sm:$0xff]
        %v1719 = vld [vmem:[%s4 + $0x8] sm:$0xff]
        %v1720 = vld [vmem:[%s4 + $0x10] sm:$0xff]
        %v1721 = vld [vmem:[%s4 + $0x18] sm:$0xff]
        %v1722 = vld [vmem:[%s4 + $0x20] sm:$0xff]
        %v1723 = vld [vmem:[%s4 + $0x28] sm:$0xff]
        %v1724 = vld [vmem:[%s4 + $0x30] sm:$0xff]
        %v1725 = vld [vmem:[%s4 + $0x38] sm:$0xff]
        %v1726 = vld [vmem:[%s4 + $0x40] sm:$0xff]
        %v1727 = vld [vmem:[%s4 + $0x48] sm:$0xff]
        %v1728 = vld [vmem:[%s4 + $0x50] sm:$0xff]
        %v1729 = vld [vmem:[%s4 + $0x58] sm:$0xff]
        %v1730 = vld [vmem:[%s4 + $0x60] sm:$0xff]
        %v1731 = vld [vmem:[%s4 + $0x68] sm:$0xff]
        %v1732 = vld [vmem:[%s4 + $0x70] sm:$0xff]
        %v1733 = vld [vmem:[%s4 + $0x78] sm:$0xff]
        %v1734 = vld [vmem:[%s4 + $0x80] sm:$0xff]
        %v1735 = vld [vmem:[%s4 + $0x88] sm:$0xff]
        %v1736 = vld [vmem:[%s4 + $0x90] sm:$0xff]
        %v1737 = vld [vmem:[%s4 + $0x98] sm:$0xff]
        %v1738 = vld [vmem:[%s4 + $0xa0] sm:$0xff]
        %v1739 = vld [vmem:[%s4 + $0xa8] sm:$0xff]
        %v1740 = vld [vmem:[%s4 + $0xb0] sm:$0xff]
        %v1741 = vld [vmem:[%s4 + $0xb8] sm:$0xff]
        %v1742 = vld [vmem:[%s4 + $0xc0] sm:$0xff]
        %v1743 = vld [vmem:[%s4 + $0xc8] sm:$0xff]
        %v1744 = vld [vmem:[%s4 + $0xd0] sm:$0xff]
        %v1745 = vld [vmem:[%s4 + $0xd8] sm:$0xff]
        %v1746 = vld [vmem:[%s4 + $0xe0] sm:$0xff]
        %v1747 = vld [vmem:[%s4 + $0xe8] sm:$0xff]
        %v1748 = vld [vmem:[%s4 + $0xf0] sm:$0xff]
        %v1749 = vld [vmem:[%s4 + $0xf8] sm:$0xff]
        %v1782 = vunpack.c.l.b16 %v1718
        %v1783 = vunpack.c.h.b16 %v1718
        %v1784 = vunpack.c.l.b16 %v1719
        %v1785 = vunpack.c.h.b16 %v1719
        %v1786 = vunpack.c.l.b16 %v1720
        %v1787 = vunpack.c.h.b16 %v1720
        %v1788 = vunpack.c.l.b16 %v1721
        %v1789 = vunpack.c.h.b16 %v1721
        %v1790 = vunpack.c.l.b16 %v1722
        %v1791 = vunpack.c.h.b16 %v1722
        %v1792 = vunpack.c.l.b16 %v1723
        %v1793 = vunpack.c.h.b16 %v1723
        %v1794 = vunpack.c.l.b16 %v1724
        %v1795 = vunpack.c.h.b16 %v1724
        %v1796 = vunpack.c.l.b16 %v1725
        %v1797 = vunpack.c.h.b16 %v1725
        %v1798 = vunpack.c.l.b16 %v1726
        %v1799 = vunpack.c.h.b16 %v1726
        %v1800 = vunpack.c.l.b16 %v1727
        %v1801 = vunpack.c.h.b16 %v1727
        %v1802 = vunpack.c.l.b16 %v1728
        %v1803 = vunpack.c.h.b16 %v1728
        %v1804 = vunpack.c.l.b16 %v1729
        %v1805 = vunpack.c.h.b16 %v1729
        %v1806 = vunpack.c.l.b16 %v1730
        %v1807 = vunpack.c.h.b16 %v1730
        %v1808 = vunpack.c.l.b16 %v1731
        %v1809 = vunpack.c.h.b16 %v1731
        %v1810 = vunpack.c.l.b16 %v1732
        %v1811 = vunpack.c.h.b16 %v1732
        %v1812 = vunpack.c.l.b16 %v1733
        %v1813 = vunpack.c.h.b16 %v1733
        %v1814 = vunpack.c.l.b16 %v1734
        %v1815 = vunpack.c.h.b16 %v1734
        %v1816 = vunpack.c.l.b16 %v1735
        %v1817 = vunpack.c.h.b16 %v1735
        %v1818 = vunpack.c.l.b16 %v1736
        %v1819 = vunpack.c.h.b16 %v1736
        %v1820 = vunpack.c.l.b16 %v1737
        %v1821 = vunpack.c.h.b16 %v1737
        %v1822 = vunpack.c.l.b16 %v1738
        %v1823 = vunpack.c.h.b16 %v1738
        %v1824 = vunpack.c.l.b16 %v1739
        %v1825 = vunpack.c.h.b16 %v1739
        %v1826 = vunpack.c.l.b16 %v1740
        %v1827 = vunpack.c.h.b16 %v1740
        %v1828 = vunpack.c.l.b16 %v1741
        %v1829 = vunpack.c.h.b16 %v1741
        %v1830 = vunpack.c.l.b16 %v1742
        %v1831 = vunpack.c.h.b16 %v1742
        %v1832 = vunpack.c.l.b16 %v1743
        %v1833 = vunpack.c.h.b16 %v1743
        %v1834 = vunpack.c.l.b16 %v1744
        %v1835 = vunpack.c.h.b16 %v1744
        %v1836 = vunpack.c.l.b16 %v1745
        %v1837 = vunpack.c.h.b16 %v1745
        %v1838 = vunpack.c.l.b16 %v1746
        %v1839 = vunpack.c.h.b16 %v1746
        %v1840 = vunpack.c.l.b16 %v1747
        %v1841 = vunpack.c.h.b16 %v1747
        %v1842 = vunpack.c.l.b16 %v1748
        %v1843 = vunpack.c.h.b16 %v1748
        %v1844 = vunpack.c.l.b16 %v1749
        %v1845 = vunpack.c.h.b16 %v1749
        %v1846 = vpack.c.b16 %v1786, %v1782
        %v1847 = vpack.c.b16 %v1787, %v1783
        %v1848 = vpack.c.b16 %v1788, %v1784
        %v1849 = vpack.c.b16 %v1789, %v1785
        %v1850 = vpack.c.b16 %v1794, %v1790
        %v1851 = vpack.c.b16 %v1795, %v1791
        %v1852 = vpack.c.b16 %v1796, %v1792
        %v1853 = vpack.c.b16 %v1797, %v1793
        %v1854 = vpack.c.b16 %v1802, %v1798
        %v1855 = vpack.c.b16 %v1803, %v1799
        %v1856 = vpack.c.b16 %v1804, %v1800
        %v1857 = vpack.c.b16 %v1805, %v1801
        %v1858 = vpack.c.b16 %v1810, %v1806
        %v1859 = vpack.c.b16 %v1811, %v1807
        %v1860 = vpack.c.b16 %v1812, %v1808
        %v1861 = vpack.c.b16 %v1813, %v1809
        %v1862 = vpack.c.b16 %v1818, %v1814
        %v1863 = vpack.c.b16 %v1819, %v1815
        %v1864 = vpack.c.b16 %v1820, %v1816
        %v1865 = vpack.c.b16 %v1821, %v1817
        %v1866 = vpack.c.b16 %v1826, %v1822
        %v1867 = vpack.c.b16 %v1827, %v1823
        %v1868 = vpack.c.b16 %v1828, %v1824
        %v1869 = vpack.c.b16 %v1829, %v1825
        %v1870 = vpack.c.b16 %v1834, %v1830
        %v1871 = vpack.c.b16 %v1835, %v1831
        %v1872 = vpack.c.b16 %v1836, %v1832
        %v1873 = vpack.c.b16 %v1837, %v1833
        %v1874 = vpack.c.b16 %v1842, %v1838
        %v1875 = vpack.c.b16 %v1843, %v1839
        %v1876 = vpack.c.b16 %v1844, %v1840
        %v1877 = vpack.c.b16 %v1845, %v1841
        %1910 = vmatprep.subr.bf16.mxu0 %v1847
        %1911 = vmatpush1.bf16.msra.mxu0 %v1846
        %1912 = vmatprep.subr.bf16.mxu0 %v1851
        %1913 = vmatpush1.bf16.msra.mxu0 %v1850
        %1914 = vmatprep.subr.bf16.mxu0 %v1855
        %1915 = vmatpush1.bf16.msra.mxu0 %v1854
        %1916 = vmatprep.subr.bf16.mxu0 %v1859
        %1917 = vmatpush1.bf16.msra.mxu0 %v1858
        %1918 = vmatprep.subr.bf16.mxu0 %v1863
        %1919 = vmatpush1.bf16.msra.mxu0 %v1862
        %1920 = vmatprep.subr.bf16.mxu0 %v1867
        %1921 = vmatpush1.bf16.msra.mxu0 %v1866
        %1922 = vmatprep.subr.bf16.mxu0 %v1871
        %1923 = vmatpush1.bf16.msra.mxu0 %v1870
        %1924 = vmatprep.subr.bf16.mxu0 %v1875
        %1925 = vmatpush1.bf16.msra.mxu0 %v1874
        %1926 = vmatprep.subr.bf16.mxu0 0
        %1927 = vmatpush1.bf16.msra.mxu0 0
        %1928 = vmatprep.subr.bf16.mxu0 0
        %1929 = vmatpush1.bf16.msra.mxu0 0
        %1930 = vmatprep.subr.bf16.mxu0 0
        %1931 = vmatpush1.bf16.msra.mxu0 0
        %1932 = vmatprep.subr.bf16.mxu0 0
        %1933 = vmatpush1.bf16.msra.mxu0 0
        %1934 = vmatprep.subr.bf16.mxu0 0
        %1935 = vmatpush1.bf16.msra.mxu0 0
        %1936 = vmatprep.subr.bf16.mxu0 0
        %1937 = vmatpush1.bf16.msra.mxu0 0
        %1938 = vmatprep.subr.bf16.mxu0 0
        %1939 = vmatpush1.bf16.msra.mxu0 0
        %1940 = vmatprep.subr.bf16.mxu0 0
        %1941 = vmatpush1.bf16.msra.mxu0 0
        %1942 = vmatprep.mubr.bf16.mxu0 0
        %1943 = vmatmul.mubr.bf16.gmra.mrb[0].mxu0 %v1709
        %v1944 = vpop.f32.mrb[0].mxu0
        %v1945 = vadd.f32 0.0, %v1944
        %v1946 = vpop.f32.mrb[0].mxu0
        %v1947 = vadd.f32 0.0, %v1946
        %v1948 = vpop.f32.mrb[0].mxu0
        %v1949 = vpop.f32.mrb[0].mxu0
        %1950 = vdwg.mxu0
        %1951 = vmatprep.subr.bf16.mxu0 %v1849
        %1952 = vmatpush1.bf16.msra.mxu0 %v1848
        %1953 = vmatprep.subr.bf16.mxu0 %v1853
        %1954 = vmatpush1.bf16.msra.mxu0 %v1852
        %1955 = vmatprep.subr.bf16.mxu0 %v1857
        %1956 = vmatpush1.bf16.msra.mxu0 %v1856
        %1957 = vmatprep.subr.bf16.mxu0 %v1861
        %1958 = vmatpush1.bf16.msra.mxu0 %v1860
        %1959 = vmatprep.subr.bf16.mxu0 %v1865
        %1960 = vmatpush1.bf16.msra.mxu0 %v1864
        %1961 = vmatprep.subr.bf16.mxu0 %v1869
        %1962 = vmatpush1.bf16.msra.mxu0 %v1868
        %1963 = vmatprep.subr.bf16.mxu0 %v1873
        %1964 = vmatpush1.bf16.msra.mxu0 %v1872
        %1965 = vmatprep.subr.bf16.mxu0 %v1877
        %1966 = vmatpush1.bf16.msra.mxu0 %v1876
        %1967 = vmatprep.subr.bf16.mxu0 0
        %1968 = vmatpush1.bf16.msra.mxu0 0
        %1969 = vmatprep.subr.bf16.mxu0 0
        %1970 = vmatpush1.bf16.msra.mxu0 0
        %1971 = vmatprep.subr.bf16.mxu0 0
        %1972 = vmatpush1.bf16.msra.mxu0 0
        %1973 = vmatprep.subr.bf16.mxu0 0
        %1974 = vmatpush1.bf16.msra.mxu0 0
        %1975 = vmatprep.subr.bf16.mxu0 0
        %1976 = vmatpush1.bf16.msra.mxu0 0
        %1977 = vmatprep.subr.bf16.mxu0 0
        %1978 = vmatpush1.bf16.msra.mxu0 0
        %1979 = vmatprep.subr.bf16.mxu0 0
        %1980 = vmatpush1.bf16.msra.mxu0 0
        %1981 = vmatprep.subr.bf16.mxu0 0
        %1982 = vmatpush1.bf16.msra.mxu0 0
        %1983 = vmatprep.mubr.bf16.mxu0 0
        %1984 = vmatmul.mubr.bf16.gmra.mrb[0].mxu0 %v1709
        %v1985 = vpop.f32.mrb[0].mxu0
        %v1986 = vadd.f32 0.0, %v1985
        %v1987 = vpop.f32.mrb[0].mxu0
        %v1988 = vadd.f32 0.0, %v1987
        %v1989 = vpop.f32.mrb[0].mxu0
        %v1990 = vpop.f32.mrb[0].mxu0
        %1991 = vdwg.mxu0
        %v1992 = vadd.f32 %v1714, %v1945
        %v1993 = vadd.f32 %v1715, %v1947
        %v1994 = vadd.f32 %v1716, %v1986
        %v1995 = vadd.f32 %v1717, %v1988
        %v1996 = vxor.u32 %v1992, 2147483648
        %v1997 = vxor.u32 %v1993, 2147483648
        %v1998 = vxor.u32 %v1994, 2147483648
        %v1999 = vmul.f32 %v1996, 1.442695
        %v2000 = vpow.pop %v1999
        %v2001 = vmul.f32 %v1997, 1.442695
        %v2002 = vpow.pop %v2001
        %v2003 = vmul.f32 %v1998, 1.442695
        %v2004 = vpow.pop %v2003
        %v2005 = vadd.f32 %v2000, 1.0
        %v2006 = vadd.f32 %v2002, 1.0
        %v2007 = vadd.f32 %v2004, 1.0
        %v2008 = vrcp.pop %v2005
        %v2009 = vmul.f32 1.0, %v2008
        %v2010 = vrcp.pop %v2006
        %v2011 = vmul.f32 1.0, %v2010
        %v2012 = vrcp.pop %v2007
        %v2013 = vmul.f32 1.0, %v2012
        %v2014 = vtanh.pop %v1995
        %v2015 = vmul.f32 %v2011, %v1706
        %v2016 = vmul.f32 %v2009, %v2014
        %v2017 = vadd.f32 %v2015, %v2016
        %v2018 = vtanh.pop %v2017
        %v2019 = vmul.f32 %v2013, %v2018
        %v2020 = vpack.c.bf16 %v2019, %v2019
        %s2021 = scalar_lea.vmem [#allocation3], 4
        %2022 = vst [vmem:[%s2021] sm:$0xf] %v2020
        %s2023 = smul.u32 2, 4
        %s2024 = smul.addr %s2023, 8
        %s2025 = scalar_lea.vmem [#allocation2], %s2024
        %v2026 = vld [vmem:[%s2025] sm:$0xff]
        %v2027 = vld [vmem:[%s2025 + $0x8] sm:$0xff]
        %v2028 = vld [vmem:[%s2025 + $0x10] sm:$0xff]
        %v2029 = vld [vmem:[%s2025 + $0x18] sm:$0xff]
        %v2030 = vld [vmem:[%s4] sm:$0xff]
        %v2031 = vld [vmem:[%s4 + $0x8] sm:$0xff]
        %v2032 = vld [vmem:[%s4 + $0x10] sm:$0xff]
        %v2033 = vld [vmem:[%s4 + $0x18] sm:$0xff]
        %v2034 = vld [vmem:[%s4 + $0x20] sm:$0xff]
        %v2035 = vld [vmem:[%s4 + $0x28] sm:$0xff]
        %v2036 = vld [vmem:[%s4 + $0x30] sm:$0xff]
        %v2037 = vld [vmem:[%s4 + $0x38] sm:$0xff]
        %v2038 = vld [vmem:[%s4 + $0x40] sm:$0xff]
        %v2039 = vld [vmem:[%s4 + $0x48] sm:$0xff]
        %v2040 = vld [vmem:[%s4 + $0x50] sm:$0xff]
        %v2041 = vld [vmem:[%s4 + $0x58] sm:$0xff]
        %v2042 = vld [vmem:[%s4 + $0x60] sm:$0xff]
        %v2043 = vld [vmem:[%s4 + $0x68] sm:$0xff]
        %v2044 = vld [vmem:[%s4 + $0x70] sm:$0xff]
        %v2045 = vld [vmem:[%s4 + $0x78] sm:$0xff]
        %v2046 = vld [vmem:[%s4 + $0x80] sm:$0xff]
        %v2047 = vld [vmem:[%s4 + $0x88] sm:$0xff]
        %v2048 = vld [vmem:[%s4 + $0x90] sm:$0xff]
        %v2049 = vld [vmem:[%s4 + $0x98] sm:$0xff]
        %v2050 = vld [vmem:[%s4 + $0xa0] sm:$0xff]
        %v2051 = vld [vmem:[%s4 + $0xa8] sm:$0xff]
        %v2052 = vld [vmem:[%s4 + $0xb0] sm:$0xff]
        %v2053 = vld [vmem:[%s4 + $0xb8] sm:$0xff]
        %v2054 = vld [vmem:[%s4 + $0xc0] sm:$0xff]
        %v2055 = vld [vmem:[%s4 + $0xc8] sm:$0xff]
        %v2056 = vld [vmem:[%s4 + $0xd0] sm:$0xff]
        %v2057 = vld [vmem:[%s4 + $0xd8] sm:$0xff]
        %v2058 = vld [vmem:[%s4 + $0xe0] sm:$0xff]
        %v2059 = vld [vmem:[%s4 + $0xe8] sm:$0xff]
        %v2060 = vld [vmem:[%s4 + $0xf0] sm:$0xff]
        %v2061 = vld [vmem:[%s4 + $0xf8] sm:$0xff]
        %v2094 = vunpack.c.l.b16 %v2030
        %v2095 = vunpack.c.h.b16 %v2030
        %v2096 = vunpack.c.l.b16 %v2031
        %v2097 = vunpack.c.h.b16 %v2031
        %v2098 = vunpack.c.l.b16 %v2032
        %v2099 = vunpack.c.h.b16 %v2032
        %v2100 = vunpack.c.l.b16 %v2033
        %v2101 = vunpack.c.h.b16 %v2033
        %v2102 = vunpack.c.l.b16 %v2034
        %v2103 = vunpack.c.h.b16 %v2034
        %v2104 = vunpack.c.l.b16 %v2035
        %v2105 = vunpack.c.h.b16 %v2035
        %v2106 = vunpack.c.l.b16 %v2036
        %v2107 = vunpack.c.h.b16 %v2036
        %v2108 = vunpack.c.l.b16 %v2037
        %v2109 = vunpack.c.h.b16 %v2037
        %v2110 = vunpack.c.l.b16 %v2038
        %v2111 = vunpack.c.h.b16 %v2038
        %v2112 = vunpack.c.l.b16 %v2039
        %v2113 = vunpack.c.h.b16 %v2039
        %v2114 = vunpack.c.l.b16 %v2040
        %v2115 = vunpack.c.h.b16 %v2040
        %v2116 = vunpack.c.l.b16 %v2041
        %v2117 = vunpack.c.h.b16 %v2041
        %v2118 = vunpack.c.l.b16 %v2042
        %v2119 = vunpack.c.h.b16 %v2042
        %v2120 = vunpack.c.l.b16 %v2043
        %v2121 = vunpack.c.h.b16 %v2043
        %v2122 = vunpack.c.l.b16 %v2044
        %v2123 = vunpack.c.h.b16 %v2044
        %v2124 = vunpack.c.l.b16 %v2045
        %v2125 = vunpack.c.h.b16 %v2045
        %v2126 = vunpack.c.l.b16 %v2046
        %v2127 = vunpack.c.h.b16 %v2046
        %v2128 = vunpack.c.l.b16 %v2047
        %v2129 = vunpack.c.h.b16 %v2047
        %v2130 = vunpack.c.l.b16 %v2048
        %v2131 = vunpack.c.h.b16 %v2048
        %v2132 = vunpack.c.l.b16 %v2049
        %v2133 = vunpack.c.h.b16 %v2049
        %v2134 = vunpack.c.l.b16 %v2050
        %v2135 = vunpack.c.h.b16 %v2050
        %v2136 = vunpack.c.l.b16 %v2051
        %v2137 = vunpack.c.h.b16 %v2051
        %v2138 = vunpack.c.l.b16 %v2052
        %v2139 = vunpack.c.h.b16 %v2052
        %v2140 = vunpack.c.l.b16 %v2053
        %v2141 = vunpack.c.h.b16 %v2053
        %v2142 = vunpack.c.l.b16 %v2054
        %v2143 = vunpack.c.h.b16 %v2054
        %v2144 = vunpack.c.l.b16 %v2055
        %v2145 = vunpack.c.h.b16 %v2055
        %v2146 = vunpack.c.l.b16 %v2056
        %v2147 = vunpack.c.h.b16 %v2056
        %v2148 = vunpack.c.l.b16 %v2057
        %v2149 = vunpack.c.h.b16 %v2057
        %v2150 = vunpack.c.l.b16 %v2058
        %v2151 = vunpack.c.h.b16 %v2058
        %v2152 = vunpack.c.l.b16 %v2059
        %v2153 = vunpack.c.h.b16 %v2059
        %v2154 = vunpack.c.l.b16 %v2060
        %v2155 = vunpack.c.h.b16 %v2060
        %v2156 = vunpack.c.l.b16 %v2061
        %v2157 = vunpack.c.h.b16 %v2061
        %v2158 = vpack.c.b16 %v2098, %v2094
        %v2159 = vpack.c.b16 %v2099, %v2095
        %v2160 = vpack.c.b16 %v2100, %v2096
        %v2161 = vpack.c.b16 %v2101, %v2097
        %v2162 = vpack.c.b16 %v2106, %v2102
        %v2163 = vpack.c.b16 %v2107, %v2103
        %v2164 = vpack.c.b16 %v2108, %v2104
        %v2165 = vpack.c.b16 %v2109, %v2105
        %v2166 = vpack.c.b16 %v2114, %v2110
        %v2167 = vpack.c.b16 %v2115, %v2111
        %v2168 = vpack.c.b16 %v2116, %v2112
        %v2169 = vpack.c.b16 %v2117, %v2113
        %v2170 = vpack.c.b16 %v2122, %v2118
        %v2171 = vpack.c.b16 %v2123, %v2119
        %v2172 = vpack.c.b16 %v2124, %v2120
        %v2173 = vpack.c.b16 %v2125, %v2121
        %v2174 = vpack.c.b16 %v2130, %v2126
        %v2175 = vpack.c.b16 %v2131, %v2127
        %v2176 = vpack.c.b16 %v2132, %v2128
        %v2177 = vpack.c.b16 %v2133, %v2129
        %v2178 = vpack.c.b16 %v2138, %v2134
        %v2179 = vpack.c.b16 %v2139, %v2135
        %v2180 = vpack.c.b16 %v2140, %v2136
        %v2181 = vpack.c.b16 %v2141, %v2137
        %v2182 = vpack.c.b16 %v2146, %v2142
        %v2183 = vpack.c.b16 %v2147, %v2143
        %v2184 = vpack.c.b16 %v2148, %v2144
        %v2185 = vpack.c.b16 %v2149, %v2145
        %v2186 = vpack.c.b16 %v2154, %v2150
        %v2187 = vpack.c.b16 %v2155, %v2151
        %v2188 = vpack.c.b16 %v2156, %v2152
        %v2189 = vpack.c.b16 %v2157, %v2153
        %2222 = vmatprep.subr.bf16.mxu0 %v2159
        %2223 = vmatpush1.bf16.msra.mxu0 %v2158
        %2224 = vmatprep.subr.bf16.mxu0 %v2163
        %2225 = vmatpush1.bf16.msra.mxu0 %v2162
        %2226 = vmatprep.subr.bf16.mxu0 %v2167
        %2227 = vmatpush1.bf16.msra.mxu0 %v2166
        %2228 = vmatprep.subr.bf16.mxu0 %v2171
        %2229 = vmatpush1.bf16.msra.mxu0 %v2170
        %2230 = vmatprep.subr.bf16.mxu0 %v2175
        %2231 = vmatpush1.bf16.msra.mxu0 %v2174
        %2232 = vmatprep.subr.bf16.mxu0 %v2179
        %2233 = vmatpush1.bf16.msra.mxu0 %v2178
        %2234 = vmatprep.subr.bf16.mxu0 %v2183
        %2235 = vmatpush1.bf16.msra.mxu0 %v2182
        %2236 = vmatprep.subr.bf16.mxu0 %v2187
        %2237 = vmatpush1.bf16.msra.mxu0 %v2186
        %2238 = vmatprep.subr.bf16.mxu0 0
        %2239 = vmatpush1.bf16.msra.mxu0 0
        %2240 = vmatprep.subr.bf16.mxu0 0
        %2241 = vmatpush1.bf16.msra.mxu0 0
        %2242 = vmatprep.subr.bf16.mxu0 0
        %2243 = vmatpush1.bf16.msra.mxu0 0
        %2244 = vmatprep.subr.bf16.mxu0 0
        %2245 = vmatpush1.bf16.msra.mxu0 0
        %2246 = vmatprep.subr.bf16.mxu0 0
        %2247 = vmatpush1.bf16.msra.mxu0 0
        %2248 = vmatprep.subr.bf16.mxu0 0
        %2249 = vmatpush1.bf16.msra.mxu0 0
        %2250 = vmatprep.subr.bf16.mxu0 0
        %2251 = vmatpush1.bf16.msra.mxu0 0
        %2252 = vmatprep.subr.bf16.mxu0 0
        %2253 = vmatpush1.bf16.msra.mxu0 0
        %2254 = vmatprep.mubr.bf16.mxu0 0
        %2255 = vmatmul.mubr.bf16.gmra.mrb[0].mxu0 %v2020
        %v2256 = vpop.f32.mrb[0].mxu0
        %v2257 = vadd.f32 0.0, %v2256
        %v2258 = vpop.f32.mrb[0].mxu0
        %v2259 = vadd.f32 0.0, %v2258
        %v2260 = vpop.f32.mrb[0].mxu0
        %v2261 = vpop.f32.mrb[0].mxu0
        %2262 = vdwg.mxu0
        %2263 = vmatprep.subr.bf16.mxu0 %v2161
        %2264 = vmatpush1.bf16.msra.mxu0 %v2160
        %2265 = vmatprep.subr.bf16.mxu0 %v2165
        %2266 = vmatpush1.bf16.msra.mxu0 %v2164
        %2267 = vmatprep.subr.bf16.mxu0 %v2169
        %2268 = vmatpush1.bf16.msra.mxu0 %v2168
        %2269 = vmatprep.subr.bf16.mxu0 %v2173
        %2270 = vmatpush1.bf16.msra.mxu0 %v2172
        %2271 = vmatprep.subr.bf16.mxu0 %v2177
        %2272 = vmatpush1.bf16.msra.mxu0 %v2176
        %2273 = vmatprep.subr.bf16.mxu0 %v2181
        %2274 = vmatpush1.bf16.msra.mxu0 %v2180
        %2275 = vmatprep.subr.bf16.mxu0 %v2185
        %2276 = vmatpush1.bf16.msra.mxu0 %v2184
        %2277 = vmatprep.subr.bf16.mxu0 %v2189
        %2278 = vmatpush1.bf16.msra.mxu0 %v2188
        %2279 = vmatprep.subr.bf16.mxu0 0
        %2280 = vmatpush1.bf16.msra.mxu0 0
        %2281 = vmatprep.subr.bf16.mxu0 0
        %2282 = vmatpush1.bf16.msra.mxu0 0
        %2283 = vmatprep.subr.bf16.mxu0 0
        %2284 = vmatpush1.bf16.msra.mxu0 0
        %2285 = vmatprep.subr.bf16.mxu0 0
        %2286 = vmatpush1.bf16.msra.mxu0 0
        %2287 = vmatprep.subr.bf16.mxu0 0
        %2288 = vmatpush1.bf16.msra.mxu0 0
        %2289 = vmatprep.subr.bf16.mxu0 0
        %2290 = vmatpush1.bf16.msra.mxu0 0
        %2291 = vmatprep.subr.bf16.mxu0 0
        %2292 = vmatpush1.bf16.msra.mxu0 0
        %2293 = vmatprep.subr.bf16.mxu0 0
        %2294 = vmatpush1.bf16.msra.mxu0 0
        %2295 = vmatprep.mubr.bf16.mxu0 0
        %2296 = vmatmul.mubr.bf16.gmra.mrb[0].mxu0 %v2020
        %v2297 = vpop.f32.mrb[0].mxu0
        %v2298 = vadd.f32 0.0, %v2297
        %v2299 = vpop.f32.mrb[0].mxu0
        %v2300 = vadd.f32 0.0, %v2299
        %v2301 = vpop.f32.mrb[0].mxu0
        %v2302 = vpop.f32.mrb[0].mxu0
        %2303 = vdwg.mxu0
        %v2304 = vadd.f32 %v2026, %v2257
        %v2305 = vadd.f32 %v2027, %v2259
        %v2306 = vadd.f32 %v2028, %v2298
        %v2307 = vadd.f32 %v2029, %v2300
        %v2308 = vxor.u32 %v2304, 2147483648
        %v2309 = vxor.u32 %v2305, 2147483648
        %v2310 = vxor.u32 %v2306, 2147483648
        %v2311 = vmul.f32 %v2308, 1.442695
        %v2312 = vpow.pop %v2311
        %v2313 = vmul.f32 %v2309, 1.442695
        %v2314 = vpow.pop %v2313
        %v2315 = vmul.f32 %v2310, 1.442695
        %v2316 = vpow.pop %v2315
        %v2317 = vadd.f32 %v2312, 1.0
        %v2318 = vadd.f32 %v2314, 1.0
        %v2319 = vadd.f32 %v2316, 1.0
        %v2320 = vrcp.pop %v2317
        %v2321 = vmul.f32 1.0, %v2320
        %v2322 = vrcp.pop %v2318
        %v2323 = vmul.f32 1.0, %v2322
        %v2324 = vrcp.pop %v2319
        %v2325 = vmul.f32 1.0, %v2324
        %v2326 = vtanh.pop %v2307
        %v2327 = vmul.f32 %v2323, %v2017
        %v2328 = vmul.f32 %v2321, %v2326
        %v2329 = vadd.f32 %v2327, %v2328
        %v2330 = vtanh.pop %v2329
        %v2331 = vmul.f32 %v2325, %v2330
        %v2332 = vpack.c.bf16 %v2331, %v2331
        %s2333 = scalar_lea.vmem [#allocation3], 8
        %2334 = vst [vmem:[%s2333] sm:$0xf] %v2332
        %s2335 = smul.u32 3, 4
        %s2336 = smul.addr %s2335, 8
        %s2337 = scalar_lea.vmem [#allocation2], %s2336
        %v2338 = vld [vmem:[%s2337] sm:$0xff]
        %v2339 = vld [vmem:[%s2337 + $0x8] sm:$0xff]
        %v2340 = vld [vmem:[%s2337 + $0x10] sm:$0xff]
        %v2341 = vld [vmem:[%s2337 + $0x18] sm:$0xff]
        %v2342 = vld [vmem:[%s4] sm:$0xff]
        %v2343 = vld [vmem:[%s4 + $0x8] sm:$0xff]
        %v2344 = vld [vmem:[%s4 + $0x10] sm:$0xff]
        %v2345 = vld [vmem:[%s4 + $0x18] sm:$0xff]
        %v2346 = vld [vmem:[%s4 + $0x20] sm:$0xff]
        %v2347 = vld [vmem:[%s4 + $0x28] sm:$0xff]
        %v2348 = vld [vmem:[%s4 + $0x30] sm:$0xff]
        %v2349 = vld [vmem:[%s4 + $0x38] sm:$0xff]
        %v2350 = vld [vmem:[%s4 + $0x40] sm:$0xff]
        %v2351 = vld [vmem:[%s4 + $0x48] sm:$0xff]
        %v2352 = vld [vmem:[%s4 + $0x50] sm:$0xff]
        %v2353 = vld [vmem:[%s4 + $0x58] sm:$0xff]
        %v2354 = vld [vmem:[%s4 + $0x60] sm:$0xff]
        %v2355 = vld [vmem:[%s4 + $0x68] sm:$0xff]
        %v2356 = vld [vmem:[%s4 + $0x70] sm:$0xff]
        %v2357 = vld [vmem:[%s4 + $0x78] sm:$0xff]
        %v2358 = vld [vmem:[%s4 + $0x80] sm:$0xff]
        %v2359 = vld [vmem:[%s4 + $0x88] sm:$0xff]
        %v2360 = vld [vmem:[%s4 + $0x90] sm:$0xff]
        %v2361 = vld [vmem:[%s4 + $0x98] sm:$0xff]
        %v2362 = vld [vmem:[%s4 + $0xa0] sm:$0xff]
        %v2363 = vld [vmem:[%s4 + $0xa8] sm:$0xff]
        %v2364 = vld [vmem:[%s4 + $0xb0] sm:$0xff]
        %v2365 = vld [vmem:[%s4 + $0xb8] sm:$0xff]
        %v2366 = vld [vmem:[%s4 + $0xc0] sm:$0xff]
        %v2367 = vld [vmem:[%s4 + $0xc8] sm:$0xff]
        %v2368 = vld [vmem:[%s4 + $0xd0] sm:$0xff]
        %v2369 = vld [vmem:[%s4 + $0xd8] sm:$0xff]
        %v2370 = vld [vmem:[%s4 + $0xe0] sm:$0xff]
        %v2371 = vld [vmem:[%s4 + $0xe8] sm:$0xff]
        %v2372 = vld [vmem:[%s4 + $0xf0] sm:$0xff]
        %v2373 = vld [vmem:[%s4 + $0xf8] sm:$0xff]
        %v2406 = vunpack.c.l.b16 %v2342
        %v2407 = vunpack.c.h.b16 %v2342
        %v2408 = vunpack.c.l.b16 %v2343
        %v2409 = vunpack.c.h.b16 %v2343
        %v2410 = vunpack.c.l.b16 %v2344
        %v2411 = vunpack.c.h.b16 %v2344
        %v2412 = vunpack.c.l.b16 %v2345
        %v2413 = vunpack.c.h.b16 %v2345
        %v2414 = vunpack.c.l.b16 %v2346
        %v2415 = vunpack.c.h.b16 %v2346
        %v2416 = vunpack.c.l.b16 %v2347
        %v2417 = vunpack.c.h.b16 %v2347
        %v2418 = vunpack.c.l.b16 %v2348
        %v2419 = vunpack.c.h.b16 %v2348
        %v2420 = vunpack.c.l.b16 %v2349
        %v2421 = vunpack.c.h.b16 %v2349
        %v2422 = vunpack.c.l.b16 %v2350
        %v2423 = vunpack.c.h.b16 %v2350
        %v2424 = vunpack.c.l.b16 %v2351
        %v2425 = vunpack.c.h.b16 %v2351
        %v2426 = vunpack.c.l.b16 %v2352
        %v2427 = vunpack.c.h.b16 %v2352
        %v2428 = vunpack.c.l.b16 %v2353
        %v2429 = vunpack.c.h.b16 %v2353
        %v2430 = vunpack.c.l.b16 %v2354
        %v2431 = vunpack.c.h.b16 %v2354
        %v2432 = vunpack.c.l.b16 %v2355
        %v2433 = vunpack.c.h.b16 %v2355
        %v2434 = vunpack.c.l.b16 %v2356
        %v2435 = vunpack.c.h.b16 %v2356
        %v2436 = vunpack.c.l.b16 %v2357
        %v2437 = vunpack.c.h.b16 %v2357
        %v2438 = vunpack.c.l.b16 %v2358
        %v2439 = vunpack.c.h.b16 %v2358
        %v2440 = vunpack.c.l.b16 %v2359
        %v2441 = vunpack.c.h.b16 %v2359
        %v2442 = vunpack.c.l.b16 %v2360
        %v2443 = vunpack.c.h.b16 %v2360
        %v2444 = vunpack.c.l.b16 %v2361
        %v2445 = vunpack.c.h.b16 %v2361
        %v2446 = vunpack.c.l.b16 %v2362
        %v2447 = vunpack.c.h.b16 %v2362
        %v2448 = vunpack.c.l.b16 %v2363
        %v2449 = vunpack.c.h.b16 %v2363
        %v2450 = vunpack.c.l.b16 %v2364
        %v2451 = vunpack.c.h.b16 %v2364
        %v2452 = vunpack.c.l.b16 %v2365
        %v2453 = vunpack.c.h.b16 %v2365
        %v2454 = vunpack.c.l.b16 %v2366
        %v2455 = vunpack.c.h.b16 %v2366
        %v2456 = vunpack.c.l.b16 %v2367
        %v2457 = vunpack.c.h.b16 %v2367
        %v2458 = vunpack.c.l.b16 %v2368
        %v2459 = vunpack.c.h.b16 %v2368
        %v2460 = vunpack.c.l.b16 %v2369
        %v2461 = vunpack.c.h.b16 %v2369
        %v2462 = vunpack.c.l.b16 %v2370
        %v2463 = vunpack.c.h.b16 %v2370
        %v2464 = vunpack.c.l.b16 %v2371
        %v2465 = vunpack.c.h.b16 %v2371
        %v2466 = vunpack.c.l.b16 %v2372
        %v2467 = vunpack.c.h.b16 %v2372
        %v2468 = vunpack.c.l.b16 %v2373
        %v2469 = vunpack.c.h.b16 %v2373
        %v2470 = vpack.c.b16 %v2410, %v2406
        %v2471 = vpack.c.b16 %v2411, %v2407
        %v2472 = vpack.c.b16 %v2412, %v2408
        %v2473 = vpack.c.b16 %v2413, %v2409
        %v2474 = vpack.c.b16 %v2418, %v2414
        %v2475 = vpack.c.b16 %v2419, %v2415
        %v2476 = vpack.c.b16 %v2420, %v2416
        %v2477 = vpack.c.b16 %v2421, %v2417
        %v2478 = vpack.c.b16 %v2426, %v2422
        %v2479 = vpack.c.b16 %v2427, %v2423
        %v2480 = vpack.c.b16 %v2428, %v2424
        %v2481 = vpack.c.b16 %v2429, %v2425
        %v2482 = vpack.c.b16 %v2434, %v2430
        %v2483 = vpack.c.b16 %v2435, %v2431
        %v2484 = vpack.c.b16 %v2436, %v2432
        %v2485 = vpack.c.b16 %v2437, %v2433
        %v2486 = vpack.c.b16 %v2442, %v2438
        %v2487 = vpack.c.b16 %v2443, %v2439
        %v2488 = vpack.c.b16 %v2444, %v2440
        %v2489 = vpack.c.b16 %v2445, %v2441
        %v2490 = vpack.c.b16 %v2450, %v2446
        %v2491 = vpack.c.b16 %v2451, %v2447
        %v2492 = vpack.c.b16 %v2452, %v2448
        %v2493 = vpack.c.b16 %v2453, %v2449
        %v2494 = vpack.c.b16 %v2458, %v2454
        %v2495 = vpack.c.b16 %v2459, %v2455
        %v2496 = vpack.c.b16 %v2460, %v2456
        %v2497 = vpack.c.b16 %v2461, %v2457
        %v2498 = vpack.c.b16 %v2466, %v2462
        %v2499 = vpack.c.b16 %v2467, %v2463
        %v2500 = vpack.c.b16 %v2468, %v2464
        %v2501 = vpack.c.b16 %v2469, %v2465
        %2534 = vmatprep.subr.bf16.mxu0 %v2471
        %2535 = vmatpush1.bf16.msra.mxu0 %v2470
        %2536 = vmatprep.subr.bf16.mxu0 %v2475
        %2537 = vmatpush1.bf16.msra.mxu0 %v2474
        %2538 = vmatprep.subr.bf16.mxu0 %v2479
        %2539 = vmatpush1.bf16.msra.mxu0 %v2478
        %2540 = vmatprep.subr.bf16.mxu0 %v2483
        %2541 = vmatpush1.bf16.msra.mxu0 %v2482
        %2542 = vmatprep.subr.bf16.mxu0 %v2487
        %2543 = vmatpush1.bf16.msra.mxu0 %v2486
        %2544 = vmatprep.subr.bf16.mxu0 %v2491
        %2545 = vmatpush1.bf16.msra.mxu0 %v2490
        %2546 = vmatprep.subr.bf16.mxu0 %v2495
        %2547 = vmatpush1.bf16.msra.mxu0 %v2494
        %2548 = vmatprep.subr.bf16.mxu0 %v2499
        %2549 = vmatpush1.bf16.msra.mxu0 %v2498
        %2550 = vmatprep.subr.bf16.mxu0 0
        %2551 = vmatpush1.bf16.msra.mxu0 0
        %2552 = vmatprep.subr.bf16.mxu0 0
        %2553 = vmatpush1.bf16.msra.mxu0 0
        %2554 = vmatprep.subr.bf16.mxu0 0
        %2555 = vmatpush1.bf16.msra.mxu0 0
        %2556 = vmatprep.subr.bf16.mxu0 0
        %2557 = vmatpush1.bf16.msra.mxu0 0
        %2558 = vmatprep.subr.bf16.mxu0 0
        %2559 = vmatpush1.bf16.msra.mxu0 0
        %2560 = vmatprep.subr.bf16.mxu0 0
        %2561 = vmatpush1.bf16.msra.mxu0 0
        %2562 = vmatprep.subr.bf16.mxu0 0
        %2563 = vmatpush1.bf16.msra.mxu0 0
        %2564 = vmatprep.subr.bf16.mxu0 0
        %2565 = vmatpush1.bf16.msra.mxu0 0
        %2566 = vmatprep.mubr.bf16.mxu0 0
        %2567 = vmatmul.mubr.bf16.gmra.mrb[0].mxu0 %v2332
        %v2568 = vpop.f32.mrb[0].mxu0
        %v2569 = vadd.f32 0.0, %v2568
        %v2570 = vpop.f32.mrb[0].mxu0
        %v2571 = vadd.f32 0.0, %v2570
        %v2572 = vpop.f32.mrb[0].mxu0
        %v2573 = vpop.f32.mrb[0].mxu0
        %2574 = vdwg.mxu0
        %2575 = vmatprep.subr.bf16.mxu0 %v2473
        %2576 = vmatpush1.bf16.msra.mxu0 %v2472
        %2577 = vmatprep.subr.bf16.mxu0 %v2477
        %2578 = vmatpush1.bf16.msra.mxu0 %v2476
        %2579 = vmatprep.subr.bf16.mxu0 %v2481
        %2580 = vmatpush1.bf16.msra.mxu0 %v2480
        %2581 = vmatprep.subr.bf16.mxu0 %v2485
        %2582 = vmatpush1.bf16.msra.mxu0 %v2484
        %2583 = vmatprep.subr.bf16.mxu0 %v2489
        %2584 = vmatpush1.bf16.msra.mxu0 %v2488
        %2585 = vmatprep.subr.bf16.mxu0 %v2493
        %2586 = vmatpush1.bf16.msra.mxu0 %v2492
        %2587 = vmatprep.subr.bf16.mxu0 %v2497
        %2588 = vmatpush1.bf16.msra.mxu0 %v2496
        %2589 = vmatprep.subr.bf16.mxu0 %v2501
        %2590 = vmatpush1.bf16.msra.mxu0 %v2500
        %2591 = vmatprep.subr.bf16.mxu0 0
        %2592 = vmatpush1.bf16.msra.mxu0 0
        %2593 = vmatprep.subr.bf16.mxu0 0
        %2594 = vmatpush1.bf16.msra.mxu0 0
        %2595 = vmatprep.subr.bf16.mxu0 0
        %2596 = vmatpush1.bf16.msra.mxu0 0
        %2597 = vmatprep.subr.bf16.mxu0 0
        %2598 = vmatpush1.bf16.msra.mxu0 0
        %2599 = vmatprep.subr.bf16.mxu0 0
        %2600 = vmatpush1.bf16.msra.mxu0 0
        %2601 = vmatprep.subr.bf16.mxu0 0
        %2602 = vmatpush1.bf16.msra.mxu0 0
        %2603 = vmatprep.subr.bf16.mxu0 0
        %2604 = vmatpush1.bf16.msra.mxu0 0
        %2605 = vmatprep.subr.bf16.mxu0 0
        %2606 = vmatpush1.bf16.msra.mxu0 0
        %2607 = vmatprep.mubr.bf16.mxu0 0
        %2608 = vmatmul.mubr.bf16.gmra.mrb[0].mxu0 %v2332
        %v2609 = vpop.f32.mrb[0].mxu0
        %v2610 = vadd.f32 0.0, %v2609
        %v2611 = vpop.f32.mrb[0].mxu0
        %v2612 = vadd.f32 0.0, %v2611
        %v2613 = vpop.f32.mrb[0].mxu0
        %v2614 = vpop.f32.mrb[0].mxu0
        %2615 = vdwg.mxu0
        %v2616 = vadd.f32 %v2338, %v2569
        %v2617 = vadd.f32 %v2339, %v2571
        %v2618 = vadd.f32 %v2340, %v2610
        %v2619 = vadd.f32 %v2341, %v2612
        %v2620 = vxor.u32 %v2616, 2147483648
        %v2621 = vxor.u32 %v2617, 2147483648
        %v2622 = vxor.u32 %v2618, 2147483648
        %v2623 = vmul.f32 %v2620, 1.442695
        %v2624 = vpow.pop %v2623
        %v2625 = vmul.f32 %v2621, 1.442695
        %v2626 = vpow.pop %v2625
        %v2627 = vmul.f32 %v2622, 1.442695
        %v2628 = vpow.pop %v2627
        %v2629 = vadd.f32 %v2624, 1.0
        %v2630 = vadd.f32 %v2626, 1.0
        %v2631 = vadd.f32 %v2628, 1.0
        %v2632 = vrcp.pop %v2629
        %v2633 = vmul.f32 1.0, %v2632
        %v2634 = vrcp.pop %v2630
        %v2635 = vmul.f32 1.0, %v2634
        %v2636 = vrcp.pop %v2631
        %v2637 = vmul.f32 1.0, %v2636
        %v2638 = vtanh.pop %v2619
        %v2639 = vmul.f32 %v2635, %v2329
        %v2640 = vmul.f32 %v2633, %v2638
        %v2641 = vadd.f32 %v2639, %v2640
        %v2642 = vtanh.pop %v2641
        %v2643 = vmul.f32 %v2637, %v2642
        %v2644 = vpack.c.bf16 %v2643, %v2643
        %s2645 = scalar_lea.vmem [#allocation3], 12
        %2646 = vst [vmem:[%s2645] sm:$0xf] %v2644
        %s2647 = smul.u32 4, 4
        %s2648 = smul.addr %s2647, 8
        %s2649 = scalar_lea.vmem [#allocation2], %s2648
        %v2650 = vld [vmem:[%s2649] sm:$0xff]
        %v2651 = vld [vmem:[%s2649 + $0x8] sm:$0xff]
        %v2652 = vld [vmem:[%s2649 + $0x10] sm:$0xff]
        %v2653 = vld [vmem:[%s2649 + $0x18] sm:$0xff]
        %v2654 = vld [vmem:[%s4] sm:$0xff]
        %v2655 = vld [vmem:[%s4 + $0x8] sm:$0xff]
        %v2656 = vld [vmem:[%s4 + $0x10] sm:$0xff]
        %v2657 = vld [vmem:[%s4 + $0x18] sm:$0xff]
        %v2658 = vld [vmem:[%s4 + $0x20] sm:$0xff]
        %v2659 = vld [vmem:[%s4 + $0x28] sm:$0xff]
        %v2660 = vld [vmem:[%s4 + $0x30] sm:$0xff]
        %v2661 = vld [vmem:[%s4 + $0x38] sm:$0xff]
        %v2662 = vld [vmem:[%s4 + $0x40] sm:$0xff]
        %v2663 = vld [vmem:[%s4 + $0x48] sm:$0xff]
        %v2664 = vld [vmem:[%s4 + $0x50] sm:$0xff]
        %v2665 = vld [vmem:[%s4 + $0x58] sm:$0xff]
        %v2666 = vld [vmem:[%s4 + $0x60] sm:$0xff]
        %v2667 = vld [vmem:[%s4 + $0x68] sm:$0xff]
        %v2668 = vld [vmem:[%s4 + $0x70] sm:$0xff]
        %v2669 = vld [vmem:[%s4 + $0x78] sm:$0xff]
        %v2670 = vld [vmem:[%s4 + $0x80] sm:$0xff]
        %v2671 = vld [vmem:[%s4 + $0x88] sm:$0xff]
        %v2672 = vld [vmem:[%s4 + $0x90] sm:$0xff]
        %v2673 = vld [vmem:[%s4 + $0x98] sm:$0xff]
        %v2674 = vld [vmem:[%s4 + $0xa0] sm:$0xff]
        %v2675 = vld [vmem:[%s4 + $0xa8] sm:$0xff]
        %v2676 = vld [vmem:[%s4 + $0xb0] sm:$0xff]
        %v2677 = vld [vmem:[%s4 + $0xb8] sm:$0xff]
        %v2678 = vld [vmem:[%s4 + $0xc0] sm:$0xff]
        %v2679 = vld [vmem:[%s4 + $0xc8] sm:$0xff]
        %v2680 = vld [vmem:[%s4 + $0xd0] sm:$0xff]
        %v2681 = vld [vmem:[%s4 + $0xd8] sm:$0xff]
        %v2682 = vld [vmem:[%s4 + $0xe0] sm:$0xff]
        %v2683 = vld [vmem:[%s4 + $0xe8] sm:$0xff]
        %v2684 = vld [vmem:[%s4 + $0xf0] sm:$0xff]
        %v2685 = vld [vmem:[%s4 + $0xf8] sm:$0xff]
        %v2718 = vunpack.c.l.b16 %v2654
        %v2719 = vunpack.c.h.b16 %v2654
        %v2720 = vunpack.c.l.b16 %v2655
        %v2721 = vunpack.c.h.b16 %v2655
        %v2722 = vunpack.c.l.b16 %v2656
        %v2723 = vunpack.c.h.b16 %v2656
        %v2724 = vunpack.c.l.b16 %v2657
        %v2725 = vunpack.c.h.b16 %v2657
        %v2726 = vunpack.c.l.b16 %v2658
        %v2727 = vunpack.c.h.b16 %v2658
        %v2728 = vunpack.c.l.b16 %v2659
        %v2729 = vunpack.c.h.b16 %v2659
        %v2730 = vunpack.c.l.b16 %v2660
        %v2731 = vunpack.c.h.b16 %v2660
        %v2732 = vunpack.c.l.b16 %v2661
        %v2733 = vunpack.c.h.b16 %v2661
        %v2734 = vunpack.c.l.b16 %v2662
        %v2735 = vunpack.c.h.b16 %v2662
        %v2736 = vunpack.c.l.b16 %v2663
        %v2737 = vunpack.c.h.b16 %v2663
        %v2738 = vunpack.c.l.b16 %v2664
        %v2739 = vunpack.c.h.b16 %v2664
        %v2740 = vunpack.c.l.b16 %v2665
        %v2741 = vunpack.c.h.b16 %v2665
        %v2742 = vunpack.c.l.b16 %v2666
        %v2743 = vunpack.c.h.b16 %v2666
        %v2744 = vunpack.c.l.b16 %v2667
        %v2745 = vunpack.c.h.b16 %v2667
        %v2746 = vunpack.c.l.b16 %v2668
        %v2747 = vunpack.c.h.b16 %v2668
        %v2748 = vunpack.c.l.b16 %v2669
        %v2749 = vunpack.c.h.b16 %v2669
        %v2750 = vunpack.c.l.b16 %v2670
        %v2751 = vunpack.c.h.b16 %v2670
        %v2752 = vunpack.c.l.b16 %v2671
        %v2753 = vunpack.c.h.b16 %v2671
        %v2754 = vunpack.c.l.b16 %v2672
        %v2755 = vunpack.c.h.b16 %v2672
        %v2756 = vunpack.c.l.b16 %v2673
        %v2757 = vunpack.c.h.b16 %v2673
        %v2758 = vunpack.c.l.b16 %v2674
        %v2759 = vunpack.c.h.b16 %v2674
        %v2760 = vunpack.c.l.b16 %v2675
        %v2761 = vunpack.c.h.b16 %v2675
        %v2762 = vunpack.c.l.b16 %v2676
        %v2763 = vunpack.c.h.b16 %v2676
        %v2764 = vunpack.c.l.b16 %v2677
        %v2765 = vunpack.c.h.b16 %v2677
        %v2766 = vunpack.c.l.b16 %v2678
        %v2767 = vunpack.c.h.b16 %v2678
        %v2768 = vunpack.c.l.b16 %v2679
        %v2769 = vunpack.c.h.b16 %v2679
        %v2770 = vunpack.c.l.b16 %v2680
        %v2771 = vunpack.c.h.b16 %v2680
        %v2772 = vunpack.c.l.b16 %v2681
        %v2773 = vunpack.c.h.b16 %v2681
        %v2774 = vunpack.c.l.b16 %v2682
        %v2775 = vunpack.c.h.b16 %v2682
        %v2776 = vunpack.c.l.b16 %v2683
        %v2777 = vunpack.c.h.b16 %v2683
        %v2778 = vunpack.c.l.b16 %v2684
        %v2779 = vunpack.c.h.b16 %v2684
        %v2780 = vunpack.c.l.b16 %v2685
        %v2781 = vunpack.c.h.b16 %v2685
        %v2782 = vpack.c.b16 %v2722, %v2718
        %v2783 = vpack.c.b16 %v2723, %v2719
        %v2784 = vpack.c.b16 %v2724, %v2720
        %v2785 = vpack.c.b16 %v2725, %v2721
        %v2786 = vpack.c.b16 %v2730, %v2726
        %v2787 = vpack.c.b16 %v2731, %v2727
        %v2788 = vpack.c.b16 %v2732, %v2728
        %v2789 = vpack.c.b16 %v2733, %v2729
        %v2790 = vpack.c.b16 %v2738, %v2734
        %v2791 = vpack.c.b16 %v2739, %v2735
        %v2792 = vpack.c.b16 %v2740, %v2736
        %v2793 = vpack.c.b16 %v2741, %v2737
        %v2794 = vpack.c.b16 %v2746, %v2742
        %v2795 = vpack.c.b16 %v2747, %v2743
        %v2796 = vpack.c.b16 %v2748, %v2744
        %v2797 = vpack.c.b16 %v2749, %v2745
        %v2798 = vpack.c.b16 %v2754, %v2750
        %v2799 = vpack.c.b16 %v2755, %v2751
        %v2800 = vpack.c.b16 %v2756, %v2752
        %v2801 = vpack.c.b16 %v2757, %v2753
        %v2802 = vpack.c.b16 %v2762, %v2758
        %v2803 = vpack.c.b16 %v2763, %v2759
        %v2804 = vpack.c.b16 %v2764, %v2760
        %v2805 = vpack.c.b16 %v2765, %v2761
        %v2806 = vpack.c.b16 %v2770, %v2766
        %v2807 = vpack.c.b16 %v2771, %v2767
        %v2808 = vpack.c.b16 %v2772, %v2768
        %v2809 = vpack.c.b16 %v2773, %v2769
        %v2810 = vpack.c.b16 %v2778, %v2774
        %v2811 = vpack.c.b16 %v2779, %v2775
        %v2812 = vpack.c.b16 %v2780, %v2776
        %v2813 = vpack.c.b16 %v2781, %v2777
        %2846 = vmatprep.subr.bf16.mxu0 %v2783
        %2847 = vmatpush1.bf16.msra.mxu0 %v2782
        %2848 = vmatprep.subr.bf16.mxu0 %v2787
        %2849 = vmatpush1.bf16.msra.mxu0 %v2786
        %2850 = vmatprep.subr.bf16.mxu0 %v2791
        %2851 = vmatpush1.bf16.msra.mxu0 %v2790
        %2852 = vmatprep.subr.bf16.mxu0 %v2795
        %2853 = vmatpush1.bf16.msra.mxu0 %v2794
        %2854 = vmatprep.subr.bf16.mxu0 %v2799
        %2855 = vmatpush1.bf16.msra.mxu0 %v2798
        %2856 = vmatprep.subr.bf16.mxu0 %v2803
        %2857 = vmatpush1.bf16.msra.mxu0 %v2802
        %2858 = vmatprep.subr.bf16.mxu0 %v2807
        %2859 = vmatpush1.bf16.msra.mxu0 %v2806
        %2860 = vmatprep.subr.bf16.mxu0 %v2811
        %2861 = vmatpush1.bf16.msra.mxu0 %v2810
        %2862 = vmatprep.subr.bf16.mxu0 0
        %2863 = vmatpush1.bf16.msra.mxu0 0
        %2864 = vmatprep.subr.bf16.mxu0 0
        %2865 = vmatpush1.bf16.msra.mxu0 0
        %2866 = vmatprep.subr.bf16.mxu0 0
        %2867 = vmatpush1.bf16.msra.mxu0 0
        %2868 = vmatprep.subr.bf16.mxu0 0
        %2869 = vmatpush1.bf16.msra.mxu0 0
        %2870 = vmatprep.subr.bf16.mxu0 0
        %2871 = vmatpush1.bf16.msra.mxu0 0
        %2872 = vmatprep.subr.bf16.mxu0 0
        %2873 = vmatpush1.bf16.msra.mxu0 0
        %2874 = vmatprep.subr.bf16.mxu0 0
        %2875 = vmatpush1.bf16.msra.mxu0 0
        %2876 = vmatprep.subr.bf16.mxu0 0
        %2877 = vmatpush1.bf16.msra.mxu0 0
        %2878 = vmatprep.mubr.bf16.mxu0 0
        %2879 = vmatmul.mubr.bf16.gmra.mrb[0].mxu0 %v2644
        %v2880 = vpop.f32.mrb[0].mxu0
        %v2881 = vadd.f32 0.0, %v2880
        %v2882 = vpop.f32.mrb[0].mxu0
        %v2883 = vadd.f32 0.0, %v2882
        %v2884 = vpop.f32.mrb[0].mxu0
        %v2885 = vpop.f32.mrb[0].mxu0
        %2886 = vdwg.mxu0
        %2887 = vmatprep.subr.bf16.mxu0 %v2785
        %2888 = vmatpush1.bf16.msra.mxu0 %v2784
        %2889 = vmatprep.subr.bf16.mxu0 %v2789
        %2890 = vmatpush1.bf16.msra.mxu0 %v2788
        %2891 = vmatprep.subr.bf16.mxu0 %v2793
        %2892 = vmatpush1.bf16.msra.mxu0 %v2792
        %2893 = vmatprep.subr.bf16.mxu0 %v2797
        %2894 = vmatpush1.bf16.msra.mxu0 %v2796
        %2895 = vmatprep.subr.bf16.mxu0 %v2801
        %2896 = vmatpush1.bf16.msra.mxu0 %v2800
        %2897 = vmatprep.subr.bf16.mxu0 %v2805
        %2898 = vmatpush1.bf16.msra.mxu0 %v2804
        %2899 = vmatprep.subr.bf16.mxu0 %v2809
        %2900 = vmatpush1.bf16.msra.mxu0 %v2808
        %2901 = vmatprep.subr.bf16.mxu0 %v2813
        %2902 = vmatpush1.bf16.msra.mxu0 %v2812
        %2903 = vmatprep.subr.bf16.mxu0 0
        %2904 = vmatpush1.bf16.msra.mxu0 0
        %2905 = vmatprep.subr.bf16.mxu0 0
        %2906 = vmatpush1.bf16.msra.mxu0 0
        %2907 = vmatprep.subr.bf16.mxu0 0
        %2908 = vmatpush1.bf16.msra.mxu0 0
        %2909 = vmatprep.subr.bf16.mxu0 0
        %2910 = vmatpush1.bf16.msra.mxu0 0
        %2911 = vmatprep.subr.bf16.mxu0 0
        %2912 = vmatpush1.bf16.msra.mxu0 0
        %2913 = vmatprep.subr.bf16.mxu0 0
        %2914 = vmatpush1.bf16.msra.mxu0 0
        %2915 = vmatprep.subr.bf16.mxu0 0
        %2916 = vmatpush1.bf16.msra.mxu0 0
        %2917 = vmatprep.subr.bf16.mxu0 0
        %2918 = vmatpush1.bf16.msra.mxu0 0
        %2919 = vmatprep.mubr.bf16.mxu0 0
        %2920 = vmatmul.mubr.bf16.gmra.mrb[0].mxu0 %v2644
        %v2921 = vpop.f32.mrb[0].mxu0
        %v2922 = vadd.f32 0.0, %v2921
        %v2923 = vpop.f32.mrb[0].mxu0
        %v2924 = vadd.f32 0.0, %v2923
        %v2925 = vpop.f32.mrb[0].mxu0
        %v2926 = vpop.f32.mrb[0].mxu0
        %2927 = vdwg.mxu0
        %v2928 = vadd.f32 %v2650, %v2881
        %v2929 = vadd.f32 %v2651, %v2883
        %v2930 = vadd.f32 %v2652, %v2922
        %v2931 = vadd.f32 %v2653, %v2924
        %v2932 = vxor.u32 %v2928, 2147483648
        %v2933 = vxor.u32 %v2929, 2147483648
        %v2934 = vxor.u32 %v2930, 2147483648
        %v2935 = vmul.f32 %v2932, 1.442695
        %v2936 = vpow.pop %v2935
        %v2937 = vmul.f32 %v2933, 1.442695
        %v2938 = vpow.pop %v2937
        %v2939 = vmul.f32 %v2934, 1.442695
        %v2940 = vpow.pop %v2939
        %v2941 = vadd.f32 %v2936, 1.0
        %v2942 = vadd.f32 %v2938, 1.0
        %v2943 = vadd.f32 %v2940, 1.0
        %v2944 = vrcp.pop %v2941
        %v2945 = vmul.f32 1.0, %v2944
        %v2946 = vrcp.pop %v2942
        %v2947 = vmul.f32 1.0, %v2946
        %v2948 = vrcp.pop %v2943
        %v2949 = vmul.f32 1.0, %v2948
        %v2950 = vtanh.pop %v2931
        %v2951 = vmul.f32 %v2947, %v2641
        %v2952 = vmul.f32 %v2945, %v2950
        %v2953 = vadd.f32 %v2951, %v2952
        %v2954 = vtanh.pop %v2953
        %v2955 = vmul.f32 %v2949, %v2954
        %v2956 = vpack.c.bf16 %v2955, %v2955
        %s2957 = scalar_lea.vmem [#allocation3], 16
        %2958 = vst [vmem:[%s2957] sm:$0xf] %v2956
        %s2959 = smul.u32 5, 4
        %s2960 = smul.addr %s2959, 8
        %s2961 = scalar_lea.vmem [#allocation2], %s2960
        %v2962 = vld [vmem:[%s2961] sm:$0xff]
        %v2963 = vld [vmem:[%s2961 + $0x8] sm:$0xff]
        %v2964 = vld [vmem:[%s2961 + $0x10] sm:$0xff]
        %v2965 = vld [vmem:[%s2961 + $0x18] sm:$0xff]
        %v2966 = vld [vmem:[%s4] sm:$0xff]
        %v2967 = vld [vmem:[%s4 + $0x8] sm:$0xff]
        %v2968 = vld [vmem:[%s4 + $0x10] sm:$0xff]
        %v2969 = vld [vmem:[%s4 + $0x18] sm:$0xff]
        %v2970 = vld [vmem:[%s4 + $0x20] sm:$0xff]
        %v2971 = vld [vmem:[%s4 + $0x28] sm:$0xff]
        %v2972 = vld [vmem:[%s4 + $0x30] sm:$0xff]
        %v2973 = vld [vmem:[%s4 + $0x38] sm:$0xff]
        %v2974 = vld [vmem:[%s4 + $0x40] sm:$0xff]
        %v2975 = vld [vmem:[%s4 + $0x48] sm:$0xff]
        %v2976 = vld [vmem:[%s4 + $0x50] sm:$0xff]
        %v2977 = vld [vmem:[%s4 + $0x58] sm:$0xff]
        %v2978 = vld [vmem:[%s4 + $0x60] sm:$0xff]
        %v2979 = vld [vmem:[%s4 + $0x68] sm:$0xff]
        %v2980 = vld [vmem:[%s4 + $0x70] sm:$0xff]
        %v2981 = vld [vmem:[%s4 + $0x78] sm:$0xff]
        %v2982 = vld [vmem:[%s4 + $0x80] sm:$0xff]
        %v2983 = vld [vmem:[%s4 + $0x88] sm:$0xff]
        %v2984 = vld [vmem:[%s4 + $0x90] sm:$0xff]
        %v2985 = vld [vmem:[%s4 + $0x98] sm:$0xff]
        %v2986 = vld [vmem:[%s4 + $0xa0] sm:$0xff]
        %v2987 = vld [vmem:[%s4 + $0xa8] sm:$0xff]
        %v2988 = vld [vmem:[%s4 + $0xb0] sm:$0xff]
        %v2989 = vld [vmem:[%s4 + $0xb8] sm:$0xff]
        %v2990 = vld [vmem:[%s4 + $0xc0] sm:$0xff]
        %v2991 = vld [vmem:[%s4 + $0xc8] sm:$0xff]
        %v2992 = vld [vmem:[%s4 + $0xd0] sm:$0xff]
        %v2993 = vld [vmem:[%s4 + $0xd8] sm:$0xff]
        %v2994 = vld [vmem:[%s4 + $0xe0] sm:$0xff]
        %v2995 = vld [vmem:[%s4 + $0xe8] sm:$0xff]
        %v2996 = vld [vmem:[%s4 + $0xf0] sm:$0xff]
        %v2997 = vld [vmem:[%s4 + $0xf8] sm:$0xff]
        %v3030 = vunpack.c.l.b16 %v2966
        %v3031 = vunpack.c.h.b16 %v2966
        %v3032 = vunpack.c.l.b16 %v2967
        %v3033 = vunpack.c.h.b16 %v2967
        %v3034 = vunpack.c.l.b16 %v2968
        %v3035 = vunpack.c.h.b16 %v2968
        %v3036 = vunpack.c.l.b16 %v2969
        %v3037 = vunpack.c.h.b16 %v2969
        %v3038 = vunpack.c.l.b16 %v2970
        %v3039 = vunpack.c.h.b16 %v2970
        %v3040 = vunpack.c.l.b16 %v2971
        %v3041 = vunpack.c.h.b16 %v2971
        %v3042 = vunpack.c.l.b16 %v2972
        %v3043 = vunpack.c.h.b16 %v2972
        %v3044 = vunpack.c.l.b16 %v2973
        %v3045 = vunpack.c.h.b16 %v2973
        %v3046 = vunpack.c.l.b16 %v2974
        %v3047 = vunpack.c.h.b16 %v2974
        %v3048 = vunpack.c.l.b16 %v2975
        %v3049 = vunpack.c.h.b16 %v2975
        %v3050 = vunpack.c.l.b16 %v2976
        %v3051 = vunpack.c.h.b16 %v2976
        %v3052 = vunpack.c.l.b16 %v2977
        %v3053 = vunpack.c.h.b16 %v2977
        %v3054 = vunpack.c.l.b16 %v2978
        %v3055 = vunpack.c.h.b16 %v2978
        %v3056 = vunpack.c.l.b16 %v2979
        %v3057 = vunpack.c.h.b16 %v2979
        %v3058 = vunpack.c.l.b16 %v2980
        %v3059 = vunpack.c.h.b16 %v2980
        %v3060 = vunpack.c.l.b16 %v2981
        %v3061 = vunpack.c.h.b16 %v2981
        %v3062 = vunpack.c.l.b16 %v2982
        %v3063 = vunpack.c.h.b16 %v2982
        %v3064 = vunpack.c.l.b16 %v2983
        %v3065 = vunpack.c.h.b16 %v2983
        %v3066 = vunpack.c.l.b16 %v2984
        %v3067 = vunpack.c.h.b16 %v2984
        %v3068 = vunpack.c.l.b16 %v2985
        %v3069 = vunpack.c.h.b16 %v2985
        %v3070 = vunpack.c.l.b16 %v2986
        %v3071 = vunpack.c.h.b16 %v2986
        %v3072 = vunpack.c.l.b16 %v2987
        %v3073 = vunpack.c.h.b16 %v2987
        %v3074 = vunpack.c.l.b16 %v2988
        %v3075 = vunpack.c.h.b16 %v2988
        %v3076 = vunpack.c.l.b16 %v2989
        %v3077 = vunpack.c.h.b16 %v2989
        %v3078 = vunpack.c.l.b16 %v2990
        %v3079 = vunpack.c.h.b16 %v2990
        %v3080 = vunpack.c.l.b16 %v2991
        %v3081 = vunpack.c.h.b16 %v2991
        %v3082 = vunpack.c.l.b16 %v2992
        %v3083 = vunpack.c.h.b16 %v2992
        %v3084 = vunpack.c.l.b16 %v2993
        %v3085 = vunpack.c.h.b16 %v2993
        %v3086 = vunpack.c.l.b16 %v2994
        %v3087 = vunpack.c.h.b16 %v2994
        %v3088 = vunpack.c.l.b16 %v2995
        %v3089 = vunpack.c.h.b16 %v2995
        %v3090 = vunpack.c.l.b16 %v2996
        %v3091 = vunpack.c.h.b16 %v2996
        %v3092 = vunpack.c.l.b16 %v2997
        %v3093 = vunpack.c.h.b16 %v2997
        %v3094 = vpack.c.b16 %v3034, %v3030
        %v3095 = vpack.c.b16 %v3035, %v3031
        %v3096 = vpack.c.b16 %v3036, %v3032
        %v3097 = vpack.c.b16 %v3037, %v3033
        %v3098 = vpack.c.b16 %v3042, %v3038
        %v3099 = vpack.c.b16 %v3043, %v3039
        %v3100 = vpack.c.b16 %v3044, %v3040
        %v3101 = vpack.c.b16 %v3045, %v3041
        %v3102 = vpack.c.b16 %v3050, %v3046
        %v3103 = vpack.c.b16 %v3051, %v3047
        %v3104 = vpack.c.b16 %v3052, %v3048
        %v3105 = vpack.c.b16 %v3053, %v3049
        %v3106 = vpack.c.b16 %v3058, %v3054
        %v3107 = vpack.c.b16 %v3059, %v3055
        %v3108 = vpack.c.b16 %v3060, %v3056
        %v3109 = vpack.c.b16 %v3061, %v3057
        %v3110 = vpack.c.b16 %v3066, %v3062
        %v3111 = vpack.c.b16 %v3067, %v3063
        %v3112 = vpack.c.b16 %v3068, %v3064
        %v3113 = vpack.c.b16 %v3069, %v3065
        %v3114 = vpack.c.b16 %v3074, %v3070
        %v3115 = vpack.c.b16 %v3075, %v3071
        %v3116 = vpack.c.b16 %v3076, %v3072
        %v3117 = vpack.c.b16 %v3077, %v3073
        %v3118 = vpack.c.b16 %v3082, %v3078
        %v3119 = vpack.c.b16 %v3083, %v3079
        %v3120 = vpack.c.b16 %v3084, %v3080
        %v3121 = vpack.c.b16 %v3085, %v3081
        %v3122 = vpack.c.b16 %v3090, %v3086
        %v3123 = vpack.c.b16 %v3091, %v3087
        %v3124 = vpack.c.b16 %v3092, %v3088
        %v3125 = vpack.c.b16 %v3093, %v3089
        %3158 = vmatprep.subr.bf16.mxu0 %v3095
        %3159 = vmatpush1.bf16.msra.mxu0 %v3094
        %3160 = vmatprep.subr.bf16.mxu0 %v3099
        %3161 = vmatpush1.bf16.msra.mxu0 %v3098
        %3162 = vmatprep.subr.bf16.mxu0 %v3103
        %3163 = vmatpush1.bf16.msra.mxu0 %v3102
        %3164 = vmatprep.subr.bf16.mxu0 %v3107
        %3165 = vmatpush1.bf16.msra.mxu0 %v3106
        %3166 = vmatprep.subr.bf16.mxu0 %v3111
        %3167 = vmatpush1.bf16.msra.mxu0 %v3110
        %3168 = vmatprep.subr.bf16.mxu0 %v3115
        %3169 = vmatpush1.bf16.msra.mxu0 %v3114
        %3170 = vmatprep.subr.bf16.mxu0 %v3119
        %3171 = vmatpush1.bf16.msra.mxu0 %v3118
        %3172 = vmatprep.subr.bf16.mxu0 %v3123
        %3173 = vmatpush1.bf16.msra.mxu0 %v3122
        %3174 = vmatprep.subr.bf16.mxu0 0
        %3175 = vmatpush1.bf16.msra.mxu0 0
        %3176 = vmatprep.subr.bf16.mxu0 0
        %3177 = vmatpush1.bf16.msra.mxu0 0
        %3178 = vmatprep.subr.bf16.mxu0 0
        %3179 = vmatpush1.bf16.msra.mxu0 0
        %3180 = vmatprep.subr.bf16.mxu0 0
        %3181 = vmatpush1.bf16.msra.mxu0 0
        %3182 = vmatprep.subr.bf16.mxu0 0
        %3183 = vmatpush1.bf16.msra.mxu0 0
        %3184 = vmatprep.subr.bf16.mxu0 0
        %3185 = vmatpush1.bf16.msra.mxu0 0
        %3186 = vmatprep.subr.bf16.mxu0 0
        %3187 = vmatpush1.bf16.msra.mxu0 0
        %3188 = vmatprep.subr.bf16.mxu0 0
        %3189 = vmatpush1.bf16.msra.mxu0 0
        %3190 = vmatprep.mubr.bf16.mxu0 0
        %3191 = vmatmul.mubr.bf16.gmra.mrb[0].mxu0 %v2956
        %v3192 = vpop.f32.mrb[0].mxu0
        %v3193 = vadd.f32 0.0, %v3192
        %v3194 = vpop.f32.mrb[0].mxu0
        %v3195 = vadd.f32 0.0, %v3194
        %v3196 = vpop.f32.mrb[0].mxu0
        %v3197 = vpop.f32.mrb[0].mxu0
        %3198 = vdwg.mxu0
        %3199 = vmatprep.subr.bf16.mxu0 %v3097
        %3200 = vmatpush1.bf16.msra.mxu0 %v3096
        %3201 = vmatprep.subr.bf16.mxu0 %v3101
        %3202 = vmatpush1.bf16.msra.mxu0 %v3100
        %3203 = vmatprep.subr.bf16.mxu0 %v3105
        %3204 = vmatpush1.bf16.msra.mxu0 %v3104
        %3205 = vmatprep.subr.bf16.mxu0 %v3109
        %3206 = vmatpush1.bf16.msra.mxu0 %v3108
        %3207 = vmatprep.subr.bf16.mxu0 %v3113
        %3208 = vmatpush1.bf16.msra.mxu0 %v3112
        %3209 = vmatprep.subr.bf16.mxu0 %v3117
        %3210 = vmatpush1.bf16.msra.mxu0 %v3116
        %3211 = vmatprep.subr.bf16.mxu0 %v3121
        %3212 = vmatpush1.bf16.msra.mxu0 %v3120
        %3213 = vmatprep.subr.bf16.mxu0 %v3125
        %3214 = vmatpush1.bf16.msra.mxu0 %v3124
        %3215 = vmatprep.subr.bf16.mxu0 0
        %3216 = vmatpush1.bf16.msra.mxu0 0
        %3217 = vmatprep.subr.bf16.mxu0 0
        %3218 = vmatpush1.bf16.msra.mxu0 0
        %3219 = vmatprep.subr.bf16.mxu0 0
        %3220 = vmatpush1.bf16.msra.mxu0 0
        %3221 = vmatprep.subr.bf16.mxu0 0
        %3222 = vmatpush1.bf16.msra.mxu0 0
        %3223 = vmatprep.subr.bf16.mxu0 0
        %3224 = vmatpush1.bf16.msra.mxu0 0
        %3225 = vmatprep.subr.bf16.mxu0 0
        %3226 = vmatpush1.bf16.msra.mxu0 0
        %3227 = vmatprep.subr.bf16.mxu0 0
        %3228 = vmatpush1.bf16.msra.mxu0 0
        %3229 = vmatprep.subr.bf16.mxu0 0
        %3230 = vmatpush1.bf16.msra.mxu0 0
        %3231 = vmatprep.mubr.bf16.mxu0 0
        %3232 = vmatmul.mubr.bf16.gmra.mrb[0].mxu0 %v2956
        %v3233 = vpop.f32.mrb[0].mxu0
        %v3234 = vadd.f32 0.0, %v3233
        %v3235 = vpop.f32.mrb[0].mxu0
        %v3236 = vadd.f32 0.0, %v3235
        %v3237 = vpop.f32.mrb[0].mxu0
        %v3238 = vpop.f32.mrb[0].mxu0
        %3239 = vdwg.mxu0
        %v3240 = vadd.f32 %v2962, %v3193
        %v3241 = vadd.f32 %v2963, %v3195
        %v3242 = vadd.f32 %v2964, %v3234
        %v3243 = vadd.f32 %v2965, %v3236
        %v3244 = vxor.u32 %v3240, 2147483648
        %v3245 = vxor.u32 %v3241, 2147483648
        %v3246 = vxor.u32 %v3242, 2147483648
        %v3247 = vmul.f32 %v3244, 1.442695
        %v3248 = vpow.pop %v3247
        %v3249 = vmul.f32 %v3245, 1.442695
        %v3250 = vpow.pop %v3249
        %v3251 = vmul.f32 %v3246, 1.442695
        %v3252 = vpow.pop %v3251
        %v3253 = vadd.f32 %v3248, 1.0
        %v3254 = vadd.f32 %v3250, 1.0
        %v3255 = vadd.f32 %v3252, 1.0
        %v3256 = vrcp.pop %v3253
        %v3257 = vmul.f32 1.0, %v3256
        %v3258 = vrcp.pop %v3254
        %v3259 = vmul.f32 1.0, %v3258
        %v3260 = vrcp.pop %v3255
        %v3261 = vmul.f32 1.0, %v3260
        %v3262 = vtanh.pop %v3243
        %v3263 = vmul.f32 %v3259, %v2953
        %v3264 = vmul.f32 %v3257, %v3262
        %v3265 = vadd.f32 %v3263, %v3264
        %v3266 = vtanh.pop %v3265
        %v3267 = vmul.f32 %v3261, %v3266
        %v3268 = vpack.c.bf16 %v3267, %v3267
        %s3269 = scalar_lea.vmem [#allocation3], 20
        %3270 = vst [vmem:[%s3269] sm:$0xf] %v3268
        %s3271 = smul.u32 6, 4
        %s3272 = smul.addr %s3271, 8
        %s3273 = scalar_lea.vmem [#allocation2], %s3272
        %v3274 = vld [vmem:[%s3273] sm:$0xff]
        %v3275 = vld [vmem:[%s3273 + $0x8] sm:$0xff]
        %v3276 = vld [vmem:[%s3273 + $0x10] sm:$0xff]
        %v3277 = vld [vmem:[%s3273 + $0x18] sm:$0xff]
        %v3278 = vld [vmem:[%s4] sm:$0xff]
        %v3279 = vld [vmem:[%s4 + $0x8] sm:$0xff]
        %v3280 = vld [vmem:[%s4 + $0x10] sm:$0xff]
        %v3281 = vld [vmem:[%s4 + $0x18] sm:$0xff]
        %v3282 = vld [vmem:[%s4 + $0x20] sm:$0xff]
        %v3283 = vld [vmem:[%s4 + $0x28] sm:$0xff]
        %v3284 = vld [vmem:[%s4 + $0x30] sm:$0xff]
        %v3285 = vld [vmem:[%s4 + $0x38] sm:$0xff]
        %v3286 = vld [vmem:[%s4 + $0x40] sm:$0xff]
        %v3287 = vld [vmem:[%s4 + $0x48] sm:$0xff]
        %v3288 = vld [vmem:[%s4 + $0x50] sm:$0xff]
        %v3289 = vld [vmem:[%s4 + $0x58] sm:$0xff]
        %v3290 = vld [vmem:[%s4 + $0x60] sm:$0xff]
        %v3291 = vld [vmem:[%s4 + $0x68] sm:$0xff]
        %v3292 = vld [vmem:[%s4 + $0x70] sm:$0xff]
        %v3293 = vld [vmem:[%s4 + $0x78] sm:$0xff]
        %v3294 = vld [vmem:[%s4 + $0x80] sm:$0xff]
        %v3295 = vld [vmem:[%s4 + $0x88] sm:$0xff]
        %v3296 = vld [vmem:[%s4 + $0x90] sm:$0xff]
        %v3297 = vld [vmem:[%s4 + $0x98] sm:$0xff]
        %v3298 = vld [vmem:[%s4 + $0xa0] sm:$0xff]
        %v3299 = vld [vmem:[%s4 + $0xa8] sm:$0xff]
        %v3300 = vld [vmem:[%s4 + $0xb0] sm:$0xff]
        %v3301 = vld [vmem:[%s4 + $0xb8] sm:$0xff]
        %v3302 = vld [vmem:[%s4 + $0xc0] sm:$0xff]
        %v3303 = vld [vmem:[%s4 + $0xc8] sm:$0xff]
        %v3304 = vld [vmem:[%s4 + $0xd0] sm:$0xff]
        %v3305 = vld [vmem:[%s4 + $0xd8] sm:$0xff]
        %v3306 = vld [vmem:[%s4 + $0xe0] sm:$0xff]
        %v3307 = vld [vmem:[%s4 + $0xe8] sm:$0xff]
        %v3308 = vld [vmem:[%s4 + $0xf0] sm:$0xff]
        %v3309 = vld [vmem:[%s4 + $0xf8] sm:$0xff]
        %v3342 = vunpack.c.l.b16 %v3278
        %v3343 = vunpack.c.h.b16 %v3278
        %v3344 = vunpack.c.l.b16 %v3279
        %v3345 = vunpack.c.h.b16 %v3279
        %v3346 = vunpack.c.l.b16 %v3280
        %v3347 = vunpack.c.h.b16 %v3280
        %v3348 = vunpack.c.l.b16 %v3281
        %v3349 = vunpack.c.h.b16 %v3281
        %v3350 = vunpack.c.l.b16 %v3282
        %v3351 = vunpack.c.h.b16 %v3282
        %v3352 = vunpack.c.l.b16 %v3283
        %v3353 = vunpack.c.h.b16 %v3283
        %v3354 = vunpack.c.l.b16 %v3284
        %v3355 = vunpack.c.h.b16 %v3284
        %v3356 = vunpack.c.l.b16 %v3285
        %v3357 = vunpack.c.h.b16 %v3285
        %v3358 = vunpack.c.l.b16 %v3286
        %v3359 = vunpack.c.h.b16 %v3286
        %v3360 = vunpack.c.l.b16 %v3287
        %v3361 = vunpack.c.h.b16 %v3287
        %v3362 = vunpack.c.l.b16 %v3288
        %v3363 = vunpack.c.h.b16 %v3288
        %v3364 = vunpack.c.l.b16 %v3289
        %v3365 = vunpack.c.h.b16 %v3289
        %v3366 = vunpack.c.l.b16 %v3290
        %v3367 = vunpack.c.h.b16 %v3290
        %v3368 = vunpack.c.l.b16 %v3291
        %v3369 = vunpack.c.h.b16 %v3291
        %v3370 = vunpack.c.l.b16 %v3292
        %v3371 = vunpack.c.h.b16 %v3292
        %v3372 = vunpack.c.l.b16 %v3293
        %v3373 = vunpack.c.h.b16 %v3293
        %v3374 = vunpack.c.l.b16 %v3294
        %v3375 = vunpack.c.h.b16 %v3294
        %v3376 = vunpack.c.l.b16 %v3295
        %v3377 = vunpack.c.h.b16 %v3295
        %v3378 = vunpack.c.l.b16 %v3296
        %v3379 = vunpack.c.h.b16 %v3296
        %v3380 = vunpack.c.l.b16 %v3297
        %v3381 = vunpack.c.h.b16 %v3297
        %v3382 = vunpack.c.l.b16 %v3298
        %v3383 = vunpack.c.h.b16 %v3298
        %v3384 = vunpack.c.l.b16 %v3299
        %v3385 = vunpack.c.h.b16 %v3299
        %v3386 = vunpack.c.l.b16 %v3300
        %v3387 = vunpack.c.h.b16 %v3300
        %v3388 = vunpack.c.l.b16 %v3301
        %v3389 = vunpack.c.h.b16 %v3301
        %v3390 = vunpack.c.l.b16 %v3302
        %v3391 = vunpack.c.h.b16 %v3302
        %v3392 = vunpack.c.l.b16 %v3303
        %v3393 = vunpack.c.h.b16 %v3303
        %v3394 = vunpack.c.l.b16 %v3304
        %v3395 = vunpack.c.h.b16 %v3304
        %v3396 = vunpack.c.l.b16 %v3305
        %v3397 = vunpack.c.h.b16 %v3305
        %v3398 = vunpack.c.l.b16 %v3306
        %v3399 = vunpack.c.h.b16 %v3306
        %v3400 = vunpack.c.l.b16 %v3307
        %v3401 = vunpack.c.h.b16 %v3307
        %v3402 = vunpack.c.l.b16 %v3308
        %v3403 = vunpack.c.h.b16 %v3308
        %v3404 = vunpack.c.l.b16 %v3309
        %v3405 = vunpack.c.h.b16 %v3309
        %v3406 = vpack.c.b16 %v3346, %v3342
        %v3407 = vpack.c.b16 %v3347, %v3343
        %v3408 = vpack.c.b16 %v3348, %v3344
        %v3409 = vpack.c.b16 %v3349, %v3345
        %v3410 = vpack.c.b16 %v3354, %v3350
        %v3411 = vpack.c.b16 %v3355, %v3351
        %v3412 = vpack.c.b16 %v3356, %v3352
        %v3413 = vpack.c.b16 %v3357, %v3353
        %v3414 = vpack.c.b16 %v3362, %v3358
        %v3415 = vpack.c.b16 %v3363, %v3359
        %v3416 = vpack.c.b16 %v3364, %v3360
        %v3417 = vpack.c.b16 %v3365, %v3361
        %v3418 = vpack.c.b16 %v3370, %v3366
        %v3419 = vpack.c.b16 %v3371, %v3367
        %v3420 = vpack.c.b16 %v3372, %v3368
        %v3421 = vpack.c.b16 %v3373, %v3369
        %v3422 = vpack.c.b16 %v3378, %v3374
        %v3423 = vpack.c.b16 %v3379, %v3375
        %v3424 = vpack.c.b16 %v3380, %v3376
        %v3425 = vpack.c.b16 %v3381, %v3377
        %v3426 = vpack.c.b16 %v3386, %v3382
        %v3427 = vpack.c.b16 %v3387, %v3383
        %v3428 = vpack.c.b16 %v3388, %v3384
        %v3429 = vpack.c.b16 %v3389, %v3385
        %v3430 = vpack.c.b16 %v3394, %v3390
        %v3431 = vpack.c.b16 %v3395, %v3391
        %v3432 = vpack.c.b16 %v3396, %v3392
        %v3433 = vpack.c.b16 %v3397, %v3393
        %v3434 = vpack.c.b16 %v3402, %v3398
        %v3435 = vpack.c.b16 %v3403, %v3399
        %v3436 = vpack.c.b16 %v3404, %v3400
        %v3437 = vpack.c.b16 %v3405, %v3401
        %3470 = vmatprep.subr.bf16.mxu0 %v3407
        %3471 = vmatpush1.bf16.msra.mxu0 %v3406
        %3472 = vmatprep.subr.bf16.mxu0 %v3411
        %3473 = vmatpush1.bf16.msra.mxu0 %v3410
        %3474 = vmatprep.subr.bf16.mxu0 %v3415
        %3475 = vmatpush1.bf16.msra.mxu0 %v3414
        %3476 = vmatprep.subr.bf16.mxu0 %v3419
        %3477 = vmatpush1.bf16.msra.mxu0 %v3418
        %3478 = vmatprep.subr.bf16.mxu0 %v3423
        %3479 = vmatpush1.bf16.msra.mxu0 %v3422
        %3480 = vmatprep.subr.bf16.mxu0 %v3427
        %3481 = vmatpush1.bf16.msra.mxu0 %v3426
        %3482 = vmatprep.subr.bf16.mxu0 %v3431
        %3483 = vmatpush1.bf16.msra.mxu0 %v3430
        %3484 = vmatprep.subr.bf16.mxu0 %v3435
        %3485 = vmatpush1.bf16.msra.mxu0 %v3434
        %3486 = vmatprep.subr.bf16.mxu0 0
        %3487 = vmatpush1.bf16.msra.mxu0 0
        %3488 = vmatprep.subr.bf16.mxu0 0
        %3489 = vmatpush1.bf16.msra.mxu0 0
        %3490 = vmatprep.subr.bf16.mxu0 0
        %3491 = vmatpush1.bf16.msra.mxu0 0
        %3492 = vmatprep.subr.bf16.mxu0 0
        %3493 = vmatpush1.bf16.msra.mxu0 0
        %3494 = vmatprep.subr.bf16.mxu0 0
        %3495 = vmatpush1.bf16.msra.mxu0 0
        %3496 = vmatprep.subr.bf16.mxu0 0
        %3497 = vmatpush1.bf16.msra.mxu0 0
        %3498 = vmatprep.subr.bf16.mxu0 0
        %3499 = vmatpush1.bf16.msra.mxu0 0
        %3500 = vmatprep.subr.bf16.mxu0 0
        %3501 = vmatpush1.bf16.msra.mxu0 0
        %3502 = vmatprep.mubr.bf16.mxu0 0
        %3503 = vmatmul.mubr.bf16.gmra.mrb[0].mxu0 %v3268
        %v3504 = vpop.f32.mrb[0].mxu0
        %v3505 = vadd.f32 0.0, %v3504
        %v3506 = vpop.f32.mrb[0].mxu0
        %v3507 = vadd.f32 0.0, %v3506
        %v3508 = vpop.f32.mrb[0].mxu0
        %v3509 = vpop.f32.mrb[0].mxu0
        %3510 = vdwg.mxu0
        %3511 = vmatprep.subr.bf16.mxu0 %v3409
        %3512 = vmatpush1.bf16.msra.mxu0 %v3408
        %3513 = vmatprep.subr.bf16.mxu0 %v3413
        %3514 = vmatpush1.bf16.msra.mxu0 %v3412
        %3515 = vmatprep.subr.bf16.mxu0 %v3417
        %3516 = vmatpush1.bf16.msra.mxu0 %v3416
        %3517 = vmatprep.subr.bf16.mxu0 %v3421
        %3518 = vmatpush1.bf16.msra.mxu0 %v3420
        %3519 = vmatprep.subr.bf16.mxu0 %v3425
        %3520 = vmatpush1.bf16.msra.mxu0 %v3424
        %3521 = vmatprep.subr.bf16.mxu0 %v3429
        %3522 = vmatpush1.bf16.msra.mxu0 %v3428
        %3523 = vmatprep.subr.bf16.mxu0 %v3433
        %3524 = vmatpush1.bf16.msra.mxu0 %v3432
        %3525 = vmatprep.subr.bf16.mxu0 %v3437
        %3526 = vmatpush1.bf16.msra.mxu0 %v3436
        %3527 = vmatprep.subr.bf16.mxu0 0
        %3528 = vmatpush1.bf16.msra.mxu0 0
        %3529 = vmatprep.subr.bf16.mxu0 0
        %3530 = vmatpush1.bf16.msra.mxu0 0
        %3531 = vmatprep.subr.bf16.mxu0 0
        %3532 = vmatpush1.bf16.msra.mxu0 0
        %3533 = vmatprep.subr.bf16.mxu0 0
        %3534 = vmatpush1.bf16.msra.mxu0 0
        %3535 = vmatprep.subr.bf16.mxu0 0
        %3536 = vmatpush1.bf16.msra.mxu0 0
        %3537 = vmatprep.subr.bf16.mxu0 0
        %3538 = vmatpush1.bf16.msra.mxu0 0
        %3539 = vmatprep.subr.bf16.mxu0 0
        %3540 = vmatpush1.bf16.msra.mxu0 0
        %3541 = vmatprep.subr.bf16.mxu0 0
        %3542 = vmatpush1.bf16.msra.mxu0 0
        %3543 = vmatprep.mubr.bf16.mxu0 0
        %3544 = vmatmul.mubr.bf16.gmra.mrb[0].mxu0 %v3268
        %v3545 = vpop.f32.mrb[0].mxu0
        %v3546 = vadd.f32 0.0, %v3545
        %v3547 = vpop.f32.mrb[0].mxu0
        %v3548 = vadd.f32 0.0, %v3547
        %v3549 = vpop.f32.mrb[0].mxu0
        %v3550 = vpop.f32.mrb[0].mxu0
        %3551 = vdwg.mxu0
        %v3552 = vadd.f32 %v3274, %v3505
        %v3553 = vadd.f32 %v3275, %v3507
        %v3554 = vadd.f32 %v3276, %v3546
        %v3555 = vadd.f32 %v3277, %v3548
        %v3556 = vxor.u32 %v3552, 2147483648
        %v3557 = vxor.u32 %v3553, 2147483648
        %v3558 = vxor.u32 %v3554, 2147483648
        %v3559 = vmul.f32 %v3556, 1.442695
        %v3560 = vpow.pop %v3559
        %v3561 = vmul.f32 %v3557, 1.442695
        %v3562 = vpow.pop %v3561
        %v3563 = vmul.f32 %v3558, 1.442695
        %v3564 = vpow.pop %v3563
        %v3565 = vadd.f32 %v3560, 1.0
        %v3566 = vadd.f32 %v3562, 1.0
        %v3567 = vadd.f32 %v3564, 1.0
        %v3568 = vrcp.pop %v3565
        %v3569 = vmul.f32 1.0, %v3568
        %v3570 = vrcp.pop %v3566
        %v3571 = vmul.f32 1.0, %v3570
        %v3572 = vrcp.pop %v3567
        %v3573 = vmul.f32 1.0, %v3572
        %v3574 = vtanh.pop %v3555
        %v3575 = vmul.f32 %v3571, %v3265
        %v3576 = vmul.f32 %v3569, %v3574
        %v3577 = vadd.f32 %v3575, %v3576
        %v3578 = vtanh.pop %v3577
        %v3579 = vmul.f32 %v3573, %v3578
        %v3580 = vpack.c.bf16 %v3579, %v3579
        %s3581 = scalar_lea.vmem [#allocation3], 24
        %3582 = vst [vmem:[%s3581] sm:$0xf] %v3580
        %s3583 = smul.u32 7, 4
        %s3584 = smul.addr %s3583, 8
        %s3585 = scalar_lea.vmem [#allocation2], %s3584
        %v3586 = vld [vmem:[%s3585] sm:$0xff]
        %v3587 = vld [vmem:[%s3585 + $0x8] sm:$0xff]
        %v3588 = vld [vmem:[%s3585 + $0x10] sm:$0xff]
        %v3589 = vld [vmem:[%s3585 + $0x18] sm:$0xff]
        %v3590 = vld [vmem:[%s4] sm:$0xff]
        %v3591 = vld [vmem:[%s4 + $0x8] sm:$0xff]
        %v3592 = vld [vmem:[%s4 + $0x10] sm:$0xff]
        %v3593 = vld [vmem:[%s4 + $0x18] sm:$0xff]
        %v3594 = vld [vmem:[%s4 + $0x20] sm:$0xff]
        %v3595 = vld [vmem:[%s4 + $0x28] sm:$0xff]
        %v3596 = vld [vmem:[%s4 + $0x30] sm:$0xff]
        %v3597 = vld [vmem:[%s4 + $0x38] sm:$0xff]
        %v3598 = vld [vmem:[%s4 + $0x40] sm:$0xff]
        %v3599 = vld [vmem:[%s4 + $0x48] sm:$0xff]
        %v3600 = vld [vmem:[%s4 + $0x50] sm:$0xff]
        %v3601 = vld [vmem:[%s4 + $0x58] sm:$0xff]
        %v3602 = vld [vmem:[%s4 + $0x60] sm:$0xff]
        %v3603 = vld [vmem:[%s4 + $0x68] sm:$0xff]
        %v3604 = vld [vmem:[%s4 + $0x70] sm:$0xff]
        %v3605 = vld [vmem:[%s4 + $0x78] sm:$0xff]
        %v3606 = vld [vmem:[%s4 + $0x80] sm:$0xff]
        %v3607 = vld [vmem:[%s4 + $0x88] sm:$0xff]
        %v3608 = vld [vmem:[%s4 + $0x90] sm:$0xff]
        %v3609 = vld [vmem:[%s4 + $0x98] sm:$0xff]
        %v3610 = vld [vmem:[%s4 + $0xa0] sm:$0xff]
        %v3611 = vld [vmem:[%s4 + $0xa8] sm:$0xff]
        %v3612 = vld [vmem:[%s4 + $0xb0] sm:$0xff]
        %v3613 = vld [vmem:[%s4 + $0xb8] sm:$0xff]
        %v3614 = vld [vmem:[%s4 + $0xc0] sm:$0xff]
        %v3615 = vld [vmem:[%s4 + $0xc8] sm:$0xff]
        %v3616 = vld [vmem:[%s4 + $0xd0] sm:$0xff]
        %v3617 = vld [vmem:[%s4 + $0xd8] sm:$0xff]
        %v3618 = vld [vmem:[%s4 + $0xe0] sm:$0xff]
        %v3619 = vld [vmem:[%s4 + $0xe8] sm:$0xff]
        %v3620 = vld [vmem:[%s4 + $0xf0] sm:$0xff]
        %v3621 = vld [vmem:[%s4 + $0xf8] sm:$0xff]
        %v3654 = vunpack.c.l.b16 %v3590
        %v3655 = vunpack.c.h.b16 %v3590
        %v3656 = vunpack.c.l.b16 %v3591
        %v3657 = vunpack.c.h.b16 %v3591
        %v3658 = vunpack.c.l.b16 %v3592
        %v3659 = vunpack.c.h.b16 %v3592
        %v3660 = vunpack.c.l.b16 %v3593
        %v3661 = vunpack.c.h.b16 %v3593
        %v3662 = vunpack.c.l.b16 %v3594
        %v3663 = vunpack.c.h.b16 %v3594
        %v3664 = vunpack.c.l.b16 %v3595
        %v3665 = vunpack.c.h.b16 %v3595
        %v3666 = vunpack.c.l.b16 %v3596
        %v3667 = vunpack.c.h.b16 %v3596
        %v3668 = vunpack.c.l.b16 %v3597
        %v3669 = vunpack.c.h.b16 %v3597
        %v3670 = vunpack.c.l.b16 %v3598
        %v3671 = vunpack.c.h.b16 %v3598
        %v3672 = vunpack.c.l.b16 %v3599
        %v3673 = vunpack.c.h.b16 %v3599
        %v3674 = vunpack.c.l.b16 %v3600
        %v3675 = vunpack.c.h.b16 %v3600
        %v3676 = vunpack.c.l.b16 %v3601
        %v3677 = vunpack.c.h.b16 %v3601
        %v3678 = vunpack.c.l.b16 %v3602
        %v3679 = vunpack.c.h.b16 %v3602
        %v3680 = vunpack.c.l.b16 %v3603
        %v3681 = vunpack.c.h.b16 %v3603
        %v3682 = vunpack.c.l.b16 %v3604
        %v3683 = vunpack.c.h.b16 %v3604
        %v3684 = vunpack.c.l.b16 %v3605
        %v3685 = vunpack.c.h.b16 %v3605
        %v3686 = vunpack.c.l.b16 %v3606
        %v3687 = vunpack.c.h.b16 %v3606
        %v3688 = vunpack.c.l.b16 %v3607
        %v3689 = vunpack.c.h.b16 %v3607
        %v3690 = vunpack.c.l.b16 %v3608
        %v3691 = vunpack.c.h.b16 %v3608
        %v3692 = vunpack.c.l.b16 %v3609
        %v3693 = vunpack.c.h.b16 %v3609
        %v3694 = vunpack.c.l.b16 %v3610
        %v3695 = vunpack.c.h.b16 %v3610
        %v3696 = vunpack.c.l.b16 %v3611
        %v3697 = vunpack.c.h.b16 %v3611
        %v3698 = vunpack.c.l.b16 %v3612
        %v3699 = vunpack.c.h.b16 %v3612
        %v3700 = vunpack.c.l.b16 %v3613
        %v3701 = vunpack.c.h.b16 %v3613
        %v3702 = vunpack.c.l.b16 %v3614
        %v3703 = vunpack.c.h.b16 %v3614
        %v3704 = vunpack.c.l.b16 %v3615
        %v3705 = vunpack.c.h.b16 %v3615
        %v3706 = vunpack.c.l.b16 %v3616
        %v3707 = vunpack.c.h.b16 %v3616
        %v3708 = vunpack.c.l.b16 %v3617
        %v3709 = vunpack.c.h.b16 %v3617
        %v3710 = vunpack.c.l.b16 %v3618
        %v3711 = vunpack.c.h.b16 %v3618
        %v3712 = vunpack.c.l.b16 %v3619
        %v3713 = vunpack.c.h.b16 %v3619
        %v3714 = vunpack.c.l.b16 %v3620
        %v3715 = vunpack.c.h.b16 %v3620
        %v3716 = vunpack.c.l.b16 %v3621
        %v3717 = vunpack.c.h.b16 %v3621
        %v3718 = vpack.c.b16 %v3658, %v3654
        %v3719 = vpack.c.b16 %v3659, %v3655
        %v3720 = vpack.c.b16 %v3660, %v3656
        %v3721 = vpack.c.b16 %v3661, %v3657
        %v3722 = vpack.c.b16 %v3666, %v3662
        %v3723 = vpack.c.b16 %v3667, %v3663
        %v3724 = vpack.c.b16 %v3668, %v3664
        %v3725 = vpack.c.b16 %v3669, %v3665
        %v3726 = vpack.c.b16 %v3674, %v3670
        %v3727 = vpack.c.b16 %v3675, %v3671
        %v3728 = vpack.c.b16 %v3676, %v3672
        %v3729 = vpack.c.b16 %v3677, %v3673
        %v3730 = vpack.c.b16 %v3682, %v3678
        %v3731 = vpack.c.b16 %v3683, %v3679
        %v3732 = vpack.c.b16 %v3684, %v3680
        %v3733 = vpack.c.b16 %v3685, %v3681
        %v3734 = vpack.c.b16 %v3690, %v3686
        %v3735 = vpack.c.b16 %v3691, %v3687
        %v3736 = vpack.c.b16 %v3692, %v3688
        %v3737 = vpack.c.b16 %v3693, %v3689
        %v3738 = vpack.c.b16 %v3698, %v3694
        %v3739 = vpack.c.b16 %v3699, %v3695
        %v3740 = vpack.c.b16 %v3700, %v3696
        %v3741 = vpack.c.b16 %v3701, %v3697
        %v3742 = vpack.c.b16 %v3706, %v3702
        %v3743 = vpack.c.b16 %v3707, %v3703
        %v3744 = vpack.c.b16 %v3708, %v3704
        %v3745 = vpack.c.b16 %v3709, %v3705
        %v3746 = vpack.c.b16 %v3714, %v3710
        %v3747 = vpack.c.b16 %v3715, %v3711
        %v3748 = vpack.c.b16 %v3716, %v3712
        %v3749 = vpack.c.b16 %v3717, %v3713
        %3782 = vmatprep.subr.bf16.mxu0 %v3719
        %3783 = vmatpush1.bf16.msra.mxu0 %v3718
        %3784 = vmatprep.subr.bf16.mxu0 %v3723
        %3785 = vmatpush1.bf16.msra.mxu0 %v3722
        %3786 = vmatprep.subr.bf16.mxu0 %v3727
        %3787 = vmatpush1.bf16.msra.mxu0 %v3726
        %3788 = vmatprep.subr.bf16.mxu0 %v3731
        %3789 = vmatpush1.bf16.msra.mxu0 %v3730
        %3790 = vmatprep.subr.bf16.mxu0 %v3735
        %3791 = vmatpush1.bf16.msra.mxu0 %v3734
        %3792 = vmatprep.subr.bf16.mxu0 %v3739
        %3793 = vmatpush1.bf16.msra.mxu0 %v3738
        %3794 = vmatprep.subr.bf16.mxu0 %v3743
        %3795 = vmatpush1.bf16.msra.mxu0 %v3742
        %3796 = vmatprep.subr.bf16.mxu0 %v3747
        %3797 = vmatpush1.bf16.msra.mxu0 %v3746
        %3798 = vmatprep.subr.bf16.mxu0 0
        %3799 = vmatpush1.bf16.msra.mxu0 0
        %3800 = vmatprep.subr.bf16.mxu0 0
        %3801 = vmatpush1.bf16.msra.mxu0 0
        %3802 = vmatprep.subr.bf16.mxu0 0
        %3803 = vmatpush1.bf16.msra.mxu0 0
        %3804 = vmatprep.subr.bf16.mxu0 0
        %3805 = vmatpush1.bf16.msra.mxu0 0
        %3806 = vmatprep.subr.bf16.mxu0 0
        %3807 = vmatpush1.bf16.msra.mxu0 0
        %3808 = vmatprep.subr.bf16.mxu0 0
        %3809 = vmatpush1.bf16.msra.mxu0 0
        %3810 = vmatprep.subr.bf16.mxu0 0
        %3811 = vmatpush1.bf16.msra.mxu0 0
        %3812 = vmatprep.subr.bf16.mxu0 0
        %3813 = vmatpush1.bf16.msra.mxu0 0
        %3814 = vmatprep.mubr.bf16.mxu0 0
        %3815 = vmatmul.mubr.bf16.gmra.mrb[0].mxu0 %v3580
        %v3816 = vpop.f32.mrb[0].mxu0
        %v3817 = vadd.f32 0.0, %v3816
        %v3818 = vpop.f32.mrb[0].mxu0
        %v3819 = vadd.f32 0.0, %v3818
        %v3820 = vpop.f32.mrb[0].mxu0
        %v3821 = vpop.f32.mrb[0].mxu0
        %3822 = vdwg.mxu0
        %3823 = vmatprep.subr.bf16.mxu0 %v3721
        %3824 = vmatpush1.bf16.msra.mxu0 %v3720
        %3825 = vmatprep.subr.bf16.mxu0 %v3725
        %3826 = vmatpush1.bf16.msra.mxu0 %v3724
        %3827 = vmatprep.subr.bf16.mxu0 %v3729
        %3828 = vmatpush1.bf16.msra.mxu0 %v3728
        %3829 = vmatprep.subr.bf16.mxu0 %v3733
        %3830 = vmatpush1.bf16.msra.mxu0 %v3732
        %3831 = vmatprep.subr.bf16.mxu0 %v3737
        %3832 = vmatpush1.bf16.msra.mxu0 %v3736
        %3833 = vmatprep.subr.bf16.mxu0 %v3741
        %3834 = vmatpush1.bf16.msra.mxu0 %v3740
        %3835 = vmatprep.subr.bf16.mxu0 %v3745
        %3836 = vmatpush1.bf16.msra.mxu0 %v3744
        %3837 = vmatprep.subr.bf16.mxu0 %v3749
        %3838 = vmatpush1.bf16.msra.mxu0 %v3748
        %3839 = vmatprep.subr.bf16.mxu0 0
        %3840 = vmatpush1.bf16.msra.mxu0 0
        %3841 = vmatprep.subr.bf16.mxu0 0
        %3842 = vmatpush1.bf16.msra.mxu0 0
        %3843 = vmatprep.subr.bf16.mxu0 0
        %3844 = vmatpush1.bf16.msra.mxu0 0
        %3845 = vmatprep.subr.bf16.mxu0 0
        %3846 = vmatpush1.bf16.msra.mxu0 0
        %3847 = vmatprep.subr.bf16.mxu0 0
        %3848 = vmatpush1.bf16.msra.mxu0 0
        %3849 = vmatprep.subr.bf16.mxu0 0
        %3850 = vmatpush1.bf16.msra.mxu0 0
        %3851 = vmatprep.subr.bf16.mxu0 0
        %3852 = vmatpush1.bf16.msra.mxu0 0
        %3853 = vmatprep.subr.bf16.mxu0 0
        %3854 = vmatpush1.bf16.msra.mxu0 0
        %3855 = vmatprep.mubr.bf16.mxu0 0
        %3856 = vmatmul.mubr.bf16.gmra.mrb[0].mxu0 %v3580
        %v3857 = vpop.f32.mrb[0].mxu0
        %v3858 = vadd.f32 0.0, %v3857
        %v3859 = vpop.f32.mrb[0].mxu0
        %v3860 = vadd.f32 0.0, %v3859
        %v3861 = vpop.f32.mrb[0].mxu0
        %v3862 = vpop.f32.mrb[0].mxu0
        %3863 = vdwg.mxu0
        %v3864 = vadd.f32 %v3586, %v3817
        %v3865 = vadd.f32 %v3587, %v3819
        %v3866 = vadd.f32 %v3588, %v3858
        %v3867 = vadd.f32 %v3589, %v3860
        %v3868 = vxor.u32 %v3864, 2147483648
        %v3869 = vxor.u32 %v3865, 2147483648
        %v3870 = vxor.u32 %v3866, 2147483648
        %v3871 = vmul.f32 %v3868, 1.442695
        %v3872 = vpow.pop %v3871
        %v3873 = vmul.f32 %v3869, 1.442695
        %v3874 = vpow.pop %v3873
        %v3875 = vmul.f32 %v3870, 1.442695
        %v3876 = vpow.pop %v3875
        %v3877 = vadd.f32 %v3872, 1.0
        %v3878 = vadd.f32 %v3874, 1.0
        %v3879 = vadd.f32 %v3876, 1.0
        %v3880 = vrcp.pop %v3877
        %v3881 = vmul.f32 1.0, %v3880
        %v3882 = vrcp.pop %v3878
        %v3883 = vmul.f32 1.0, %v3882
        %v3884 = vrcp.pop %v3879
        %v3885 = vmul.f32 1.0, %v3884
        %v3886 = vtanh.pop %v3867
        %v3887 = vmul.f32 %v3883, %v3577
        %v3888 = vmul.f32 %v3881, %v3886
        %v3889 = vadd.f32 %v3887, %v3888
        %v3890 = vtanh.pop %v3889
        %v3891 = vmul.f32 %v3885, %v3890
        %v3892 = vpack.c.bf16 %v3891, %v3891
        %s3893 = scalar_lea.vmem [#allocation3], 28
        %3894 = vst [vmem:[%s3893] sm:$0xf] %v3892
        %s3895 = smul.u32 8, 4
        %s3896 = smul.addr %s3895, 8
        %s3897 = scalar_lea.vmem [#allocation2], %s3896
        %v3898 = vld [vmem:[%s3897] sm:$0xff]
        %v3899 = vld [vmem:[%s3897 + $0x8] sm:$0xff]
        %v3900 = vld [vmem:[%s3897 + $0x10] sm:$0xff]
        %v3901 = vld [vmem:[%s3897 + $0x18] sm:$0xff]
        %v3902 = vld [vmem:[%s4] sm:$0xff]
        %v3903 = vld [vmem:[%s4 + $0x8] sm:$0xff]
        %v3904 = vld [vmem:[%s4 + $0x10] sm:$0xff]
        %v3905 = vld [vmem:[%s4 + $0x18] sm:$0xff]
        %v3906 = vld [vmem:[%s4 + $0x20] sm:$0xff]
        %v3907 = vld [vmem:[%s4 + $0x28] sm:$0xff]
        %v3908 = vld [vmem:[%s4 + $0x30] sm:$0xff]
        %v3909 = vld [vmem:[%s4 + $0x38] sm:$0xff]
        %v3910 = vld [vmem:[%s4 + $0x40] sm:$0xff]
        %v3911 = vld [vmem:[%s4 + $0x48] sm:$0xff]
        %v3912 = vld [vmem:[%s4 + $0x50] sm:$0xff]
        %v3913 = vld [vmem:[%s4 + $0x58] sm:$0xff]
        %v3914 = vld [vmem:[%s4 + $0x60] sm:$0xff]
        %v3915 = vld [vmem:[%s4 + $0x68] sm:$0xff]
        %v3916 = vld [vmem:[%s4 + $0x70] sm:$0xff]
        %v3917 = vld [vmem:[%s4 + $0x78] sm:$0xff]
        %v3918 = vld [vmem:[%s4 + $0x80] sm:$0xff]
        %v3919 = vld [vmem:[%s4 + $0x88] sm:$0xff]
        %v3920 = vld [vmem:[%s4 + $0x90] sm:$0xff]
        %v3921 = vld [vmem:[%s4 + $0x98] sm:$0xff]
        %v3922 = vld [vmem:[%s4 + $0xa0] sm:$0xff]
        %v3923 = vld [vmem:[%s4 + $0xa8] sm:$0xff]
        %v3924 = vld [vmem:[%s4 + $0xb0] sm:$0xff]
        %v3925 = vld [vmem:[%s4 + $0xb8] sm:$0xff]
        %v3926 = vld [vmem:[%s4 + $0xc0] sm:$0xff]
        %v3927 = vld [vmem:[%s4 + $0xc8] sm:$0xff]
        %v3928 = vld [vmem:[%s4 + $0xd0] sm:$0xff]
        %v3929 = vld [vmem:[%s4 + $0xd8] sm:$0xff]
        %v3930 = vld [vmem:[%s4 + $0xe0] sm:$0xff]
        %v3931 = vld [vmem:[%s4 + $0xe8] sm:$0xff]
        %v3932 = vld [vmem:[%s4 + $0xf0] sm:$0xff]
        %v3933 = vld [vmem:[%s4 + $0xf8] sm:$0xff]
        %v3966 = vunpack.c.l.b16 %v3902
        %v3967 = vunpack.c.h.b16 %v3902
        %v3968 = vunpack.c.l.b16 %v3903
        %v3969 = vunpack.c.h.b16 %v3903
        %v3970 = vunpack.c.l.b16 %v3904
        %v3971 = vunpack.c.h.b16 %v3904
        %v3972 = vunpack.c.l.b16 %v3905
        %v3973 = vunpack.c.h.b16 %v3905
        %v3974 = vunpack.c.l.b16 %v3906
        %v3975 = vunpack.c.h.b16 %v3906
        %v3976 = vunpack.c.l.b16 %v3907
        %v3977 = vunpack.c.h.b16 %v3907
        %v3978 = vunpack.c.l.b16 %v3908
        %v3979 = vunpack.c.h.b16 %v3908
        %v3980 = vunpack.c.l.b16 %v3909
        %v3981 = vunpack.c.h.b16 %v3909
        %v3982 = vunpack.c.l.b16 %v3910
        %v3983 = vunpack.c.h.b16 %v3910
        %v3984 = vunpack.c.l.b16 %v3911
        %v3985 = vunpack.c.h.b16 %v3911
        %v3986 = vunpack.c.l.b16 %v3912
        %v3987 = vunpack.c.h.b16 %v3912
        %v3988 = vunpack.c.l.b16 %v3913
        %v3989 = vunpack.c.h.b16 %v3913
        %v3990 = vunpack.c.l.b16 %v3914
        %v3991 = vunpack.c.h.b16 %v3914
        %v3992 = vunpack.c.l.b16 %v3915
        %v3993 = vunpack.c.h.b16 %v3915
        %v3994 = vunpack.c.l.b16 %v3916
        %v3995 = vunpack.c.h.b16 %v3916
        %v3996 = vunpack.c.l.b16 %v3917
        %v3997 = vunpack.c.h.b16 %v3917
        %v3998 = vunpack.c.l.b16 %v3918
        %v3999 = vunpack.c.h.b16 %v3918
        %v4000 = vunpack.c.l.b16 %v3919
        %v4001 = vunpack.c.h.b16 %v3919
        %v4002 = vunpack.c.l.b16 %v3920
        %v4003 = vunpack.c.h.b16 %v3920
        %v4004 = vunpack.c.l.b16 %v3921
        %v4005 = vunpack.c.h.b16 %v3921
        %v4006 = vunpack.c.l.b16 %v3922
        %v4007 = vunpack.c.h.b16 %v3922
        %v4008 = vunpack.c.l.b16 %v3923
        %v4009 = vunpack.c.h.b16 %v3923
        %v4010 = vunpack.c.l.b16 %v3924
        %v4011 = vunpack.c.h.b16 %v3924
        %v4012 = vunpack.c.l.b16 %v3925
        %v4013 = vunpack.c.h.b16 %v3925
        %v4014 = vunpack.c.l.b16 %v3926
        %v4015 = vunpack.c.h.b16 %v3926
        %v4016 = vunpack.c.l.b16 %v3927
        %v4017 = vunpack.c.h.b16 %v3927
        %v4018 = vunpack.c.l.b16 %v3928
        %v4019 = vunpack.c.h.b16 %v3928
        %v4020 = vunpack.c.l.b16 %v3929
        %v4021 = vunpack.c.h.b16 %v3929
        %v4022 = vunpack.c.l.b16 %v3930
        %v4023 = vunpack.c.h.b16 %v3930
        %v4024 = vunpack.c.l.b16 %v3931
        %v4025 = vunpack.c.h.b16 %v3931
        %v4026 = vunpack.c.l.b16 %v3932
        %v4027 = vunpack.c.h.b16 %v3932
        %v4028 = vunpack.c.l.b16 %v3933
        %v4029 = vunpack.c.h.b16 %v3933
        %v4030 = vpack.c.b16 %v3970, %v3966
        %v4031 = vpack.c.b16 %v3971, %v3967
        %v4032 = vpack.c.b16 %v3972, %v3968
        %v4033 = vpack.c.b16 %v3973, %v3969
        %v4034 = vpack.c.b16 %v3978, %v3974
        %v4035 = vpack.c.b16 %v3979, %v3975
        %v4036 = vpack.c.b16 %v3980, %v3976
        %v4037 = vpack.c.b16 %v3981, %v3977
        %v4038 = vpack.c.b16 %v3986, %v3982
        %v4039 = vpack.c.b16 %v3987, %v3983
        %v4040 = vpack.c.b16 %v3988, %v3984
        %v4041 = vpack.c.b16 %v3989, %v3985
        %v4042 = vpack.c.b16 %v3994, %v3990
        %v4043 = vpack.c.b16 %v3995, %v3991
        %v4044 = vpack.c.b16 %v3996, %v3992
        %v4045 = vpack.c.b16 %v3997, %v3993
        %v4046 = vpack.c.b16 %v4002, %v3998
        %v4047 = vpack.c.b16 %v4003, %v3999
        %v4048 = vpack.c.b16 %v4004, %v4000
        %v4049 = vpack.c.b16 %v4005, %v4001
        %v4050 = vpack.c.b16 %v4010, %v4006
        %v4051 = vpack.c.b16 %v4011, %v4007
        %v4052 = vpack.c.b16 %v4012, %v4008
        %v4053 = vpack.c.b16 %v4013, %v4009
        %v4054 = vpack.c.b16 %v4018, %v4014
        %v4055 = vpack.c.b16 %v4019, %v4015
        %v4056 = vpack.c.b16 %v4020, %v4016
        %v4057 = vpack.c.b16 %v4021, %v4017
        %v4058 = vpack.c.b16 %v4026, %v4022
        %v4059 = vpack.c.b16 %v4027, %v4023
        %v4060 = vpack.c.b16 %v4028, %v4024
        %v4061 = vpack.c.b16 %v4029, %v4025
        %4094 = vmatprep.subr.bf16.mxu0 %v4031
        %4095 = vmatpush1.bf16.msra.mxu0 %v4030
        %4096 = vmatprep.subr.bf16.mxu0 %v4035
        %4097 = vmatpush1.bf16.msra.mxu0 %v4034
        %4098 = vmatprep.subr.bf16.mxu0 %v4039
        %4099 = vmatpush1.bf16.msra.mxu0 %v4038
        %4100 = vmatprep.subr.bf16.mxu0 %v4043
        %4101 = vmatpush1.bf16.msra.mxu0 %v4042
        %4102 = vmatprep.subr.bf16.mxu0 %v4047
        %4103 = vmatpush1.bf16.msra.mxu0 %v4046
        %4104 = vmatprep.subr.bf16.mxu0 %v4051
        %4105 = vmatpush1.bf16.msra.mxu0 %v4050
        %4106 = vmatprep.subr.bf16.mxu0 %v4055
        %4107 = vmatpush1.bf16.msra.mxu0 %v4054
        %4108 = vmatprep.subr.bf16.mxu0 %v4059
        %4109 = vmatpush1.bf16.msra.mxu0 %v4058
        %4110 = vmatprep.subr.bf16.mxu0 0
        %4111 = vmatpush1.bf16.msra.mxu0 0
        %4112 = vmatprep.subr.bf16.mxu0 0
        %4113 = vmatpush1.bf16.msra.mxu0 0
        %4114 = vmatprep.subr.bf16.mxu0 0
        %4115 = vmatpush1.bf16.msra.mxu0 0
        %4116 = vmatprep.subr.bf16.mxu0 0
        %4117 = vmatpush1.bf16.msra.mxu0 0
        %4118 = vmatprep.subr.bf16.mxu0 0
        %4119 = vmatpush1.bf16.msra.mxu0 0
        %4120 = vmatprep.subr.bf16.mxu0 0
        %4121 = vmatpush1.bf16.msra.mxu0 0
        %4122 = vmatprep.subr.bf16.mxu0 0
        %4123 = vmatpush1.bf16.msra.mxu0 0
        %4124 = vmatprep.subr.bf16.mxu0 0
        %4125 = vmatpush1.bf16.msra.mxu0 0
        %4126 = vmatprep.mubr.bf16.mxu0 0
        %4127 = vmatmul.mubr.bf16.gmra.mrb[0].mxu0 %v3892
        %v4128 = vpop.f32.mrb[0].mxu0
        %v4129 = vadd.f32 0.0, %v4128
        %v4130 = vpop.f32.mrb[0].mxu0
        %v4131 = vadd.f32 0.0, %v4130
        %v4132 = vpop.f32.mrb[0].mxu0
        %v4133 = vpop.f32.mrb[0].mxu0
        %4134 = vdwg.mxu0
        %4135 = vmatprep.subr.bf16.mxu0 %v4033
        %4136 = vmatpush1.bf16.msra.mxu0 %v4032
        %4137 = vmatprep.subr.bf16.mxu0 %v4037
        %4138 = vmatpush1.bf16.msra.mxu0 %v4036
        %4139 = vmatprep.subr.bf16.mxu0 %v4041
        %4140 = vmatpush1.bf16.msra.mxu0 %v4040
        %4141 = vmatprep.subr.bf16.mxu0 %v4045
        %4142 = vmatpush1.bf16.msra.mxu0 %v4044
        %4143 = vmatprep.subr.bf16.mxu0 %v4049
        %4144 = vmatpush1.bf16.msra.mxu0 %v4048
        %4145 = vmatprep.subr.bf16.mxu0 %v4053
        %4146 = vmatpush1.bf16.msra.mxu0 %v4052
        %4147 = vmatprep.subr.bf16.mxu0 %v4057
        %4148 = vmatpush1.bf16.msra.mxu0 %v4056
        %4149 = vmatprep.subr.bf16.mxu0 %v4061
        %4150 = vmatpush1.bf16.msra.mxu0 %v4060
        %4151 = vmatprep.subr.bf16.mxu0 0
        %4152 = vmatpush1.bf16.msra.mxu0 0
        %4153 = vmatprep.subr.bf16.mxu0 0
        %4154 = vmatpush1.bf16.msra.mxu0 0
        %4155 = vmatprep.subr.bf16.mxu0 0
        %4156 = vmatpush1.bf16.msra.mxu0 0
        %4157 = vmatprep.subr.bf16.mxu0 0
        %4158 = vmatpush1.bf16.msra.mxu0 0
        %4159 = vmatprep.subr.bf16.mxu0 0
        %4160 = vmatpush1.bf16.msra.mxu0 0
        %4161 = vmatprep.subr.bf16.mxu0 0
        %4162 = vmatpush1.bf16.msra.mxu0 0
        %4163 = vmatprep.subr.bf16.mxu0 0
        %4164 = vmatpush1.bf16.msra.mxu0 0
        %4165 = vmatprep.subr.bf16.mxu0 0
        %4166 = vmatpush1.bf16.msra.mxu0 0
        %4167 = vmatprep.mubr.bf16.mxu0 0
        %4168 = vmatmul.mubr.bf16.gmra.mrb[0].mxu0 %v3892
        %v4169 = vpop.f32.mrb[0].mxu0
        %v4170 = vadd.f32 0.0, %v4169
        %v4171 = vpop.f32.mrb[0].mxu0
        %v4172 = vadd.f32 0.0, %v4171
        %v4173 = vpop.f32.mrb[0].mxu0
        %v4174 = vpop.f32.mrb[0].mxu0
        %4175 = vdwg.mxu0
        %v4176 = vadd.f32 %v3898, %v4129
        %v4177 = vadd.f32 %v3899, %v4131
        %v4178 = vadd.f32 %v3900, %v4170
        %v4179 = vadd.f32 %v3901, %v4172
        %v4180 = vxor.u32 %v4176, 2147483648
        %v4181 = vxor.u32 %v4177, 2147483648
        %v4182 = vxor.u32 %v4178, 2147483648
        %v4183 = vmul.f32 %v4180, 1.442695
        %v4184 = vpow.pop %v4183
        %v4185 = vmul.f32 %v4181, 1.442695
        %v4186 = vpow.pop %v4185
        %v4187 = vmul.f32 %v4182, 1.442695
        %v4188 = vpow.pop %v4187
        %v4189 = vadd.f32 %v4184, 1.0
        %v4190 = vadd.f32 %v4186, 1.0
        %v4191 = vadd.f32 %v4188, 1.0
        %v4192 = vrcp.pop %v4189
        %v4193 = vmul.f32 1.0, %v4192
        %v4194 = vrcp.pop %v4190
        %v4195 = vmul.f32 1.0, %v4194
        %v4196 = vrcp.pop %v4191
        %v4197 = vmul.f32 1.0, %v4196
        %v4198 = vtanh.pop %v4179
        %v4199 = vmul.f32 %v4195, %v3889
        %v4200 = vmul.f32 %v4193, %v4198
        %v4201 = vadd.f32 %v4199, %v4200
        %v4202 = vtanh.pop %v4201
        %v4203 = vmul.f32 %v4197, %v4202
        %v4204 = vpack.c.bf16 %v4203, %v4203
        %s4205 = scalar_lea.vmem [#allocation3], 32
        %4206 = vst [vmem:[%s4205] sm:$0xf] %v4204
        %s4207 = smul.u32 9, 4
        %s4208 = smul.addr %s4207, 8
        %s4209 = scalar_lea.vmem [#allocation2], %s4208
        %v4210 = vld [vmem:[%s4209] sm:$0xff]
        %v4211 = vld [vmem:[%s4209 + $0x8] sm:$0xff]
        %v4212 = vld [vmem:[%s4209 + $0x10] sm:$0xff]
        %v4213 = vld [vmem:[%s4209 + $0x18] sm:$0xff]
        %v4214 = vld [vmem:[%s4] sm:$0xff]
        %v4215 = vld [vmem:[%s4 + $0x8] sm:$0xff]
        %v4216 = vld [vmem:[%s4 + $0x10] sm:$0xff]
        %v4217 = vld [vmem:[%s4 + $0x18] sm:$0xff]
        %v4218 = vld [vmem:[%s4 + $0x20] sm:$0xff]
        %v4219 = vld [vmem:[%s4 + $0x28] sm:$0xff]
        %v4220 = vld [vmem:[%s4 + $0x30] sm:$0xff]
        %v4221 = vld [vmem:[%s4 + $0x38] sm:$0xff]
        %v4222 = vld [vmem:[%s4 + $0x40] sm:$0xff]
        %v4223 = vld [vmem:[%s4 + $0x48] sm:$0xff]
        %v4224 = vld [vmem:[%s4 + $0x50] sm:$0xff]
        %v4225 = vld [vmem:[%s4 + $0x58] sm:$0xff]
        %v4226 = vld [vmem:[%s4 + $0x60] sm:$0xff]
        %v4227 = vld [vmem:[%s4 + $0x68] sm:$0xff]
        %v4228 = vld [vmem:[%s4 + $0x70] sm:$0xff]
        %v4229 = vld [vmem:[%s4 + $0x78] sm:$0xff]
        %v4230 = vld [vmem:[%s4 + $0x80] sm:$0xff]
        %v4231 = vld [vmem:[%s4 + $0x88] sm:$0xff]
        %v4232 = vld [vmem:[%s4 + $0x90] sm:$0xff]
        %v4233 = vld [vmem:[%s4 + $0x98] sm:$0xff]
        %v4234 = vld [vmem:[%s4 + $0xa0] sm:$0xff]
        %v4235 = vld [vmem:[%s4 + $0xa8] sm:$0xff]
        %v4236 = vld [vmem:[%s4 + $0xb0] sm:$0xff]
        %v4237 = vld [vmem:[%s4 + $0xb8] sm:$0xff]
        %v4238 = vld [vmem:[%s4 + $0xc0] sm:$0xff]
        %v4239 = vld [vmem:[%s4 + $0xc8] sm:$0xff]
        %v4240 = vld [vmem:[%s4 + $0xd0] sm:$0xff]
        %v4241 = vld [vmem:[%s4 + $0xd8] sm:$0xff]
        %v4242 = vld [vmem:[%s4 + $0xe0] sm:$0xff]
        %v4243 = vld [vmem:[%s4 + $0xe8] sm:$0xff]
        %v4244 = vld [vmem:[%s4 + $0xf0] sm:$0xff]
        %v4245 = vld [vmem:[%s4 + $0xf8] sm:$0xff]
        %v4278 = vunpack.c.l.b16 %v4214
        %v4279 = vunpack.c.h.b16 %v4214
        %v4280 = vunpack.c.l.b16 %v4215
        %v4281 = vunpack.c.h.b16 %v4215
        %v4282 = vunpack.c.l.b16 %v4216
        %v4283 = vunpack.c.h.b16 %v4216
        %v4284 = vunpack.c.l.b16 %v4217
        %v4285 = vunpack.c.h.b16 %v4217
        %v4286 = vunpack.c.l.b16 %v4218
        %v4287 = vunpack.c.h.b16 %v4218
        %v4288 = vunpack.c.l.b16 %v4219
        %v4289 = vunpack.c.h.b16 %v4219
        %v4290 = vunpack.c.l.b16 %v4220
        %v4291 = vunpack.c.h.b16 %v4220
        %v4292 = vunpack.c.l.b16 %v4221
        %v4293 = vunpack.c.h.b16 %v4221
        %v4294 = vunpack.c.l.b16 %v4222
        %v4295 = vunpack.c.h.b16 %v4222
        %v4296 = vunpack.c.l.b16 %v4223
        %v4297 = vunpack.c.h.b16 %v4223
        %v4298 = vunpack.c.l.b16 %v4224
        %v4299 = vunpack.c.h.b16 %v4224
        %v4300 = vunpack.c.l.b16 %v4225
        %v4301 = vunpack.c.h.b16 %v4225
        %v4302 = vunpack.c.l.b16 %v4226
        %v4303 = vunpack.c.h.b16 %v4226
        %v4304 = vunpack.c.l.b16 %v4227
        %v4305 = vunpack.c.h.b16 %v4227
        %v4306 = vunpack.c.l.b16 %v4228
        %v4307 = vunpack.c.h.b16 %v4228
        %v4308 = vunpack.c.l.b16 %v4229
        %v4309 = vunpack.c.h.b16 %v4229
        %v4310 = vunpack.c.l.b16 %v4230
        %v4311 = vunpack.c.h.b16 %v4230
        %v4312 = vunpack.c.l.b16 %v4231
        %v4313 = vunpack.c.h.b16 %v4231
        %v4314 = vunpack.c.l.b16 %v4232
        %v4315 = vunpack.c.h.b16 %v4232
        %v4316 = vunpack.c.l.b16 %v4233
        %v4317 = vunpack.c.h.b16 %v4233
        %v4318 = vunpack.c.l.b16 %v4234
        %v4319 = vunpack.c.h.b16 %v4234
        %v4320 = vunpack.c.l.b16 %v4235
        %v4321 = vunpack.c.h.b16 %v4235
        %v4322 = vunpack.c.l.b16 %v4236
        %v4323 = vunpack.c.h.b16 %v4236
        %v4324 = vunpack.c.l.b16 %v4237
        %v4325 = vunpack.c.h.b16 %v4237
        %v4326 = vunpack.c.l.b16 %v4238
        %v4327 = vunpack.c.h.b16 %v4238
        %v4328 = vunpack.c.l.b16 %v4239
        %v4329 = vunpack.c.h.b16 %v4239
        %v4330 = vunpack.c.l.b16 %v4240
        %v4331 = vunpack.c.h.b16 %v4240
        %v4332 = vunpack.c.l.b16 %v4241
        %v4333 = vunpack.c.h.b16 %v4241
        %v4334 = vunpack.c.l.b16 %v4242
        %v4335 = vunpack.c.h.b16 %v4242
        %v4336 = vunpack.c.l.b16 %v4243
        %v4337 = vunpack.c.h.b16 %v4243
        %v4338 = vunpack.c.l.b16 %v4244
        %v4339 = vunpack.c.h.b16 %v4244
        %v4340 = vunpack.c.l.b16 %v4245
        %v4341 = vunpack.c.h.b16 %v4245
        %v4342 = vpack.c.b16 %v4282, %v4278
        %v4343 = vpack.c.b16 %v4283, %v4279
        %v4344 = vpack.c.b16 %v4284, %v4280
        %v4345 = vpack.c.b16 %v4285, %v4281
        %v4346 = vpack.c.b16 %v4290, %v4286
        %v4347 = vpack.c.b16 %v4291, %v4287
        %v4348 = vpack.c.b16 %v4292, %v4288
        %v4349 = vpack.c.b16 %v4293, %v4289
        %v4350 = vpack.c.b16 %v4298, %v4294
        %v4351 = vpack.c.b16 %v4299, %v4295
        %v4352 = vpack.c.b16 %v4300, %v4296
        %v4353 = vpack.c.b16 %v4301, %v4297
        %v4354 = vpack.c.b16 %v4306, %v4302
        %v4355 = vpack.c.b16 %v4307, %v4303
        %v4356 = vpack.c.b16 %v4308, %v4304
        %v4357 = vpack.c.b16 %v4309, %v4305
        %v4358 = vpack.c.b16 %v4314, %v4310
        %v4359 = vpack.c.b16 %v4315, %v4311
        %v4360 = vpack.c.b16 %v4316, %v4312
        %v4361 = vpack.c.b16 %v4317, %v4313
        %v4362 = vpack.c.b16 %v4322, %v4318
        %v4363 = vpack.c.b16 %v4323, %v4319
        %v4364 = vpack.c.b16 %v4324, %v4320
        %v4365 = vpack.c.b16 %v4325, %v4321
        %v4366 = vpack.c.b16 %v4330, %v4326
        %v4367 = vpack.c.b16 %v4331, %v4327
        %v4368 = vpack.c.b16 %v4332, %v4328
        %v4369 = vpack.c.b16 %v4333, %v4329
        %v4370 = vpack.c.b16 %v4338, %v4334
        %v4371 = vpack.c.b16 %v4339, %v4335
        %v4372 = vpack.c.b16 %v4340, %v4336
        %v4373 = vpack.c.b16 %v4341, %v4337
        %4406 = vmatprep.subr.bf16.mxu0 %v4343
        %4407 = vmatpush1.bf16.msra.mxu0 %v4342
        %4408 = vmatprep.subr.bf16.mxu0 %v4347
        %4409 = vmatpush1.bf16.msra.mxu0 %v4346
        %4410 = vmatprep.subr.bf16.mxu0 %v4351
        %4411 = vmatpush1.bf16.msra.mxu0 %v4350
        %4412 = vmatprep.subr.bf16.mxu0 %v4355
        %4413 = vmatpush1.bf16.msra.mxu0 %v4354
        %4414 = vmatprep.subr.bf16.mxu0 %v4359
        %4415 = vmatpush1.bf16.msra.mxu0 %v4358
        %4416 = vmatprep.subr.bf16.mxu0 %v4363
        %4417 = vmatpush1.bf16.msra.mxu0 %v4362
        %4418 = vmatprep.subr.bf16.mxu0 %v4367
        %4419 = vmatpush1.bf16.msra.mxu0 %v4366
        %4420 = vmatprep.subr.bf16.mxu0 %v4371
        %4421 = vmatpush1.bf16.msra.mxu0 %v4370
        %4422 = vmatprep.subr.bf16.mxu0 0
        %4423 = vmatpush1.bf16.msra.mxu0 0
        %4424 = vmatprep.subr.bf16.mxu0 0
        %4425 = vmatpush1.bf16.msra.mxu0 0
        %4426 = vmatprep.subr.bf16.mxu0 0
        %4427 = vmatpush1.bf16.msra.mxu0 0
        %4428 = vmatprep.subr.bf16.mxu0 0
        %4429 = vmatpush1.bf16.msra.mxu0 0
        %4430 = vmatprep.subr.bf16.mxu0 0
        %4431 = vmatpush1.bf16.msra.mxu0 0
        %4432 = vmatprep.subr.bf16.mxu0 0
        %4433 = vmatpush1.bf16.msra.mxu0 0
        %4434 = vmatprep.subr.bf16.mxu0 0
        %4435 = vmatpush1.bf16.msra.mxu0 0
        %4436 = vmatprep.subr.bf16.mxu0 0
        %4437 = vmatpush1.bf16.msra.mxu0 0
        %4438 = vmatprep.mubr.bf16.mxu0 0
        %4439 = vmatmul.mubr.bf16.gmra.mrb[0].mxu0 %v4204
        %v4440 = vpop.f32.mrb[0].mxu0
        %v4441 = vadd.f32 0.0, %v4440
        %v4442 = vpop.f32.mrb[0].mxu0
        %v4443 = vadd.f32 0.0, %v4442
        %v4444 = vpop.f32.mrb[0].mxu0
        %v4445 = vpop.f32.mrb[0].mxu0
        %4446 = vdwg.mxu0
        %4447 = vmatprep.subr.bf16.mxu0 %v4345
        %4448 = vmatpush1.bf16.msra.mxu0 %v4344
        %4449 = vmatprep.subr.bf16.mxu0 %v4349
        %4450 = vmatpush1.bf16.msra.mxu0 %v4348
        %4451 = vmatprep.subr.bf16.mxu0 %v4353
        %4452 = vmatpush1.bf16.msra.mxu0 %v4352
        %4453 = vmatprep.subr.bf16.mxu0 %v4357
        %4454 = vmatpush1.bf16.msra.mxu0 %v4356
        %4455 = vmatprep.subr.bf16.mxu0 %v4361
        %4456 = vmatpush1.bf16.msra.mxu0 %v4360
        %4457 = vmatprep.subr.bf16.mxu0 %v4365
        %4458 = vmatpush1.bf16.msra.mxu0 %v4364
        %4459 = vmatprep.subr.bf16.mxu0 %v4369
        %4460 = vmatpush1.bf16.msra.mxu0 %v4368
        %4461 = vmatprep.subr.bf16.mxu0 %v4373
        %4462 = vmatpush1.bf16.msra.mxu0 %v4372
        %4463 = vmatprep.subr.bf16.mxu0 0
        %4464 = vmatpush1.bf16.msra.mxu0 0
        %4465 = vmatprep.subr.bf16.mxu0 0
        %4466 = vmatpush1.bf16.msra.mxu0 0
        %4467 = vmatprep.subr.bf16.mxu0 0
        %4468 = vmatpush1.bf16.msra.mxu0 0
        %4469 = vmatprep.subr.bf16.mxu0 0
        %4470 = vmatpush1.bf16.msra.mxu0 0
        %4471 = vmatprep.subr.bf16.mxu0 0
        %4472 = vmatpush1.bf16.msra.mxu0 0
        %4473 = vmatprep.subr.bf16.mxu0 0
        %4474 = vmatpush1.bf16.msra.mxu0 0
        %4475 = vmatprep.subr.bf16.mxu0 0
        %4476 = vmatpush1.bf16.msra.mxu0 0
        %4477 = vmatprep.subr.bf16.mxu0 0
        %4478 = vmatpush1.bf16.msra.mxu0 0
        %4479 = vmatprep.mubr.bf16.mxu0 0
        %4480 = vmatmul.mubr.bf16.gmra.mrb[0].mxu0 %v4204
        %v4481 = vpop.f32.mrb[0].mxu0
        %v4482 = vadd.f32 0.0, %v4481
        %v4483 = vpop.f32.mrb[0].mxu0
        %v4484 = vadd.f32 0.0, %v4483
        %v4485 = vpop.f32.mrb[0].mxu0
        %v4486 = vpop.f32.mrb[0].mxu0
        %4487 = vdwg.mxu0
        %v4488 = vadd.f32 %v4210, %v4441
        %v4489 = vadd.f32 %v4211, %v4443
        %v4490 = vadd.f32 %v4212, %v4482
        %v4491 = vadd.f32 %v4213, %v4484
        %v4492 = vxor.u32 %v4488, 2147483648
        %v4493 = vxor.u32 %v4489, 2147483648
        %v4494 = vxor.u32 %v4490, 2147483648
        %v4495 = vmul.f32 %v4492, 1.442695
        %v4496 = vpow.pop %v4495
        %v4497 = vmul.f32 %v4493, 1.442695
        %v4498 = vpow.pop %v4497
        %v4499 = vmul.f32 %v4494, 1.442695
        %v4500 = vpow.pop %v4499
        %v4501 = vadd.f32 %v4496, 1.0
        %v4502 = vadd.f32 %v4498, 1.0
        %v4503 = vadd.f32 %v4500, 1.0
        %v4504 = vrcp.pop %v4501
        %v4505 = vmul.f32 1.0, %v4504
        %v4506 = vrcp.pop %v4502
        %v4507 = vmul.f32 1.0, %v4506
        %v4508 = vrcp.pop %v4503
        %v4509 = vmul.f32 1.0, %v4508
        %v4510 = vtanh.pop %v4491
        %v4511 = vmul.f32 %v4507, %v4201
        %v4512 = vmul.f32 %v4505, %v4510
        %v4513 = vadd.f32 %v4511, %v4512
        %v4514 = vtanh.pop %v4513
        %v4515 = vmul.f32 %v4509, %v4514
        %v4516 = vpack.c.bf16 %v4515, %v4515
        %s4517 = scalar_lea.vmem [#allocation3], 36
        %4518 = vst [vmem:[%s4517] sm:$0xf] %v4516
        %s4519 = smul.u32 10, 4
        %s4520 = smul.addr %s4519, 8
        %s4521 = scalar_lea.vmem [#allocation2], %s4520
        %v4522 = vld [vmem:[%s4521] sm:$0xff]
        %v4523 = vld [vmem:[%s4521 + $0x8] sm:$0xff]
        %v4524 = vld [vmem:[%s4521 + $0x10] sm:$0xff]
        %v4525 = vld [vmem:[%s4521 + $0x18] sm:$0xff]
        %v4526 = vld [vmem:[%s4] sm:$0xff]
        %v4527 = vld [vmem:[%s4 + $0x8] sm:$0xff]
        %v4528 = vld [vmem:[%s4 + $0x10] sm:$0xff]
        %v4529 = vld [vmem:[%s4 + $0x18] sm:$0xff]
        %v4530 = vld [vmem:[%s4 + $0x20] sm:$0xff]
        %v4531 = vld [vmem:[%s4 + $0x28] sm:$0xff]
        %v4532 = vld [vmem:[%s4 + $0x30] sm:$0xff]
        %v4533 = vld [vmem:[%s4 + $0x38] sm:$0xff]
        %v4534 = vld [vmem:[%s4 + $0x40] sm:$0xff]
        %v4535 = vld [vmem:[%s4 + $0x48] sm:$0xff]
        %v4536 = vld [vmem:[%s4 + $0x50] sm:$0xff]
        %v4537 = vld [vmem:[%s4 + $0x58] sm:$0xff]
        %v4538 = vld [vmem:[%s4 + $0x60] sm:$0xff]
        %v4539 = vld [vmem:[%s4 + $0x68] sm:$0xff]
        %v4540 = vld [vmem:[%s4 + $0x70] sm:$0xff]
        %v4541 = vld [vmem:[%s4 + $0x78] sm:$0xff]
        %v4542 = vld [vmem:[%s4 + $0x80] sm:$0xff]
        %v4543 = vld [vmem:[%s4 + $0x88] sm:$0xff]
        %v4544 = vld [vmem:[%s4 + $0x90] sm:$0xff]
        %v4545 = vld [vmem:[%s4 + $0x98] sm:$0xff]
        %v4546 = vld [vmem:[%s4 + $0xa0] sm:$0xff]
        %v4547 = vld [vmem:[%s4 + $0xa8] sm:$0xff]
        %v4548 = vld [vmem:[%s4 + $0xb0] sm:$0xff]
        %v4549 = vld [vmem:[%s4 + $0xb8] sm:$0xff]
        %v4550 = vld [vmem:[%s4 + $0xc0] sm:$0xff]
        %v4551 = vld [vmem:[%s4 + $0xc8] sm:$0xff]
        %v4552 = vld [vmem:[%s4 + $0xd0] sm:$0xff]
        %v4553 = vld [vmem:[%s4 + $0xd8] sm:$0xff]
        %v4554 = vld [vmem:[%s4 + $0xe0] sm:$0xff]
        %v4555 = vld [vmem:[%s4 + $0xe8] sm:$0xff]
        %v4556 = vld [vmem:[%s4 + $0xf0] sm:$0xff]
        %v4557 = vld [vmem:[%s4 + $0xf8] sm:$0xff]
        %v4590 = vunpack.c.l.b16 %v4526
        %v4591 = vunpack.c.h.b16 %v4526
        %v4592 = vunpack.c.l.b16 %v4527
        %v4593 = vunpack.c.h.b16 %v4527
        %v4594 = vunpack.c.l.b16 %v4528
        %v4595 = vunpack.c.h.b16 %v4528
        %v4596 = vunpack.c.l.b16 %v4529
        %v4597 = vunpack.c.h.b16 %v4529
        %v4598 = vunpack.c.l.b16 %v4530
        %v4599 = vunpack.c.h.b16 %v4530
        %v4600 = vunpack.c.l.b16 %v4531
        %v4601 = vunpack.c.h.b16 %v4531
        %v4602 = vunpack.c.l.b16 %v4532
        %v4603 = vunpack.c.h.b16 %v4532
        %v4604 = vunpack.c.l.b16 %v4533
        %v4605 = vunpack.c.h.b16 %v4533
        %v4606 = vunpack.c.l.b16 %v4534
        %v4607 = vunpack.c.h.b16 %v4534
        %v4608 = vunpack.c.l.b16 %v4535
        %v4609 = vunpack.c.h.b16 %v4535
        %v4610 = vunpack.c.l.b16 %v4536
        %v4611 = vunpack.c.h.b16 %v4536
        %v4612 = vunpack.c.l.b16 %v4537
        %v4613 = vunpack.c.h.b16 %v4537
        %v4614 = vunpack.c.l.b16 %v4538
        %v4615 = vunpack.c.h.b16 %v4538
        %v4616 = vunpack.c.l.b16 %v4539
        %v4617 = vunpack.c.h.b16 %v4539
        %v4618 = vunpack.c.l.b16 %v4540
        %v4619 = vunpack.c.h.b16 %v4540
        %v4620 = vunpack.c.l.b16 %v4541
        %v4621 = vunpack.c.h.b16 %v4541
        %v4622 = vunpack.c.l.b16 %v4542
        %v4623 = vunpack.c.h.b16 %v4542
        %v4624 = vunpack.c.l.b16 %v4543
        %v4625 = vunpack.c.h.b16 %v4543
        %v4626 = vunpack.c.l.b16 %v4544
        %v4627 = vunpack.c.h.b16 %v4544
        %v4628 = vunpack.c.l.b16 %v4545
        %v4629 = vunpack.c.h.b16 %v4545
        %v4630 = vunpack.c.l.b16 %v4546
        %v4631 = vunpack.c.h.b16 %v4546
        %v4632 = vunpack.c.l.b16 %v4547
        %v4633 = vunpack.c.h.b16 %v4547
        %v4634 = vunpack.c.l.b16 %v4548
        %v4635 = vunpack.c.h.b16 %v4548
        %v4636 = vunpack.c.l.b16 %v4549
        %v4637 = vunpack.c.h.b16 %v4549
        %v4638 = vunpack.c.l.b16 %v4550
        %v4639 = vunpack.c.h.b16 %v4550
        %v4640 = vunpack.c.l.b16 %v4551
        %v4641 = vunpack.c.h.b16 %v4551
        %v4642 = vunpack.c.l.b16 %v4552
        %v4643 = vunpack.c.h.b16 %v4552
        %v4644 = vunpack.c.l.b16 %v4553
        %v4645 = vunpack.c.h.b16 %v4553
        %v4646 = vunpack.c.l.b16 %v4554
        %v4647 = vunpack.c.h.b16 %v4554
        %v4648 = vunpack.c.l.b16 %v4555
        %v4649 = vunpack.c.h.b16 %v4555
        %v4650 = vunpack.c.l.b16 %v4556
        %v4651 = vunpack.c.h.b16 %v4556
        %v4652 = vunpack.c.l.b16 %v4557
        %v4653 = vunpack.c.h.b16 %v4557
        %v4654 = vpack.c.b16 %v4594, %v4590
        %v4655 = vpack.c.b16 %v4595, %v4591
        %v4656 = vpack.c.b16 %v4596, %v4592
        %v4657 = vpack.c.b16 %v4597, %v4593
        %v4658 = vpack.c.b16 %v4602, %v4598
        %v4659 = vpack.c.b16 %v4603, %v4599
        %v4660 = vpack.c.b16 %v4604, %v4600
        %v4661 = vpack.c.b16 %v4605, %v4601
        %v4662 = vpack.c.b16 %v4610, %v4606
        %v4663 = vpack.c.b16 %v4611, %v4607
        %v4664 = vpack.c.b16 %v4612, %v4608
        %v4665 = vpack.c.b16 %v4613, %v4609
        %v4666 = vpack.c.b16 %v4618, %v4614
        %v4667 = vpack.c.b16 %v4619, %v4615
        %v4668 = vpack.c.b16 %v4620, %v4616
        %v4669 = vpack.c.b16 %v4621, %v4617
        %v4670 = vpack.c.b16 %v4626, %v4622
        %v4671 = vpack.c.b16 %v4627, %v4623
        %v4672 = vpack.c.b16 %v4628, %v4624
        %v4673 = vpack.c.b16 %v4629, %v4625
        %v4674 = vpack.c.b16 %v4634, %v4630
        %v4675 = vpack.c.b16 %v4635, %v4631
        %v4676 = vpack.c.b16 %v4636, %v4632
        %v4677 = vpack.c.b16 %v4637, %v4633
        %v4678 = vpack.c.b16 %v4642, %v4638
        %v4679 = vpack.c.b16 %v4643, %v4639
        %v4680 = vpack.c.b16 %v4644, %v4640
        %v4681 = vpack.c.b16 %v4645, %v4641
        %v4682 = vpack.c.b16 %v4650, %v4646
        %v4683 = vpack.c.b16 %v4651, %v4647
        %v4684 = vpack.c.b16 %v4652, %v4648
        %v4685 = vpack.c.b16 %v4653, %v4649
        %4718 = vmatprep.subr.bf16.mxu0 %v4655
        %4719 = vmatpush1.bf16.msra.mxu0 %v4654
        %4720 = vmatprep.subr.bf16.mxu0 %v4659
        %4721 = vmatpush1.bf16.msra.mxu0 %v4658
        %4722 = vmatprep.subr.bf16.mxu0 %v4663
        %4723 = vmatpush1.bf16.msra.mxu0 %v4662
        %4724 = vmatprep.subr.bf16.mxu0 %v4667
        %4725 = vmatpush1.bf16.msra.mxu0 %v4666
        %4726 = vmatprep.subr.bf16.mxu0 %v4671
        %4727 = vmatpush1.bf16.msra.mxu0 %v4670
        %4728 = vmatprep.subr.bf16.mxu0 %v4675
        %4729 = vmatpush1.bf16.msra.mxu0 %v4674
        %4730 = vmatprep.subr.bf16.mxu0 %v4679
        %4731 = vmatpush1.bf16.msra.mxu0 %v4678
        %4732 = vmatprep.subr.bf16.mxu0 %v4683
        %4733 = vmatpush1.bf16.msra.mxu0 %v4682
        %4734 = vmatprep.subr.bf16.mxu0 0
        %4735 = vmatpush1.bf16.msra.mxu0 0
        %4736 = vmatprep.subr.bf16.mxu0 0
        %4737 = vmatpush1.bf16.msra.mxu0 0
        %4738 = vmatprep.subr.bf16.mxu0 0
        %4739 = vmatpush1.bf16.msra.mxu0 0
        %4740 = vmatprep.subr.bf16.mxu0 0
        %4741 = vmatpush1.bf16.msra.mxu0 0
        %4742 = vmatprep.subr.bf16.mxu0 0
        %4743 = vmatpush1.bf16.msra.mxu0 0
        %4744 = vmatprep.subr.bf16.mxu0 0
        %4745 = vmatpush1.bf16.msra.mxu0 0
        %4746 = vmatprep.subr.bf16.mxu0 0
        %4747 = vmatpush1.bf16.msra.mxu0 0
        %4748 = vmatprep.subr.bf16.mxu0 0
        %4749 = vmatpush1.bf16.msra.mxu0 0
        %4750 = vmatprep.mubr.bf16.mxu0 0
        %4751 = vmatmul.mubr.bf16.gmra.mrb[0].mxu0 %v4516
        %v4752 = vpop.f32.mrb[0].mxu0
        %v4753 = vadd.f32 0.0, %v4752
        %v4754 = vpop.f32.mrb[0].mxu0
        %v4755 = vadd.f32 0.0, %v4754
        %v4756 = vpop.f32.mrb[0].mxu0
        %v4757 = vpop.f32.mrb[0].mxu0
        %4758 = vdwg.mxu0
        %4759 = vmatprep.subr.bf16.mxu0 %v4657
        %4760 = vmatpush1.bf16.msra.mxu0 %v4656
        %4761 = vmatprep.subr.bf16.mxu0 %v4661
        %4762 = vmatpush1.bf16.msra.mxu0 %v4660
        %4763 = vmatprep.subr.bf16.mxu0 %v4665
        %4764 = vmatpush1.bf16.msra.mxu0 %v4664
        %4765 = vmatprep.subr.bf16.mxu0 %v4669
        %4766 = vmatpush1.bf16.msra.mxu0 %v4668
        %4767 = vmatprep.subr.bf16.mxu0 %v4673
        %4768 = vmatpush1.bf16.msra.mxu0 %v4672
        %4769 = vmatprep.subr.bf16.mxu0 %v4677
        %4770 = vmatpush1.bf16.msra.mxu0 %v4676
        %4771 = vmatprep.subr.bf16.mxu0 %v4681
        %4772 = vmatpush1.bf16.msra.mxu0 %v4680
        %4773 = vmatprep.subr.bf16.mxu0 %v4685
        %4774 = vmatpush1.bf16.msra.mxu0 %v4684
        %4775 = vmatprep.subr.bf16.mxu0 0
        %4776 = vmatpush1.bf16.msra.mxu0 0
        %4777 = vmatprep.subr.bf16.mxu0 0
        %4778 = vmatpush1.bf16.msra.mxu0 0
        %4779 = vmatprep.subr.bf16.mxu0 0
        %4780 = vmatpush1.bf16.msra.mxu0 0
        %4781 = vmatprep.subr.bf16.mxu0 0
        %4782 = vmatpush1.bf16.msra.mxu0 0
        %4783 = vmatprep.subr.bf16.mxu0 0
        %4784 = vmatpush1.bf16.msra.mxu0 0
        %4785 = vmatprep.subr.bf16.mxu0 0
        %4786 = vmatpush1.bf16.msra.mxu0 0
        %4787 = vmatprep.subr.bf16.mxu0 0
        %4788 = vmatpush1.bf16.msra.mxu0 0
        %4789 = vmatprep.subr.bf16.mxu0 0
        %4790 = vmatpush1.bf16.msra.mxu0 0
        %4791 = vmatprep.mubr.bf16.mxu0 0
        %4792 = vmatmul.mubr.bf16.gmra.mrb[0].mxu0 %v4516
        %v4793 = vpop.f32.mrb[0].mxu0
        %v4794 = vadd.f32 0.0, %v4793
        %v4795 = vpop.f32.mrb[0].mxu0
        %v4796 = vadd.f32 0.0, %v4795
        %v4797 = vpop.f32.mrb[0].mxu0
        %v4798 = vpop.f32.mrb[0].mxu0
        %4799 = vdwg.mxu0
        %v4800 = vadd.f32 %v4522, %v4753
        %v4801 = vadd.f32 %v4523, %v4755
        %v4802 = vadd.f32 %v4524, %v4794
        %v4803 = vadd.f32 %v4525, %v4796
        %v4804 = vxor.u32 %v4800, 2147483648
        %v4805 = vxor.u32 %v4801, 2147483648
        %v4806 = vxor.u32 %v4802, 2147483648
        %v4807 = vmul.f32 %v4804, 1.442695
        %v4808 = vpow.pop %v4807
        %v4809 = vmul.f32 %v4805, 1.442695
        %v4810 = vpow.pop %v4809
        %v4811 = vmul.f32 %v4806, 1.442695
        %v4812 = vpow.pop %v4811
        %v4813 = vadd.f32 %v4808, 1.0
        %v4814 = vadd.f32 %v4810, 1.0
        %v4815 = vadd.f32 %v4812, 1.0
        %v4816 = vrcp.pop %v4813
        %v4817 = vmul.f32 1.0, %v4816
        %v4818 = vrcp.pop %v4814
        %v4819 = vmul.f32 1.0, %v4818
        %v4820 = vrcp.pop %v4815
        %v4821 = vmul.f32 1.0, %v4820
        %v4822 = vtanh.pop %v4803
        %v4823 = vmul.f32 %v4819, %v4513
        %v4824 = vmul.f32 %v4817, %v4822
        %v4825 = vadd.f32 %v4823, %v4824
        %v4826 = vtanh.pop %v4825
        %v4827 = vmul.f32 %v4821, %v4826
        %v4828 = vpack.c.bf16 %v4827, %v4827
        %s4829 = scalar_lea.vmem [#allocation3], 40
        %4830 = vst [vmem:[%s4829] sm:$0xf] %v4828
        %s4831 = smul.u32 11, 4
        %s4832 = smul.addr %s4831, 8
        %s4833 = scalar_lea.vmem [#allocation2], %s4832
        %v4834 = vld [vmem:[%s4833] sm:$0xff]
        %v4835 = vld [vmem:[%s4833 + $0x8] sm:$0xff]
        %v4836 = vld [vmem:[%s4833 + $0x10] sm:$0xff]
        %v4837 = vld [vmem:[%s4833 + $0x18] sm:$0xff]
        %v4838 = vld [vmem:[%s4] sm:$0xff]
        %v4839 = vld [vmem:[%s4 + $0x8] sm:$0xff]
        %v4840 = vld [vmem:[%s4 + $0x10] sm:$0xff]
        %v4841 = vld [vmem:[%s4 + $0x18] sm:$0xff]
        %v4842 = vld [vmem:[%s4 + $0x20] sm:$0xff]
        %v4843 = vld [vmem:[%s4 + $0x28] sm:$0xff]
        %v4844 = vld [vmem:[%s4 + $0x30] sm:$0xff]
        %v4845 = vld [vmem:[%s4 + $0x38] sm:$0xff]
        %v4846 = vld [vmem:[%s4 + $0x40] sm:$0xff]
        %v4847 = vld [vmem:[%s4 + $0x48] sm:$0xff]
        %v4848 = vld [vmem:[%s4 + $0x50] sm:$0xff]
        %v4849 = vld [vmem:[%s4 + $0x58] sm:$0xff]
        %v4850 = vld [vmem:[%s4 + $0x60] sm:$0xff]
        %v4851 = vld [vmem:[%s4 + $0x68] sm:$0xff]
        %v4852 = vld [vmem:[%s4 + $0x70] sm:$0xff]
        %v4853 = vld [vmem:[%s4 + $0x78] sm:$0xff]
        %v4854 = vld [vmem:[%s4 + $0x80] sm:$0xff]
        %v4855 = vld [vmem:[%s4 + $0x88] sm:$0xff]
        %v4856 = vld [vmem:[%s4 + $0x90] sm:$0xff]
        %v4857 = vld [vmem:[%s4 + $0x98] sm:$0xff]
        %v4858 = vld [vmem:[%s4 + $0xa0] sm:$0xff]
        %v4859 = vld [vmem:[%s4 + $0xa8] sm:$0xff]
        %v4860 = vld [vmem:[%s4 + $0xb0] sm:$0xff]
        %v4861 = vld [vmem:[%s4 + $0xb8] sm:$0xff]
        %v4862 = vld [vmem:[%s4 + $0xc0] sm:$0xff]
        %v4863 = vld [vmem:[%s4 + $0xc8] sm:$0xff]
        %v4864 = vld [vmem:[%s4 + $0xd0] sm:$0xff]
        %v4865 = vld [vmem:[%s4 + $0xd8] sm:$0xff]
        %v4866 = vld [vmem:[%s4 + $0xe0] sm:$0xff]
        %v4867 = vld [vmem:[%s4 + $0xe8] sm:$0xff]
        %v4868 = vld [vmem:[%s4 + $0xf0] sm:$0xff]
        %v4869 = vld [vmem:[%s4 + $0xf8] sm:$0xff]
        %v4902 = vunpack.c.l.b16 %v4838
        %v4903 = vunpack.c.h.b16 %v4838
        %v4904 = vunpack.c.l.b16 %v4839
        %v4905 = vunpack.c.h.b16 %v4839
        %v4906 = vunpack.c.l.b16 %v4840
        %v4907 = vunpack.c.h.b16 %v4840
        %v4908 = vunpack.c.l.b16 %v4841
        %v4909 = vunpack.c.h.b16 %v4841
        %v4910 = vunpack.c.l.b16 %v4842
        %v4911 = vunpack.c.h.b16 %v4842
        %v4912 = vunpack.c.l.b16 %v4843
        %v4913 = vunpack.c.h.b16 %v4843
        %v4914 = vunpack.c.l.b16 %v4844
        %v4915 = vunpack.c.h.b16 %v4844
        %v4916 = vunpack.c.l.b16 %v4845
        %v4917 = vunpack.c.h.b16 %v4845
        %v4918 = vunpack.c.l.b16 %v4846
        %v4919 = vunpack.c.h.b16 %v4846
        %v4920 = vunpack.c.l.b16 %v4847
        %v4921 = vunpack.c.h.b16 %v4847
        %v4922 = vunpack.c.l.b16 %v4848
        %v4923 = vunpack.c.h.b16 %v4848
        %v4924 = vunpack.c.l.b16 %v4849
        %v4925 = vunpack.c.h.b16 %v4849
        %v4926 = vunpack.c.l.b16 %v4850
        %v4927 = vunpack.c.h.b16 %v4850
        %v4928 = vunpack.c.l.b16 %v4851
        %v4929 = vunpack.c.h.b16 %v4851
        %v4930 = vunpack.c.l.b16 %v4852
        %v4931 = vunpack.c.h.b16 %v4852
        %v4932 = vunpack.c.l.b16 %v4853
        %v4933 = vunpack.c.h.b16 %v4853
        %v4934 = vunpack.c.l.b16 %v4854
        %v4935 = vunpack.c.h.b16 %v4854
        %v4936 = vunpack.c.l.b16 %v4855
        %v4937 = vunpack.c.h.b16 %v4855
        %v4938 = vunpack.c.l.b16 %v4856
        %v4939 = vunpack.c.h.b16 %v4856
        %v4940 = vunpack.c.l.b16 %v4857
        %v4941 = vunpack.c.h.b16 %v4857
        %v4942 = vunpack.c.l.b16 %v4858
        %v4943 = vunpack.c.h.b16 %v4858
        %v4944 = vunpack.c.l.b16 %v4859
        %v4945 = vunpack.c.h.b16 %v4859
        %v4946 = vunpack.c.l.b16 %v4860
        %v4947 = vunpack.c.h.b16 %v4860
        %v4948 = vunpack.c.l.b16 %v4861
        %v4949 = vunpack.c.h.b16 %v4861
        %v4950 = vunpack.c.l.b16 %v4862
        %v4951 = vunpack.c.h.b16 %v4862
        %v4952 = vunpack.c.l.b16 %v4863
        %v4953 = vunpack.c.h.b16 %v4863
        %v4954 = vunpack.c.l.b16 %v4864
        %v4955 = vunpack.c.h.b16 %v4864
        %v4956 = vunpack.c.l.b16 %v4865
        %v4957 = vunpack.c.h.b16 %v4865
        %v4958 = vunpack.c.l.b16 %v4866
        %v4959 = vunpack.c.h.b16 %v4866
        %v4960 = vunpack.c.l.b16 %v4867
        %v4961 = vunpack.c.h.b16 %v4867
        %v4962 = vunpack.c.l.b16 %v4868
        %v4963 = vunpack.c.h.b16 %v4868
        %v4964 = vunpack.c.l.b16 %v4869
        %v4965 = vunpack.c.h.b16 %v4869
        %v4966 = vpack.c.b16 %v4906, %v4902
        %v4967 = vpack.c.b16 %v4907, %v4903
        %v4968 = vpack.c.b16 %v4908, %v4904
        %v4969 = vpack.c.b16 %v4909, %v4905
        %v4970 = vpack.c.b16 %v4914, %v4910
        %v4971 = vpack.c.b16 %v4915, %v4911
        %v4972 = vpack.c.b16 %v4916, %v4912
        %v4973 = vpack.c.b16 %v4917, %v4913
        %v4974 = vpack.c.b16 %v4922, %v4918
        %v4975 = vpack.c.b16 %v4923, %v4919
        %v4976 = vpack.c.b16 %v4924, %v4920
        %v4977 = vpack.c.b16 %v4925, %v4921
        %v4978 = vpack.c.b16 %v4930, %v4926
        %v4979 = vpack.c.b16 %v4931, %v4927
        %v4980 = vpack.c.b16 %v4932, %v4928
        %v4981 = vpack.c.b16 %v4933, %v4929
        %v4982 = vpack.c.b16 %v4938, %v4934
        %v4983 = vpack.c.b16 %v4939, %v4935
        %v4984 = vpack.c.b16 %v4940, %v4936
        %v4985 = vpack.c.b16 %v4941, %v4937
        %v4986 = vpack.c.b16 %v4946, %v4942
        %v4987 = vpack.c.b16 %v4947, %v4943
        %v4988 = vpack.c.b16 %v4948, %v4944
        %v4989 = vpack.c.b16 %v4949, %v4945
        %v4990 = vpack.c.b16 %v4954, %v4950
        %v4991 = vpack.c.b16 %v4955, %v4951
        %v4992 = vpack.c.b16 %v4956, %v4952
        %v4993 = vpack.c.b16 %v4957, %v4953
        %v4994 = vpack.c.b16 %v4962, %v4958
        %v4995 = vpack.c.b16 %v4963, %v4959
        %v4996 = vpack.c.b16 %v4964, %v4960
        %v4997 = vpack.c.b16 %v4965, %v4961
        %5030 = vmatprep.subr.bf16.mxu0 %v4967
        %5031 = vmatpush1.bf16.msra.mxu0 %v4966
        %5032 = vmatprep.subr.bf16.mxu0 %v4971
        %5033 = vmatpush1.bf16.msra.mxu0 %v4970
        %5034 = vmatprep.subr.bf16.mxu0 %v4975
        %5035 = vmatpush1.bf16.msra.mxu0 %v4974
        %5036 = vmatprep.subr.bf16.mxu0 %v4979
        %5037 = vmatpush1.bf16.msra.mxu0 %v4978
        %5038 = vmatprep.subr.bf16.mxu0 %v4983
        %5039 = vmatpush1.bf16.msra.mxu0 %v4982
        %5040 = vmatprep.subr.bf16.mxu0 %v4987
        %5041 = vmatpush1.bf16.msra.mxu0 %v4986
        %5042 = vmatprep.subr.bf16.mxu0 %v4991
        %5043 = vmatpush1.bf16.msra.mxu0 %v4990
        %5044 = vmatprep.subr.bf16.mxu0 %v4995
        %5045 = vmatpush1.bf16.msra.mxu0 %v4994
        %5046 = vmatprep.subr.bf16.mxu0 0
        %5047 = vmatpush1.bf16.msra.mxu0 0
        %5048 = vmatprep.subr.bf16.mxu0 0
        %5049 = vmatpush1.bf16.msra.mxu0 0
        %5050 = vmatprep.subr.bf16.mxu0 0
        %5051 = vmatpush1.bf16.msra.mxu0 0
        %5052 = vmatprep.subr.bf16.mxu0 0
        %5053 = vmatpush1.bf16.msra.mxu0 0
        %5054 = vmatprep.subr.bf16.mxu0 0
        %5055 = vmatpush1.bf16.msra.mxu0 0
        %5056 = vmatprep.subr.bf16.mxu0 0
        %5057 = vmatpush1.bf16.msra.mxu0 0
        %5058 = vmatprep.subr.bf16.mxu0 0
        %5059 = vmatpush1.bf16.msra.mxu0 0
        %5060 = vmatprep.subr.bf16.mxu0 0
        %5061 = vmatpush1.bf16.msra.mxu0 0
        %5062 = vmatprep.mubr.bf16.mxu0 0
        %5063 = vmatmul.mubr.bf16.gmra.mrb[0].mxu0 %v4828
        %v5064 = vpop.f32.mrb[0].mxu0
        %v5065 = vadd.f32 0.0, %v5064
        %v5066 = vpop.f32.mrb[0].mxu0
        %v5067 = vadd.f32 0.0, %v5066
        %v5068 = vpop.f32.mrb[0].mxu0
        %v5069 = vpop.f32.mrb[0].mxu0
        %5070 = vdwg.mxu0
        %5071 = vmatprep.subr.bf16.mxu0 %v4969
        %5072 = vmatpush1.bf16.msra.mxu0 %v4968
        %5073 = vmatprep.subr.bf16.mxu0 %v4973
        %5074 = vmatpush1.bf16.msra.mxu0 %v4972
        %5075 = vmatprep.subr.bf16.mxu0 %v4977
        %5076 = vmatpush1.bf16.msra.mxu0 %v4976
        %5077 = vmatprep.subr.bf16.mxu0 %v4981
        %5078 = vmatpush1.bf16.msra.mxu0 %v4980
        %5079 = vmatprep.subr.bf16.mxu0 %v4985
        %5080 = vmatpush1.bf16.msra.mxu0 %v4984
        %5081 = vmatprep.subr.bf16.mxu0 %v4989
        %5082 = vmatpush1.bf16.msra.mxu0 %v4988
        %5083 = vmatprep.subr.bf16.mxu0 %v4993
        %5084 = vmatpush1.bf16.msra.mxu0 %v4992
        %5085 = vmatprep.subr.bf16.mxu0 %v4997
        %5086 = vmatpush1.bf16.msra.mxu0 %v4996
        %5087 = vmatprep.subr.bf16.mxu0 0
        %5088 = vmatpush1.bf16.msra.mxu0 0
        %5089 = vmatprep.subr.bf16.mxu0 0
        %5090 = vmatpush1.bf16.msra.mxu0 0
        %5091 = vmatprep.subr.bf16.mxu0 0
        %5092 = vmatpush1.bf16.msra.mxu0 0
        %5093 = vmatprep.subr.bf16.mxu0 0
        %5094 = vmatpush1.bf16.msra.mxu0 0
        %5095 = vmatprep.subr.bf16.mxu0 0
        %5096 = vmatpush1.bf16.msra.mxu0 0
        %5097 = vmatprep.subr.bf16.mxu0 0
        %5098 = vmatpush1.bf16.msra.mxu0 0
        %5099 = vmatprep.subr.bf16.mxu0 0
        %5100 = vmatpush1.bf16.msra.mxu0 0
        %5101 = vmatprep.subr.bf16.mxu0 0
        %5102 = vmatpush1.bf16.msra.mxu0 0
        %5103 = vmatprep.mubr.bf16.mxu0 0
        %5104 = vmatmul.mubr.bf16.gmra.mrb[0].mxu0 %v4828
        %v5105 = vpop.f32.mrb[0].mxu0
        %v5106 = vadd.f32 0.0, %v5105
        %v5107 = vpop.f32.mrb[0].mxu0
        %v5108 = vadd.f32 0.0, %v5107
        %v5109 = vpop.f32.mrb[0].mxu0
        %v5110 = vpop.f32.mrb[0].mxu0
        %5111 = vdwg.mxu0
        %v5112 = vadd.f32 %v4834, %v5065
        %v5113 = vadd.f32 %v4835, %v5067
        %v5114 = vadd.f32 %v4836, %v5106
        %v5115 = vadd.f32 %v4837, %v5108
        %v5116 = vxor.u32 %v5112, 2147483648
        %v5117 = vxor.u32 %v5113, 2147483648
        %v5118 = vxor.u32 %v5114, 2147483648
        %v5119 = vmul.f32 %v5116, 1.442695
        %v5120 = vpow.pop %v5119
        %v5121 = vmul.f32 %v5117, 1.442695
        %v5122 = vpow.pop %v5121
        %v5123 = vmul.f32 %v5118, 1.442695
        %v5124 = vpow.pop %v5123
        %v5125 = vadd.f32 %v5120, 1.0
        %v5126 = vadd.f32 %v5122, 1.0
        %v5127 = vadd.f32 %v5124, 1.0
        %v5128 = vrcp.pop %v5125
        %v5129 = vmul.f32 1.0, %v5128
        %v5130 = vrcp.pop %v5126
        %v5131 = vmul.f32 1.0, %v5130
        %v5132 = vrcp.pop %v5127
        %v5133 = vmul.f32 1.0, %v5132
        %v5134 = vtanh.pop %v5115
        %v5135 = vmul.f32 %v5131, %v4825
        %v5136 = vmul.f32 %v5129, %v5134
        %v5137 = vadd.f32 %v5135, %v5136
        %v5138 = vtanh.pop %v5137
        %v5139 = vmul.f32 %v5133, %v5138
        %v5140 = vpack.c.bf16 %v5139, %v5139
        %s5141 = scalar_lea.vmem [#allocation3], 44
        %5142 = vst [vmem:[%s5141] sm:$0xf] %v5140
        %s5143 = smul.u32 12, 4
        %s5144 = smul.addr %s5143, 8
        %s5145 = scalar_lea.vmem [#allocation2], %s5144
        %v5146 = vld [vmem:[%s5145] sm:$0xff]
        %v5147 = vld [vmem:[%s5145 + $0x8] sm:$0xff]
        %v5148 = vld [vmem:[%s5145 + $0x10] sm:$0xff]
        %v5149 = vld [vmem:[%s5145 + $0x18] sm:$0xff]
        %v5150 = vld [vmem:[%s4] sm:$0xff]
        %v5151 = vld [vmem:[%s4 + $0x8] sm:$0xff]
        %v5152 = vld [vmem:[%s4 + $0x10] sm:$0xff]
        %v5153 = vld [vmem:[%s4 + $0x18] sm:$0xff]
        %v5154 = vld [vmem:[%s4 + $0x20] sm:$0xff]
        %v5155 = vld [vmem:[%s4 + $0x28] sm:$0xff]
        %v5156 = vld [vmem:[%s4 + $0x30] sm:$0xff]
        %v5157 = vld [vmem:[%s4 + $0x38] sm:$0xff]
        %v5158 = vld [vmem:[%s4 + $0x40] sm:$0xff]
        %v5159 = vld [vmem:[%s4 + $0x48] sm:$0xff]
        %v5160 = vld [vmem:[%s4 + $0x50] sm:$0xff]
        %v5161 = vld [vmem:[%s4 + $0x58] sm:$0xff]
        %v5162 = vld [vmem:[%s4 + $0x60] sm:$0xff]
        %v5163 = vld [vmem:[%s4 + $0x68] sm:$0xff]
        %v5164 = vld [vmem:[%s4 + $0x70] sm:$0xff]
        %v5165 = vld [vmem:[%s4 + $0x78] sm:$0xff]
        %v5166 = vld [vmem:[%s4 + $0x80] sm:$0xff]
        %v5167 = vld [vmem:[%s4 + $0x88] sm:$0xff]
        %v5168 = vld [vmem:[%s4 + $0x90] sm:$0xff]
        %v5169 = vld [vmem:[%s4 + $0x98] sm:$0xff]
        %v5170 = vld [vmem:[%s4 + $0xa0] sm:$0xff]
        %v5171 = vld [vmem:[%s4 + $0xa8] sm:$0xff]
        %v5172 = vld [vmem:[%s4 + $0xb0] sm:$0xff]
        %v5173 = vld [vmem:[%s4 + $0xb8] sm:$0xff]
        %v5174 = vld [vmem:[%s4 + $0xc0] sm:$0xff]
        %v5175 = vld [vmem:[%s4 + $0xc8] sm:$0xff]
        %v5176 = vld [vmem:[%s4 + $0xd0] sm:$0xff]
        %v5177 = vld [vmem:[%s4 + $0xd8] sm:$0xff]
        %v5178 = vld [vmem:[%s4 + $0xe0] sm:$0xff]
        %v5179 = vld [vmem:[%s4 + $0xe8] sm:$0xff]
        %v5180 = vld [vmem:[%s4 + $0xf0] sm:$0xff]
        %v5181 = vld [vmem:[%s4 + $0xf8] sm:$0xff]
        %v5214 = vunpack.c.l.b16 %v5150
        %v5215 = vunpack.c.h.b16 %v5150
        %v5216 = vunpack.c.l.b16 %v5151
        %v5217 = vunpack.c.h.b16 %v5151
        %v5218 = vunpack.c.l.b16 %v5152
        %v5219 = vunpack.c.h.b16 %v5152
        %v5220 = vunpack.c.l.b16 %v5153
        %v5221 = vunpack.c.h.b16 %v5153
        %v5222 = vunpack.c.l.b16 %v5154
        %v5223 = vunpack.c.h.b16 %v5154
        %v5224 = vunpack.c.l.b16 %v5155
        %v5225 = vunpack.c.h.b16 %v5155
        %v5226 = vunpack.c.l.b16 %v5156
        %v5227 = vunpack.c.h.b16 %v5156
        %v5228 = vunpack.c.l.b16 %v5157
        %v5229 = vunpack.c.h.b16 %v5157
        %v5230 = vunpack.c.l.b16 %v5158
        %v5231 = vunpack.c.h.b16 %v5158
        %v5232 = vunpack.c.l.b16 %v5159
        %v5233 = vunpack.c.h.b16 %v5159
        %v5234 = vunpack.c.l.b16 %v5160
        %v5235 = vunpack.c.h.b16 %v5160
        %v5236 = vunpack.c.l.b16 %v5161
        %v5237 = vunpack.c.h.b16 %v5161
        %v5238 = vunpack.c.l.b16 %v5162
        %v5239 = vunpack.c.h.b16 %v5162
        %v5240 = vunpack.c.l.b16 %v5163
        %v5241 = vunpack.c.h.b16 %v5163
        %v5242 = vunpack.c.l.b16 %v5164
        %v5243 = vunpack.c.h.b16 %v5164
        %v5244 = vunpack.c.l.b16 %v5165
        %v5245 = vunpack.c.h.b16 %v5165
        %v5246 = vunpack.c.l.b16 %v5166
        %v5247 = vunpack.c.h.b16 %v5166
        %v5248 = vunpack.c.l.b16 %v5167
        %v5249 = vunpack.c.h.b16 %v5167
        %v5250 = vunpack.c.l.b16 %v5168
        %v5251 = vunpack.c.h.b16 %v5168
        %v5252 = vunpack.c.l.b16 %v5169
        %v5253 = vunpack.c.h.b16 %v5169
        %v5254 = vunpack.c.l.b16 %v5170
        %v5255 = vunpack.c.h.b16 %v5170
        %v5256 = vunpack.c.l.b16 %v5171
        %v5257 = vunpack.c.h.b16 %v5171
        %v5258 = vunpack.c.l.b16 %v5172
        %v5259 = vunpack.c.h.b16 %v5172
        %v5260 = vunpack.c.l.b16 %v5173
        %v5261 = vunpack.c.h.b16 %v5173
        %v5262 = vunpack.c.l.b16 %v5174
        %v5263 = vunpack.c.h.b16 %v5174
        %v5264 = vunpack.c.l.b16 %v5175
        %v5265 = vunpack.c.h.b16 %v5175
        %v5266 = vunpack.c.l.b16 %v5176
        %v5267 = vunpack.c.h.b16 %v5176
        %v5268 = vunpack.c.l.b16 %v5177
        %v5269 = vunpack.c.h.b16 %v5177
        %v5270 = vunpack.c.l.b16 %v5178
        %v5271 = vunpack.c.h.b16 %v5178
        %v5272 = vunpack.c.l.b16 %v5179
        %v5273 = vunpack.c.h.b16 %v5179
        %v5274 = vunpack.c.l.b16 %v5180
        %v5275 = vunpack.c.h.b16 %v5180
        %v5276 = vunpack.c.l.b16 %v5181
        %v5277 = vunpack.c.h.b16 %v5181
        %v5278 = vpack.c.b16 %v5218, %v5214
        %v5279 = vpack.c.b16 %v5219, %v5215
        %v5280 = vpack.c.b16 %v5220, %v5216
        %v5281 = vpack.c.b16 %v5221, %v5217
        %v5282 = vpack.c.b16 %v5226, %v5222
        %v5283 = vpack.c.b16 %v5227, %v5223
        %v5284 = vpack.c.b16 %v5228, %v5224
        %v5285 = vpack.c.b16 %v5229, %v5225
        %v5286 = vpack.c.b16 %v5234, %v5230
        %v5287 = vpack.c.b16 %v5235, %v5231
        %v5288 = vpack.c.b16 %v5236, %v5232
        %v5289 = vpack.c.b16 %v5237, %v5233
        %v5290 = vpack.c.b16 %v5242, %v5238
        %v5291 = vpack.c.b16 %v5243, %v5239
        %v5292 = vpack.c.b16 %v5244, %v5240
        %v5293 = vpack.c.b16 %v5245, %v5241
        %v5294 = vpack.c.b16 %v5250, %v5246
        %v5295 = vpack.c.b16 %v5251, %v5247
        %v5296 = vpack.c.b16 %v5252, %v5248
        %v5297 = vpack.c.b16 %v5253, %v5249
        %v5298 = vpack.c.b16 %v5258, %v5254
        %v5299 = vpack.c.b16 %v5259, %v5255
        %v5300 = vpack.c.b16 %v5260, %v5256
        %v5301 = vpack.c.b16 %v5261, %v5257
        %v5302 = vpack.c.b16 %v5266, %v5262
        %v5303 = vpack.c.b16 %v5267, %v5263
        %v5304 = vpack.c.b16 %v5268, %v5264
        %v5305 = vpack.c.b16 %v5269, %v5265
        %v5306 = vpack.c.b16 %v5274, %v5270
        %v5307 = vpack.c.b16 %v5275, %v5271
        %v5308 = vpack.c.b16 %v5276, %v5272
        %v5309 = vpack.c.b16 %v5277, %v5273
        %5342 = vmatprep.subr.bf16.mxu0 %v5279
        %5343 = vmatpush1.bf16.msra.mxu0 %v5278
        %5344 = vmatprep.subr.bf16.mxu0 %v5283
        %5345 = vmatpush1.bf16.msra.mxu0 %v5282
        %5346 = vmatprep.subr.bf16.mxu0 %v5287
        %5347 = vmatpush1.bf16.msra.mxu0 %v5286
        %5348 = vmatprep.subr.bf16.mxu0 %v5291
        %5349 = vmatpush1.bf16.msra.mxu0 %v5290
        %5350 = vmatprep.subr.bf16.mxu0 %v5295
        %5351 = vmatpush1.bf16.msra.mxu0 %v5294
        %5352 = vmatprep.subr.bf16.mxu0 %v5299
        %5353 = vmatpush1.bf16.msra.mxu0 %v5298
        %5354 = vmatprep.subr.bf16.mxu0 %v5303
        %5355 = vmatpush1.bf16.msra.mxu0 %v5302
        %5356 = vmatprep.subr.bf16.mxu0 %v5307
        %5357 = vmatpush1.bf16.msra.mxu0 %v5306
        %5358 = vmatprep.subr.bf16.mxu0 0
        %5359 = vmatpush1.bf16.msra.mxu0 0
        %5360 = vmatprep.subr.bf16.mxu0 0
        %5361 = vmatpush1.bf16.msra.mxu0 0
        %5362 = vmatprep.subr.bf16.mxu0 0
        %5363 = vmatpush1.bf16.msra.mxu0 0
        %5364 = vmatprep.subr.bf16.mxu0 0
        %5365 = vmatpush1.bf16.msra.mxu0 0
        %5366 = vmatprep.subr.bf16.mxu0 0
        %5367 = vmatpush1.bf16.msra.mxu0 0
        %5368 = vmatprep.subr.bf16.mxu0 0
        %5369 = vmatpush1.bf16.msra.mxu0 0
        %5370 = vmatprep.subr.bf16.mxu0 0
        %5371 = vmatpush1.bf16.msra.mxu0 0
        %5372 = vmatprep.subr.bf16.mxu0 0
        %5373 = vmatpush1.bf16.msra.mxu0 0
        %5374 = vmatprep.mubr.bf16.mxu0 0
        %5375 = vmatmul.mubr.bf16.gmra.mrb[0].mxu0 %v5140
        %v5376 = vpop.f32.mrb[0].mxu0
        %v5377 = vadd.f32 0.0, %v5376
        %v5378 = vpop.f32.mrb[0].mxu0
        %v5379 = vadd.f32 0.0, %v5378
        %v5380 = vpop.f32.mrb[0].mxu0
        %v5381 = vpop.f32.mrb[0].mxu0
        %5382 = vdwg.mxu0
        %5383 = vmatprep.subr.bf16.mxu0 %v5281
        %5384 = vmatpush1.bf16.msra.mxu0 %v5280
        %5385 = vmatprep.subr.bf16.mxu0 %v5285
        %5386 = vmatpush1.bf16.msra.mxu0 %v5284
        %5387 = vmatprep.subr.bf16.mxu0 %v5289
        %5388 = vmatpush1.bf16.msra.mxu0 %v5288
        %5389 = vmatprep.subr.bf16.mxu0 %v5293
        %5390 = vmatpush1.bf16.msra.mxu0 %v5292
        %5391 = vmatprep.subr.bf16.mxu0 %v5297
        %5392 = vmatpush1.bf16.msra.mxu0 %v5296
        %5393 = vmatprep.subr.bf16.mxu0 %v5301
        %5394 = vmatpush1.bf16.msra.mxu0 %v5300
        %5395 = vmatprep.subr.bf16.mxu0 %v5305
        %5396 = vmatpush1.bf16.msra.mxu0 %v5304
        %5397 = vmatprep.subr.bf16.mxu0 %v5309
        %5398 = vmatpush1.bf16.msra.mxu0 %v5308
        %5399 = vmatprep.subr.bf16.mxu0 0
        %5400 = vmatpush1.bf16.msra.mxu0 0
        %5401 = vmatprep.subr.bf16.mxu0 0
        %5402 = vmatpush1.bf16.msra.mxu0 0
        %5403 = vmatprep.subr.bf16.mxu0 0
        %5404 = vmatpush1.bf16.msra.mxu0 0
        %5405 = vmatprep.subr.bf16.mxu0 0
        %5406 = vmatpush1.bf16.msra.mxu0 0
        %5407 = vmatprep.subr.bf16.mxu0 0
        %5408 = vmatpush1.bf16.msra.mxu0 0
        %5409 = vmatprep.subr.bf16.mxu0 0
        %5410 = vmatpush1.bf16.msra.mxu0 0
        %5411 = vmatprep.subr.bf16.mxu0 0
        %5412 = vmatpush1.bf16.msra.mxu0 0
        %5413 = vmatprep.subr.bf16.mxu0 0
        %5414 = vmatpush1.bf16.msra.mxu0 0
        %5415 = vmatprep.mubr.bf16.mxu0 0
        %5416 = vmatmul.mubr.bf16.gmra.mrb[0].mxu0 %v5140
        %v5417 = vpop.f32.mrb[0].mxu0
        %v5418 = vadd.f32 0.0, %v5417
        %v5419 = vpop.f32.mrb[0].mxu0
        %v5420 = vadd.f32 0.0, %v5419
        %v5421 = vpop.f32.mrb[0].mxu0
        %v5422 = vpop.f32.mrb[0].mxu0
        %5423 = vdwg.mxu0
        %v5424 = vadd.f32 %v5146, %v5377
        %v5425 = vadd.f32 %v5147, %v5379
        %v5426 = vadd.f32 %v5148, %v5418
        %v5427 = vadd.f32 %v5149, %v5420
        %v5428 = vxor.u32 %v5424, 2147483648
        %v5429 = vxor.u32 %v5425, 2147483648
        %v5430 = vxor.u32 %v5426, 2147483648
        %v5431 = vmul.f32 %v5428, 1.442695
        %v5432 = vpow.pop %v5431
        %v5433 = vmul.f32 %v5429, 1.442695
        %v5434 = vpow.pop %v5433
        %v5435 = vmul.f32 %v5430, 1.442695
        %v5436 = vpow.pop %v5435
        %v5437 = vadd.f32 %v5432, 1.0
        %v5438 = vadd.f32 %v5434, 1.0
        %v5439 = vadd.f32 %v5436, 1.0
        %v5440 = vrcp.pop %v5437
        %v5441 = vmul.f32 1.0, %v5440
        %v5442 = vrcp.pop %v5438
        %v5443 = vmul.f32 1.0, %v5442
        %v5444 = vrcp.pop %v5439
        %v5445 = vmul.f32 1.0, %v5444
        %v5446 = vtanh.pop %v5427
        %v5447 = vmul.f32 %v5443, %v5137
        %v5448 = vmul.f32 %v5441, %v5446
        %v5449 = vadd.f32 %v5447, %v5448
        %v5450 = vtanh.pop %v5449
        %v5451 = vmul.f32 %v5445, %v5450
        %v5452 = vpack.c.bf16 %v5451, %v5451
        %s5453 = scalar_lea.vmem [#allocation3], 48
        %5454 = vst [vmem:[%s5453] sm:$0xf] %v5452
        %s5455 = smul.u32 13, 4
        %s5456 = smul.addr %s5455, 8
        %s5457 = scalar_lea.vmem [#allocation2], %s5456
        %v5458 = vld [vmem:[%s5457] sm:$0xff]
        %v5459 = vld [vmem:[%s5457 + $0x8] sm:$0xff]
        %v5460 = vld [vmem:[%s5457 + $0x10] sm:$0xff]
        %v5461 = vld [vmem:[%s5457 + $0x18] sm:$0xff]
        %v5462 = vld [vmem:[%s4] sm:$0xff]
        %v5463 = vld [vmem:[%s4 + $0x8] sm:$0xff]
        %v5464 = vld [vmem:[%s4 + $0x10] sm:$0xff]
        %v5465 = vld [vmem:[%s4 + $0x18] sm:$0xff]
        %v5466 = vld [vmem:[%s4 + $0x20] sm:$0xff]
        %v5467 = vld [vmem:[%s4 + $0x28] sm:$0xff]
        %v5468 = vld [vmem:[%s4 + $0x30] sm:$0xff]
        %v5469 = vld [vmem:[%s4 + $0x38] sm:$0xff]
        %v5470 = vld [vmem:[%s4 + $0x40] sm:$0xff]
        %v5471 = vld [vmem:[%s4 + $0x48] sm:$0xff]
        %v5472 = vld [vmem:[%s4 + $0x50] sm:$0xff]
        %v5473 = vld [vmem:[%s4 + $0x58] sm:$0xff]
        %v5474 = vld [vmem:[%s4 + $0x60] sm:$0xff]
        %v5475 = vld [vmem:[%s4 + $0x68] sm:$0xff]
        %v5476 = vld [vmem:[%s4 + $0x70] sm:$0xff]
        %v5477 = vld [vmem:[%s4 + $0x78] sm:$0xff]
        %v5478 = vld [vmem:[%s4 + $0x80] sm:$0xff]
        %v5479 = vld [vmem:[%s4 + $0x88] sm:$0xff]
        %v5480 = vld [vmem:[%s4 + $0x90] sm:$0xff]
        %v5481 = vld [vmem:[%s4 + $0x98] sm:$0xff]
        %v5482 = vld [vmem:[%s4 + $0xa0] sm:$0xff]
        %v5483 = vld [vmem:[%s4 + $0xa8] sm:$0xff]
        %v5484 = vld [vmem:[%s4 + $0xb0] sm:$0xff]
        %v5485 = vld [vmem:[%s4 + $0xb8] sm:$0xff]
        %v5486 = vld [vmem:[%s4 + $0xc0] sm:$0xff]
        %v5487 = vld [vmem:[%s4 + $0xc8] sm:$0xff]
        %v5488 = vld [vmem:[%s4 + $0xd0] sm:$0xff]
        %v5489 = vld [vmem:[%s4 + $0xd8] sm:$0xff]
        %v5490 = vld [vmem:[%s4 + $0xe0] sm:$0xff]
        %v5491 = vld [vmem:[%s4 + $0xe8] sm:$0xff]
        %v5492 = vld [vmem:[%s4 + $0xf0] sm:$0xff]
        %v5493 = vld [vmem:[%s4 + $0xf8] sm:$0xff]
        %v5526 = vunpack.c.l.b16 %v5462
        %v5527 = vunpack.c.h.b16 %v5462
        %v5528 = vunpack.c.l.b16 %v5463
        %v5529 = vunpack.c.h.b16 %v5463
        %v5530 = vunpack.c.l.b16 %v5464
        %v5531 = vunpack.c.h.b16 %v5464
        %v5532 = vunpack.c.l.b16 %v5465
        %v5533 = vunpack.c.h.b16 %v5465
        %v5534 = vunpack.c.l.b16 %v5466
        %v5535 = vunpack.c.h.b16 %v5466
        %v5536 = vunpack.c.l.b16 %v5467
        %v5537 = vunpack.c.h.b16 %v5467
        %v5538 = vunpack.c.l.b16 %v5468
        %v5539 = vunpack.c.h.b16 %v5468
        %v5540 = vunpack.c.l.b16 %v5469
        %v5541 = vunpack.c.h.b16 %v5469
        %v5542 = vunpack.c.l.b16 %v5470
        %v5543 = vunpack.c.h.b16 %v5470
        %v5544 = vunpack.c.l.b16 %v5471
        %v5545 = vunpack.c.h.b16 %v5471
        %v5546 = vunpack.c.l.b16 %v5472
        %v5547 = vunpack.c.h.b16 %v5472
        %v5548 = vunpack.c.l.b16 %v5473
        %v5549 = vunpack.c.h.b16 %v5473
        %v5550 = vunpack.c.l.b16 %v5474
        %v5551 = vunpack.c.h.b16 %v5474
        %v5552 = vunpack.c.l.b16 %v5475
        %v5553 = vunpack.c.h.b16 %v5475
        %v5554 = vunpack.c.l.b16 %v5476
        %v5555 = vunpack.c.h.b16 %v5476
        %v5556 = vunpack.c.l.b16 %v5477
        %v5557 = vunpack.c.h.b16 %v5477
        %v5558 = vunpack.c.l.b16 %v5478
        %v5559 = vunpack.c.h.b16 %v5478
        %v5560 = vunpack.c.l.b16 %v5479
        %v5561 = vunpack.c.h.b16 %v5479
        %v5562 = vunpack.c.l.b16 %v5480
        %v5563 = vunpack.c.h.b16 %v5480
        %v5564 = vunpack.c.l.b16 %v5481
        %v5565 = vunpack.c.h.b16 %v5481
        %v5566 = vunpack.c.l.b16 %v5482
        %v5567 = vunpack.c.h.b16 %v5482
        %v5568 = vunpack.c.l.b16 %v5483
        %v5569 = vunpack.c.h.b16 %v5483
        %v5570 = vunpack.c.l.b16 %v5484
        %v5571 = vunpack.c.h.b16 %v5484
        %v5572 = vunpack.c.l.b16 %v5485
        %v5573 = vunpack.c.h.b16 %v5485
        %v5574 = vunpack.c.l.b16 %v5486
        %v5575 = vunpack.c.h.b16 %v5486
        %v5576 = vunpack.c.l.b16 %v5487
        %v5577 = vunpack.c.h.b16 %v5487
        %v5578 = vunpack.c.l.b16 %v5488
        %v5579 = vunpack.c.h.b16 %v5488
        %v5580 = vunpack.c.l.b16 %v5489
        %v5581 = vunpack.c.h.b16 %v5489
        %v5582 = vunpack.c.l.b16 %v5490
        %v5583 = vunpack.c.h.b16 %v5490
        %v5584 = vunpack.c.l.b16 %v5491
        %v5585 = vunpack.c.h.b16 %v5491
        %v5586 = vunpack.c.l.b16 %v5492
        %v5587 = vunpack.c.h.b16 %v5492
        %v5588 = vunpack.c.l.b16 %v5493
        %v5589 = vunpack.c.h.b16 %v5493
        %v5590 = vpack.c.b16 %v5530, %v5526
        %v5591 = vpack.c.b16 %v5531, %v5527
        %v5592 = vpack.c.b16 %v5532, %v5528
        %v5593 = vpack.c.b16 %v5533, %v5529
        %v5594 = vpack.c.b16 %v5538, %v5534
        %v5595 = vpack.c.b16 %v5539, %v5535
        %v5596 = vpack.c.b16 %v5540, %v5536
        %v5597 = vpack.c.b16 %v5541, %v5537
        %v5598 = vpack.c.b16 %v5546, %v5542
        %v5599 = vpack.c.b16 %v5547, %v5543
        %v5600 = vpack.c.b16 %v5548, %v5544
        %v5601 = vpack.c.b16 %v5549, %v5545
        %v5602 = vpack.c.b16 %v5554, %v5550
        %v5603 = vpack.c.b16 %v5555, %v5551
        %v5604 = vpack.c.b16 %v5556, %v5552
        %v5605 = vpack.c.b16 %v5557, %v5553
        %v5606 = vpack.c.b16 %v5562, %v5558
        %v5607 = vpack.c.b16 %v5563, %v5559
        %v5608 = vpack.c.b16 %v5564, %v5560
        %v5609 = vpack.c.b16 %v5565, %v5561
        %v5610 = vpack.c.b16 %v5570, %v5566
        %v5611 = vpack.c.b16 %v5571, %v5567
        %v5612 = vpack.c.b16 %v5572, %v5568
        %v5613 = vpack.c.b16 %v5573, %v5569
        %v5614 = vpack.c.b16 %v5578, %v5574
        %v5615 = vpack.c.b16 %v5579, %v5575
        %v5616 = vpack.c.b16 %v5580, %v5576
        %v5617 = vpack.c.b16 %v5581, %v5577
        %v5618 = vpack.c.b16 %v5586, %v5582
        %v5619 = vpack.c.b16 %v5587, %v5583
        %v5620 = vpack.c.b16 %v5588, %v5584
        %v5621 = vpack.c.b16 %v5589, %v5585
        %5654 = vmatprep.subr.bf16.mxu0 %v5591
        %5655 = vmatpush1.bf16.msra.mxu0 %v5590
        %5656 = vmatprep.subr.bf16.mxu0 %v5595
        %5657 = vmatpush1.bf16.msra.mxu0 %v5594
        %5658 = vmatprep.subr.bf16.mxu0 %v5599
        %5659 = vmatpush1.bf16.msra.mxu0 %v5598
        %5660 = vmatprep.subr.bf16.mxu0 %v5603
        %5661 = vmatpush1.bf16.msra.mxu0 %v5602
        %5662 = vmatprep.subr.bf16.mxu0 %v5607
        %5663 = vmatpush1.bf16.msra.mxu0 %v5606
        %5664 = vmatprep.subr.bf16.mxu0 %v5611
        %5665 = vmatpush1.bf16.msra.mxu0 %v5610
        %5666 = vmatprep.subr.bf16.mxu0 %v5615
        %5667 = vmatpush1.bf16.msra.mxu0 %v5614
        %5668 = vmatprep.subr.bf16.mxu0 %v5619
        %5669 = vmatpush1.bf16.msra.mxu0 %v5618
        %5670 = vmatprep.subr.bf16.mxu0 0
        %5671 = vmatpush1.bf16.msra.mxu0 0
        %5672 = vmatprep.subr.bf16.mxu0 0
        %5673 = vmatpush1.bf16.msra.mxu0 0
        %5674 = vmatprep.subr.bf16.mxu0 0
        %5675 = vmatpush1.bf16.msra.mxu0 0
        %5676 = vmatprep.subr.bf16.mxu0 0
        %5677 = vmatpush1.bf16.msra.mxu0 0
        %5678 = vmatprep.subr.bf16.mxu0 0
        %5679 = vmatpush1.bf16.msra.mxu0 0
        %5680 = vmatprep.subr.bf16.mxu0 0
        %5681 = vmatpush1.bf16.msra.mxu0 0
        %5682 = vmatprep.subr.bf16.mxu0 0
        %5683 = vmatpush1.bf16.msra.mxu0 0
        %5684 = vmatprep.subr.bf16.mxu0 0
        %5685 = vmatpush1.bf16.msra.mxu0 0
        %5686 = vmatprep.mubr.bf16.mxu0 0
        %5687 = vmatmul.mubr.bf16.gmra.mrb[0].mxu0 %v5452
        %v5688 = vpop.f32.mrb[0].mxu0
        %v5689 = vadd.f32 0.0, %v5688
        %v5690 = vpop.f32.mrb[0].mxu0
        %v5691 = vadd.f32 0.0, %v5690
        %v5692 = vpop.f32.mrb[0].mxu0
        %v5693 = vpop.f32.mrb[0].mxu0
        %5694 = vdwg.mxu0
        %5695 = vmatprep.subr.bf16.mxu0 %v5593
        %5696 = vmatpush1.bf16.msra.mxu0 %v5592
        %5697 = vmatprep.subr.bf16.mxu0 %v5597
        %5698 = vmatpush1.bf16.msra.mxu0 %v5596
        %5699 = vmatprep.subr.bf16.mxu0 %v5601
        %5700 = vmatpush1.bf16.msra.mxu0 %v5600
        %5701 = vmatprep.subr.bf16.mxu0 %v5605
        %5702 = vmatpush1.bf16.msra.mxu0 %v5604
        %5703 = vmatprep.subr.bf16.mxu0 %v5609
        %5704 = vmatpush1.bf16.msra.mxu0 %v5608
        %5705 = vmatprep.subr.bf16.mxu0 %v5613
        %5706 = vmatpush1.bf16.msra.mxu0 %v5612
        %5707 = vmatprep.subr.bf16.mxu0 %v5617
        %5708 = vmatpush1.bf16.msra.mxu0 %v5616
        %5709 = vmatprep.subr.bf16.mxu0 %v5621
        %5710 = vmatpush1.bf16.msra.mxu0 %v5620
        %5711 = vmatprep.subr.bf16.mxu0 0
        %5712 = vmatpush1.bf16.msra.mxu0 0
        %5713 = vmatprep.subr.bf16.mxu0 0
        %5714 = vmatpush1.bf16.msra.mxu0 0
        %5715 = vmatprep.subr.bf16.mxu0 0
        %5716 = vmatpush1.bf16.msra.mxu0 0
        %5717 = vmatprep.subr.bf16.mxu0 0
        %5718 = vmatpush1.bf16.msra.mxu0 0
        %5719 = vmatprep.subr.bf16.mxu0 0
        %5720 = vmatpush1.bf16.msra.mxu0 0
        %5721 = vmatprep.subr.bf16.mxu0 0
        %5722 = vmatpush1.bf16.msra.mxu0 0
        %5723 = vmatprep.subr.bf16.mxu0 0
        %5724 = vmatpush1.bf16.msra.mxu0 0
        %5725 = vmatprep.subr.bf16.mxu0 0
        %5726 = vmatpush1.bf16.msra.mxu0 0
        %5727 = vmatprep.mubr.bf16.mxu0 0
        %5728 = vmatmul.mubr.bf16.gmra.mrb[0].mxu0 %v5452
        %v5729 = vpop.f32.mrb[0].mxu0
        %v5730 = vadd.f32 0.0, %v5729
        %v5731 = vpop.f32.mrb[0].mxu0
        %v5732 = vadd.f32 0.0, %v5731
        %v5733 = vpop.f32.mrb[0].mxu0
        %v5734 = vpop.f32.mrb[0].mxu0
        %5735 = vdwg.mxu0
        %v5736 = vadd.f32 %v5458, %v5689
        %v5737 = vadd.f32 %v5459, %v5691
        %v5738 = vadd.f32 %v5460, %v5730
        %v5739 = vadd.f32 %v5461, %v5732
        %v5740 = vxor.u32 %v5736, 2147483648
        %v5741 = vxor.u32 %v5737, 2147483648
        %v5742 = vxor.u32 %v5738, 2147483648
        %v5743 = vmul.f32 %v5740, 1.442695
        %v5744 = vpow.pop %v5743
        %v5745 = vmul.f32 %v5741, 1.442695
        %v5746 = vpow.pop %v5745
        %v5747 = vmul.f32 %v5742, 1.442695
        %v5748 = vpow.pop %v5747
        %v5749 = vadd.f32 %v5744, 1.0
        %v5750 = vadd.f32 %v5746, 1.0
        %v5751 = vadd.f32 %v5748, 1.0
        %v5752 = vrcp.pop %v5749
        %v5753 = vmul.f32 1.0, %v5752
        %v5754 = vrcp.pop %v5750
        %v5755 = vmul.f32 1.0, %v5754
        %v5756 = vrcp.pop %v5751
        %v5757 = vmul.f32 1.0, %v5756
        %v5758 = vtanh.pop %v5739
        %v5759 = vmul.f32 %v5755, %v5449
        %v5760 = vmul.f32 %v5753, %v5758
        %v5761 = vadd.f32 %v5759, %v5760
        %v5762 = vtanh.pop %v5761
        %v5763 = vmul.f32 %v5757, %v5762
        %v5764 = vpack.c.bf16 %v5763, %v5763
        %s5765 = scalar_lea.vmem [#allocation3], 52
        %5766 = vst [vmem:[%s5765] sm:$0xf] %v5764
        %s5767 = smul.u32 14, 4
        %s5768 = smul.addr %s5767, 8
        %s5769 = scalar_lea.vmem [#allocation2], %s5768
        %v5770 = vld [vmem:[%s5769] sm:$0xff]
        %v5771 = vld [vmem:[%s5769 + $0x8] sm:$0xff]
        %v5772 = vld [vmem:[%s5769 + $0x10] sm:$0xff]
        %v5773 = vld [vmem:[%s5769 + $0x18] sm:$0xff]
        %v5774 = vld [vmem:[%s4] sm:$0xff]
        %v5775 = vld [vmem:[%s4 + $0x8] sm:$0xff]
        %v5776 = vld [vmem:[%s4 + $0x10] sm:$0xff]
        %v5777 = vld [vmem:[%s4 + $0x18] sm:$0xff]
        %v5778 = vld [vmem:[%s4 + $0x20] sm:$0xff]
        %v5779 = vld [vmem:[%s4 + $0x28] sm:$0xff]
        %v5780 = vld [vmem:[%s4 + $0x30] sm:$0xff]
        %v5781 = vld [vmem:[%s4 + $0x38] sm:$0xff]
        %v5782 = vld [vmem:[%s4 + $0x40] sm:$0xff]
        %v5783 = vld [vmem:[%s4 + $0x48] sm:$0xff]
        %v5784 = vld [vmem:[%s4 + $0x50] sm:$0xff]
        %v5785 = vld [vmem:[%s4 + $0x58] sm:$0xff]
        %v5786 = vld [vmem:[%s4 + $0x60] sm:$0xff]
        %v5787 = vld [vmem:[%s4 + $0x68] sm:$0xff]
        %v5788 = vld [vmem:[%s4 + $0x70] sm:$0xff]
        %v5789 = vld [vmem:[%s4 + $0x78] sm:$0xff]
        %v5790 = vld [vmem:[%s4 + $0x80] sm:$0xff]
        %v5791 = vld [vmem:[%s4 + $0x88] sm:$0xff]
        %v5792 = vld [vmem:[%s4 + $0x90] sm:$0xff]
        %v5793 = vld [vmem:[%s4 + $0x98] sm:$0xff]
        %v5794 = vld [vmem:[%s4 + $0xa0] sm:$0xff]
        %v5795 = vld [vmem:[%s4 + $0xa8] sm:$0xff]
        %v5796 = vld [vmem:[%s4 + $0xb0] sm:$0xff]
        %v5797 = vld [vmem:[%s4 + $0xb8] sm:$0xff]
        %v5798 = vld [vmem:[%s4 + $0xc0] sm:$0xff]
        %v5799 = vld [vmem:[%s4 + $0xc8] sm:$0xff]
        %v5800 = vld [vmem:[%s4 + $0xd0] sm:$0xff]
        %v5801 = vld [vmem:[%s4 + $0xd8] sm:$0xff]
        %v5802 = vld [vmem:[%s4 + $0xe0] sm:$0xff]
        %v5803 = vld [vmem:[%s4 + $0xe8] sm:$0xff]
        %v5804 = vld [vmem:[%s4 + $0xf0] sm:$0xff]
        %v5805 = vld [vmem:[%s4 + $0xf8] sm:$0xff]
        %v5838 = vunpack.c.l.b16 %v5774
        %v5839 = vunpack.c.h.b16 %v5774
        %v5840 = vunpack.c.l.b16 %v5775
        %v5841 = vunpack.c.h.b16 %v5775
        %v5842 = vunpack.c.l.b16 %v5776
        %v5843 = vunpack.c.h.b16 %v5776
        %v5844 = vunpack.c.l.b16 %v5777
        %v5845 = vunpack.c.h.b16 %v5777
        %v5846 = vunpack.c.l.b16 %v5778
        %v5847 = vunpack.c.h.b16 %v5778
        %v5848 = vunpack.c.l.b16 %v5779
        %v5849 = vunpack.c.h.b16 %v5779
        %v5850 = vunpack.c.l.b16 %v5780
        %v5851 = vunpack.c.h.b16 %v5780
        %v5852 = vunpack.c.l.b16 %v5781
        %v5853 = vunpack.c.h.b16 %v5781
        %v5854 = vunpack.c.l.b16 %v5782
        %v5855 = vunpack.c.h.b16 %v5782
        %v5856 = vunpack.c.l.b16 %v5783
        %v5857 = vunpack.c.h.b16 %v5783
        %v5858 = vunpack.c.l.b16 %v5784
        %v5859 = vunpack.c.h.b16 %v5784
        %v5860 = vunpack.c.l.b16 %v5785
        %v5861 = vunpack.c.h.b16 %v5785
        %v5862 = vunpack.c.l.b16 %v5786
        %v5863 = vunpack.c.h.b16 %v5786
        %v5864 = vunpack.c.l.b16 %v5787
        %v5865 = vunpack.c.h.b16 %v5787
        %v5866 = vunpack.c.l.b16 %v5788
        %v5867 = vunpack.c.h.b16 %v5788
        %v5868 = vunpack.c.l.b16 %v5789
        %v5869 = vunpack.c.h.b16 %v5789
        %v5870 = vunpack.c.l.b16 %v5790
        %v5871 = vunpack.c.h.b16 %v5790
        %v5872 = vunpack.c.l.b16 %v5791
        %v5873 = vunpack.c.h.b16 %v5791
        %v5874 = vunpack.c.l.b16 %v5792
        %v5875 = vunpack.c.h.b16 %v5792
        %v5876 = vunpack.c.l.b16 %v5793
        %v5877 = vunpack.c.h.b16 %v5793
        %v5878 = vunpack.c.l.b16 %v5794
        %v5879 = vunpack.c.h.b16 %v5794
        %v5880 = vunpack.c.l.b16 %v5795
        %v5881 = vunpack.c.h.b16 %v5795
        %v5882 = vunpack.c.l.b16 %v5796
        %v5883 = vunpack.c.h.b16 %v5796
        %v5884 = vunpack.c.l.b16 %v5797
        %v5885 = vunpack.c.h.b16 %v5797
        %v5886 = vunpack.c.l.b16 %v5798
        %v5887 = vunpack.c.h.b16 %v5798
        %v5888 = vunpack.c.l.b16 %v5799
        %v5889 = vunpack.c.h.b16 %v5799
        %v5890 = vunpack.c.l.b16 %v5800
        %v5891 = vunpack.c.h.b16 %v5800
        %v5892 = vunpack.c.l.b16 %v5801
        %v5893 = vunpack.c.h.b16 %v5801
        %v5894 = vunpack.c.l.b16 %v5802
        %v5895 = vunpack.c.h.b16 %v5802
        %v5896 = vunpack.c.l.b16 %v5803
        %v5897 = vunpack.c.h.b16 %v5803
        %v5898 = vunpack.c.l.b16 %v5804
        %v5899 = vunpack.c.h.b16 %v5804
        %v5900 = vunpack.c.l.b16 %v5805
        %v5901 = vunpack.c.h.b16 %v5805
        %v5902 = vpack.c.b16 %v5842, %v5838
        %v5903 = vpack.c.b16 %v5843, %v5839
        %v5904 = vpack.c.b16 %v5844, %v5840
        %v5905 = vpack.c.b16 %v5845, %v5841
        %v5906 = vpack.c.b16 %v5850, %v5846
        %v5907 = vpack.c.b16 %v5851, %v5847
        %v5908 = vpack.c.b16 %v5852, %v5848
        %v5909 = vpack.c.b16 %v5853, %v5849
        %v5910 = vpack.c.b16 %v5858, %v5854
        %v5911 = vpack.c.b16 %v5859, %v5855
        %v5912 = vpack.c.b16 %v5860, %v5856
        %v5913 = vpack.c.b16 %v5861, %v5857
        %v5914 = vpack.c.b16 %v5866, %v5862
        %v5915 = vpack.c.b16 %v5867, %v5863
        %v5916 = vpack.c.b16 %v5868, %v5864
        %v5917 = vpack.c.b16 %v5869, %v5865
        %v5918 = vpack.c.b16 %v5874, %v5870
        %v5919 = vpack.c.b16 %v5875, %v5871
        %v5920 = vpack.c.b16 %v5876, %v5872
        %v5921 = vpack.c.b16 %v5877, %v5873
        %v5922 = vpack.c.b16 %v5882, %v5878
        %v5923 = vpack.c.b16 %v5883, %v5879
        %v5924 = vpack.c.b16 %v5884, %v5880
        %v5925 = vpack.c.b16 %v5885, %v5881
        %v5926 = vpack.c.b16 %v5890, %v5886
        %v5927 = vpack.c.b16 %v5891, %v5887
        %v5928 = vpack.c.b16 %v5892, %v5888
        %v5929 = vpack.c.b16 %v5893, %v5889
        %v5930 = vpack.c.b16 %v5898, %v5894
        %v5931 = vpack.c.b16 %v5899, %v5895
        %v5932 = vpack.c.b16 %v5900, %v5896
        %v5933 = vpack.c.b16 %v5901, %v5897
        %5966 = vmatprep.subr.bf16.mxu0 %v5903
        %5967 = vmatpush1.bf16.msra.mxu0 %v5902
        %5968 = vmatprep.subr.bf16.mxu0 %v5907
        %5969 = vmatpush1.bf16.msra.mxu0 %v5906
        %5970 = vmatprep.subr.bf16.mxu0 %v5911
        %5971 = vmatpush1.bf16.msra.mxu0 %v5910
        %5972 = vmatprep.subr.bf16.mxu0 %v5915
        %5973 = vmatpush1.bf16.msra.mxu0 %v5914
        %5974 = vmatprep.subr.bf16.mxu0 %v5919
        %5975 = vmatpush1.bf16.msra.mxu0 %v5918
        %5976 = vmatprep.subr.bf16.mxu0 %v5923
        %5977 = vmatpush1.bf16.msra.mxu0 %v5922
        %5978 = vmatprep.subr.bf16.mxu0 %v5927
        %5979 = vmatpush1.bf16.msra.mxu0 %v5926
        %5980 = vmatprep.subr.bf16.mxu0 %v5931
        %5981 = vmatpush1.bf16.msra.mxu0 %v5930
        %5982 = vmatprep.subr.bf16.mxu0 0
        %5983 = vmatpush1.bf16.msra.mxu0 0
        %5984 = vmatprep.subr.bf16.mxu0 0
        %5985 = vmatpush1.bf16.msra.mxu0 0
        %5986 = vmatprep.subr.bf16.mxu0 0
        %5987 = vmatpush1.bf16.msra.mxu0 0
        %5988 = vmatprep.subr.bf16.mxu0 0
        %5989 = vmatpush1.bf16.msra.mxu0 0
        %5990 = vmatprep.subr.bf16.mxu0 0
        %5991 = vmatpush1.bf16.msra.mxu0 0
        %5992 = vmatprep.subr.bf16.mxu0 0
        %5993 = vmatpush1.bf16.msra.mxu0 0
        %5994 = vmatprep.subr.bf16.mxu0 0
        %5995 = vmatpush1.bf16.msra.mxu0 0
        %5996 = vmatprep.subr.bf16.mxu0 0
        %5997 = vmatpush1.bf16.msra.mxu0 0
        %5998 = vmatprep.mubr.bf16.mxu0 0
        %5999 = vmatmul.mubr.bf16.gmra.mrb[0].mxu0 %v5764
        %v6000 = vpop.f32.mrb[0].mxu0
        %v6001 = vadd.f32 0.0, %v6000
        %v6002 = vpop.f32.mrb[0].mxu0
        %v6003 = vadd.f32 0.0, %v6002
        %v6004 = vpop.f32.mrb[0].mxu0
        %v6005 = vpop.f32.mrb[0].mxu0
        %6006 = vdwg.mxu0
        %6007 = vmatprep.subr.bf16.mxu0 %v5905
        %6008 = vmatpush1.bf16.msra.mxu0 %v5904
        %6009 = vmatprep.subr.bf16.mxu0 %v5909
        %6010 = vmatpush1.bf16.msra.mxu0 %v5908
        %6011 = vmatprep.subr.bf16.mxu0 %v5913
        %6012 = vmatpush1.bf16.msra.mxu0 %v5912
        %6013 = vmatprep.subr.bf16.mxu0 %v5917
        %6014 = vmatpush1.bf16.msra.mxu0 %v5916
        %6015 = vmatprep.subr.bf16.mxu0 %v5921
        %6016 = vmatpush1.bf16.msra.mxu0 %v5920
        %6017 = vmatprep.subr.bf16.mxu0 %v5925
        %6018 = vmatpush1.bf16.msra.mxu0 %v5924
        %6019 = vmatprep.subr.bf16.mxu0 %v5929
        %6020 = vmatpush1.bf16.msra.mxu0 %v5928
        %6021 = vmatprep.subr.bf16.mxu0 %v5933
        %6022 = vmatpush1.bf16.msra.mxu0 %v5932
        %6023 = vmatprep.subr.bf16.mxu0 0
        %6024 = vmatpush1.bf16.msra.mxu0 0
        %6025 = vmatprep.subr.bf16.mxu0 0
        %6026 = vmatpush1.bf16.msra.mxu0 0
        %6027 = vmatprep.subr.bf16.mxu0 0
        %6028 = vmatpush1.bf16.msra.mxu0 0
        %6029 = vmatprep.subr.bf16.mxu0 0
        %6030 = vmatpush1.bf16.msra.mxu0 0
        %6031 = vmatprep.subr.bf16.mxu0 0
        %6032 = vmatpush1.bf16.msra.mxu0 0
        %6033 = vmatprep.subr.bf16.mxu0 0
        %6034 = vmatpush1.bf16.msra.mxu0 0
        %6035 = vmatprep.subr.bf16.mxu0 0
        %6036 = vmatpush1.bf16.msra.mxu0 0
        %6037 = vmatprep.subr.bf16.mxu0 0
        %6038 = vmatpush1.bf16.msra.mxu0 0
        %6039 = vmatprep.mubr.bf16.mxu0 0
        %6040 = vmatmul.mubr.bf16.gmra.mrb[0].mxu0 %v5764
        %v6041 = vpop.f32.mrb[0].mxu0
        %v6042 = vadd.f32 0.0, %v6041
        %v6043 = vpop.f32.mrb[0].mxu0
        %v6044 = vadd.f32 0.0, %v6043
        %v6045 = vpop.f32.mrb[0].mxu0
        %v6046 = vpop.f32.mrb[0].mxu0
        %6047 = vdwg.mxu0
        %v6048 = vadd.f32 %v5770, %v6001
        %v6049 = vadd.f32 %v5771, %v6003
        %v6050 = vadd.f32 %v5772, %v6042
        %v6051 = vadd.f32 %v5773, %v6044
        %v6052 = vxor.u32 %v6048, 2147483648
        %v6053 = vxor.u32 %v6049, 2147483648
        %v6054 = vxor.u32 %v6050, 2147483648
        %v6055 = vmul.f32 %v6052, 1.442695
        %v6056 = vpow.pop %v6055
        %v6057 = vmul.f32 %v6053, 1.442695
        %v6058 = vpow.pop %v6057
        %v6059 = vmul.f32 %v6054, 1.442695
        %v6060 = vpow.pop %v6059
        %v6061 = vadd.f32 %v6056, 1.0
        %v6062 = vadd.f32 %v6058, 1.0
        %v6063 = vadd.f32 %v6060, 1.0
        %v6064 = vrcp.pop %v6061
        %v6065 = vmul.f32 1.0, %v6064
        %v6066 = vrcp.pop %v6062
        %v6067 = vmul.f32 1.0, %v6066
        %v6068 = vrcp.pop %v6063
        %v6069 = vmul.f32 1.0, %v6068
        %v6070 = vtanh.pop %v6051
        %v6071 = vmul.f32 %v6067, %v5761
        %v6072 = vmul.f32 %v6065, %v6070
        %v6073 = vadd.f32 %v6071, %v6072
        %v6074 = vtanh.pop %v6073
        %v6075 = vmul.f32 %v6069, %v6074
        %v6076 = vpack.c.bf16 %v6075, %v6075
        %s6077 = scalar_lea.vmem [#allocation3], 56
        %6078 = vst [vmem:[%s6077] sm:$0xf] %v6076
        %v6079 = vld [vmem:[#allocation9] sm:$0xf]
        %v6080 = vld [vmem:[#allocation9 + $0x4] sm:$0xf]
        %v6081 = vld [vmem:[#allocation9 + $0x8] sm:$0xf]
        %v6082 = vld [vmem:[#allocation9 + $0xc] sm:$0xf]
        %v6083 = vld [vmem:[#allocation9 + $0x10] sm:$0xf]
        %v6084 = vld [vmem:[#allocation9 + $0x14] sm:$0xf]
        %v6085 = vld [vmem:[#allocation9 + $0x18] sm:$0xf]
        %v6086 = vld [vmem:[#allocation9 + $0x1c] sm:$0xf]
        %v6087 = vld [vmem:[#allocation9 + $0x20] sm:$0xf]
        %v6088 = vld [vmem:[#allocation9 + $0x24] sm:$0xf]
        %v6089 = vld [vmem:[#allocation9 + $0x28] sm:$0xf]
        %v6090 = vld [vmem:[#allocation9 + $0x2c] sm:$0xf]
        %v6091 = vld [vmem:[#allocation9 + $0x30] sm:$0xf]
        %v6092 = vld [vmem:[#allocation9 + $0x34] sm:$0xf]
        %v6093 = vld [vmem:[#allocation9 + $0x38] sm:$0xf]
        %v6094 = vld [vmem:[#allocation9 + $0x3c] sm:$0xf]
        %v6095 = vld [vmem:[#allocation10] sm:$0x1]
        %v6097 = vlaneseq
        %v6098 = vshrl.u32 %v6097, 7
        %v6099 = vsub.s32 0, %v6098
        %v6100 = vrot.slane %v6095, %v6099
        %v6118 = vunpack.c.l.b16 %v6079
        %v6119 = vunpack.c.l.b16 %v6080
        %v6120 = vunpack.c.l.b16 %v6081
        %v6121 = vunpack.c.l.b16 %v6082
        %v6122 = vunpack.c.l.b16 %v6083
        %v6123 = vunpack.c.l.b16 %v6084
        %v6124 = vunpack.c.l.b16 %v6085
        %v6125 = vunpack.c.l.b16 %v6086
        %v6126 = vunpack.c.l.b16 %v6087
        %v6127 = vunpack.c.l.b16 %v6088
        %v6128 = vunpack.c.l.b16 %v6089
        %v6129 = vunpack.c.l.b16 %v6090
        %v6130 = vunpack.c.l.b16 %v6091
        %v6131 = vunpack.c.l.b16 %v6092
        %v6132 = vunpack.c.l.b16 %v6093
        %v6133 = vunpack.c.l.b16 %v6094
        %v6134 = vpack.c.b16 %v6119, %v6118
        %v6135 = vpack.c.b16 %v6121, %v6120
        %v6136 = vpack.c.b16 %v6123, %v6122
        %v6137 = vpack.c.b16 %v6125, %v6124
        %v6138 = vpack.c.b16 %v6127, %v6126
        %v6139 = vpack.c.b16 %v6129, %v6128
        %v6140 = vpack.c.b16 %v6131, %v6130
        %v6141 = vpack.c.b16 %v6133, %v6132
        %6150 = vmatprep.subr.bf16.mxu0 0
        %6151 = vmatpush1.bf16.msra.mxu0 %v6134
        %6152 = vmatprep.subr.bf16.mxu0 0
        %6153 = vmatpush1.bf16.msra.mxu0 %v6135
        %6154 = vmatprep.subr.bf16.mxu0 0
        %6155 = vmatpush1.bf16.msra.mxu0 %v6136
        %6156 = vmatprep.subr.bf16.mxu0 0
        %6157 = vmatpush1.bf16.msra.mxu0 %v6137
        %6158 = vmatprep.subr.bf16.mxu0 0
        %6159 = vmatpush1.bf16.msra.mxu0 %v6138
        %6160 = vmatprep.subr.bf16.mxu0 0
        %6161 = vmatpush1.bf16.msra.mxu0 %v6139
        %6162 = vmatprep.subr.bf16.mxu0 0
        %6163 = vmatpush1.bf16.msra.mxu0 %v6140
        %6164 = vmatprep.subr.bf16.mxu0 0
        %6165 = vmatpush1.bf16.msra.mxu0 %v6141
        %6166 = vmatprep.subr.bf16.mxu0 0
        %6167 = vmatpush1.bf16.msra.mxu0 0
        %6168 = vmatprep.subr.bf16.mxu0 0
        %6169 = vmatpush1.bf16.msra.mxu0 0
        %6170 = vmatprep.subr.bf16.mxu0 0
        %6171 = vmatpush1.bf16.msra.mxu0 0
        %6172 = vmatprep.subr.bf16.mxu0 0
        %6173 = vmatpush1.bf16.msra.mxu0 0
        %6174 = vmatprep.subr.bf16.mxu0 0
        %6175 = vmatpush1.bf16.msra.mxu0 0
        %6176 = vmatprep.subr.bf16.mxu0 0
        %6177 = vmatpush1.bf16.msra.mxu0 0
        %6178 = vmatprep.subr.bf16.mxu0 0
        %6179 = vmatpush1.bf16.msra.mxu0 0
        %6180 = vmatprep.subr.bf16.mxu0 0
        %6181 = vmatpush1.bf16.msra.mxu0 0
        %6182 = vmatprep.mubr.bf16.mxu0 0
        %6183 = vmatmul.mubr.bf16.gmra.mrb[0].mxu0 %v6076
        %v6184 = vpop.f32.mrb[0].mxu0
        %v6185 = vadd.f32 %v6100, %v6184
        %v6186 = vpop.f32.mrb[0].mxu0
        %v6187 = vpop.f32.mrb[0].mxu0
        %v6188 = vpop.f32.mrb[0].mxu0
        %6189 = vdwg.mxu0
        %v6190 = vmul.f32 %v6185, 0.25
        %v6191 = vld [vmem:[#allocation3] sm:$0xf]
        %v6192 = vld [vmem:[#allocation3 + $0x4] sm:$0xf]
        %v6193 = vld [vmem:[#allocation3 + $0x8] sm:$0xf]
        %v6194 = vld [vmem:[#allocation3 + $0xc] sm:$0xf]
        %v6195 = vld [vmem:[#allocation3 + $0x10] sm:$0xf]
        %v6196 = vld [vmem:[#allocation3 + $0x14] sm:$0xf]
        %v6197 = vld [vmem:[#allocation3 + $0x18] sm:$0xf]
        %v6198 = vld [vmem:[#allocation3 + $0x1c] sm:$0xf]
        %v6199 = vld [vmem:[#allocation3 + $0x20] sm:$0xf]
        %v6200 = vld [vmem:[#allocation3 + $0x24] sm:$0xf]
        %v6201 = vld [vmem:[#allocation3 + $0x28] sm:$0xf]
        %v6202 = vld [vmem:[#allocation3 + $0x2c] sm:$0xf]
        %v6203 = vld [vmem:[#allocation3 + $0x30] sm:$0xf]
        %v6204 = vld [vmem:[#allocation3 + $0x34] sm:$0xf]
        %v6205 = vld [vmem:[#allocation3 + $0x38] sm:$0xf]
        %v6206 = vld [vmem:[#allocation12] sm:$0xf]
        %v6207 = vld [vmem:[#allocation12 + $0x4] sm:$0xf]
        %v6208 = vld [vmem:[#allocation12 + $0x8] sm:$0xf]
        %v6209 = vld [vmem:[#allocation12 + $0xc] sm:$0xf]
        %v6210 = vld [vmem:[#allocation12 + $0x10] sm:$0xf]
        %v6211 = vld [vmem:[#allocation12 + $0x14] sm:$0xf]
        %v6212 = vld [vmem:[#allocation12 + $0x18] sm:$0xf]
        %v6213 = vld [vmem:[#allocation12 + $0x1c] sm:$0xf]
        %v6214 = vld [vmem:[#allocation12 + $0x20] sm:$0xf]
        %v6215 = vld [vmem:[#allocation12 + $0x24] sm:$0xf]
        %v6216 = vld [vmem:[#allocation12 + $0x28] sm:$0xf]
        %v6217 = vld [vmem:[#allocation12 + $0x2c] sm:$0xf]
        %v6218 = vld [vmem:[#allocation12 + $0x30] sm:$0xf]
        %v6219 = vld [vmem:[#allocation12 + $0x34] sm:$0xf]
        %v6220 = vld [vmem:[#allocation12 + $0x38] sm:$0xf]
        %v6221 = vld [vmem:[#allocation12 + $0x3c] sm:$0xf]
        %v6222 = vld [vmem:[#allocation13] sm:$0x1]
        %v6224 = vlaneseq
        %v6225 = vshrl.u32 %v6224, 7
        %v6226 = vsub.s32 0, %v6225
        %v6227 = vrot.slane %v6222, %v6226
        %v6244 = vunpack.c.l.b16 %v6191
        %v6245 = vunpack.c.l.b16 %v6192
        %v6246 = vunpack.c.l.b16 %v6193
        %v6247 = vunpack.c.l.b16 %v6194
        %v6248 = vunpack.c.l.b16 %v6195
        %v6249 = vunpack.c.l.b16 %v6196
        %v6250 = vunpack.c.l.b16 %v6197
        %v6251 = vunpack.c.l.b16 %v6198
        %v6252 = vunpack.c.l.b16 %v6199
        %v6253 = vunpack.c.l.b16 %v6200
        %v6254 = vunpack.c.l.b16 %v6201
        %v6255 = vunpack.c.l.b16 %v6202
        %v6256 = vunpack.c.l.b16 %v6203
        %v6257 = vunpack.c.l.b16 %v6204
        %v6258 = vunpack.c.l.b16 %v6205
        %v6259 = vpack.c.b16 %v6245, %v6244
        %v6260 = vpack.c.b16 %v6247, %v6246
        %v6261 = vpack.c.b16 %v6249, %v6248
        %v6262 = vpack.c.b16 %v6251, %v6250
        %v6263 = vpack.c.b16 %v6253, %v6252
        %v6264 = vpack.c.b16 %v6255, %v6254
        %v6265 = vpack.c.b16 %v6257, %v6256
        %v6266 = vpack.c.b16 %v6258, %v6258
        %v6291 = vunpack.c.l.b16 %v6206
        %v6292 = vunpack.c.l.b16 %v6207
        %v6293 = vunpack.c.l.b16 %v6208
        %v6294 = vunpack.c.l.b16 %v6209
        %v6295 = vunpack.c.l.b16 %v6210
        %v6296 = vunpack.c.l.b16 %v6211
        %v6297 = vunpack.c.l.b16 %v6212
        %v6298 = vunpack.c.l.b16 %v6213
        %v6299 = vunpack.c.l.b16 %v6214
        %v6300 = vunpack.c.l.b16 %v6215
        %v6301 = vunpack.c.l.b16 %v6216
        %v6302 = vunpack.c.l.b16 %v6217
        %v6303 = vunpack.c.l.b16 %v6218
        %v6304 = vunpack.c.l.b16 %v6219
        %v6305 = vunpack.c.l.b16 %v6220
        %v6306 = vunpack.c.l.b16 %v6221
        %v6307 = vpack.c.b16 %v6292, %v6291
        %v6308 = vpack.c.b16 %v6294, %v6293
        %v6309 = vpack.c.b16 %v6296, %v6295
        %v6310 = vpack.c.b16 %v6298, %v6297
        %v6311 = vpack.c.b16 %v6300, %v6299
        %v6312 = vpack.c.b16 %v6302, %v6301
        %v6313 = vpack.c.b16 %v6304, %v6303
        %v6314 = vpack.c.b16 %v6306, %v6305
        %6323 = vmatprep.subr.bf16.mxu0 0
        %6324 = vmatpush1.bf16.msra.mxu0 %v6307
        %6325 = vmatprep.subr.bf16.mxu0 0
        %6326 = vmatpush1.bf16.msra.mxu0 %v6308
        %6327 = vmatprep.subr.bf16.mxu0 0
        %6328 = vmatpush1.bf16.msra.mxu0 %v6309
        %6329 = vmatprep.subr.bf16.mxu0 0
        %6330 = vmatpush1.bf16.msra.mxu0 %v6310
        %6331 = vmatprep.subr.bf16.mxu0 0
        %6332 = vmatpush1.bf16.msra.mxu0 %v6311
        %6333 = vmatprep.subr.bf16.mxu0 0
        %6334 = vmatpush1.bf16.msra.mxu0 %v6312
        %6335 = vmatprep.subr.bf16.mxu0 0
        %6336 = vmatpush1.bf16.msra.mxu0 %v6313
        %6337 = vmatprep.subr.bf16.mxu0 0
        %6338 = vmatpush1.bf16.msra.mxu0 %v6314
        %6339 = vmatprep.subr.bf16.mxu0 0
        %6340 = vmatpush1.bf16.msra.mxu0 0
        %6341 = vmatprep.subr.bf16.mxu0 0
        %6342 = vmatpush1.bf16.msra.mxu0 0
        %6343 = vmatprep.subr.bf16.mxu0 0
        %6344 = vmatpush1.bf16.msra.mxu0 0
        %6345 = vmatprep.subr.bf16.mxu0 0
        %6346 = vmatpush1.bf16.msra.mxu0 0
        %6347 = vmatprep.subr.bf16.mxu0 0
        %6348 = vmatpush1.bf16.msra.mxu0 0
        %6349 = vmatprep.subr.bf16.mxu0 0
        %6350 = vmatpush1.bf16.msra.mxu0 0
        %6351 = vmatprep.subr.bf16.mxu0 0
        %6352 = vmatpush1.bf16.msra.mxu0 0
        %6353 = vmatprep.subr.bf16.mxu0 0
        %6354 = vmatpush1.bf16.msra.mxu0 0
        %6355 = vmatprep.mubr.bf16.mxu0 0
        %6356 = vmatmul.mubr.bf16.gmra.mrb[0].mxu0 %v6259
        %v6357 = vpop.f32.mrb[0].mxu0
        %v6358 = vadd.f32 %v6227, %v6357
        %v6359 = vpop.f32.mrb[0].mxu0
        %v6360 = vpop.f32.mrb[0].mxu0
        %v6361 = vadd.f32 %v6227, %v6360
        %v6362 = vpop.f32.mrb[0].mxu0
        %6363 = vmatprep.mubr.bf16.mxu0 0
        %6364 = vmatmul.mubr.bf16.gmra.mrb[0].mxu0 %v6260
        %v6365 = vpop.f32.mrb[0].mxu0
        %v6366 = vadd.f32 %v6227, %v6365
        %v6367 = vpop.f32.mrb[0].mxu0
        %v6368 = vpop.f32.mrb[0].mxu0
        %v6369 = vadd.f32 %v6227, %v6368
        %v6370 = vpop.f32.mrb[0].mxu0
        %6371 = vmatprep.mubr.bf16.mxu0 0
        %6372 = vmatmul.mubr.bf16.gmra.mrb[0].mxu0 %v6261
        %v6373 = vpop.f32.mrb[0].mxu0
        %v6374 = vadd.f32 %v6227, %v6373
        %v6375 = vpop.f32.mrb[0].mxu0
        %v6376 = vpop.f32.mrb[0].mxu0
        %v6377 = vadd.f32 %v6227, %v6376
        %v6378 = vpop.f32.mrb[0].mxu0
        %6379 = vmatprep.mubr.bf16.mxu0 0
        %6380 = vmatmul.mubr.bf16.gmra.mrb[0].mxu0 %v6262
        %v6381 = vpop.f32.mrb[0].mxu0
        %v6382 = vadd.f32 %v6227, %v6381
        %v6383 = vpop.f32.mrb[0].mxu0
        %v6384 = vpop.f32.mrb[0].mxu0
        %v6385 = vadd.f32 %v6227, %v6384
        %v6386 = vpop.f32.mrb[0].mxu0
        %6387 = vmatprep.mubr.bf16.mxu0 0
        %6388 = vmatmul.mubr.bf16.gmra.mrb[0].mxu0 %v6263
        %v6389 = vpop.f32.mrb[0].mxu0
        %v6390 = vadd.f32 %v6227, %v6389
        %v6391 = vpop.f32.mrb[0].mxu0
        %v6392 = vpop.f32.mrb[0].mxu0
        %v6393 = vadd.f32 %v6227, %v6392
        %v6394 = vpop.f32.mrb[0].mxu0
        %6395 = vmatprep.mubr.bf16.mxu0 0
        %6396 = vmatmul.mubr.bf16.gmra.mrb[0].mxu0 %v6264
        %v6397 = vpop.f32.mrb[0].mxu0
        %v6398 = vadd.f32 %v6227, %v6397
        %v6399 = vpop.f32.mrb[0].mxu0
        %v6400 = vpop.f32.mrb[0].mxu0
        %v6401 = vadd.f32 %v6227, %v6400
        %v6402 = vpop.f32.mrb[0].mxu0
        %6403 = vmatprep.mubr.bf16.mxu0 0
        %6404 = vmatmul.mubr.bf16.gmra.mrb[0].mxu0 %v6265
        %v6405 = vpop.f32.mrb[0].mxu0
        %v6406 = vadd.f32 %v6227, %v6405
        %v6407 = vpop.f32.mrb[0].mxu0
        %v6408 = vpop.f32.mrb[0].mxu0
        %v6409 = vadd.f32 %v6227, %v6408
        %v6410 = vpop.f32.mrb[0].mxu0
        %6411 = vmatprep.mubr.bf16.mxu0 0
        %6412 = vmatmul.mubr.bf16.gmra.mrb[0].mxu0 %v6266
        %v6413 = vpop.f32.mrb[0].mxu0
        %v6414 = vadd.f32 %v6227, %v6413
        %v6415 = vpop.f32.mrb[0].mxu0
        %v6416 = vpop.f32.mrb[0].mxu0
        %v6417 = vpop.f32.mrb[0].mxu0
        %6418 = vdwg.mxu0
        %v6419 = vmul.f32 %v6358, %v6190
        %v6420 = vmul.f32 %v6361, %v6190
        %v6421 = vmul.f32 %v6366, %v6190
        %v6422 = vmul.f32 %v6369, %v6190
        %v6423 = vmul.f32 %v6374, %v6190
        %v6424 = vmul.f32 %v6377, %v6190
        %v6425 = vmul.f32 %v6382, %v6190
        %v6426 = vmul.f32 %v6385, %v6190
        %v6427 = vmul.f32 %v6390, %v6190
        %v6428 = vmul.f32 %v6393, %v6190
        %v6429 = vmul.f32 %v6398, %v6190
        %v6430 = vmul.f32 %v6401, %v6190
        %v6431 = vmul.f32 %v6406, %v6190
        %v6432 = vmul.f32 %v6409, %v6190
        %v6433 = vmul.f32 %v6414, %v6190
        %v6434 = vld [vmem:[%s17] sm:$0xff]
        %v6435 = vld [vmem:[%s17 + $0x8] sm:$0xff]
        %v6436 = vld [vmem:[%s17 + $0x10] sm:$0xff]
        %v6437 = vld [vmem:[%s17 + $0x18] sm:$0xff]
        %v6438 = vld [vmem:[%s17 + $0x20] sm:$0xff]
        %v6439 = vld [vmem:[%s17 + $0x28] sm:$0xff]
        %v6440 = vld [vmem:[%s17 + $0x30] sm:$0xff]
        %v6441 = vld [vmem:[%s17 + $0x38] sm:$0xff]
        %v6442 = vld [vmem:[%s17 + $0x40] sm:$0xff]
        %v6443 = vld [vmem:[%s17 + $0x48] sm:$0xff]
        %v6444 = vld [vmem:[%s17 + $0x50] sm:$0xff]
        %v6445 = vld [vmem:[%s17 + $0x58] sm:$0xff]
        %v6446 = vld [vmem:[%s17 + $0x60] sm:$0xff]
        %v6447 = vld [vmem:[%s17 + $0x68] sm:$0xff]
        %v6448 = vld [vmem:[%s17 + $0x70] sm:$0xff]
        %v6449 = vld [vmem:[%s17 + $0x78] sm:$0xff]
        %6450 = vmatprep.subr.mxu0 0.0
        %6451 = vmatpush1.msra.mxu0 %v6434
        %6452 = vmatprep.subr.mxu0 0.0
        %6453 = vmatpush1.msra.mxu0 %v6435
        %6454 = vmatprep.subr.mxu0 0.0
        %6455 = vmatpush1.msra.mxu0 %v6436
        %6456 = vmatprep.subr.mxu0 0.0
        %6457 = vmatpush1.msra.mxu0 %v6437
        %6458 = vmatprep.subr.mxu0 0.0
        %6459 = vmatpush1.msra.mxu0 %v6438
        %6460 = vmatprep.subr.mxu0 0.0
        %6461 = vmatpush1.msra.mxu0 %v6439
        %6462 = vmatprep.subr.mxu0 0.0
        %6463 = vmatpush1.msra.mxu0 %v6440
        %6464 = vmatprep.subr.mxu0 0.0
        %6465 = vmatpush1.msra.mxu0 %v6441
        %6466 = vmatprep.subr.mxu0 0.0
        %6467 = vmatpush1.msra.mxu0 %v6442
        %6468 = vmatprep.subr.mxu0 0.0
        %6469 = vmatpush1.msra.mxu0 %v6443
        %6470 = vmatprep.subr.mxu0 0.0
        %6471 = vmatpush1.msra.mxu0 %v6444
        %6472 = vmatprep.subr.mxu0 0.0
        %6473 = vmatpush1.msra.mxu0 %v6445
        %6474 = vmatprep.subr.mxu0 0.0
        %6475 = vmatpush1.msra.mxu0 %v6446
        %6476 = vmatprep.subr.mxu0 0.0
        %6477 = vmatpush1.msra.mxu0 %v6447
        %6478 = vmatprep.subr.mxu0 0.0
        %6479 = vmatpush1.msra.mxu0 %v6448
        %6480 = vmatprep.subr.mxu0 0.0
        %6481 = vmatpush1.msra.mxu0 %v6449
        %6482 = vmatprep.subr.mxu0 0.0
        %6483 = vmatpush1.msra.mxu0 0.0
        %6484 = vmatprep.subr.mxu0 0.0
        %6485 = vmatpush1.msra.mxu0 0.0
        %6486 = vmatprep.subr.mxu0 0.0
        %6487 = vmatpush1.msra.mxu0 0.0
        %6488 = vmatprep.subr.mxu0 0.0
        %6489 = vmatpush1.msra.mxu0 0.0
        %6490 = vmatprep.subr.mxu0 0.0
        %6491 = vmatpush1.msra.mxu0 0.0
        %6492 = vmatprep.subr.mxu0 0.0
        %6493 = vmatpush1.msra.mxu0 0.0
        %6494 = vmatprep.subr.mxu0 0.0
        %6495 = vmatpush1.msra.mxu0 0.0
        %6496 = vmatprep.subr.mxu0 0.0
        %6497 = vmatpush1.msra.mxu0 0.0
        %6498 = vmatprep.subr.mxu0 0.0
        %6499 = vmatpush1.msra.mxu0 0.0
        %6500 = vmatprep.subr.mxu0 0.0
        %6501 = vmatpush1.msra.mxu0 0.0
        %6502 = vmatprep.subr.mxu0 0.0
        %6503 = vmatpush1.msra.mxu0 0.0
        %6504 = vmatprep.subr.mxu0 0.0
        %6505 = vmatpush1.msra.mxu0 0.0
        %6506 = vmatprep.subr.mxu0 0.0
        %6507 = vmatpush1.msra.mxu0 0.0
        %6508 = vmatprep.subr.mxu0 0.0
        %6509 = vmatpush1.msra.mxu0 0.0
        %6510 = vmatprep.subr.mxu0 0.0
        %6511 = vmatpush1.msra.mxu0 0.0
        %6512 = vmatprep.subr.mxu0 0.0
        %6513 = vmatpush1.msra.mxu0 0.0
        %6514 = vmatprep.mubr.f32.mxu0 0.0
        %6515 = vmatmul.mubr.f32.gmra.mrb[0].mxu0 %v6419
        %v6516 = vpop.f32.mrb[0].mxu0
        %v6517 = vadd.f32 0.0, %v6516
        %v6518 = vpop.f32.mrb[0].mxu0
        %6519 = vmatprep.mubr.f32.mxu0 0.0
        %6520 = vmatmul.mubr.f32.gmra.mrb[0].mxu0 %v6420
        %v6521 = vpop.f32.mrb[0].mxu0
        %v6522 = vadd.f32 0.0, %v6521
        %v6523 = vpop.f32.mrb[0].mxu0
        %6524 = vmatprep.mubr.f32.mxu0 0.0
        %6525 = vmatmul.mubr.f32.gmra.mrb[0].mxu0 %v6421
        %v6526 = vpop.f32.mrb[0].mxu0
        %v6527 = vadd.f32 0.0, %v6526
        %v6528 = vpop.f32.mrb[0].mxu0
        %6529 = vmatprep.mubr.f32.mxu0 0.0
        %6530 = vmatmul.mubr.f32.gmra.mrb[0].mxu0 %v6422
        %v6531 = vpop.f32.mrb[0].mxu0
        %v6532 = vadd.f32 0.0, %v6531
        %v6533 = vpop.f32.mrb[0].mxu0
        %6534 = vmatprep.mubr.f32.mxu0 0.0
        %6535 = vmatmul.mubr.f32.gmra.mrb[0].mxu0 %v6423
        %v6536 = vpop.f32.mrb[0].mxu0
        %v6537 = vadd.f32 0.0, %v6536
        %v6538 = vpop.f32.mrb[0].mxu0
        %6539 = vmatprep.mubr.f32.mxu0 0.0
        %6540 = vmatmul.mubr.f32.gmra.mrb[0].mxu0 %v6424
        %v6541 = vpop.f32.mrb[0].mxu0
        %v6542 = vadd.f32 0.0, %v6541
        %v6543 = vpop.f32.mrb[0].mxu0
        %6544 = vmatprep.mubr.f32.mxu0 0.0
        %6545 = vmatmul.mubr.f32.gmra.mrb[0].mxu0 %v6425
        %v6546 = vpop.f32.mrb[0].mxu0
        %v6547 = vadd.f32 0.0, %v6546
        %v6548 = vpop.f32.mrb[0].mxu0
        %6549 = vmatprep.mubr.f32.mxu0 0.0
        %6550 = vmatmul.mubr.f32.gmra.mrb[0].mxu0 %v6426
        %v6551 = vpop.f32.mrb[0].mxu0
        %v6552 = vadd.f32 0.0, %v6551
        %v6553 = vpop.f32.mrb[0].mxu0
        %6554 = vmatprep.mubr.f32.mxu0 0.0
        %6555 = vmatmul.mubr.f32.gmra.mrb[0].mxu0 %v6427
        %v6556 = vpop.f32.mrb[0].mxu0
        %v6557 = vadd.f32 0.0, %v6556
        %v6558 = vpop.f32.mrb[0].mxu0
        %6559 = vmatprep.mubr.f32.mxu0 0.0
        %6560 = vmatmul.mubr.f32.gmra.mrb[0].mxu0 %v6428
        %v6561 = vpop.f32.mrb[0].mxu0
        %v6562 = vadd.f32 0.0, %v6561
        %v6563 = vpop.f32.mrb[0].mxu0
        %6564 = vmatprep.mubr.f32.mxu0 0.0
        %6565 = vmatmul.mubr.f32.gmra.mrb[0].mxu0 %v6429
        %v6566 = vpop.f32.mrb[0].mxu0
        %v6567 = vadd.f32 0.0, %v6566
        %v6568 = vpop.f32.mrb[0].mxu0
        %6569 = vmatprep.mubr.f32.mxu0 0.0
        %6570 = vmatmul.mubr.f32.gmra.mrb[0].mxu0 %v6430
        %v6571 = vpop.f32.mrb[0].mxu0
        %v6572 = vadd.f32 0.0, %v6571
        %v6573 = vpop.f32.mrb[0].mxu0
        %6574 = vmatprep.mubr.f32.mxu0 0.0
        %6575 = vmatmul.mubr.f32.gmra.mrb[0].mxu0 %v6431
        %v6576 = vpop.f32.mrb[0].mxu0
        %v6577 = vadd.f32 0.0, %v6576
        %v6578 = vpop.f32.mrb[0].mxu0
        %6579 = vmatprep.mubr.f32.mxu0 0.0
        %6580 = vmatmul.mubr.f32.gmra.mrb[0].mxu0 %v6432
        %v6581 = vpop.f32.mrb[0].mxu0
        %v6582 = vadd.f32 0.0, %v6581
        %v6583 = vpop.f32.mrb[0].mxu0
        %6584 = vmatprep.mubr.f32.mxu0 0.0
        %6585 = vmatmul.mubr.f32.gmra.mrb[0].mxu0 %v6433
        %v6586 = vpop.f32.mrb[0].mxu0
        %v6587 = vadd.f32 0.0, %v6586
        %v6588 = vpop.f32.mrb[0].mxu0
        %6589 = vdwg.mxu0
        %vm6590 = vcmask 64512
        %v6591 = vsel %vm6590, %v6517, -inf
        %v6592 = vsel %vm6590, %v6522, -inf
        %v6593 = vsel %vm6590, %v6527, -inf
        %v6594 = vsel %vm6590, %v6532, -inf
        %v6595 = vsel %vm6590, %v6537, -inf
        %v6596 = vmax.f32 %v6591, %v6595
        %v6597 = vsel %vm6590, %v6542, -inf
        %v6598 = vmax.f32 %v6592, %v6597
        %v6599 = vsel %vm6590, %v6547, -inf
        %v6600 = vmax.f32 %v6593, %v6599
        %v6601 = vsel %vm6590, %v6552, -inf
        %v6602 = vmax.f32 %v6594, %v6601
        %v6603 = vsel %vm6590, %v6557, -inf
        %v6604 = vmax.f32 %v6596, %v6603
        %v6605 = vsel %vm6590, %v6562, -inf
        %v6606 = vmax.f32 %v6598, %v6605
        %v6607 = vsel %vm6590, %v6567, -inf
        %v6608 = vmax.f32 %v6600, %v6607
        %v6609 = vsel %vm6590, %v6572, -inf
        %v6610 = vmax.f32 %v6602, %v6609
        %v6611 = vsel %vm6590, %v6577, -inf
        %v6612 = vmax.f32 %v6604, %v6611
        %v6613 = vsel %vm6590, %v6582, -inf
        %v6614 = vmax.f32 %v6606, %v6613
        %v6615 = vsel %vm6590, %v6587, -inf
        %v6616 = vmax.f32 %v6608, %v6615
        %v6617 = vmax.f32 %v6612, %v6614
        %v6618 = vmax.f32 %v6616, %v6610
        %v6619 = vmax.f32 %v6617, %v6618
        %v6620 = vsub.f32 %v6517, %v6619
        %v6621 = vsub.f32 %v6522, %v6619
        %v6622 = vsub.f32 %v6527, %v6619
        %v6623 = vsub.f32 %v6532, %v6619
        %v6624 = vsub.f32 %v6537, %v6619
        %v6625 = vsub.f32 %v6542, %v6619
        %v6626 = vsub.f32 %v6547, %v6619
        %v6627 = vsub.f32 %v6552, %v6619
        %v6628 = vsub.f32 %v6557, %v6619
        %v6629 = vsub.f32 %v6562, %v6619
        %v6630 = vsub.f32 %v6567, %v6619
        %v6631 = vsub.f32 %v6572, %v6619
        %v6632 = vsub.f32 %v6577, %v6619
        %v6633 = vsub.f32 %v6582, %v6619
        %v6634 = vsub.f32 %v6587, %v6619
        %v6635 = vmul.f32 %v6620, 1.442695
        %v6636 = vpow.pop %v6635
        %v6637 = vmul.f32 %v6621, 1.442695
        %v6638 = vpow.pop %v6637
        %v6639 = vmul.f32 %v6622, 1.442695
        %v6640 = vpow.pop %v6639
        %v6641 = vmul.f32 %v6623, 1.442695
        %v6642 = vpow.pop %v6641
        %v6643 = vmul.f32 %v6624, 1.442695
        %v6644 = vpow.pop %v6643
        %v6645 = vmul.f32 %v6625, 1.442695
        %v6646 = vpow.pop %v6645
        %v6647 = vmul.f32 %v6626, 1.442695
        %v6648 = vpow.pop %v6647
        %v6649 = vmul.f32 %v6627, 1.442695
        %v6650 = vpow.pop %v6649
        %v6651 = vmul.f32 %v6628, 1.442695
        %v6652 = vpow.pop %v6651
        %v6653 = vmul.f32 %v6629, 1.442695
        %v6654 = vpow.pop %v6653
        %v6655 = vmul.f32 %v6630, 1.442695
        %v6656 = vpow.pop %v6655
        %v6657 = vmul.f32 %v6631, 1.442695
        %v6658 = vpow.pop %v6657
        %v6659 = vmul.f32 %v6632, 1.442695
        %v6660 = vpow.pop %v6659
        %v6661 = vmul.f32 %v6633, 1.442695
        %v6662 = vpow.pop %v6661
        %v6663 = vmul.f32 %v6634, 1.442695
        %v6664 = vpow.pop %v6663
        %v6665 = vsel %vm6590, %v6636, 0.0
        %v6666 = vsel %vm6590, %v6638, 0.0
        %v6667 = vadd.f32 %v6665, %v6666
        %v6668 = vsel %vm6590, %v6640, 0.0
        %v6669 = vadd.f32 %v6667, %v6668
        %v6670 = vsel %vm6590, %v6642, 0.0
        %v6671 = vadd.f32 %v6669, %v6670
        %v6672 = vsel %vm6590, %v6644, 0.0
        %v6673 = vadd.f32 %v6671, %v6672
        %v6674 = vsel %vm6590, %v6646, 0.0
        %v6675 = vadd.f32 %v6673, %v6674
        %v6676 = vsel %vm6590, %v6648, 0.0
        %v6677 = vadd.f32 %v6675, %v6676
        %v6678 = vsel %vm6590, %v6650, 0.0
        %v6679 = vadd.f32 %v6677, %v6678
        %v6680 = vsel %vm6590, %v6652, 0.0
        %v6681 = vadd.f32 %v6679, %v6680
        %v6682 = vsel %vm6590, %v6654, 0.0
        %v6683 = vadd.f32 %v6681, %v6682
        %v6684 = vsel %vm6590, %v6656, 0.0
        %v6685 = vadd.f32 %v6683, %v6684
        %v6686 = vsel %vm6590, %v6658, 0.0
        %v6687 = vadd.f32 %v6685, %v6686
        %v6688 = vsel %vm6590, %v6660, 0.0
        %v6689 = vadd.f32 %v6687, %v6688
        %v6690 = vsel %vm6590, %v6662, 0.0
        %v6691 = vadd.f32 %v6689, %v6690
        %v6692 = vsel %vm6590, %v6664, 0.0
        %v6693 = vadd.f32 %v6691, %v6692
        %v6694 = vrcp.pop %v6693
        %v6695 = vld [vmem:[%s10] sm:$0xf]
        %v6696 = vld [vmem:[%s10 + $0x4] sm:$0xf]
        %v6697 = vld [vmem:[%s10 + $0x8] sm:$0xf]
        %v6698 = vld [vmem:[%s10 + $0xc] sm:$0xf]
        %v6699 = vld [vmem:[%s10 + $0x10] sm:$0xf]
        %v6700 = vld [vmem:[%s10 + $0x14] sm:$0xf]
        %v6701 = vld [vmem:[%s10 + $0x18] sm:$0xf]
        %v6702 = vld [vmem:[%s10 + $0x1c] sm:$0xf]
        %v6703 = vld [vmem:[%s10 + $0x20] sm:$0xf]
        %v6704 = vld [vmem:[%s10 + $0x24] sm:$0xf]
        %v6705 = vld [vmem:[%s10 + $0x28] sm:$0xf]
        %v6706 = vld [vmem:[%s10 + $0x2c] sm:$0xf]
        %v6707 = vld [vmem:[%s10 + $0x30] sm:$0xf]
        %v6708 = vld [vmem:[%s10 + $0x34] sm:$0xf]
        %v6709 = vld [vmem:[%s10 + $0x38] sm:$0xf]
        %v6710 = vld [vmem:[%s10 + $0x3c] sm:$0xf]
        %v6711 = vld [vmem:[#allocation15] sm:$0x1]
        %v6713 = vlaneseq
        %v6714 = vshrl.u32 %v6713, 7
        %v6715 = vsub.s32 0, %v6714
        %v6716 = vrot.slane %v6711, %v6715
        %v6734 = vunpack.c.l.b16 %v6695
        %v6735 = vunpack.c.l.b16 %v6696
        %v6736 = vunpack.c.l.b16 %v6697
        %v6737 = vunpack.c.l.b16 %v6698
        %v6738 = vunpack.c.l.b16 %v6699
        %v6739 = vunpack.c.l.b16 %v6700
        %v6740 = vunpack.c.l.b16 %v6701
        %v6741 = vunpack.c.l.b16 %v6702
        %v6742 = vunpack.c.l.b16 %v6703
        %v6743 = vunpack.c.l.b16 %v6704
        %v6744 = vunpack.c.l.b16 %v6705
        %v6745 = vunpack.c.l.b16 %v6706
        %v6746 = vunpack.c.l.b16 %v6707
        %v6747 = vunpack.c.l.b16 %v6708
        %v6748 = vunpack.c.l.b16 %v6709
        %v6749 = vunpack.c.l.b16 %v6710
        %v6750 = vpack.c.b16 %v6735, %v6734
        %v6751 = vpack.c.b16 %v6737, %v6736
        %v6752 = vpack.c.b16 %v6739, %v6738
        %v6753 = vpack.c.b16 %v6741, %v6740
        %v6754 = vpack.c.b16 %v6743, %v6742
        %v6755 = vpack.c.b16 %v6745, %v6744
        %v6756 = vpack.c.b16 %v6747, %v6746
        %v6757 = vpack.c.b16 %v6749, %v6748
        %6766 = vmatprep.subr.bf16.mxu0 0
        %6767 = vmatpush1.bf16.msra.mxu0 %v6750
        %6768 = vmatprep.subr.bf16.mxu0 0
        %6769 = vmatpush1.bf16.msra.mxu0 %v6751
        %6770 = vmatprep.subr.bf16.mxu0 0
        %6771 = vmatpush1.bf16.msra.mxu0 %v6752
        %6772 = vmatprep.subr.bf16.mxu0 0
        %6773 = vmatpush1.bf16.msra.mxu0 %v6753
        %6774 = vmatprep.subr.bf16.mxu0 0
        %6775 = vmatpush1.bf16.msra.mxu0 %v6754
        %6776 = vmatprep.subr.bf16.mxu0 0
        %6777 = vmatpush1.bf16.msra.mxu0 %v6755
        %6778 = vmatprep.subr.bf16.mxu0 0
        %6779 = vmatpush1.bf16.msra.mxu0 %v6756
        %6780 = vmatprep.subr.bf16.mxu0 0
        %6781 = vmatpush1.bf16.msra.mxu0 %v6757
        %6782 = vmatprep.subr.bf16.mxu0 0
        %6783 = vmatpush1.bf16.msra.mxu0 0
        %6784 = vmatprep.subr.bf16.mxu0 0
        %6785 = vmatpush1.bf16.msra.mxu0 0
        %6786 = vmatprep.subr.bf16.mxu0 0
        %6787 = vmatpush1.bf16.msra.mxu0 0
        %6788 = vmatprep.subr.bf16.mxu0 0
        %6789 = vmatpush1.bf16.msra.mxu0 0
        %6790 = vmatprep.subr.bf16.mxu0 0
        %6791 = vmatpush1.bf16.msra.mxu0 0
        %6792 = vmatprep.subr.bf16.mxu0 0
        %6793 = vmatpush1.bf16.msra.mxu0 0
        %6794 = vmatprep.subr.bf16.mxu0 0
        %6795 = vmatpush1.bf16.msra.mxu0 0
        %6796 = vmatprep.subr.bf16.mxu0 0
        %6797 = vmatpush1.bf16.msra.mxu0 0
        %6798 = vmatprep.mubr.bf16.mxu0 0
        %6799 = vmatmul.mubr.bf16.gmra.mrb[0].mxu0 %v6259
        %v6800 = vpop.f32.mrb[0].mxu0
        %v6801 = vadd.f32 %v6716, %v6800
        %v6802 = vpop.f32.mrb[0].mxu0
        %v6803 = vpop.f32.mrb[0].mxu0
        %v6804 = vadd.f32 %v6716, %v6803
        %v6805 = vpop.f32.mrb[0].mxu0
        %6806 = vmatprep.mubr.bf16.mxu0 0
        %6807 = vmatmul.mubr.bf16.gmra.mrb[0].mxu0 %v6260
        %v6808 = vpop.f32.mrb[0].mxu0
        %v6809 = vadd.f32 %v6716, %v6808
        %v6810 = vpop.f32.mrb[0].mxu0
        %v6811 = vpop.f32.mrb[0].mxu0
        %v6812 = vadd.f32 %v6716, %v6811
        %v6813 = vpop.f32.mrb[0].mxu0
        %6814 = vmatprep.mubr.bf16.mxu0 0
        %6815 = vmatmul.mubr.bf16.gmra.mrb[0].mxu0 %v6261
        %v6816 = vpop.f32.mrb[0].mxu0
        %v6817 = vadd.f32 %v6716, %v6816
        %v6818 = vpop.f32.mrb[0].mxu0
        %v6819 = vpop.f32.mrb[0].mxu0
        %v6820 = vadd.f32 %v6716, %v6819
        %v6821 = vpop.f32.mrb[0].mxu0
        %6822 = vmatprep.mubr.bf16.mxu0 0
        %6823 = vmatmul.mubr.bf16.gmra.mrb[0].mxu0 %v6262
        %v6824 = vpop.f32.mrb[0].mxu0
        %v6825 = vadd.f32 %v6716, %v6824
        %v6826 = vpop.f32.mrb[0].mxu0
        %v6827 = vpop.f32.mrb[0].mxu0
        %v6828 = vadd.f32 %v6716, %v6827
        %v6829 = vpop.f32.mrb[0].mxu0
        %6830 = vmatprep.mubr.bf16.mxu0 0
        %6831 = vmatmul.mubr.bf16.gmra.mrb[0].mxu0 %v6263
        %v6832 = vpop.f32.mrb[0].mxu0
        %v6833 = vadd.f32 %v6716, %v6832
        %v6834 = vpop.f32.mrb[0].mxu0
        %v6835 = vpop.f32.mrb[0].mxu0
        %v6836 = vadd.f32 %v6716, %v6835
        %v6837 = vpop.f32.mrb[0].mxu0
        %6838 = vmatprep.mubr.bf16.mxu0 0
        %6839 = vmatmul.mubr.bf16.gmra.mrb[0].mxu0 %v6264
        %v6840 = vpop.f32.mrb[0].mxu0
        %v6841 = vadd.f32 %v6716, %v6840
        %v6842 = vpop.f32.mrb[0].mxu0
        %v6843 = vpop.f32.mrb[0].mxu0
        %v6844 = vadd.f32 %v6716, %v6843
        %v6845 = vpop.f32.mrb[0].mxu0
        %6846 = vmatprep.mubr.bf16.mxu0 0
        %6847 = vmatmul.mubr.bf16.gmra.mrb[0].mxu0 %v6265
        %v6848 = vpop.f32.mrb[0].mxu0
        %v6849 = vadd.f32 %v6716, %v6848
        %v6850 = vpop.f32.mrb[0].mxu0
        %v6851 = vpop.f32.mrb[0].mxu0
        %v6852 = vadd.f32 %v6716, %v6851
        %v6853 = vpop.f32.mrb[0].mxu0
        %6854 = vmatprep.mubr.bf16.mxu0 0
        %6855 = vmatmul.mubr.bf16.gmra.mrb[0].mxu0 %v6266
        %v6856 = vpop.f32.mrb[0].mxu0
        %v6857 = vadd.f32 %v6716, %v6856
        %v6858 = vpop.f32.mrb[0].mxu0
        %v6859 = vpop.f32.mrb[0].mxu0
        %v6860 = vpop.f32.mrb[0].mxu0
        %6861 = vdwg.mxu0
        %v6862 = vld [vmem:[%s18] sm:$0xff]
        %v6864 = vsel %vm6590, %v6636, 0
        %v6867 = vsel %vm6590, %v6638, 0
        %v6870 = vsel %vm6590, %v6640, 0
        %v6873 = vsel %vm6590, %v6642, 0
        %v6876 = vsel %vm6590, %v6644, 0
        %v6879 = vsel %vm6590, %v6646, 0
        %v6882 = vsel %vm6590, %v6648, 0
        %v6885 = vsel %vm6590, %v6650, 0
        %v6888 = vsel %vm6590, %v6652, 0
        %v6891 = vsel %vm6590, %v6654, 0
        %v6894 = vsel %vm6590, %v6656, 0
        %v6897 = vsel %vm6590, %v6658, 0
        %v6900 = vsel %vm6590, %v6660, 0
        %v6903 = vsel %vm6590, %v6662, 0
        %v6906 = vsel %vm6590, %v6664, 0
        %6908 = vmatprep.subr.mxu0 0.0
        %6909 = vmatpush1.msra.mxu0 %v6862
        %6910 = vmatprep.subr.mxu0 0.0
        %6911 = vmatpush1.msra.mxu0 0.0
        %6912 = vmatprep.subr.mxu0 0.0
        %6913 = vmatpush1.msra.mxu0 0.0
        %6914 = vmatprep.subr.mxu0 0.0
        %6915 = vmatpush1.msra.mxu0 0.0
        %6916 = vmatprep.subr.mxu0 0.0
        %6917 = vmatpush1.msra.mxu0 0.0
        %6918 = vmatprep.subr.mxu0 0.0
        %6919 = vmatpush1.msra.mxu0 0.0
        %6920 = vmatprep.subr.mxu0 0.0
        %6921 = vmatpush1.msra.mxu0 0.0
        %6922 = vmatprep.subr.mxu0 0.0
        %6923 = vmatpush1.msra.mxu0 0.0
        %6924 = vmatprep.subr.mxu0 0.0
        %6925 = vmatpush1.msra.mxu0 0.0
        %6926 = vmatprep.subr.mxu0 0.0
        %6927 = vmatpush1.msra.mxu0 0.0
        %6928 = vmatprep.subr.mxu0 0.0
        %6929 = vmatpush1.msra.mxu0 0.0
        %6930 = vmatprep.subr.mxu0 0.0
        %6931 = vmatpush1.msra.mxu0 0.0
        %6932 = vmatprep.subr.mxu0 0.0
        %6933 = vmatpush1.msra.mxu0 0.0
        %6934 = vmatprep.subr.mxu0 0.0
        %6935 = vmatpush1.msra.mxu0 0.0
        %6936 = vmatprep.subr.mxu0 0.0
        %6937 = vmatpush1.msra.mxu0 0.0
        %6938 = vmatprep.subr.mxu0 0.0
        %6939 = vmatpush1.msra.mxu0 0.0
        %6940 = vmatprep.subr.mxu0 0.0
        %6941 = vmatpush1.msra.mxu0 0.0
        %6942 = vmatprep.subr.mxu0 0.0
        %6943 = vmatpush1.msra.mxu0 0.0
        %6944 = vmatprep.subr.mxu0 0.0
        %6945 = vmatpush1.msra.mxu0 0.0
        %6946 = vmatprep.subr.mxu0 0.0
        %6947 = vmatpush1.msra.mxu0 0.0
        %6948 = vmatprep.subr.mxu0 0.0
        %6949 = vmatpush1.msra.mxu0 0.0
        %6950 = vmatprep.subr.mxu0 0.0
        %6951 = vmatpush1.msra.mxu0 0.0
        %6952 = vmatprep.subr.mxu0 0.0
        %6953 = vmatpush1.msra.mxu0 0.0
        %6954 = vmatprep.subr.mxu0 0.0
        %6955 = vmatpush1.msra.mxu0 0.0
        %6956 = vmatprep.subr.mxu0 0.0
        %6957 = vmatpush1.msra.mxu0 0.0
        %6958 = vmatprep.subr.mxu0 0.0
        %6959 = vmatpush1.msra.mxu0 0.0
        %6960 = vmatprep.subr.mxu0 0.0
        %6961 = vmatpush1.msra.mxu0 0.0
        %6962 = vmatprep.subr.mxu0 0.0
        %6963 = vmatpush1.msra.mxu0 0.0
        %6964 = vmatprep.subr.mxu0 0.0
        %6965 = vmatpush1.msra.mxu0 0.0
        %6966 = vmatprep.subr.mxu0 0.0
        %6967 = vmatpush1.msra.mxu0 0.0
        %6968 = vmatprep.subr.mxu0 0.0
        %6969 = vmatpush1.msra.mxu0 0.0
        %6970 = vmatprep.subr.mxu0 0.0
        %6971 = vmatpush1.msra.mxu0 0.0
        %6972 = vmatprep.mubr.f32.mxu0 0.0
        %6973 = vmatmul.mubr.f32.gmra.mrb[0].mxu0 %v6864
        %v6974 = vpop.f32.mrb[0].mxu0
        %v6975 = vadd.f32 0.0, %v6974
        %v6976 = vpop.f32.mrb[0].mxu0
        %6977 = vmatprep.mubr.f32.mxu0 0.0
        %6978 = vmatmul.mubr.f32.gmra.mrb[0].mxu0 %v6867
        %v6979 = vpop.f32.mrb[0].mxu0
        %v6980 = vadd.f32 0.0, %v6979
        %v6981 = vpop.f32.mrb[0].mxu0
        %6982 = vmatprep.mubr.f32.mxu0 0.0
        %6983 = vmatmul.mubr.f32.gmra.mrb[0].mxu0 %v6870
        %v6984 = vpop.f32.mrb[0].mxu0
        %v6985 = vadd.f32 0.0, %v6984
        %v6986 = vpop.f32.mrb[0].mxu0
        %6987 = vmatprep.mubr.f32.mxu0 0.0
        %6988 = vmatmul.mubr.f32.gmra.mrb[0].mxu0 %v6873
        %v6989 = vpop.f32.mrb[0].mxu0
        %v6990 = vadd.f32 0.0, %v6989
        %v6991 = vpop.f32.mrb[0].mxu0
        %6992 = vmatprep.mubr.f32.mxu0 0.0
        %6993 = vmatmul.mubr.f32.gmra.mrb[0].mxu0 %v6876
        %v6994 = vpop.f32.mrb[0].mxu0
        %v6995 = vadd.f32 0.0, %v6994
        %v6996 = vpop.f32.mrb[0].mxu0
        %6997 = vmatprep.mubr.f32.mxu0 0.0
        %6998 = vmatmul.mubr.f32.gmra.mrb[0].mxu0 %v6879
        %v6999 = vpop.f32.mrb[0].mxu0
        %v7000 = vadd.f32 0.0, %v6999
        %v7001 = vpop.f32.mrb[0].mxu0
        %7002 = vmatprep.mubr.f32.mxu0 0.0
        %7003 = vmatmul.mubr.f32.gmra.mrb[0].mxu0 %v6882
        %v7004 = vpop.f32.mrb[0].mxu0
        %v7005 = vadd.f32 0.0, %v7004
        %v7006 = vpop.f32.mrb[0].mxu0
        %7007 = vmatprep.mubr.f32.mxu0 0.0
        %7008 = vmatmul.mubr.f32.gmra.mrb[0].mxu0 %v6885
        %v7009 = vpop.f32.mrb[0].mxu0
        %v7010 = vadd.f32 0.0, %v7009
        %v7011 = vpop.f32.mrb[0].mxu0
        %7012 = vmatprep.mubr.f32.mxu0 0.0
        %7013 = vmatmul.mubr.f32.gmra.mrb[0].mxu0 %v6888
        %v7014 = vpop.f32.mrb[0].mxu0
        %v7015 = vadd.f32 0.0, %v7014
        %v7016 = vpop.f32.mrb[0].mxu0
        %7017 = vmatprep.mubr.f32.mxu0 0.0
        %7018 = vmatmul.mubr.f32.gmra.mrb[0].mxu0 %v6891
        %v7019 = vpop.f32.mrb[0].mxu0
        %v7020 = vadd.f32 0.0, %v7019
        %v7021 = vpop.f32.mrb[0].mxu0
        %7022 = vmatprep.mubr.f32.mxu0 0.0
        %7023 = vmatmul.mubr.f32.gmra.mrb[0].mxu0 %v6894
        %v7024 = vpop.f32.mrb[0].mxu0
        %v7025 = vadd.f32 0.0, %v7024
        %v7026 = vpop.f32.mrb[0].mxu0
        %7027 = vmatprep.mubr.f32.mxu0 0.0
        %7028 = vmatmul.mubr.f32.gmra.mrb[0].mxu0 %v6897
        %v7029 = vpop.f32.mrb[0].mxu0
        %v7030 = vadd.f32 0.0, %v7029
        %v7031 = vpop.f32.mrb[0].mxu0
        %7032 = vmatprep.mubr.f32.mxu0 0.0
        %7033 = vmatmul.mubr.f32.gmra.mrb[0].mxu0 %v6900
        %v7034 = vpop.f32.mrb[0].mxu0
        %v7035 = vadd.f32 0.0, %v7034
        %v7036 = vpop.f32.mrb[0].mxu0
        %7037 = vmatprep.mubr.f32.mxu0 0.0
        %7038 = vmatmul.mubr.f32.gmra.mrb[0].mxu0 %v6903
        %v7039 = vpop.f32.mrb[0].mxu0
        %v7040 = vadd.f32 0.0, %v7039
        %v7041 = vpop.f32.mrb[0].mxu0
        %7042 = vmatprep.mubr.f32.mxu0 0.0
        %7043 = vmatmul.mubr.f32.gmra.mrb[0].mxu0 %v6906
        %v7044 = vpop.f32.mrb[0].mxu0
        %v7045 = vadd.f32 0.0, %v7044
        %v7046 = vpop.f32.mrb[0].mxu0
        %7047 = vdwg.mxu0
        %v7048 = vmul.f32 %v6975, %v6801
        %v7049 = vmul.f32 %v6980, %v6804
        %v7050 = vmul.f32 %v6985, %v6809
        %v7051 = vmul.f32 %v6990, %v6812
        %v7052 = vmul.f32 %v6995, %v6817
        %v7053 = vmul.f32 %v7000, %v6820
        %v7054 = vmul.f32 %v7005, %v6825
        %v7055 = vmul.f32 %v7010, %v6828
        %v7056 = vmul.f32 %v7015, %v6833
        %v7057 = vmul.f32 %v7020, %v6836
        %v7058 = vmul.f32 %v7025, %v6841
        %v7059 = vmul.f32 %v7030, %v6844
        %v7060 = vmul.f32 %v7035, %v6849
        %v7061 = vmul.f32 %v7040, %v6852
        %v7062 = vmul.f32 %v7045, %v6857
        %v7063 = vadd.f32 %v7048, %v7049
        %v7064 = vadd.f32 %v7063, %v7050
        %v7065 = vadd.f32 %v7064, %v7051
        %v7066 = vadd.f32 %v7065, %v7052
        %v7067 = vadd.f32 %v7066, %v7053
        %v7068 = vadd.f32 %v7067, %v7054
        %v7069 = vadd.f32 %v7068, %v7055
        %v7070 = vadd.f32 %v7069, %v7056
        %v7071 = vadd.f32 %v7070, %v7057
        %v7072 = vadd.f32 %v7071, %v7058
        %v7073 = vadd.f32 %v7072, %v7059
        %v7074 = vadd.f32 %v7073, %v7060
        %v7075 = vadd.f32 %v7074, %v7061
        %v7076 = vadd.f32 %v7075, %v7062
        %v7078 = vsel %vm6590, %v6694, 0
        %7080 = vmatprep.subr.mxu0 0.0
        %7081 = vmatpush1.msra.mxu0 %v6862
        %7082 = vmatprep.subr.mxu0 0.0
        %7083 = vmatpush1.msra.mxu0 0.0
        %7084 = vmatprep.subr.mxu0 0.0
        %7085 = vmatpush1.msra.mxu0 0.0
        %7086 = vmatprep.subr.mxu0 0.0
        %7087 = vmatpush1.msra.mxu0 0.0
        %7088 = vmatprep.subr.mxu0 0.0
        %7089 = vmatpush1.msra.mxu0 0.0
        %7090 = vmatprep.subr.mxu0 0.0
        %7091 = vmatpush1.msra.mxu0 0.0
        %7092 = vmatprep.subr.mxu0 0.0
        %7093 = vmatpush1.msra.mxu0 0.0
        %7094 = vmatprep.subr.mxu0 0.0
        %7095 = vmatpush1.msra.mxu0 0.0
        %7096 = vmatprep.subr.mxu0 0.0
        %7097 = vmatpush1.msra.mxu0 0.0
        %7098 = vmatprep.subr.mxu0 0.0
        %7099 = vmatpush1.msra.mxu0 0.0
        %7100 = vmatprep.subr.mxu0 0.0
        %7101 = vmatpush1.msra.mxu0 0.0
        %7102 = vmatprep.subr.mxu0 0.0
        %7103 = vmatpush1.msra.mxu0 0.0
        %7104 = vmatprep.subr.mxu0 0.0
        %7105 = vmatpush1.msra.mxu0 0.0
        %7106 = vmatprep.subr.mxu0 0.0
        %7107 = vmatpush1.msra.mxu0 0.0
        %7108 = vmatprep.subr.mxu0 0.0
        %7109 = vmatpush1.msra.mxu0 0.0
        %7110 = vmatprep.subr.mxu0 0.0
        %7111 = vmatpush1.msra.mxu0 0.0
        %7112 = vmatprep.subr.mxu0 0.0
        %7113 = vmatpush1.msra.mxu0 0.0
        %7114 = vmatprep.subr.mxu0 0.0
        %7115 = vmatpush1.msra.mxu0 0.0
        %7116 = vmatprep.subr.mxu0 0.0
        %7117 = vmatpush1.msra.mxu0 0.0
        %7118 = vmatprep.subr.mxu0 0.0
        %7119 = vmatpush1.msra.mxu0 0.0
        %7120 = vmatprep.subr.mxu0 0.0
        %7121 = vmatpush1.msra.mxu0 0.0
        %7122 = vmatprep.subr.mxu0 0.0
        %7123 = vmatpush1.msra.mxu0 0.0
        %7124 = vmatprep.subr.mxu0 0.0
        %7125 = vmatpush1.msra.mxu0 0.0
        %7126 = vmatprep.subr.mxu0 0.0
        %7127 = vmatpush1.msra.mxu0 0.0
        %7128 = vmatprep.subr.mxu0 0.0
        %7129 = vmatpush1.msra.mxu0 0.0
        %7130 = vmatprep.subr.mxu0 0.0
        %7131 = vmatpush1.msra.mxu0 0.0
        %7132 = vmatprep.subr.mxu0 0.0
        %7133 = vmatpush1.msra.mxu0 0.0
        %7134 = vmatprep.subr.mxu0 0.0
        %7135 = vmatpush1.msra.mxu0 0.0
        %7136 = vmatprep.subr.mxu0 0.0
        %7137 = vmatpush1.msra.mxu0 0.0
        %7138 = vmatprep.subr.mxu0 0.0
        %7139 = vmatpush1.msra.mxu0 0.0
        %7140 = vmatprep.subr.mxu0 0.0
        %7141 = vmatpush1.msra.mxu0 0.0
        %7142 = vmatprep.subr.mxu0 0.0
        %7143 = vmatpush1.msra.mxu0 0.0
        %7144 = vmatprep.mubr.f32.mxu0 0.0
        %7145 = vmatmul.mubr.f32.gmra.mrb[0].mxu0 %v7078
        %v7146 = vpop.f32.mrb[0].mxu0
        %v7147 = vadd.f32 0.0, %v7146
        %v7148 = vpop.f32.mrb[0].mxu0
        %7149 = vdwg.mxu0
        %v7150 = vmul.f32 %v7076, %v7147
        %v7151 = vpack.c.bf16 %v7150, %v7150
        %v7152 = vld [vmem:[#allocation16] sm:$0xf]
        %v7153 = vld [vmem:[#allocation16 + $0x4] sm:$0xf]
        %v7154 = vld [vmem:[#allocation16 + $0x8] sm:$0xf]
        %v7155 = vld [vmem:[#allocation16 + $0xc] sm:$0xf]
        %v7156 = vld [vmem:[#allocation16 + $0x10] sm:$0xf]
        %v7157 = vld [vmem:[#allocation16 + $0x14] sm:$0xf]
        %v7158 = vld [vmem:[#allocation16 + $0x18] sm:$0xf]
        %v7159 = vld [vmem:[#allocation16 + $0x1c] sm:$0xf]
        %v7160 = vld [vmem:[#allocation16 + $0x20] sm:$0xf]
        %v7161 = vld [vmem:[#allocation16 + $0x24] sm:$0xf]
        %v7162 = vld [vmem:[#allocation16 + $0x28] sm:$0xf]
        %v7163 = vld [vmem:[#allocation16 + $0x2c] sm:$0xf]
        %v7164 = vld [vmem:[#allocation16 + $0x30] sm:$0xf]
        %v7165 = vld [vmem:[#allocation16 + $0x34] sm:$0xf]
        %v7166 = vld [vmem:[#allocation16 + $0x38] sm:$0xf]
        %v7167 = vld [vmem:[#allocation16 + $0x3c] sm:$0xf]
        %v7168 = vld [vmem:[%s13] sm:$0x1]
        %v7170 = vlaneseq
        %v7171 = vshrl.u32 %v7170, 7
        %v7172 = vsub.s32 0, %v7171
        %v7173 = vrot.slane %v7168, %v7172
        %v7191 = vunpack.c.l.b16 %v7152
        %v7192 = vunpack.c.l.b16 %v7153
        %v7193 = vunpack.c.l.b16 %v7154
        %v7194 = vunpack.c.l.b16 %v7155
        %v7195 = vunpack.c.l.b16 %v7156
        %v7196 = vunpack.c.l.b16 %v7157
        %v7197 = vunpack.c.l.b16 %v7158
        %v7198 = vunpack.c.l.b16 %v7159
        %v7199 = vunpack.c.l.b16 %v7160
        %v7200 = vunpack.c.l.b16 %v7161
        %v7201 = vunpack.c.l.b16 %v7162
        %v7202 = vunpack.c.l.b16 %v7163
        %v7203 = vunpack.c.l.b16 %v7164
        %v7204 = vunpack.c.l.b16 %v7165
        %v7205 = vunpack.c.l.b16 %v7166
        %v7206 = vunpack.c.l.b16 %v7167
        %v7207 = vpack.c.b16 %v7192, %v7191
        %v7208 = vpack.c.b16 %v7194, %v7193
        %v7209 = vpack.c.b16 %v7196, %v7195
        %v7210 = vpack.c.b16 %v7198, %v7197
        %v7211 = vpack.c.b16 %v7200, %v7199
        %v7212 = vpack.c.b16 %v7202, %v7201
        %v7213 = vpack.c.b16 %v7204, %v7203
        %v7214 = vpack.c.b16 %v7206, %v7205
        %7223 = vmatprep.subr.bf16.mxu0 0
        %7224 = vmatpush1.bf16.msra.mxu0 %v7207
        %7225 = vmatprep.subr.bf16.mxu0 0
        %7226 = vmatpush1.bf16.msra.mxu0 %v7208
        %7227 = vmatprep.subr.bf16.mxu0 0
        %7228 = vmatpush1.bf16.msra.mxu0 %v7209
        %7229 = vmatprep.subr.bf16.mxu0 0
        %7230 = vmatpush1.bf16.msra.mxu0 %v7210
        %7231 = vmatprep.subr.bf16.mxu0 0
        %7232 = vmatpush1.bf16.msra.mxu0 %v7211
        %7233 = vmatprep.subr.bf16.mxu0 0
        %7234 = vmatpush1.bf16.msra.mxu0 %v7212
        %7235 = vmatprep.subr.bf16.mxu0 0
        %7236 = vmatpush1.bf16.msra.mxu0 %v7213
        %7237 = vmatprep.subr.bf16.mxu0 0
        %7238 = vmatpush1.bf16.msra.mxu0 %v7214
        %7239 = vmatprep.subr.bf16.mxu0 0
        %7240 = vmatpush1.bf16.msra.mxu0 0
        %7241 = vmatprep.subr.bf16.mxu0 0
        %7242 = vmatpush1.bf16.msra.mxu0 0
        %7243 = vmatprep.subr.bf16.mxu0 0
        %7244 = vmatpush1.bf16.msra.mxu0 0
        %7245 = vmatprep.subr.bf16.mxu0 0
        %7246 = vmatpush1.bf16.msra.mxu0 0
        %7247 = vmatprep.subr.bf16.mxu0 0
        %7248 = vmatpush1.bf16.msra.mxu0 0
        %7249 = vmatprep.subr.bf16.mxu0 0
        %7250 = vmatpush1.bf16.msra.mxu0 0
        %7251 = vmatprep.subr.bf16.mxu0 0
        %7252 = vmatpush1.bf16.msra.mxu0 0
        %7253 = vmatprep.subr.bf16.mxu0 0
        %7254 = vmatpush1.bf16.msra.mxu0 0
        %7255 = vmatprep.mubr.bf16.mxu0 0
        %7256 = vmatmul.mubr.bf16.gmra.mrb[0].mxu0 %v7151
        %v7257 = vpop.f32.mrb[0].mxu0
        %v7258 = vadd.f32 %v7173, %v7257
        %v7259 = vpop.f32.mrb[0].mxu0
        %v7260 = vpop.f32.mrb[0].mxu0
        %v7261 = vpop.f32.mrb[0].mxu0
        %7262 = vdwg.mxu0
        %v7263 = vld [vmem:[%s14] sm:$0x1]
        %v7265 = vlaneseq
        %v7266 = vshrl.u32 %v7265, 7
        %v7267 = vsub.s32 0, %v7266
        %v7268 = vrot.slane %v7263, %v7267
        %v7270 = vmul.f32 %v6075, %v7268
        %7271 = vadd.xlane.f32.xlu0 %v7270
        %v7272 = vpop.xlane.xlu0 %7271
        %v7273 = vld [vmem:[%s15] sm:$0x1]
        %v7275 = vlaneseq
        %v7276 = vshrl.u32 %v7275, 7
        %v7277 = vsub.s32 0, %v7276
        %v7278 = vrot.slane %v7273, %v7277
        %v7280 = vmul.f32 %v7258, %v7278
        %7281 = vadd.xlane.f32.xlu0 %v7280
        %v7282 = vpop.xlane.xlu0 %7281
        %v7283 = vadd.f32 %v7272, %v7282
        %v7284 = vld [vmem:[#allocation4] sm:$0x1]
        %v7286 = vlaneseq
        %v7287 = vshrl.u32 %v7286, 7
        %v7288 = vsub.s32 0, %v7287
        %v7289 = vrot.slane %v7284, %v7288
        %v7291 = vadd.f32 %v7283, %v7289
        %vm7292 = vcmask 7168
        %7293 = vst.msk [vmem:[%s711] sm:$0xff] %vm7292, %v7291
        %p7294 = scmp.lt.s32.totalorder %s37, 1
        %s7295 = scalar_select %p7294, %s37, 1
        %s7296 = smul.addr %s7295, 8
        %s7297 = scalar_lea.vmem %s19, %s7296
        // Predicated region
        $region129: #{tpu_custom_call.1} parent=95 // pred_check
          %p7298 = pneg %p459
        $region130: #{tpu_custom_call.1} parent=95 // pred_check_branch
          %7300 = sbr.rel (%p7298) target = $region132
        $region131: #{tpu_custom_call.1} parent=95 // pred_region
          _
        $region132: #{tpu_custom_call.1} parent=95 // pred_fallthru
          _
      $region96: #{tpu_custom_call.1} parent=5 // pred_fallthru
        _
      %p7301 = scmp.le.s32.totalorder 2, %s32
      // Predicated region
      $region133: #{tpu_custom_call.1} parent=5 // pred_check
        %p7302 = pneg %p7301
      $region134: #{tpu_custom_call.1} parent=5 // pred_check_branch
        %7304 = sbr.rel (%p7302) target = $region136
      $region135: #{tpu_custom_call.1} parent=5 // pred_region
        %s7305 = ssub.s32 %s32, 2
        // Predicated region
        $region137: #{tpu_custom_call.1} parent=135 // pred_check
          %p7306 = pneg %p465
        $region138: #{tpu_custom_call.1} parent=135 // pred_check_branch
          %7308 = sbr.rel (%p7306) target = $region140
        $region139: #{tpu_custom_call.1} parent=135 // pred_region
          %p7309 = scmp.lt.s32.totalorder %s38, 1
          %s7310 = scalar_select %p7309, %s38, 1
          %s7311 = smul.addr %s7310, 8
          %s7312 = scalar_lea.vmem %s19, %s7311
        $region140: #{tpu_custom_call.1} parent=135 // pred_fallthru
          _
      $region136: #{tpu_custom_call.1} parent=5 // pred_fallthru
        _
    $region6: #{tpu_custom_call.1} parent=1 // loop_footer
      %s36 = sadd.s32 1, %s32
    $region7: #{tpu_custom_call.1} parent=1 // loop_footer_branch
      %31 = sbr.rel target = $region3
    $region8: #{tpu_custom_call.1} parent=1 // loop_exit
      _
    %7313 = vsyncpa [#allocation6], 1
    %s7314 = scalar_lea.sflag [#allocation6], 1
    %7315 = vsyncpa %s7314, 1
    %7316 = vsyncpa [#allocation8], 1
    %7317 = vsyncpa [#allocation11], 1
    %7318 = vsyncpa [#allocation14], 1
    %7319 = vsyncpa [#allocation17], 1

</llo_original>
